<compile_context>
chip_gen: v5e
topology: v5e:2x2
jax: 0.10.0
libtpu: 0.0.40
codegen_flags: <defaults>
</compile_context>

<pallas_src>
import math
from functools import partial

import jax
import jax.numpy as jnp
from jax import lax
from jax.experimental import pallas as pl
from jax.experimental.pallas import tpu as pltpu

_EPS = 1e-5           # torch LayerNorm default eps
_NEG = -1e30          # finite "minus infinity" for the causal mask
_LM_TILE = 2048       # vocab tile for the tied lm_head

_VMEM_LIMIT_CACHE = None


def _vmem_limit_bytes():
    """~96 MiB on 128-MiB-VMEM parts (v5e/v6e), ~48 MiB on v7x (64 MiB VMEM)."""
    global _VMEM_LIMIT_CACHE
    if _VMEM_LIMIT_CACHE is None:
        try:
            cap = int(pltpu.get_tpu_info().vmem_capacity_bytes)
            _VMEM_LIMIT_CACHE = min((cap * 3) // 4, 100 * 1024 * 1024)
        except Exception:
            _VMEM_LIMIT_CACHE = 64 * 1024 * 1024
    return _VMEM_LIMIT_CACHE


def _cp(sem):
    return pltpu.CompilerParams(dimension_semantics=sem,
                                vmem_limit_bytes=_vmem_limit_bytes())


def _round_up(n, m):
    return ((n + m - 1) // m) * m


def _pick_tile(n, target):
    """Largest divisor of n that is <= target and a multiple of 8 (else n)."""
    if n <= target:
        return n
    for t in range(target, 7, -1):
        if n % t == 0 and t % 8 == 0:
            return t
    return n


def _row_tile(M, C):
    # bigger row tiles when the fused weights are small enough to leave headroom
    return _pick_tile(M, 512 if C <= 1024 else 256)


def _mlp_chunk(C, Hf):
    """Hidden-dim chunk so double-buffered bf16 (C,th)+(th,C) stays ~<=16 MiB."""
    budget = 16 * 1024 * 1024
    th_max = max(128, budget // (8 * C))
    if Hf <= th_max:
        return Hf
    t = (th_max // 128) * 128
    while t >= 128:
        if Hf % t == 0:
            return t
        t -= 128
    return Hf


def _layernorm(x, g, b):
    # two-pass (centered) variance for numerical parity with torch
    mu = jnp.mean(x, axis=-1, keepdims=True)
    d = x - mu
    var = jnp.mean(d * d, axis=-1, keepdims=True)
    return d * lax.rsqrt(var + _EPS) * g + b


# ----------------------------------------------------------------------------
# kernels
# ----------------------------------------------------------------------------
def ln_linear_kernel(x_ref, g_ref, b_ref, w_ref, bias_ref, o_ref):
    """o = LN(x) @ W + bias    (x: (tm,C) f32, W: (C,N) bf16, o: bf16)"""
    x = x_ref[...].astype(jnp.float32)
    xn = _layernorm(x, g_ref[...], b_ref[...]).astype(jnp.bfloat16)
    acc = jnp.dot(xn, w_ref[...], preferred_element_type=jnp.float32)
    o_ref[...] = (acc + bias_ref[...]).astype(o_ref.dtype)


def linear_residual_kernel(y_ref, w_ref, bias_ref, res_ref, o_ref):
    """o = y @ W + bias + res   (attn output projection fused with residual add)"""
    acc = jnp.dot(y_ref[...].astype(jnp.bfloat16), w_ref[...],
                  preferred_element_type=jnp.float32)
    o_ref[...] = (acc + bias_ref[...] + res_ref[...]).astype(o_ref.dtype)


def ln_mlp_residual_kernel(x_ref, g_ref, b_ref, w1_ref, b1_ref,
                           w2_ref, b2_ref, o_ref, xn_sc, acc_sc):
    """o = x + fc2(gelu(fc1(LN(x)))) ; hidden dim chunked over grid axis 1."""
    j = pl.program_id(1)

    @pl.when(j == 0)
    def _():
        x = x_ref[...].astype(jnp.float32)
        xn_sc[...] = _layernorm(x, g_ref[...], b_ref[...]).astype(jnp.bfloat16)
        acc_sc[...] = x + b2_ref[...]          # residual + fc2 bias (added once)

    h = jnp.dot(xn_sc[...], w1_ref[...],
                preferred_element_type=jnp.float32) + b1_ref[...]
    # exact (erf-based) GELU, matching torch.nn.GELU() default
    h = 0.5 * h * (1.0 + lax.erf(h * (1.0 / math.sqrt(2.0))))
    acc_sc[...] += jnp.dot(h.astype(jnp.bfloat16), w2_ref[...],
                           preferred_element_type=jnp.float32)

    @pl.when(j == pl.num_programs(1) - 1)
    def _():
        o_ref[...] = acc_sc[...].astype(o_ref.dtype)


def flash_attn_kernel(q_ref, k_ref, v_ref, o_ref, m_sc, l_sc, acc_sc,
                      *, scale, t):
    """Causal flash attention. Grid: (B*H, nq, nk), tq == tk == t.

    K/V tiles above the diagonal are never DMA'd (index_map clamp) nor computed;
    diagonal tiles take a masked path, strictly-below tiles an unmasked path.
    """
    qi = pl.program_id(1)
    ki = pl.program_id(2)

    @pl.when(ki == 0)
    def _():
        m_sc[...] = jnp.full_like(m_sc, _NEG)
        l_sc[...] = jnp.zeros_like(l_sc)
        acc_sc[...] = jnp.zeros_like(acc_sc)

    def update(mask_diag):
        q = q_ref[0].astype(jnp.bfloat16)                        # (t, hd)
        k = k_ref[0].astype(jnp.bfloat16)                        # (t, hd)
        s = lax.dot_general(q, k, (((1,), (1,)), ((), ())),
                            preferred_element_type=jnp.float32) * scale
        if mask_diag:
            row = lax.broadcasted_iota(jnp.int32, (t, t), 0)
            col = lax.broadcasted_iota(jnp.int32, (t, t), 1)
            s = jnp.where(col <= row, s, jnp.float32(_NEG))
        m_prev = m_sc[...]
        m_new = jnp.maximum(m_prev, jnp.max(s, axis=-1, keepdims=True))
        alpha = jnp.exp(m_prev - m_new)
        p = jnp.exp(s - m_new)
        l_sc[...] = alpha * l_sc[...] + jnp.sum(p, axis=-1, keepdims=True)
        acc_sc[...] = alpha * acc_sc[...] + lax.dot_general(
            p.astype(jnp.bfloat16), v_ref[0].astype(jnp.bfloat16),
            (((1,), (0,)), ((), ())), preferred_element_type=jnp.float32)
        m_sc[...] = m_new

    @pl.when(ki < qi)          # fully unmasked tiles: no iota/compare/select
    def _():
        update(False)

    @pl.when(ki == qi)         # diagonal tile: apply causal mask
    def _():
        update(True)

    @pl.when(ki == pl.num_programs(2) - 1)
    def _():
        inv_l = pl.reciprocal(l_sc[...], approx=True)
        o_ref[0] = (acc_sc[...] * inv_l).astype(o_ref.dtype)


def lnf_lmhead_kernel(x_ref, g_ref, b_ref, w_ref, o_ref):
    """o = LN_f(x_last) @ wte_tile^T   (tied lm_head, contracts over C in-kernel)"""
    x = x_ref[...].astype(jnp.float32)
    xn = _layernorm(x, g_ref[...], b_ref[...]).astype(jnp.bfloat16)
    w = w_ref[...].astype(jnp.bfloat16)                          # (tn, C) bf16
    o_ref[...] = lax.dot_general(xn, w, (((1,), (1,)), ((), ())),
                                 preferred_element_type=jnp.float32
                                 ).astype(o_ref.dtype)


# ----------------------------------------------------------------------------
# pallas_call wrappers
# ----------------------------------------------------------------------------
def fused_ln_linear(x, g, b, w, bias):
    M, C = x.shape
    N = w.shape[1]
    tm = _row_tile(M, C)
    return pl.pallas_call(
        ln_linear_kernel,
        out_shape=jax.ShapeDtypeStruct((M, N), jnp.bfloat16),
        grid_spec=pltpu.PrefetchScalarGridSpec(
            num_scalar_prefetch=0, grid=(M // tm,),
            in_specs=[
                pl.BlockSpec((tm, C), lambda i: (i, 0)),
                pl.BlockSpec((1, C), lambda i: (0, 0)),
                pl.BlockSpec((1, C), lambda i: (0, 0)),
                pl.BlockSpec((C, N), lambda i: (0, 0)),   # weight resident
                pl.BlockSpec((1, N), lambda i: (0, 0)),
            ],
            out_specs=pl.BlockSpec((tm, N), lambda i: (i, 0)),
        ),
        compiler_params=_cp(("parallel",)),
    )(x, g, b, w, bias)


def fused_linear_residual(y, w, bias, res):
    M, C = y.shape
    N = w.shape[1]
    tm = _row_tile(M, C)
    return pl.pallas_call(
        linear_residual_kernel,
        out_shape=jax.ShapeDtypeStruct((M, N), jnp.float32),
        grid_spec=pltpu.PrefetchScalarGridSpec(
            num_scalar_prefetch=0, grid=(M // tm,),
            in_specs=[
                pl.BlockSpec((tm, C), lambda i: (i, 0)),
                pl.BlockSpec((C, N), lambda i: (0, 0)),
                pl.BlockSpec((1, N), lambda i: (0, 0)),
                pl.BlockSpec((tm, N), lambda i: (i, 0)),
            ],
            out_specs=pl.BlockSpec((tm, N), lambda i: (i, 0)),
        ),
        compiler_params=_cp(("parallel",)),
    )(y, w, bias, res)


def fused_ln_mlp_residual(x, g, b, w1, b1, w2, b2):
    M, C = x.shape
    Hf = w1.shape[1]
    tm = _row_tile(M, C)
    th = _mlp_chunk(C, Hf)
    return pl.pallas_call(
        ln_mlp_residual_kernel,
        out_shape=jax.ShapeDtypeStruct((M, C), jnp.float32),
        grid_spec=pltpu.PrefetchScalarGridSpec(
            num_scalar_prefetch=0, grid=(M // tm, Hf // th),
            in_specs=[
                pl.BlockSpec((tm, C), lambda i, j: (i, 0)),
                pl.BlockSpec((1, C), lambda i, j: (0, 0)),
                pl.BlockSpec((1, C), lambda i, j: (0, 0)),
                pl.BlockSpec((C, th), lambda i, j: (0, j)),   # fc1 chunk
                pl.BlockSpec((1, th), lambda i, j: (0, j)),
                pl.BlockSpec((th, C), lambda i, j: (j, 0)),   # fc2 chunk
                pl.BlockSpec((1, C), lambda i, j: (0, 0)),
            ],
            out_specs=pl.BlockSpec((tm, C), lambda i, j: (i, 0)),
            scratch_shapes=[
                pltpu.VMEM((tm, C), jnp.bfloat16),   # LN(x), reused across chunks
                pltpu.VMEM((tm, C), jnp.float32),    # output accumulator
            ],
        ),
        compiler_params=_cp(("parallel", "arbitrary")),
    )(x, g, b, w1, b1, w2, b2)


def flash_attention(q, k, v):
    BH, T, hd = q.shape
    scale = 1.0 / math.sqrt(hd)
    t = _pick_tile(T, 256)
    nq = T // t
    q_spec = pl.BlockSpec((1, t, hd), lambda b, qi, ki: (b, qi, 0))
    # clamp the kv block index: fully-masked (above-diagonal) steps re-fetch the
    # previous block, so Pallas elides the DMA entirely.
    kv_spec = pl.BlockSpec((1, t, hd),
                           lambda b, qi, ki: (b, jnp.minimum(ki, qi), 0))
    return pl.pallas_call(
        partial(flash_attn_kernel, scale=scale, t=t),
        out_shape=jax.ShapeDtypeStruct((BH, T, hd), jnp.bfloat16),
        grid_spec=pltpu.PrefetchScalarGridSpec(
            num_scalar_prefetch=0, grid=(BH, nq, nq),
            in_specs=[q_spec, kv_spec, kv_spec],
            out_specs=pl.BlockSpec((1, t, hd), lambda b, qi, ki: (b, qi, 0)),
            scratch_shapes=[
                pltpu.VMEM((t, 1), jnp.float32),   # running max
                pltpu.VMEM((t, 1), jnp.float32),   # running sum
                pltpu.VMEM((t, hd), jnp.float32),  # output accumulator
            ],
        ),
        compiler_params=_cp(("parallel", "parallel", "arbitrary")),
    )(q, k, v)


def lnf_lm_head(x_last, g, b, wte):
    Bq, C = x_last.shape
    Vp = wte.shape[0]
    tn = min(_LM_TILE, Vp)
    assert Vp % tn == 0
    return pl.pallas_call(
        lnf_lmhead_kernel,
        out_shape=jax.ShapeDtypeStruct((Bq, Vp), jnp.float32),
        grid_spec=pltpu.PrefetchScalarGridSpec(
            num_scalar_prefetch=0, grid=(Vp // tn,),
            in_specs=[
                pl.BlockSpec((Bq, C), lambda n: (0, 0)),
                pl.BlockSpec((1, C), lambda n: (0, 0)),
                pl.BlockSpec((1, C), lambda n: (0, 0)),
                pl.BlockSpec((tn, C), lambda n: (n, 0)),   # bf16 vocab tile
            ],
            out_specs=pl.BlockSpec((Bq, tn), lambda n: (0, n)),
        ),
        compiler_params=_cp(("parallel",)),
    )(x_last, g, b, wte)


# ----------------------------------------------------------------------------
# Parameter initialization (mirrors GPT._init_weights shapes/std; linear weights
# stored transposed w.r.t. torch, i.e. (in, out), and in bf16; wte is stored in
# bf16 and zero-padded to a multiple of the lm_head vocab tile)
# ----------------------------------------------------------------------------
def init_params(key, cfg):
    C = cfg["n_embd"]
    V = cfg["vocab_size"]
    L = cfg["n_layer"]
    BS = cfg["block_size"]
    std = 0.02
    resid_std = 0.02 / math.sqrt(2 * L)

    keys = iter(jax.random.split(key, 4 + 4 * L))

    V_pad = _round_up(V, _LM_TILE)
    wte = jax.random.normal(next(keys), (V, C), jnp.float32) * std
    wte = jnp.pad(wte, ((0, V_pad - V), (0, 0))).astype(jnp.bfloat16)

    params = {
        # weight tying: wte.weight == lm_head.weight (single bf16 array)
        "wte": wte,
        "wpe": jax.random.normal(next(keys), (BS, C), jnp.float32) * std,
        "lnf_g": jnp.ones((1, C), jnp.float32),
        "lnf_b": jnp.zeros((1, C), jnp.float32),
        "blocks": [],
    }
    for _ in range(L):
        blk = {
            "ln1_g": jnp.ones((1, C), jnp.float32),
            "ln1_b": jnp.zeros((1, C), jnp.float32),
            "attn_w": (jax.random.normal(next(keys), (C, 3 * C), jnp.float32)
                       * std).astype(jnp.bfloat16),
            "attn_b": jnp.zeros((1, 3 * C), jnp.float32),
            "proj_w": (jax.random.normal(next(keys), (C, C), jnp.float32)
                       * resid_std).astype(jnp.bfloat16),
            "proj_b": jnp.zeros((1, C), jnp.float32),
            "ln2_g": jnp.ones((1, C), jnp.float32),
            "ln2_b": jnp.zeros((1, C), jnp.float32),
            "fc_w": (jax.random.normal(next(keys), (C, 4 * C), jnp.float32)
                     * std).astype(jnp.bfloat16),
            "fc_b": jnp.zeros((1, 4 * C), jnp.float32),
            "fc2_w": (jax.random.normal(next(keys), (4 * C, C), jnp.float32)
                      * resid_std).astype(jnp.bfloat16),
            "fc2_b": jnp.zeros((1, C), jnp.float32),
        }
        params["blocks"].append(blk)
    return params


# ----------------------------------------------------------------------------
# GPT forward (default path: targets=None, full_logits=False -> last-token logits)
# ----------------------------------------------------------------------------
def make_gpt_forward(cfg):
    C = cfg["n_embd"]
    H = cfg["n_head"]
    V = cfg["vocab_size"]
    hd = C // H

    def forward(params, idx):
        B, T = idx.shape
        assert T <= cfg["block_size"]
        # embedding lookups (gather) kept as JAX glue
        tok_emb = jnp.take(params["wte"], idx, axis=0).astype(jnp.float32)
        pos_emb = params["wpe"][:T][None, :, :]                  # (1, T, C)
        x = (tok_emb + pos_emb).reshape(B * T, C)                # f32 residual

        for lp in params["blocks"]:
            # --- attention sub-block: LN1 + QKV fused (bf16 out), flash attn,
            #     proj + residual fused ---
            qkv = fused_ln_linear(x, lp["ln1_g"], lp["ln1_b"],
                                  lp["attn_w"], lp["attn_b"])    # (B*T, 3C) bf16
            qkv = qkv.reshape(B, T, 3, H, hd).transpose(2, 0, 3, 1, 4)
            qkv = qkv.reshape(3, B * H, T, hd)
            y = flash_attention(qkv[0], qkv[1], qkv[2])           # (B*H,T,hd) bf16
            y = y.reshape(B, H, T, hd).transpose(0, 2, 1, 3).reshape(B * T, C)
            x = fused_linear_residual(y, lp["proj_w"], lp["proj_b"], x)
            # --- MLP sub-block: LN2 + fc + GELU + fc2 + residual fused,
            #     hidden dim chunked to bound VMEM ---
            x = fused_ln_mlp_residual(x, lp["ln2_g"], lp["ln2_b"],
                                      lp["fc_w"], lp["fc_b"],
                                      lp["fc2_w"], lp["fc2_b"])

        # default inference path: ln_f + tied lm_head on the LAST token only,
        # fused into one vocab-tiled kernel over the padded bf16 embedding
        x_last = x.reshape(B, T, C)[:, -1, :]                     # (B, C)
        logits = lnf_lm_head(x_last, params["lnf_g"], params["lnf_b"],
                             params["wte"])                       # (B, V_pad)
        logits = logits[:, :V][:, None, :]                        # (B, 1, vocab)
        # TODO(synk): targets-based F.cross_entropy loss path not implemented
        # TODO(synk): full_logits=True path (logits for all T positions) not implemented
        return logits, None

    return forward


if __name__ == "__main__":
    cfg = dict(vocab_size=512, block_size=128, n_layer=2, n_head=4, n_embd=128)

    key = jax.random.PRNGKey(0)
    pkey, ikey = jax.random.split(key)
    params = init_params(pkey, cfg)

    B, T = 2, 64
    idx = jax.random.randint(ikey, (B, T), 0, cfg["vocab_size"], dtype=jnp.int32)

    forward = jax.jit(make_gpt_forward(cfg))
    logits, loss = forward(params, idx)
    logits = jax.block_until_ready(logits)
    assert logits.shape == (B, 1, cfg["vocab_size"])
    assert loss is None
    assert bool(jnp.all(jnp.isfinite(logits)))
    print("KERNEL_OK")
</pallas_src>

<mosaic_0001>
module attributes {stable_mosaic.version = 11 : i64} {
  func.func @ln_linear_kernel(%arg0: i32, %arg1: memref<128x128xf32, #tpu.memory_space<vmem>>, %arg2: memref<1x128xf32, #tpu.memory_space<vmem>>, %arg3: memref<1x128xf32, #tpu.memory_space<vmem>>, %arg4: memref<128x384xbf16, #tpu.memory_space<vmem>>, %arg5: memref<1x384xf32, #tpu.memory_space<vmem>>, %arg6: memref<128x384xbf16, #tpu.memory_space<vmem>>) attributes {dimension_semantics = [#tpu.dimension_semantics<parallel>], iteration_bounds = array<i64: 1>, scalar_prefetch = 0 : i64, scratch_operands = 0 : i64, tpu.core_type = #tpu.core_type<tc>, window_params = [{transform_indices = @transform_0, window_bounds = array<i64: 128, 128>}, {pipeline_mode = #tpu.pipeline_mode<synchronous>, transform_indices = @transform_1, window_bounds = array<i64: 1, 128>}, {pipeline_mode = #tpu.pipeline_mode<synchronous>, transform_indices = @transform_2, window_bounds = array<i64: 1, 128>}, {pipeline_mode = #tpu.pipeline_mode<synchronous>, transform_indices = @transform_3, window_bounds = array<i64: 128, 384>}, {pipeline_mode = #tpu.pipeline_mode<synchronous>, transform_indices = @transform_4, window_bounds = array<i64: 1, 384>}, {transform_indices = @transform_5, window_bounds = array<i64: 128, 384>}]} {
    %c0 = arith.constant 0 : index
    %c0_0 = arith.constant 0 : index
    %0 = vector.load %arg1[%c0, %c0_0] : memref<128x128xf32, #tpu.memory_space<vmem>>, vector<128x128xf32>
    %c0_1 = arith.constant 0 : index
    %c0_2 = arith.constant 0 : index
    %1 = vector.load %arg2[%c0_1, %c0_2] : memref<1x128xf32, #tpu.memory_space<vmem>>, vector<1x128xf32>
    %c0_3 = arith.constant 0 : index
    %c0_4 = arith.constant 0 : index
    %2 = vector.load %arg3[%c0_3, %c0_4] : memref<1x128xf32, #tpu.memory_space<vmem>>, vector<1x128xf32>
    %cst = arith.constant dense<0.000000e+00> : vector<128xf32>
    %3 = vector.multi_reduction <add>, %0, %cst [1] : vector<128x128xf32> to vector<128xf32>
    %4 = vector.shape_cast %3 : vector<128xf32> to vector<128x1xf32>
    %cst_5 = arith.constant 1.280000e+02 : f32
    %5 = vector.broadcast %cst_5 : f32 to vector<128x1xf32>
    %6 = arith.divf %4, %5 : vector<128x1xf32>
    %7 = vector.broadcast %6 : vector<128x1xf32> to vector<128x128xf32>
    %8 = arith.subf %0, %7 : vector<128x128xf32>
    %9 = arith.mulf %8, %8 : vector<128x128xf32>
    %cst_6 = arith.constant dense<0.000000e+00> : vector<128xf32>
    %10 = vector.multi_reduction <add>, %9, %cst_6 [1] : vector<128x128xf32> to vector<128xf32>
    %11 = vector.shape_cast %10 : vector<128xf32> to vector<128x1xf32>
    %cst_7 = arith.constant 1.280000e+02 : f32
    %12 = vector.broadcast %cst_7 : f32 to vector<128x1xf32>
    %13 = arith.divf %11, %12 : vector<128x1xf32>
    %cst_8 = arith.constant 9.99999974E-6 : f32
    %14 = vector.broadcast %cst_8 : f32 to vector<128x1xf32>
    %15 = arith.addf %13, %14 : vector<128x1xf32>
    %16 = math.rsqrt %15 : vector<128x1xf32>
    %17 = vector.broadcast %16 : vector<128x1xf32> to vector<128x128xf32>
    %18 = arith.mulf %8, %17 : vector<128x128xf32>
    %19 = vector.broadcast %1 : vector<1x128xf32> to vector<128x128xf32>
    %20 = arith.mulf %18, %19 : vector<128x128xf32>
    %21 = vector.broadcast %2 : vector<1x128xf32> to vector<128x128xf32>
    %22 = arith.addf %20, %21 : vector<128x128xf32>
    %23 = arith.truncf %22 : vector<128x128xf32> to vector<128x128xbf16>
    %c0_9 = arith.constant 0 : index
    %c0_10 = arith.constant 0 : index
    %24 = vector.load %arg4[%c0_9, %c0_10] : memref<128x384xbf16, #tpu.memory_space<vmem>>, vector<128x384xbf16>
    %cst_11 = arith.constant dense<0.000000e+00> : vector<128x384xf32>
    %25 = tpu.matmul %23, %24, %cst_11 {dimension_numbers = #tpu.dot_dimension_numbers<[1], [0], [0], [1], [0, 0, 1, 1], [], []>} : vector<128x128xbf16>, vector<128x384xbf16>, vector<128x384xf32> -> vector<128x384xf32>
    %c0_12 = arith.constant 0 : index
    %c0_13 = arith.constant 0 : index
    %26 = vector.load %arg5[%c0_12, %c0_13] : memref<1x384xf32, #tpu.memory_space<vmem>>, vector<1x384xf32>
    %27 = vector.broadcast %26 : vector<1x384xf32> to vector<128x384xf32>
    %28 = arith.addf %25, %27 : vector<128x384xf32>
    %29 = arith.truncf %28 : vector<128x384xf32> to vector<128x384xbf16>
    %c0_14 = arith.constant 0 : index
    %c0_15 = arith.constant 0 : index
    %30 = vector.load %arg6[%c0_14, %c0_15] : memref<128x384xbf16, #tpu.memory_space<vmem>>, vector<128x384xbf16>
    tpu.vector_store %arg6[%c0_14, %c0_15], %29 {strides = array<i32>} : memref<128x384xbf16, #tpu.memory_space<vmem>>, vector<128x384xbf16>,
    return
  }
  func.func @transform_0(%arg0: i32) -> (i32, i32) {
    %c0_i32 = arith.constant 0 : i32
    %c0_i32_0 = arith.constant 0 : i32
    return %arg0, %c0_i32 : i32, i32
  }
  func.func @transform_1(%arg0: i32) -> (i32, i32) {
    %c0_i32 = arith.constant 0 : i32
    %c0_i32_0 = arith.constant 0 : i32
    %c0_i32_1 = arith.constant 0 : i32
    return %c0_i32, %c0_i32_0 : i32, i32
  }
  func.func @transform_2(%arg0: i32) -> (i32, i32) {
    %c0_i32 = arith.constant 0 : i32
    %c0_i32_0 = arith.constant 0 : i32
    %c0_i32_1 = arith.constant 0 : i32
    return %c0_i32, %c0_i32_0 : i32, i32
  }
  func.func @transform_3(%arg0: i32) -> (i32, i32) {
    %c0_i32 = arith.constant 0 : i32
    %c0_i32_0 = arith.constant 0 : i32
    %c0_i32_1 = arith.constant 0 : i32
    return %c0_i32, %c0_i32_0 : i32, i32
  }
  func.func @transform_4(%arg0: i32) -> (i32, i32) {
    %c0_i32 = arith.constant 0 : i32
    %c0_i32_0 = arith.constant 0 : i32
    %c0_i32_1 = arith.constant 0 : i32
    return %c0_i32, %c0_i32_0 : i32, i32
  }
  func.func @transform_5(%arg0: i32) -> (i32, i32) {
    %c0_i32 = arith.constant 0 : i32
    %c0_i32_0 = arith.constant 0 : i32
    return %arg0, %c0_i32 : i32, i32
  }
}

module attributes {stable_mosaic.version = 11 : i64} {
  func.func @flash_attn_kernel(%arg0: i32, %arg1: i32, %arg2: i32, %arg3: memref<1x64x32xbf16, #tpu.memory_space<vmem>>, %arg4: memref<1x64x32xbf16, #tpu.memory_space<vmem>>, %arg5: memref<1x64x32xbf16, #tpu.memory_space<vmem>>, %arg6: memref<1x64x32xbf16, #tpu.memory_space<vmem>>, %arg7: memref<64x1xf32, #tpu.memory_space<vmem>>, %arg8: memref<64x1xf32, #tpu.memory_space<vmem>>, %arg9: memref<64x32xf32, #tpu.memory_space<vmem>>) attributes {dimension_semantics = [#tpu.dimension_semantics<parallel>, #tpu.dimension_semantics<parallel>, #tpu.dimension_semantics<arbitrary>], iteration_bounds = array<i64: 8, 1, 1>, scalar_prefetch = 0 : i64, scratch_operands = 3 : i64, tpu.core_type = #tpu.core_type<tc>, window_params = [{transform_indices = @transform_0, window_bounds = array<i64: 1, 64, 32>}, {transform_indices = @transform_1, window_bounds = array<i64: 1, 64, 32>}, {transform_indices = @transform_2, window_bounds = array<i64: 1, 64, 32>}, {transform_indices = @transform_3, window_bounds = array<i64: 1, 64, 32>}]} {
    %c0_i32 = arith.constant 0 : i32
    %0 = arith.cmpi eq, %arg2, %c0_i32 : i32
    %1 = arith.extui %0 : i1 to i32
    %c0_i32_0 = arith.constant 0 : i32
    %2 = arith.cmpi ne, %1, %c0_i32_0 : i32
    scf.if %2 {
      %cst = arith.constant -1.000000e+30 : f32
      %12 = vector.broadcast %cst : f32 to vector<64x1xf32>
      %c0 = arith.constant 0 : index
      %c0_5 = arith.constant 0 : index
      %13 = vector.load %arg7[%c0, %c0_5] : memref<64x1xf32, #tpu.memory_space<vmem>>, vector<64x1xf32>
      tpu.vector_store %arg7[%c0, %c0_5], %12 {strides = array<i32>} : memref<64x1xf32, #tpu.memory_space<vmem>>, vector<64x1xf32>,
      %cst_6 = arith.constant 0.000000e+00 : f32
      %14 = vector.broadcast %cst_6 : f32 to vector<64x1xf32>
      %c0_7 = arith.constant 0 : index
      %c0_8 = arith.constant 0 : index
      %15 = vector.load %arg8[%c0_7, %c0_8] : memref<64x1xf32, #tpu.memory_space<vmem>>, vector<64x1xf32>
      tpu.vector_store %arg8[%c0_7, %c0_8], %14 {strides = array<i32>} : memref<64x1xf32, #tpu.memory_space<vmem>>, vector<64x1xf32>,
      %cst_9 = arith.constant 0.000000e+00 : f32
      %16 = vector.broadcast %cst_9 : f32 to vector<64x32xf32>
      %c0_10 = arith.constant 0 : index
      %c0_11 = arith.constant 0 : index
      %17 = vector.load %arg9[%c0_10, %c0_11] : memref<64x32xf32, #tpu.memory_space<vmem>>, vector<64x32xf32>
      tpu.vector_store %arg9[%c0_10, %c0_11], %16 {strides = array<i32>} : memref<64x32xf32, #tpu.memory_space<vmem>>, vector<64x32xf32>,
    } else {
    }
    %3 = arith.cmpi slt, %arg2, %arg1 : i32
    %4 = arith.extui %3 : i1 to i32
    %c0_i32_1 = arith.constant 0 : i32
    %5 = arith.cmpi ne, %4, %c0_i32_1 : i32
    scf.if %5 {
      %c0 = arith.constant 0 : index
      %c0_5 = arith.constant 0 : index
      %c0_6 = arith.constant 0 : index
      %12 = vector.load %arg3[%c0, %c0_5, %c0_6] : memref<1x64x32xbf16, #tpu.memory_space<vmem>>, vector<1x64x32xbf16>
      %13 = vector.shape_cast %12 : vector<1x64x32xbf16> to vector<64x32xbf16>
      %c0_7 = arith.constant 0 : index
      %c0_8 = arith.constant 0 : index
      %c0_9 = arith.constant 0 : index
      %14 = vector.load %arg4[%c0_7, %c0_8, %c0_9] : memref<1x64x32xbf16, #tpu.memory_space<vmem>>, vector<1x64x32xbf16>
      %15 = vector.shape_cast %14 : vector<1x64x32xbf16> to vector<64x32xbf16>
      %cst = arith.constant dense<0.000000e+00> : vector<64x64xf32>
      %16 = tpu.matmul %13, %15, %cst {dimension_numbers = #tpu.dot_dimension_numbers<[1], [1], [0], [0], [0, 0, 1, 0], [], []>} : vector<64x32xbf16>, vector<64x32xbf16>, vector<64x64xf32> -> vector<64x64xf32>
      %cst_10 = arith.constant 0.176776692 : f32
      %17 = vector.broadcast %cst_10 : f32 to vector<64x64xf32>
      %18 = arith.mulf %16, %17 : vector<64x64xf32>
      %c0_11 = arith.constant 0 : index
      %c0_12 = arith.constant 0 : index
      %19 = vector.load %arg7[%c0_11, %c0_12] : memref<64x1xf32, #tpu.memory_space<vmem>>, vector<64x1xf32>
      %cst_13 = arith.constant dense<0xFF800000> : vector<64xf32>
      %20 = vector.multi_reduction <maximumf>, %18, %cst_13 [1] : vector<64x64xf32> to vector<64xf32>
      %21 = vector.shape_cast %20 : vector<64xf32> to vector<64x1xf32>
      %22 = arith.maximumf %19, %21 : vector<64x1xf32>
      %23 = arith.subf %19, %22 : vector<64x1xf32>
      %24 = math.exp %23 : vector<64x1xf32>
      %25 = vector.broadcast %22 : vector<64x1xf32> to vector<64x64xf32>
      %26 = arith.subf %18, %25 : vector<64x64xf32>
      %27 = math.exp %26 : vector<64x64xf32>
      %c0_14 = arith.constant 0 : index
      %c0_15 = arith.constant 0 : index
      %28 = vector.load %arg8[%c0_14, %c0_15] : memref<64x1xf32, #tpu.memory_space<vmem>>, vector<64x1xf32>
      %29 = arith.mulf %24, %28 : vector<64x1xf32>
      %cst_16 = arith.constant dense<0.000000e+00> : vector<64xf32>
      %30 = vector.multi_reduction <add>, %27, %cst_16 [1] : vector<64x64xf32> to vector<64xf32>
      %31 = vector.shape_cast %30 : vector<64xf32> to vector<64x1xf32>
      %32 = arith.addf %29, %31 : vector<64x1xf32>
      %c0_17 = arith.constant 0 : index
      %c0_18 = arith.constant 0 : index
      %33 = vector.load %arg8[%c0_17, %c0_18] : memref<64x1xf32, #tpu.memory_space<vmem>>, vector<64x1xf32>
      tpu.vector_store %arg8[%c0_17, %c0_18], %32 {strides = array<i32>} : memref<64x1xf32, #tpu.memory_space<vmem>>, vector<64x1xf32>,
      %c0_19 = arith.constant 0 : index
      %c0_20 = arith.constant 0 : index
      %34 = vector.load %arg9[%c0_19, %c0_20] : memref<64x32xf32, #tpu.memory_space<vmem>>, vector<64x32xf32>
      %35 = vector.broadcast %24 : vector<64x1xf32> to vector<64x32xf32>
      %36 = arith.mulf %35, %34 : vector<64x32xf32>
      %37 = arith.truncf %27 : vector<64x64xf32> to vector<64x64xbf16>
      %c0_21 = arith.constant 0 : index
      %c0_22 = arith.constant 0 : index
      %c0_23 = arith.constant 0 : index
      %38 = vector.load %arg5[%c0_21, %c0_22, %c0_23] : memref<1x64x32xbf16, #tpu.memory_space<vmem>>, vector<1x64x32xbf16>
      %39 = vector.shape_cast %38 : vector<1x64x32xbf16> to vector<64x32xbf16>
      %cst_24 = arith.constant dense<0.000000e+00> : vector<64x32xf32>
      %40 = tpu.matmul %37, %39, %cst_24 {dimension_numbers = #tpu.dot_dimension_numbers<[1], [0], [0], [1], [0, 0, 1, 1], [], []>} : vector<64x64xbf16>, vector<64x32xbf16>, vector<64x32xf32> -> vector<64x32xf32>
      %41 = arith.addf %36, %40 : vector<64x32xf32>
      %c0_25 = arith.constant 0 : index
      %c0_26 = arith.constant 0 : index
      %42 = vector.load %arg9[%c0_25, %c0_26] : memref<64x32xf32, #tpu.memory_space<vmem>>, vector<64x32xf32>
      tpu.vector_store %arg9[%c0_25, %c0_26], %41 {strides = array<i32>} : memref<64x32xf32, #tpu.memory_space<vmem>>, vector<64x32xf32>,
      %c0_27 = arith.constant 0 : index
      %c0_28 = arith.constant 0 : index
      %43 = vector.load %arg7[%c0_27, %c0_28] : memref<64x1xf32, #tpu.memory_space<vmem>>, vector<64x1xf32>
      tpu.vector_store %arg7[%c0_27, %c0_28], %22 {strides = array<i32>} : memref<64x1xf32, #tpu.memory_space<vmem>>, vector<64x1xf32>,
    } else {
    }
    %6 = arith.cmpi eq, %arg2, %arg1 : i32
    %7 = arith.extui %6 : i1 to i32
    %c0_i32_2 = arith.constant 0 : i32
    %8 = arith.cmpi ne, %7, %c0_i32_2 : i32
    scf.if %8 {
      %c0 = arith.constant 0 : index
      %c0_5 = arith.constant 0 : index
      %c0_6 = arith.constant 0 : index
      %12 = vector.load %arg3[%c0, %c0_5, %c0_6] : memref<1x64x32xbf16, #tpu.memory_space<vmem>>, vector<1x64x32xbf16>
      %13 = vector.shape_cast %12 : vector<1x64x32xbf16> to vector<64x32xbf16>
      %c0_7 = arith.constant 0 : index
      %c0_8 = arith.constant 0 : index
      %c0_9 = arith.constant 0 : index
      %14 = vector.load %arg4[%c0_7, %c0_8, %c0_9] : memref<1x64x32xbf16, #tpu.memory_space<vmem>>, vector<1x64x32xbf16>
      %15 = vector.shape_cast %14 : vector<1x64x32xbf16> to vector<64x32xbf16>
      %cst = arith.constant dense<0.000000e+00> : vector<64x64xf32>
      %16 = tpu.matmul %13, %15, %cst {dimension_numbers = #tpu.dot_dimension_numbers<[1], [1], [0], [0], [0, 0, 1, 0], [], []>} : vector<64x32xbf16>, vector<64x32xbf16>, vector<64x64xf32> -> vector<64x64xf32>
      %cst_10 = arith.constant 0.176776692 : f32
      %17 = vector.broadcast %cst_10 : f32 to vector<64x64xf32>
      %18 = arith.mulf %16, %17 : vector<64x64xf32>
      %19 = tpu.iota {dimensions = array<i32: 0>} : vector<64x64xi32>
      %20 = tpu.iota {dimensions = array<i32: 1>} : vector<64x64xi32>
      %21 = arith.cmpi sle, %20, %19 : vector<64x64xi32>
      %cst_11 = arith.constant -1.000000e+30 : f32
      %22 = vector.broadcast %cst_11 : f32 to vector<64x64xf32>
      %23 = arith.select %21, %18, %22 : vector<64x64xi1>, vector<64x64xf32>
      %c0_12 = arith.constant 0 : index
      %c0_13 = arith.constant 0 : index
      %24 = vector.load %arg7[%c0_12, %c0_13] : memref<64x1xf32, #tpu.memory_space<vmem>>, vector<64x1xf32>
      %cst_14 = arith.constant dense<0xFF800000> : vector<64xf32>
      %25 = vector.multi_reduction <maximumf>, %23, %cst_14 [1] : vector<64x64xf32> to vector<64xf32>
      %26 = vector.shape_cast %25 : vector<64xf32> to vector<64x1xf32>
      %27 = arith.maximumf %24, %26 : vector<64x1xf32>
      %28 = arith.subf %24, %27 : vector<64x1xf32>
      %29 = math.exp %28 : vector<64x1xf32>
      %30 = vector.broadcast %27 : vector<64x1xf32> to vector<64x64xf32>
      %31 = arith.subf %23, %30 : vector<64x64xf32>
      %32 = math.exp %31 : vector<64x64xf32>
      %c0_15 = arith.constant 0 : index
      %c0_16 = arith.constant 0 : index
      %33 = vector.load %arg8[%c0_15, %c0_16] : memref<64x1xf32, #tpu.memory_space<vmem>>, vector<64x1xf32>
      %34 = arith.mulf %29, %33 : vector<64x1xf32>
      %cst_17 = arith.constant dense<0.000000e+00> : vector<64xf32>
      %35 = vector.multi_reduction <add>, %32, %cst_17 [1] : vector<64x64xf32> to vector<64xf32>
      %36 = vector.shape_cast %35 : vector<64xf32> to vector<64x1xf32>
      %37 = arith.addf %34, %36 : vector<64x1xf32>
      %c0_18 = arith.constant 0 : index
      %c0_19 = arith.constant 0 : index
      %38 = vector.load %arg8[%c0_18, %c0_19] : memref<64x1xf32, #tpu.memory_space<vmem>>, vector<64x1xf32>
      tpu.vector_store %arg8[%c0_18, %c0_19], %37 {strides = array<i32>} : memref<64x1xf32, #tpu.memory_space<vmem>>, vector<64x1xf32>,
      %c0_20 = arith.constant 0 : index
      %c0_21 = arith.constant 0 : index
      %39 = vector.load %arg9[%c0_20, %c0_21] : memref<64x32xf32, #tpu.memory_space<vmem>>, vector<64x32xf32>
      %40 = vector.broadcast %29 : vector<64x1xf32> to vector<64x32xf32>
      %41 = arith.mulf %40, %39 : vector<64x32xf32>
      %42 = arith.truncf %32 : vector<64x64xf32> to vector<64x64xbf16>
      %c0_22 = arith.constant 0 : index
      %c0_23 = arith.constant 0 : index
      %c0_24 = arith.constant 0 : index
      %43 = vector.load %arg5[%c0_22, %c0_23, %c0_24] : memref<1x64x32xbf16, #tpu.memory_space<vmem>>, vector<1x64x32xbf16>
      %44 = vector.shape_cast %43 : vector<1x64x32xbf16> to vector<64x32xbf16>
      %cst_25 = arith.constant dense<0.000000e+00> : vector<64x32xf32>
      %45 = tpu.matmul %42, %44, %cst_25 {dimension_numbers = #tpu.dot_dimension_numbers<[1], [0], [0], [1], [0, 0, 1, 1], [], []>} : vector<64x64xbf16>, vector<64x32xbf16>, vector<64x32xf32> -> vector<64x32xf32>
      %46 = arith.addf %41, %45 : vector<64x32xf32>
      %c0_26 = arith.constant 0 : index
      %c0_27 = arith.constant 0 : index
      %47 = vector.load %arg9[%c0_26, %c0_27] : memref<64x32xf32, #tpu.memory_space<vmem>>, vector<64x32xf32>
      tpu.vector_store %arg9[%c0_26, %c0_27], %46 {strides = array<i32>} : memref<64x32xf32, #tpu.memory_space<vmem>>, vector<64x32xf32>,
      %c0_28 = arith.constant 0 : index
      %c0_29 = arith.constant 0 : index
      %48 = vector.load %arg7[%c0_28, %c0_29] : memref<64x1xf32, #tpu.memory_space<vmem>>, vector<64x1xf32>
      tpu.vector_store %arg7[%c0_28, %c0_29], %27 {strides = array<i32>} : memref<64x1xf32, #tpu.memory_space<vmem>>, vector<64x1xf32>,
    } else {
    }
    %c0_i32_3 = arith.constant 0 : i32
    %9 = arith.cmpi eq, %arg2, %c0_i32_3 : i32
    %10 = arith.extui %9 : i1 to i32
    %c0_i32_4 = arith.constant 0 : i32
    %11 = arith.cmpi ne, %10, %c0_i32_4 : i32
    scf.if %11 {
      %c0 = arith.constant 0 : index
      %c0_5 = arith.constant 0 : index
      %12 = vector.load %arg8[%c0, %c0_5] : memref<64x1xf32, #tpu.memory_space<vmem>>, vector<64x1xf32>
      %13 = tpu.reciprocal %12 {approx = true} : vector<64x1xf32> -> vector<64x1xf32>
      %c0_6 = arith.constant 0 : index
      %c0_7 = arith.constant 0 : index
      %14 = vector.load %arg9[%c0_6, %c0_7] : memref<64x32xf32, #tpu.memory_space<vmem>>, vector<64x32xf32>
      %15 = vector.broadcast %13 : vector<64x1xf32> to vector<64x32xf32>
      %16 = arith.mulf %14, %15 : vector<64x32xf32>
      %17 = arith.truncf %16 : vector<64x32xf32> to vector<64x32xbf16>
      %c0_8 = arith.constant 0 : index
      %c0_9 = arith.constant 0 : index
      %c0_10 = arith.constant 0 : index
      %18 = vector.load %arg6[%c0_8, %c0_9, %c0_10] : memref<1x64x32xbf16, #tpu.memory_space<vmem>>, vector<1x64x32xbf16>
      %19 = vector.shape_cast %18 : vector<1x64x32xbf16> to vector<64x32xbf16>
      %20 = vector.shape_cast %17 : vector<64x32xbf16> to vector<1x64x32xbf16>
      tpu.vector_store %arg6[%c0_8, %c0_9, %c0_10], %20 {strides = array<i32>} : memref<1x64x32xbf16, #tpu.memory_space<vmem>>, vector<1x64x32xbf16>,
    } else {
    }
    return
  }
  func.func @transform_0(%arg0: i32, %arg1: i32, %arg2: i32) -> (i32, i32, i32) {
    %c0_i32 = arith.constant 0 : i32
    %c0_i32_0 = arith.constant 0 : i32
    return %arg0, %arg1, %c0_i32 : i32, i32, i32
  }
  func.func @transform_1(%arg0: i32, %arg1: i32, %arg2: i32) -> (i32, i32, i32) {
    %0 = arith.minsi %arg2, %arg1 : i32
    %c0_i32 = arith.constant 0 : i32
    %c0_i32_0 = arith.constant 0 : i32
    return %arg0, %0, %c0_i32 : i32, i32, i32
  }
  func.func @transform_2(%arg0: i32, %arg1: i32, %arg2: i32) -> (i32, i32, i32) {
    %0 = arith.minsi %arg2, %arg1 : i32
    %c0_i32 = arith.constant 0 : i32
    %c0_i32_0 = arith.constant 0 : i32
    return %arg0, %0, %c0_i32 : i32, i32, i32
  }
  func.func @transform_3(%arg0: i32, %arg1: i32, %arg2: i32) -> (i32, i32, i32) {
    %c0_i32 = arith.constant 0 : i32
    %c0_i32_0 = arith.constant 0 : i32
    return %arg0, %arg1, %c0_i32 : i32, i32, i32
  }
}

module attributes {stable_mosaic.version = 11 : i64} {
  func.func @linear_residual_kernel(%arg0: i32, %arg1: memref<128x128xbf16, #tpu.memory_space<vmem>>, %arg2: memref<128x128xbf16, #tpu.memory_space<vmem>>, %arg3: memref<1x128xf32, #tpu.memory_space<vmem>>, %arg4: memref<128x128xf32, #tpu.memory_space<vmem>>, %arg5: memref<128x128xf32, #tpu.memory_space<vmem>>) attributes {dimension_semantics = [#tpu.dimension_semantics<parallel>], iteration_bounds = array<i64: 1>, scalar_prefetch = 0 : i64, scratch_operands = 0 : i64, tpu.core_type = #tpu.core_type<tc>, window_params = [{transform_indices = @transform_0, window_bounds = array<i64: 128, 128>}, {pipeline_mode = #tpu.pipeline_mode<synchronous>, transform_indices = @transform_1, window_bounds = array<i64: 128, 128>}, {pipeline_mode = #tpu.pipeline_mode<synchronous>, transform_indices = @transform_2, window_bounds = array<i64: 1, 128>}, {transform_indices = @transform_3, window_bounds = array<i64: 128, 128>}, {transform_indices = @transform_4, window_bounds = array<i64: 128, 128>}]} {
    %c0 = arith.constant 0 : index
    %c0_0 = arith.constant 0 : index
    %0 = vector.load %arg1[%c0, %c0_0] : memref<128x128xbf16, #tpu.memory_space<vmem>>, vector<128x128xbf16>
    %c0_1 = arith.constant 0 : index
    %c0_2 = arith.constant 0 : index
    %1 = vector.load %arg2[%c0_1, %c0_2] : memref<128x128xbf16, #tpu.memory_space<vmem>>, vector<128x128xbf16>
    %cst = arith.constant dense<0.000000e+00> : vector<128x128xf32>
    %2 = tpu.matmul %0, %1, %cst {dimension_numbers = #tpu.dot_dimension_numbers<[1], [0], [0], [1], [0, 0, 1, 1], [], []>} : vector<128x128xbf16>, vector<128x128xbf16>, vector<128x128xf32> -> vector<128x128xf32>
    %c0_3 = arith.constant 0 : index
    %c0_4 = arith.constant 0 : index
    %3 = vector.load %arg3[%c0_3, %c0_4] : memref<1x128xf32, #tpu.memory_space<vmem>>, vector<1x128xf32>
    %4 = vector.broadcast %3 : vector<1x128xf32> to vector<128x128xf32>
    %5 = arith.addf %2, %4 : vector<128x128xf32>
    %c0_5 = arith.constant 0 : index
    %c0_6 = arith.constant 0 : index
    %6 = vector.load %arg4[%c0_5, %c0_6] : memref<128x128xf32, #tpu.memory_space<vmem>>, vector<128x128xf32>
    %7 = arith.addf %5, %6 : vector<128x128xf32>
    %c0_7 = arith.constant 0 : index
    %c0_8 = arith.constant 0 : index
    %8 = vector.load %arg5[%c0_7, %c0_8] : memref<128x128xf32, #tpu.memory_space<vmem>>, vector<128x128xf32>
    tpu.vector_store %arg5[%c0_7, %c0_8], %7 {strides = array<i32>} : memref<128x128xf32, #tpu.memory_space<vmem>>, vector<128x128xf32>,
    return
  }
  func.func @transform_0(%arg0: i32) -> (i32, i32) {
    %c0_i32 = arith.constant 0 : i32
    %c0_i32_0 = arith.constant 0 : i32
    return %arg0, %c0_i32 : i32, i32
  }
  func.func @transform_1(%arg0: i32) -> (i32, i32) {
    %c0_i32 = arith.constant 0 : i32
    %c0_i32_0 = arith.constant 0 : i32
    %c0_i32_1 = arith.constant 0 : i32
    return %c0_i32, %c0_i32_0 : i32, i32
  }
  func.func @transform_2(%arg0: i32) -> (i32, i32) {
    %c0_i32 = arith.constant 0 : i32
    %c0_i32_0 = arith.constant 0 : i32
    %c0_i32_1 = arith.constant 0 : i32
    return %c0_i32, %c0_i32_0 : i32, i32
  }
  func.func @transform_3(%arg0: i32) -> (i32, i32) {
    %c0_i32 = arith.constant 0 : i32
    %c0_i32_0 = arith.constant 0 : i32
    return %arg0, %c0_i32 : i32, i32
  }
  func.func @transform_4(%arg0: i32) -> (i32, i32) {
    %c0_i32 = arith.constant 0 : i32
    %c0_i32_0 = arith.constant 0 : i32
    return %arg0, %c0_i32 : i32, i32
  }
}

module attributes {stable_mosaic.version = 11 : i64} {
  func.func @ln_mlp_residual_kernel(%arg0: i32, %arg1: i32, %arg2: memref<128x128xf32, #tpu.memory_space<vmem>>, %arg3: memref<1x128xf32, #tpu.memory_space<vmem>>, %arg4: memref<1x128xf32, #tpu.memory_space<vmem>>, %arg5: memref<128x512xbf16, #tpu.memory_space<vmem>>, %arg6: memref<1x512xf32, #tpu.memory_space<vmem>>, %arg7: memref<512x128xbf16, #tpu.memory_space<vmem>>, %arg8: memref<1x128xf32, #tpu.memory_space<vmem>>, %arg9: memref<128x128xf32, #tpu.memory_space<vmem>>, %arg10: memref<128x128xbf16, #tpu.memory_space<vmem>>, %arg11: memref<128x128xf32, #tpu.memory_space<vmem>>) attributes {dimension_semantics = [#tpu.dimension_semantics<parallel>, #tpu.dimension_semantics<arbitrary>], iteration_bounds = array<i64: 1, 1>, scalar_prefetch = 0 : i64, scratch_operands = 2 : i64, tpu.core_type = #tpu.core_type<tc>, window_params = [{transform_indices = @transform_0, window_bounds = array<i64: 128, 128>}, {pipeline_mode = #tpu.pipeline_mode<synchronous>, transform_indices = @transform_1, window_bounds = array<i64: 1, 128>}, {pipeline_mode = #tpu.pipeline_mode<synchronous>, transform_indices = @transform_2, window_bounds = array<i64: 1, 128>}, {transform_indices = @transform_3, window_bounds = array<i64: 128, 512>}, {transform_indices = @transform_4, window_bounds = array<i64: 1, 512>}, {transform_indices = @transform_5, window_bounds = array<i64: 512, 128>}, {pipeline_mode = #tpu.pipeline_mode<synchronous>, transform_indices = @transform_6, window_bounds = array<i64: 1, 128>}, {transform_indices = @transform_7, window_bounds = array<i64: 128, 128>}]} {
    %c0_i32 = arith.constant 0 : i32
    %0 = arith.cmpi eq, %arg1, %c0_i32 : i32
    %1 = arith.extui %0 : i1 to i32
    %c0_i32_0 = arith.constant 0 : i32
    %2 = arith.cmpi ne, %1, %c0_i32_0 : i32
    scf.if %2 {
      %c0_18 = arith.constant 0 : index
      %c0_19 = arith.constant 0 : index
      %26 = vector.load %arg2[%c0_18, %c0_19] : memref<128x128xf32, #tpu.memory_space<vmem>>, vector<128x128xf32>
      %c0_20 = arith.constant 0 : index
      %c0_21 = arith.constant 0 : index
      %27 = vector.load %arg3[%c0_20, %c0_21] : memref<1x128xf32, #tpu.memory_space<vmem>>, vector<1x128xf32>
      %c0_22 = arith.constant 0 : index
      %c0_23 = arith.constant 0 : index
      %28 = vector.load %arg4[%c0_22, %c0_23] : memref<1x128xf32, #tpu.memory_space<vmem>>, vector<1x128xf32>
      %cst_24 = arith.constant dense<0.000000e+00> : vector<128xf32>
      %29 = vector.multi_reduction <add>, %26, %cst_24 [1] : vector<128x128xf32> to vector<128xf32>
      %30 = vector.shape_cast %29 : vector<128xf32> to vector<128x1xf32>
      %cst_25 = arith.constant 1.280000e+02 : f32
      %31 = vector.broadcast %cst_25 : f32 to vector<128x1xf32>
      %32 = arith.divf %30, %31 : vector<128x1xf32>
      %33 = vector.broadcast %32 : vector<128x1xf32> to vector<128x128xf32>
      %34 = arith.subf %26, %33 : vector<128x128xf32>
      %35 = arith.mulf %34, %34 : vector<128x128xf32>
      %cst_26 = arith.constant dense<0.000000e+00> : vector<128xf32>
      %36 = vector.multi_reduction <add>, %35, %cst_26 [1] : vector<128x128xf32> to vector<128xf32>
      %37 = vector.shape_cast %36 : vector<128xf32> to vector<128x1xf32>
      %cst_27 = arith.constant 1.280000e+02 : f32
      %38 = vector.broadcast %cst_27 : f32 to vector<128x1xf32>
      %39 = arith.divf %37, %38 : vector<128x1xf32>
      %cst_28 = arith.constant 9.99999974E-6 : f32
      %40 = vector.broadcast %cst_28 : f32 to vector<128x1xf32>
      %41 = arith.addf %39, %40 : vector<128x1xf32>
      %42 = math.rsqrt %41 : vector<128x1xf32>
      %43 = vector.broadcast %42 : vector<128x1xf32> to vector<128x128xf32>
      %44 = arith.mulf %34, %43 : vector<128x128xf32>
      %45 = vector.broadcast %27 : vector<1x128xf32> to vector<128x128xf32>
      %46 = arith.mulf %44, %45 : vector<128x128xf32>
      %47 = vector.broadcast %28 : vector<1x128xf32> to vector<128x128xf32>
      %48 = arith.addf %46, %47 : vector<128x128xf32>
      %49 = arith.truncf %48 : vector<128x128xf32> to vector<128x128xbf16>
      %c0_29 = arith.constant 0 : index
      %c0_30 = arith.constant 0 : index
      %50 = vector.load %arg10[%c0_29, %c0_30] : memref<128x128xbf16, #tpu.memory_space<vmem>>, vector<128x128xbf16>
      tpu.vector_store %arg10[%c0_29, %c0_30], %49 {strides = array<i32>} : memref<128x128xbf16, #tpu.memory_space<vmem>>, vector<128x128xbf16>,
      %c0_31 = arith.constant 0 : index
      %c0_32 = arith.constant 0 : index
      %51 = vector.load %arg8[%c0_31, %c0_32] : memref<1x128xf32, #tpu.memory_space<vmem>>, vector<1x128xf32>
      %52 = vector.broadcast %51 : vector<1x128xf32> to vector<128x128xf32>
      %53 = arith.addf %26, %52 : vector<128x128xf32>
      %c0_33 = arith.constant 0 : index
      %c0_34 = arith.constant 0 : index
      %54 = vector.load %arg11[%c0_33, %c0_34] : memref<128x128xf32, #tpu.memory_space<vmem>>, vector<128x128xf32>
      tpu.vector_store %arg11[%c0_33, %c0_34], %53 {strides = array<i32>} : memref<128x128xf32, #tpu.memory_space<vmem>>, vector<128x128xf32>,
    } else {
    }
    %c0 = arith.constant 0 : index
    %c0_1 = arith.constant 0 : index
    %3 = vector.load %arg10[%c0, %c0_1] : memref<128x128xbf16, #tpu.memory_space<vmem>>, vector<128x128xbf16>
    %c0_2 = arith.constant 0 : index
    %c0_3 = arith.constant 0 : index
    %4 = vector.load %arg5[%c0_2, %c0_3] : memref<128x512xbf16, #tpu.memory_space<vmem>>, vector<128x512xbf16>
    %cst = arith.constant dense<0.000000e+00> : vector<128x512xf32>
    %5 = tpu.matmul %3, %4, %cst {dimension_numbers = #tpu.dot_dimension_numbers<[1], [0], [0], [1], [0, 0, 1, 1], [], []>} : vector<128x128xbf16>, vector<128x512xbf16>, vector<128x512xf32> -> vector<128x512xf32>
    %c0_4 = arith.constant 0 : index
    %c0_5 = arith.constant 0 : index
    %6 = vector.load %arg6[%c0_4, %c0_5] : memref<1x512xf32, #tpu.memory_space<vmem>>, vector<1x512xf32>
    %7 = vector.broadcast %6 : vector<1x512xf32> to vector<128x512xf32>
    %8 = arith.addf %5, %7 : vector<128x512xf32>
    %cst_6 = arith.constant 5.000000e-01 : f32
    %9 = vector.broadcast %cst_6 : f32 to vector<128x512xf32>
    %10 = arith.mulf %9, %8 : vector<128x512xf32>
    %cst_7 = arith.constant 0.707106769 : f32
    %11 = vector.broadcast %cst_7 : f32 to vector<128x512xf32>
    %12 = arith.mulf %8, %11 : vector<128x512xf32>
    %13 = math.erf %12 : vector<128x512xf32>
    %cst_8 = arith.constant 1.000000e+00 : f32
    %14 = vector.broadcast %cst_8 : f32 to vector<128x512xf32>
    %15 = arith.addf %14, %13 : vector<128x512xf32>
    %16 = arith.mulf %10, %15 : vector<128x512xf32>
    %c0_9 = arith.constant 0 : index
    %c0_10 = arith.constant 0 : index
    %17 = vector.load %arg11[%c0_9, %c0_10] : memref<128x128xf32, #tpu.memory_space<vmem>>, vector<128x128xf32>
    %18 = arith.truncf %16 : vector<128x512xf32> to vector<128x512xbf16>
    %c0_11 = arith.constant 0 : index
    %c0_12 = arith.constant 0 : index
    %19 = vector.load %arg7[%c0_11, %c0_12] : memref<512x128xbf16, #tpu.memory_space<vmem>>, vector<512x128xbf16>
    %cst_13 = arith.constant dense<0.000000e+00> : vector<128x128xf32>
    %20 = tpu.matmul %18, %19, %cst_13 {dimension_numbers = #tpu.dot_dimension_numbers<[1], [0], [0], [1], [0, 0, 1, 1], [], []>} : vector<128x512xbf16>, vector<512x128xbf16>, vector<128x128xf32> -> vector<128x128xf32>
    %21 = arith.addf %17, %20 : vector<128x128xf32>
    %c0_14 = arith.constant 0 : index
    %c0_15 = arith.constant 0 : index
    %22 = vector.load %arg11[%c0_14, %c0_15] : memref<128x128xf32, #tpu.memory_space<vmem>>, vector<128x128xf32>
    tpu.vector_store %arg11[%c0_14, %c0_15], %21 {strides = array<i32>} : memref<128x128xf32, #tpu.memory_space<vmem>>, vector<128x128xf32>,
    %c0_i32_16 = arith.constant 0 : i32
    %23 = arith.cmpi eq, %arg1, %c0_i32_16 : i32
    %24 = arith.extui %23 : i1 to i32
    %c0_i32_17 = arith.constant 0 : i32
    %25 = arith.cmpi ne, %24, %c0_i32_17 : i32
    scf.if %25 {
      %c0_18 = arith.constant 0 : index
      %c0_19 = arith.constant 0 : index
      %26 = vector.load %arg11[%c0_18, %c0_19] : memref<128x128xf32, #tpu.memory_space<vmem>>, vector<128x128xf32>
      %c0_20 = arith.constant 0 : index
      %c0_21 = arith.constant 0 : index
      %27 = vector.load %arg9[%c0_20, %c0_21] : memref<128x128xf32, #tpu.memory_space<vmem>>, vector<128x128xf32>
      tpu.vector_store %arg9[%c0_20, %c0_21], %26 {strides = array<i32>} : memref<128x128xf32, #tpu.memory_space<vmem>>, vector<128x128xf32>,
    } else {
    }
    return
  }
  func.func @transform_0(%arg0: i32, %arg1: i32) -> (i32, i32) {
    %c0_i32 = arith.constant 0 : i32
    %c0_i32_0 = arith.constant 0 : i32
    return %arg0, %c0_i32 : i32, i32
  }
  func.func @transform_1(%arg0: i32, %arg1: i32) -> (i32, i32) {
    %c0_i32 = arith.constant 0 : i32
    %c0_i32_0 = arith.constant 0 : i32
    %c0_i32_1 = arith.constant 0 : i32
    return %c0_i32, %c0_i32_0 : i32, i32
  }
  func.func @transform_2(%arg0: i32, %arg1: i32) -> (i32, i32) {
    %c0_i32 = arith.constant 0 : i32
    %c0_i32_0 = arith.constant 0 : i32
    %c0_i32_1 = arith.constant 0 : i32
    return %c0_i32, %c0_i32_0 : i32, i32
  }
  func.func @transform_3(%arg0: i32, %arg1: i32) -> (i32, i32) {
    %c0_i32 = arith.constant 0 : i32
    %c0_i32_0 = arith.constant 0 : i32
    return %c0_i32, %arg1 : i32, i32
  }
  func.func @transform_4(%arg0: i32, %arg1: i32) -> (i32, i32) {
    %c0_i32 = arith.constant 0 : i32
    %c0_i32_0 = arith.constant 0 : i32
    return %c0_i32, %arg1 : i32, i32
  }
  func.func @transform_5(%arg0: i32, %arg1: i32) -> (i32, i32) {
    %c0_i32 = arith.constant 0 : i32
    %c0_i32_0 = arith.constant 0 : i32
    return %arg1, %c0_i32 : i32, i32
  }
  func.func @transform_6(%arg0: i32, %arg1: i32) -> (i32, i32) {
    %c0_i32 = arith.constant 0 : i32
    %c0_i32_0 = arith.constant 0 : i32
    %c0_i32_1 = arith.constant 0 : i32
    return %c0_i32, %c0_i32_0 : i32, i32
  }
  func.func @transform_7(%arg0: i32, %arg1: i32) -> (i32, i32) {
    %c0_i32 = arith.constant 0 : i32
    %c0_i32_0 = arith.constant 0 : i32
    return %arg0, %c0_i32 : i32, i32
  }
}

module attributes {stable_mosaic.version = 11 : i64} {
  func.func @lnf_lmhead_kernel(%arg0: i32, %arg1: memref<2x128xf32, #tpu.memory_space<vmem>>, %arg2: memref<1x128xf32, #tpu.memory_space<vmem>>, %arg3: memref<1x128xf32, #tpu.memory_space<vmem>>, %arg4: memref<2048x128xbf16, #tpu.memory_space<vmem>>, %arg5: memref<2x2048xf32, #tpu.memory_space<vmem>>) attributes {dimension_semantics = [#tpu.dimension_semantics<parallel>], iteration_bounds = array<i64: 1>, scalar_prefetch = 0 : i64, scratch_operands = 0 : i64, tpu.core_type = #tpu.core_type<tc>, window_params = [{pipeline_mode = #tpu.pipeline_mode<synchronous>, transform_indices = @transform_0, window_bounds = array<i64: 2, 128>}, {pipeline_mode = #tpu.pipeline_mode<synchronous>, transform_indices = @transform_1, window_bounds = array<i64: 1, 128>}, {pipeline_mode = #tpu.pipeline_mode<synchronous>, transform_indices = @transform_2, window_bounds = array<i64: 1, 128>}, {transform_indices = @transform_3, window_bounds = array<i64: 2048, 128>}, {transform_indices = @transform_4, window_bounds = array<i64: 2, 2048>}]} {
    %c0 = arith.constant 0 : index
    %c0_0 = arith.constant 0 : index
    %0 = vector.load %arg1[%c0, %c0_0] : memref<2x128xf32, #tpu.memory_space<vmem>>, vector<2x128xf32>
    %c0_1 = arith.constant 0 : index
    %c0_2 = arith.constant 0 : index
    %1 = vector.load %arg2[%c0_1, %c0_2] : memref<1x128xf32, #tpu.memory_space<vmem>>, vector<1x128xf32>
    %c0_3 = arith.constant 0 : index
    %c0_4 = arith.constant 0 : index
    %2 = vector.load %arg3[%c0_3, %c0_4] : memref<1x128xf32, #tpu.memory_space<vmem>>, vector<1x128xf32>
    %cst = arith.constant dense<0.000000e+00> : vector<2xf32>
    %3 = vector.multi_reduction <add>, %0, %cst [1] : vector<2x128xf32> to vector<2xf32>
    %4 = vector.shape_cast %3 : vector<2xf32> to vector<2x1xf32>
    %cst_5 = arith.constant 1.280000e+02 : f32
    %5 = vector.broadcast %cst_5 : f32 to vector<2x1xf32>
    %6 = arith.divf %4, %5 : vector<2x1xf32>
    %7 = vector.broadcast %6 : vector<2x1xf32> to vector<2x128xf32>
    %8 = arith.subf %0, %7 : vector<2x128xf32>
    %9 = arith.mulf %8, %8 : vector<2x128xf32>
    %cst_6 = arith.constant dense<0.000000e+00> : vector<2xf32>
    %10 = vector.multi_reduction <add>, %9, %cst_6 [1] : vector<2x128xf32> to vector<2xf32>
    %11 = vector.shape_cast %10 : vector<2xf32> to vector<2x1xf32>
    %cst_7 = arith.constant 1.280000e+02 : f32
    %12 = vector.broadcast %cst_7 : f32 to vector<2x1xf32>
    %13 = arith.divf %11, %12 : vector<2x1xf32>
    %cst_8 = arith.constant 9.99999974E-6 : f32
    %14 = vector.broadcast %cst_8 : f32 to vector<2x1xf32>
    %15 = arith.addf %13, %14 : vector<2x1xf32>
    %16 = math.rsqrt %15 : vector<2x1xf32>
    %17 = vector.broadcast %16 : vector<2x1xf32> to vector<2x128xf32>
    %18 = arith.mulf %8, %17 : vector<2x128xf32>
    %19 = vector.broadcast %1 : vector<1x128xf32> to vector<2x128xf32>
    %20 = arith.mulf %18, %19 : vector<2x128xf32>
    %21 = vector.broadcast %2 : vector<1x128xf32> to vector<2x128xf32>
    %22 = arith.addf %20, %21 : vector<2x128xf32>
    %23 = arith.truncf %22 : vector<2x128xf32> to vector<2x128xbf16>
    %c0_9 = arith.constant 0 : index
    %c0_10 = arith.constant 0 : index
    %24 = vector.load %arg4[%c0_9, %c0_10] : memref<2048x128xbf16, #tpu.memory_space<vmem>>, vector<2048x128xbf16>
    %cst_11 = arith.constant dense<0.000000e+00> : vector<2x2048xf32>
    %25 = tpu.matmul %23, %24, %cst_11 {dimension_numbers = #tpu.dot_dimension_numbers<[1], [1], [0], [0], [0, 0, 1, 0], [], []>} : vector<2x128xbf16>, vector<2048x128xbf16>, vector<2x2048xf32> -> vector<2x2048xf32>
    %c0_12 = arith.constant 0 : index
    %c0_13 = arith.constant 0 : index
    %26 = vector.load %arg5[%c0_12, %c0_13] : memref<2x2048xf32, #tpu.memory_space<vmem>>, vector<2x2048xf32>
    tpu.vector_store %arg5[%c0_12, %c0_13], %25 {strides = array<i32>} : memref<2x2048xf32, #tpu.memory_space<vmem>>, vector<2x2048xf32>,
    return
  }
  func.func @transform_0(%arg0: i32) -> (i32, i32) {
    %c0_i32 = arith.constant 0 : i32
    %c0_i32_0 = arith.constant 0 : i32
    %c0_i32_1 = arith.constant 0 : i32
    return %c0_i32, %c0_i32_0 : i32, i32
  }
  func.func @transform_1(%arg0: i32) -> (i32, i32) {
    %c0_i32 = arith.constant 0 : i32
    %c0_i32_0 = arith.constant 0 : i32
    %c0_i32_1 = arith.constant 0 : i32
    return %c0_i32, %c0_i32_0 : i32, i32
  }
  func.func @transform_2(%arg0: i32) -> (i32, i32) {
    %c0_i32 = arith.constant 0 : i32
    %c0_i32_0 = arith.constant 0 : i32
    %c0_i32_1 = arith.constant 0 : i32
    return %c0_i32, %c0_i32_0 : i32, i32
  }
  func.func @transform_3(%arg0: i32) -> (i32, i32) {
    %c0_i32 = arith.constant 0 : i32
    %c0_i32_0 = arith.constant 0 : i32
    return %arg0, %c0_i32 : i32, i32
  }
  func.func @transform_4(%arg0: i32) -> (i32, i32) {
    %c0_i32 = arith.constant 0 : i32
    %c0_i32_0 = arith.constant 0 : i32
    return %c0_i32, %arg0 : i32, i32
  }
}

</mosaic_0001>

<llo_original>
// kernel: forward.9
$region0: #{forward.9}
  #allocation0 [shape = 'u32[]', space=smem, size = 0x4, offset = 0x4, fixed_abs, tag = 'smem constant byte address 0x4 - core index']
  #allocation1 [shape = 'u32[72,128]{1,0:T(1,128)}', space=vmem, size = 0x9000, scoped, tag = 'internal scratch']
  %s0 = inlined_call_operand.vmem [shape: f32[128,128], index: 0, kind: input, shape index: {}]
  %s1 = inlined_call_operand.vmem [shape: f32[1,128], index: 1, kind: input, shape index: {}]
  %s2 = inlined_call_operand.vmem [shape: f32[1,128], index: 2, kind: input, shape index: {}]
  %s3 = inlined_call_operand.vmem [shape: bf16[128,384], index: 3, kind: input, shape index: {}]
  %s4 = inlined_call_operand.vmem [shape: f32[1,384], index: 4, kind: input, shape index: {}]
  %s5 = inlined_call_operand.vmem [shape: bf16[128,384], index: 5, kind: output, shape index: {}]
  %s6 = sld [smem:[#allocation0]]
  $region30: #{forward.9} parent=0
    _
  %s8 = ssub.s32 1, %s6
  %s9 = scalar_select 0, %s8, %s6
  // Predicated region
  $region2: #{forward.9} parent=0 // pred_check
    _
  $region3: #{forward.9} parent=0 // pred_check_branch
    %11 = sbr.rel (0) target = $region5
  $region4: #{forward.9} parent=0 // pred_region
    _
  $region5: #{forward.9} parent=0 // pred_fallthru
    _
  // Predicated region
  $region6: #{forward.9} parent=0 // pred_check
    _
  $region7: #{forward.9} parent=0 // pred_check_branch
    %13 = sbr.rel (0) target = $region9
  $region8: #{forward.9} parent=0 // pred_region
    _
  $region9: #{forward.9} parent=0 // pred_fallthru
    _
  // Predicated region
  $region10: #{forward.9} parent=0 // pred_check
    _
  $region11: #{forward.9} parent=0 // pred_check_branch
    %15 = sbr.rel (0) target = $region13
  $region12: #{forward.9} parent=0 // pred_region
    _
  $region13: #{forward.9} parent=0 // pred_fallthru
    _
  // Predicated region
  $region14: #{forward.9} parent=0 // pred_check
    _
  $region15: #{forward.9} parent=0 // pred_check_branch
    %17 = sbr.rel (0) target = $region17
  $region16: #{forward.9} parent=0 // pred_region
    _
  $region17: #{forward.9} parent=0 // pred_fallthru
    _
  // Predicated region
  $region18: #{forward.9} parent=0 // pred_check
    _
  $region19: #{forward.9} parent=0 // pred_check_branch
    %19 = sbr.rel (0) target = $region21
  $region20: #{forward.9} parent=0 // pred_region
    _
  $region21: #{forward.9} parent=0 // pred_fallthru
    _
  %v20 = vld [vmem:[%s0] sm:$0xff]
  %v21 = vld [vmem:[%s0 + $0x8] sm:$0xff]
  %v22 = vld [vmem:[%s0 + $0x10] sm:$0xff]
  %v23 = vld [vmem:[%s0 + $0x18] sm:$0xff]
  %v24 = vld [vmem:[%s0 + $0x20] sm:$0xff]
  %v25 = vld [vmem:[%s0 + $0x28] sm:$0xff]
  %v26 = vld [vmem:[%s0 + $0x30] sm:$0xff]
  %v27 = vld [vmem:[%s0 + $0x38] sm:$0xff]
  %v28 = vld [vmem:[%s0 + $0x40] sm:$0xff]
  %v29 = vld [vmem:[%s0 + $0x48] sm:$0xff]
  %v30 = vld [vmem:[%s0 + $0x50] sm:$0xff]
  %v31 = vld [vmem:[%s0 + $0x58] sm:$0xff]
  %v32 = vld [vmem:[%s0 + $0x60] sm:$0xff]
  %v33 = vld [vmem:[%s0 + $0x68] sm:$0xff]
  %v34 = vld [vmem:[%s0 + $0x70] sm:$0xff]
  %v35 = vld [vmem:[%s0 + $0x78] sm:$0xff]
  %v36 = vld [vmem:[%s1] sm:$0x1]
  %v37 = vld [vmem:[%s2] sm:$0x1]
  %38 = vadd.xlane.f32.xlu0 %v20
  %v39 = vpop.xlane.xlu0 %38
  %40 = vadd.xlane.f32.xlu0 %v21
  %v41 = vpop.xlane.xlu0 %40
  %42 = vadd.xlane.f32.xlu0 %v22
  %v43 = vpop.xlane.xlu0 %42
  %44 = vadd.xlane.f32.xlu0 %v23
  %v45 = vpop.xlane.xlu0 %44
  %46 = vadd.xlane.f32.xlu0 %v24
  %v47 = vpop.xlane.xlu0 %46
  %48 = vadd.xlane.f32.xlu0 %v25
  %v49 = vpop.xlane.xlu0 %48
  %50 = vadd.xlane.f32.xlu0 %v26
  %v51 = vpop.xlane.xlu0 %50
  %52 = vadd.xlane.f32.xlu0 %v27
  %v53 = vpop.xlane.xlu0 %52
  %54 = vadd.xlane.f32.xlu0 %v28
  %v55 = vpop.xlane.xlu0 %54
  %56 = vadd.xlane.f32.xlu0 %v29
  %v57 = vpop.xlane.xlu0 %56
  %58 = vadd.xlane.f32.xlu0 %v30
  %v59 = vpop.xlane.xlu0 %58
  %60 = vadd.xlane.f32.xlu0 %v31
  %v61 = vpop.xlane.xlu0 %60
  %62 = vadd.xlane.f32.xlu0 %v32
  %v63 = vpop.xlane.xlu0 %62
  %64 = vadd.xlane.f32.xlu0 %v33
  %v65 = vpop.xlane.xlu0 %64
  %66 = vadd.xlane.f32.xlu0 %v34
  %v67 = vpop.xlane.xlu0 %66
  %68 = vadd.xlane.f32.xlu0 %v35
  %v69 = vpop.xlane.xlu0 %68
  %v70 = vrcp.pop 128.0
  %v71 = vmul.f32 128.0, %v70
  %v72 = vsub.f32 1.0, %v71
  %v73 = vmul.f32 %v70, %v72
  %v74 = vadd.f32 %v70, %v73
  %vm75 = vweird.f32 %v70
  %v76 = vsel %vm75, %v70, %v74
  %v77 = vmul.f32 %v39, %v76
  %v78 = vmul.f32 %v41, %v76
  %v79 = vmul.f32 %v43, %v76
  %v80 = vmul.f32 %v45, %v76
  %v81 = vmul.f32 %v47, %v76
  %v82 = vmul.f32 %v49, %v76
  %v83 = vmul.f32 %v51, %v76
  %v84 = vmul.f32 %v53, %v76
  %v85 = vmul.f32 %v55, %v76
  %v86 = vmul.f32 %v57, %v76
  %v87 = vmul.f32 %v59, %v76
  %v88 = vmul.f32 %v61, %v76
  %v89 = vmul.f32 %v63, %v76
  %v90 = vmul.f32 %v65, %v76
  %v91 = vmul.f32 %v67, %v76
  %v92 = vmul.f32 %v69, %v76
  %v93 = vsub.f32 %v20, %v77
  %v94 = vsub.f32 %v21, %v78
  %v95 = vsub.f32 %v22, %v79
  %v96 = vsub.f32 %v23, %v80
  %v97 = vsub.f32 %v24, %v81
  %v98 = vsub.f32 %v25, %v82
  %v99 = vsub.f32 %v26, %v83
  %v100 = vsub.f32 %v27, %v84
  %v101 = vsub.f32 %v28, %v85
  %v102 = vsub.f32 %v29, %v86
  %v103 = vsub.f32 %v30, %v87
  %v104 = vsub.f32 %v31, %v88
  %v105 = vsub.f32 %v32, %v89
  %v106 = vsub.f32 %v33, %v90
  %v107 = vsub.f32 %v34, %v91
  %v108 = vsub.f32 %v35, %v92
  %v109 = vmul.f32 %v93, %v93
  %v110 = vmul.f32 %v94, %v94
  %v111 = vmul.f32 %v95, %v95
  %v112 = vmul.f32 %v96, %v96
  %v113 = vmul.f32 %v97, %v97
  %v114 = vmul.f32 %v98, %v98
  %v115 = vmul.f32 %v99, %v99
  %v116 = vmul.f32 %v100, %v100
  %v117 = vmul.f32 %v101, %v101
  %v118 = vmul.f32 %v102, %v102
  %v119 = vmul.f32 %v103, %v103
  %v120 = vmul.f32 %v104, %v104
  %v121 = vmul.f32 %v105, %v105
  %v122 = vmul.f32 %v106, %v106
  %v123 = vmul.f32 %v107, %v107
  %v124 = vmul.f32 %v108, %v108
  %125 = vadd.xlane.f32.xlu0 %v109
  %v126 = vpop.xlane.xlu0 %125
  %127 = vadd.xlane.f32.xlu0 %v110
  %v128 = vpop.xlane.xlu0 %127
  %129 = vadd.xlane.f32.xlu0 %v111
  %v130 = vpop.xlane.xlu0 %129
  %131 = vadd.xlane.f32.xlu0 %v112
  %v132 = vpop.xlane.xlu0 %131
  %133 = vadd.xlane.f32.xlu0 %v113
  %v134 = vpop.xlane.xlu0 %133
  %135 = vadd.xlane.f32.xlu0 %v114
  %v136 = vpop.xlane.xlu0 %135
  %137 = vadd.xlane.f32.xlu0 %v115
  %v138 = vpop.xlane.xlu0 %137
  %139 = vadd.xlane.f32.xlu0 %v116
  %v140 = vpop.xlane.xlu0 %139
  %141 = vadd.xlane.f32.xlu0 %v117
  %v142 = vpop.xlane.xlu0 %141
  %143 = vadd.xlane.f32.xlu0 %v118
  %v144 = vpop.xlane.xlu0 %143
  %145 = vadd.xlane.f32.xlu0 %v119
  %v146 = vpop.xlane.xlu0 %145
  %147 = vadd.xlane.f32.xlu0 %v120
  %v148 = vpop.xlane.xlu0 %147
  %149 = vadd.xlane.f32.xlu0 %v121
  %v150 = vpop.xlane.xlu0 %149
  %151 = vadd.xlane.f32.xlu0 %v122
  %v152 = vpop.xlane.xlu0 %151
  %153 = vadd.xlane.f32.xlu0 %v123
  %v154 = vpop.xlane.xlu0 %153
  %155 = vadd.xlane.f32.xlu0 %v124
  %v156 = vpop.xlane.xlu0 %155
  %v157 = vmul.f32 %v126, %v76
  %v158 = vmul.f32 %v128, %v76
  %v159 = vmul.f32 %v130, %v76
  %v160 = vmul.f32 %v132, %v76
  %v161 = vmul.f32 %v134, %v76
  %v162 = vmul.f32 %v136, %v76
  %v163 = vmul.f32 %v138, %v76
  %v164 = vmul.f32 %v140, %v76
  %v165 = vmul.f32 %v142, %v76
  %v166 = vmul.f32 %v144, %v76
  %v167 = vmul.f32 %v146, %v76
  %v168 = vmul.f32 %v148, %v76
  %v169 = vmul.f32 %v150, %v76
  %v170 = vmul.f32 %v152, %v76
  %v171 = vmul.f32 %v154, %v76
  %v172 = vmul.f32 %v156, %v76
  %v173 = vadd.f32 %v157, 1e-05
  %v174 = vadd.f32 %v158, 1e-05
  %v175 = vadd.f32 %v159, 1e-05
  %v176 = vadd.f32 %v160, 1e-05
  %v177 = vadd.f32 %v161, 1e-05
  %v178 = vadd.f32 %v162, 1e-05
  %v179 = vadd.f32 %v163, 1e-05
  %v180 = vadd.f32 %v164, 1e-05
  %v181 = vadd.f32 %v165, 1e-05
  %v182 = vadd.f32 %v166, 1e-05
  %v183 = vadd.f32 %v167, 1e-05
  %v184 = vadd.f32 %v168, 1e-05
  %v185 = vadd.f32 %v169, 1e-05
  %v186 = vadd.f32 %v170, 1e-05
  %v187 = vadd.f32 %v171, 1e-05
  %v188 = vadd.f32 %v172, 1e-05
  %v189 = vrsqrt.pop %v173
  %v190 = vmul.f32 %v189, %v173
  %v191 = vmul.f32 %v190, %v189
  %v192 = vmul.f32 0.5, %v191
  %v193 = vsub.f32 1.5, %v192
  %v194 = vmul.f32 %v189, %v193
  %vm195 = vweird.f32 %v173
  %vm196 = vweird.f32 %v189
  %vm197 = vmor %vm195, %vm196
  %v198 = vsel %vm197, %v189, %v194
  %v199 = vrsqrt.pop %v174
  %v200 = vmul.f32 %v199, %v174
  %v201 = vmul.f32 %v200, %v199
  %v202 = vmul.f32 0.5, %v201
  %v203 = vsub.f32 1.5, %v202
  %v204 = vmul.f32 %v199, %v203
  %vm205 = vweird.f32 %v174
  %vm206 = vweird.f32 %v199
  %vm207 = vmor %vm205, %vm206
  %v208 = vsel %vm207, %v199, %v204
  %v209 = vrsqrt.pop %v175
  %v210 = vmul.f32 %v209, %v175
  %v211 = vmul.f32 %v210, %v209
  %v212 = vmul.f32 0.5, %v211
  %v213 = vsub.f32 1.5, %v212
  %v214 = vmul.f32 %v209, %v213
  %vm215 = vweird.f32 %v175
  %vm216 = vweird.f32 %v209
  %vm217 = vmor %vm215, %vm216
  %v218 = vsel %vm217, %v209, %v214
  %v219 = vrsqrt.pop %v176
  %v220 = vmul.f32 %v219, %v176
  %v221 = vmul.f32 %v220, %v219
  %v222 = vmul.f32 0.5, %v221
  %v223 = vsub.f32 1.5, %v222
  %v224 = vmul.f32 %v219, %v223
  %vm225 = vweird.f32 %v176
  %vm226 = vweird.f32 %v219
  %vm227 = vmor %vm225, %vm226
  %v228 = vsel %vm227, %v219, %v224
  %v229 = vrsqrt.pop %v177
  %v230 = vmul.f32 %v229, %v177
  %v231 = vmul.f32 %v230, %v229
  %v232 = vmul.f32 0.5, %v231
  %v233 = vsub.f32 1.5, %v232
  %v234 = vmul.f32 %v229, %v233
  %vm235 = vweird.f32 %v177
  %vm236 = vweird.f32 %v229
  %vm237 = vmor %vm235, %vm236
  %v238 = vsel %vm237, %v229, %v234
  %v239 = vrsqrt.pop %v178
  %v240 = vmul.f32 %v239, %v178
  %v241 = vmul.f32 %v240, %v239
  %v242 = vmul.f32 0.5, %v241
  %v243 = vsub.f32 1.5, %v242
  %v244 = vmul.f32 %v239, %v243
  %vm245 = vweird.f32 %v178
  %vm246 = vweird.f32 %v239
  %vm247 = vmor %vm245, %vm246
  %v248 = vsel %vm247, %v239, %v244
  %v249 = vrsqrt.pop %v179
  %v250 = vmul.f32 %v249, %v179
  %v251 = vmul.f32 %v250, %v249
  %v252 = vmul.f32 0.5, %v251
  %v253 = vsub.f32 1.5, %v252
  %v254 = vmul.f32 %v249, %v253
  %vm255 = vweird.f32 %v179
  %vm256 = vweird.f32 %v249
  %vm257 = vmor %vm255, %vm256
  %v258 = vsel %vm257, %v249, %v254
  %v259 = vrsqrt.pop %v180
  %v260 = vmul.f32 %v259, %v180
  %v261 = vmul.f32 %v260, %v259
  %v262 = vmul.f32 0.5, %v261
  %v263 = vsub.f32 1.5, %v262
  %v264 = vmul.f32 %v259, %v263
  %vm265 = vweird.f32 %v180
  %vm266 = vweird.f32 %v259
  %vm267 = vmor %vm265, %vm266
  %v268 = vsel %vm267, %v259, %v264
  %v269 = vrsqrt.pop %v181
  %v270 = vmul.f32 %v269, %v181
  %v271 = vmul.f32 %v270, %v269
  %v272 = vmul.f32 0.5, %v271
  %v273 = vsub.f32 1.5, %v272
  %v274 = vmul.f32 %v269, %v273
  %vm275 = vweird.f32 %v181
  %vm276 = vweird.f32 %v269
  %vm277 = vmor %vm275, %vm276
  %v278 = vsel %vm277, %v269, %v274
  %v279 = vrsqrt.pop %v182
  %v280 = vmul.f32 %v279, %v182
  %v281 = vmul.f32 %v280, %v279
  %v282 = vmul.f32 0.5, %v281
  %v283 = vsub.f32 1.5, %v282
  %v284 = vmul.f32 %v279, %v283
  %vm285 = vweird.f32 %v182
  %vm286 = vweird.f32 %v279
  %vm287 = vmor %vm285, %vm286
  %v288 = vsel %vm287, %v279, %v284
  %v289 = vrsqrt.pop %v183
  %v290 = vmul.f32 %v289, %v183
  %v291 = vmul.f32 %v290, %v289
  %v292 = vmul.f32 0.5, %v291
  %v293 = vsub.f32 1.5, %v292
  %v294 = vmul.f32 %v289, %v293
  %vm295 = vweird.f32 %v183
  %vm296 = vweird.f32 %v289
  %vm297 = vmor %vm295, %vm296
  %v298 = vsel %vm297, %v289, %v294
  %v299 = vrsqrt.pop %v184
  %v300 = vmul.f32 %v299, %v184
  %v301 = vmul.f32 %v300, %v299
  %v302 = vmul.f32 0.5, %v301
  %v303 = vsub.f32 1.5, %v302
  %v304 = vmul.f32 %v299, %v303
  %vm305 = vweird.f32 %v184
  %vm306 = vweird.f32 %v299
  %vm307 = vmor %vm305, %vm306
  %v308 = vsel %vm307, %v299, %v304
  %v309 = vrsqrt.pop %v185
  %v310 = vmul.f32 %v309, %v185
  %v311 = vmul.f32 %v310, %v309
  %v312 = vmul.f32 0.5, %v311
  %v313 = vsub.f32 1.5, %v312
  %v314 = vmul.f32 %v309, %v313
  %vm315 = vweird.f32 %v185
  %vm316 = vweird.f32 %v309
  %vm317 = vmor %vm315, %vm316
  %v318 = vsel %vm317, %v309, %v314
  %v319 = vrsqrt.pop %v186
  %v320 = vmul.f32 %v319, %v186
  %v321 = vmul.f32 %v320, %v319
  %v322 = vmul.f32 0.5, %v321
  %v323 = vsub.f32 1.5, %v322
  %v324 = vmul.f32 %v319, %v323
  %vm325 = vweird.f32 %v186
  %vm326 = vweird.f32 %v319
  %vm327 = vmor %vm325, %vm326
  %v328 = vsel %vm327, %v319, %v324
  %v329 = vrsqrt.pop %v187
  %v330 = vmul.f32 %v329, %v187
  %v331 = vmul.f32 %v330, %v329
  %v332 = vmul.f32 0.5, %v331
  %v333 = vsub.f32 1.5, %v332
  %v334 = vmul.f32 %v329, %v333
  %vm335 = vweird.f32 %v187
  %vm336 = vweird.f32 %v329
  %vm337 = vmor %vm335, %vm336
  %v338 = vsel %vm337, %v329, %v334
  %v339 = vrsqrt.pop %v188
  %v340 = vmul.f32 %v339, %v188
  %v341 = vmul.f32 %v340, %v339
  %v342 = vmul.f32 0.5, %v341
  %v343 = vsub.f32 1.5, %v342
  %v344 = vmul.f32 %v339, %v343
  %vm345 = vweird.f32 %v188
  %vm346 = vweird.f32 %v339
  %vm347 = vmor %vm345, %vm346
  %v348 = vsel %vm347, %v339, %v344
  %v349 = vmul.f32 %v93, %v198
  %v350 = vmul.f32 %v94, %v208
  %v351 = vmul.f32 %v95, %v218
  %v352 = vmul.f32 %v96, %v228
  %v353 = vmul.f32 %v97, %v238
  %v354 = vmul.f32 %v98, %v248
  %v355 = vmul.f32 %v99, %v258
  %v356 = vmul.f32 %v100, %v268
  %v357 = vmul.f32 %v101, %v278
  %v358 = vmul.f32 %v102, %v288
  %v359 = vmul.f32 %v103, %v298
  %v360 = vmul.f32 %v104, %v308
  %v361 = vmul.f32 %v105, %v318
  %v362 = vmul.f32 %v106, %v328
  %v363 = vmul.f32 %v107, %v338
  %v364 = vmul.f32 %v108, %v348
  %v366 = vperm.slane %v36, 0
  %v368 = vmul.f32 %v349, %v366
  %v369 = vmul.f32 %v350, %v366
  %v370 = vmul.f32 %v351, %v366
  %v371 = vmul.f32 %v352, %v366
  %v372 = vmul.f32 %v353, %v366
  %v373 = vmul.f32 %v354, %v366
  %v374 = vmul.f32 %v355, %v366
  %v375 = vmul.f32 %v356, %v366
  %v376 = vmul.f32 %v357, %v366
  %v377 = vmul.f32 %v358, %v366
  %v378 = vmul.f32 %v359, %v366
  %v379 = vmul.f32 %v360, %v366
  %v380 = vmul.f32 %v361, %v366
  %v381 = vmul.f32 %v362, %v366
  %v382 = vmul.f32 %v363, %v366
  %v383 = vmul.f32 %v364, %v366
  %v385 = vperm.slane %v37, 0
  %v387 = vadd.f32 %v368, %v385
  %v388 = vadd.f32 %v369, %v385
  %v389 = vadd.f32 %v370, %v385
  %v390 = vadd.f32 %v371, %v385
  %v391 = vadd.f32 %v372, %v385
  %v392 = vadd.f32 %v373, %v385
  %v393 = vadd.f32 %v374, %v385
  %v394 = vadd.f32 %v375, %v385
  %v395 = vadd.f32 %v376, %v385
  %v396 = vadd.f32 %v377, %v385
  %v397 = vadd.f32 %v378, %v385
  %v398 = vadd.f32 %v379, %v385
  %v399 = vadd.f32 %v380, %v385
  %v400 = vadd.f32 %v381, %v385
  %v401 = vadd.f32 %v382, %v385
  %v402 = vadd.f32 %v383, %v385
  %v403 = vpack.c.bf16 %v388, %v387
  %v404 = vpack.c.bf16 %v390, %v389
  %v405 = vpack.c.bf16 %v392, %v391
  %v406 = vpack.c.bf16 %v394, %v393
  %v407 = vpack.c.bf16 %v396, %v395
  %v408 = vpack.c.bf16 %v398, %v397
  %v409 = vpack.c.bf16 %v400, %v399
  %v410 = vpack.c.bf16 %v402, %v401
  %v411 = vld [vmem:[%s3] sm:$0xff]
  %v412 = vld [vmem:[%s3 + $0x8] sm:$0xf]
  %v413 = vld [vmem:[%s3 + $0xc] sm:$0xff]
  %v414 = vld [vmem:[%s3 + $0x14] sm:$0xf]
  %v415 = vld [vmem:[%s3 + $0x18] sm:$0xff]
  %v416 = vld [vmem:[%s3 + $0x20] sm:$0xf]
  %v417 = vld [vmem:[%s3 + $0x24] sm:$0xff]
  %v418 = vld [vmem:[%s3 + $0x2c] sm:$0xf]
  %v419 = vld [vmem:[%s3 + $0x30] sm:$0xff]
  %v420 = vld [vmem:[%s3 + $0x38] sm:$0xf]
  %v421 = vld [vmem:[%s3 + $0x3c] sm:$0xff]
  %v422 = vld [vmem:[%s3 + $0x44] sm:$0xf]
  %v423 = vld [vmem:[%s3 + $0x48] sm:$0xff]
  %v424 = vld [vmem:[%s3 + $0x50] sm:$0xf]
  %v425 = vld [vmem:[%s3 + $0x54] sm:$0xff]
  %v426 = vld [vmem:[%s3 + $0x5c] sm:$0xf]
  %v427 = vld [vmem:[%s3 + $0x60] sm:$0xff]
  %v428 = vld [vmem:[%s3 + $0x68] sm:$0xf]
  %v429 = vld [vmem:[%s3 + $0x6c] sm:$0xff]
  %v430 = vld [vmem:[%s3 + $0x74] sm:$0xf]
  %v431 = vld [vmem:[%s3 + $0x78] sm:$0xff]
  %v432 = vld [vmem:[%s3 + $0x80] sm:$0xf]
  %v433 = vld [vmem:[%s3 + $0x84] sm:$0xff]
  %v434 = vld [vmem:[%s3 + $0x8c] sm:$0xf]
  %v435 = vld [vmem:[%s3 + $0x90] sm:$0xff]
  %v436 = vld [vmem:[%s3 + $0x98] sm:$0xf]
  %v437 = vld [vmem:[%s3 + $0x9c] sm:$0xff]
  %v438 = vld [vmem:[%s3 + $0xa4] sm:$0xf]
  %v439 = vld [vmem:[%s3 + $0xa8] sm:$0xff]
  %v440 = vld [vmem:[%s3 + $0xb0] sm:$0xf]
  %v441 = vld [vmem:[%s3 + $0xb4] sm:$0xff]
  %v442 = vld [vmem:[%s3 + $0xbc] sm:$0xf]
  %v443 = vld [vmem:[%s4] sm:$0x7]
  %v445 = vperm.slane %v443, 0
  %v446 = vperm.slane %v443, 1
  %v447 = vperm.slane %v443, 2
  %v483 = vunpack.c.l.b16 %v411
  %v484 = vunpack.c.h.b16 %v411
  %v485 = vunpack.c.l.b16 %v412
  %v486 = vunpack.c.l.b16 %v413
  %v487 = vunpack.c.h.b16 %v413
  %v488 = vunpack.c.l.b16 %v414
  %v489 = vunpack.c.l.b16 %v415
  %v490 = vunpack.c.h.b16 %v415
  %v491 = vunpack.c.l.b16 %v416
  %v492 = vunpack.c.l.b16 %v417
  %v493 = vunpack.c.h.b16 %v417
  %v494 = vunpack.c.l.b16 %v418
  %v495 = vunpack.c.l.b16 %v419
  %v496 = vunpack.c.h.b16 %v419
  %v497 = vunpack.c.l.b16 %v420
  %v498 = vunpack.c.l.b16 %v421
  %v499 = vunpack.c.h.b16 %v421
  %v500 = vunpack.c.l.b16 %v422
  %v501 = vunpack.c.l.b16 %v423
  %v502 = vunpack.c.h.b16 %v423
  %v503 = vunpack.c.l.b16 %v424
  %v504 = vunpack.c.l.b16 %v425
  %v505 = vunpack.c.h.b16 %v425
  %v506 = vunpack.c.l.b16 %v426
  %v507 = vunpack.c.l.b16 %v427
  %v508 = vunpack.c.h.b16 %v427
  %v509 = vunpack.c.l.b16 %v428
  %v510 = vunpack.c.l.b16 %v429
  %v511 = vunpack.c.h.b16 %v429
  %v512 = vunpack.c.l.b16 %v430
  %v513 = vunpack.c.l.b16 %v431
  %v514 = vunpack.c.h.b16 %v431
  %v515 = vunpack.c.l.b16 %v432
  %v516 = vunpack.c.l.b16 %v433
  %v517 = vunpack.c.h.b16 %v433
  %v518 = vunpack.c.l.b16 %v434
  %v519 = vunpack.c.l.b16 %v435
  %v520 = vunpack.c.h.b16 %v435
  %v521 = vunpack.c.l.b16 %v436
  %v522 = vunpack.c.l.b16 %v437
  %v523 = vunpack.c.h.b16 %v437
  %v524 = vunpack.c.l.b16 %v438
  %v525 = vunpack.c.l.b16 %v439
  %v526 = vunpack.c.h.b16 %v439
  %v527 = vunpack.c.l.b16 %v440
  %v528 = vunpack.c.l.b16 %v441
  %v529 = vunpack.c.h.b16 %v441
  %v530 = vunpack.c.l.b16 %v442
  %v531 = vpack.c.b16 %v486, %v483
  %v532 = vpack.c.b16 %v487, %v484
  %v533 = vpack.c.b16 %v488, %v485
  %v534 = vpack.c.b16 %v492, %v489
  %v535 = vpack.c.b16 %v493, %v490
  %v536 = vpack.c.b16 %v494, %v491
  %v537 = vpack.c.b16 %v498, %v495
  %v538 = vpack.c.b16 %v499, %v496
  %v539 = vpack.c.b16 %v500, %v497
  %v540 = vpack.c.b16 %v504, %v501
  %v541 = vpack.c.b16 %v505, %v502
  %v542 = vpack.c.b16 %v506, %v503
  %v543 = vpack.c.b16 %v510, %v507
  %v544 = vpack.c.b16 %v511, %v508
  %v545 = vpack.c.b16 %v512, %v509
  %v546 = vpack.c.b16 %v516, %v513
  %v547 = vpack.c.b16 %v517, %v514
  %v548 = vpack.c.b16 %v518, %v515
  %v549 = vpack.c.b16 %v522, %v519
  %v550 = vpack.c.b16 %v523, %v520
  %v551 = vpack.c.b16 %v524, %v521
  %v552 = vpack.c.b16 %v528, %v525
  %v553 = vpack.c.b16 %v529, %v526
  %v554 = vpack.c.b16 %v530, %v527
  %579 = vmatpush.bf16.msra.mxu0 %v552
  %580 = vmatpush.bf16.msra.mxu0 %v549
  %581 = vmatpush.bf16.msra.mxu0 %v546
  %582 = vmatpush.bf16.msra.mxu0 %v543
  %583 = vmatpush.bf16.msra.mxu0 %v540
  %584 = vmatpush.bf16.msra.mxu0 %v537
  %585 = vmatpush.bf16.msra.mxu0 %v534
  %586 = vmatpush.bf16.msra.mxu0 %v531
  %587 = vmatmul.bf16.gmra.mxu0 %v403
  %v588 = vpop.f32.mrf.mxu0
  %v589 = vadd.f32 %v445, %v588
  %v590 = vpop.f32.mrf.mxu0
  %v591 = vadd.f32 %v445, %v590
  %592 = vmatmul.bf16.gmra.mxu0 %v404
  %v593 = vpop.f32.mrf.mxu0
  %v594 = vadd.f32 %v445, %v593
  %v595 = vpop.f32.mrf.mxu0
  %v596 = vadd.f32 %v445, %v595
  %597 = vmatmul.bf16.gmra.mxu0 %v405
  %v598 = vpop.f32.mrf.mxu0
  %v599 = vadd.f32 %v445, %v598
  %v600 = vpop.f32.mrf.mxu0
  %v601 = vadd.f32 %v445, %v600
  %602 = vmatmul.bf16.gmra.mxu0 %v406
  %v603 = vpop.f32.mrf.mxu0
  %v604 = vadd.f32 %v445, %v603
  %v605 = vpop.f32.mrf.mxu0
  %v606 = vadd.f32 %v445, %v605
  %607 = vmatmul.bf16.gmra.mxu0 %v407
  %v608 = vpop.f32.mrf.mxu0
  %v609 = vadd.f32 %v445, %v608
  %v610 = vpop.f32.mrf.mxu0
  %v611 = vadd.f32 %v445, %v610
  %612 = vmatmul.bf16.gmra.mxu0 %v408
  %v613 = vpop.f32.mrf.mxu0
  %v614 = vadd.f32 %v445, %v613
  %v615 = vpop.f32.mrf.mxu0
  %v616 = vadd.f32 %v445, %v615
  %617 = vmatmul.bf16.gmra.mxu0 %v409
  %v618 = vpop.f32.mrf.mxu0
  %v619 = vadd.f32 %v445, %v618
  %v620 = vpop.f32.mrf.mxu0
  %v621 = vadd.f32 %v445, %v620
  %622 = vmatmul.bf16.gmra.mxu0 %v410
  %v623 = vpop.f32.mrf.mxu0
  %v624 = vadd.f32 %v445, %v623
  %v625 = vpop.f32.mrf.mxu0
  %v626 = vadd.f32 %v445, %v625
  %627 = vdwg.mxu0
  %628 = vmatpush.bf16.msra.mxu0 %v553
  %629 = vmatpush.bf16.msra.mxu0 %v550
  %630 = vmatpush.bf16.msra.mxu0 %v547
  %631 = vmatpush.bf16.msra.mxu0 %v544
  %632 = vmatpush.bf16.msra.mxu0 %v541
  %633 = vmatpush.bf16.msra.mxu0 %v538
  %634 = vmatpush.bf16.msra.mxu0 %v535
  %635 = vmatpush.bf16.msra.mxu0 %v532
  %636 = vmatmul.bf16.gmra.mxu0 %v403
  %v637 = vpop.f32.mrf.mxu0
  %v638 = vadd.f32 %v446, %v637
  %v639 = vpop.f32.mrf.mxu0
  %v640 = vadd.f32 %v446, %v639
  %641 = vmatmul.bf16.gmra.mxu0 %v404
  %v642 = vpop.f32.mrf.mxu0
  %v643 = vadd.f32 %v446, %v642
  %v644 = vpop.f32.mrf.mxu0
  %v645 = vadd.f32 %v446, %v644
  %646 = vmatmul.bf16.gmra.mxu0 %v405
  %v647 = vpop.f32.mrf.mxu0
  %v648 = vadd.f32 %v446, %v647
  %v649 = vpop.f32.mrf.mxu0
  %v650 = vadd.f32 %v446, %v649
  %651 = vmatmul.bf16.gmra.mxu0 %v406
  %v652 = vpop.f32.mrf.mxu0
  %v653 = vadd.f32 %v446, %v652
  %v654 = vpop.f32.mrf.mxu0
  %v655 = vadd.f32 %v446, %v654
  %656 = vmatmul.bf16.gmra.mxu0 %v407
  %v657 = vpop.f32.mrf.mxu0
  %v658 = vadd.f32 %v446, %v657
  %v659 = vpop.f32.mrf.mxu0
  %v660 = vadd.f32 %v446, %v659
  %661 = vmatmul.bf16.gmra.mxu0 %v408
  %v662 = vpop.f32.mrf.mxu0
  %v663 = vadd.f32 %v446, %v662
  %v664 = vpop.f32.mrf.mxu0
  %v665 = vadd.f32 %v446, %v664
  %666 = vmatmul.bf16.gmra.mxu0 %v409
  %v667 = vpop.f32.mrf.mxu0
  %v668 = vadd.f32 %v446, %v667
  %v669 = vpop.f32.mrf.mxu0
  %v670 = vadd.f32 %v446, %v669
  %671 = vmatmul.bf16.gmra.mxu0 %v410
  %v672 = vpop.f32.mrf.mxu0
  %v673 = vadd.f32 %v446, %v672
  %v674 = vpop.f32.mrf.mxu0
  %v675 = vadd.f32 %v446, %v674
  %676 = vdwg.mxu0
  %677 = vmatpush.bf16.msra.mxu0 %v554
  %678 = vmatpush.bf16.msra.mxu0 %v551
  %679 = vmatpush.bf16.msra.mxu0 %v548
  %680 = vmatpush.bf16.msra.mxu0 %v545
  %681 = vmatpush.bf16.msra.mxu0 %v542
  %682 = vmatpush.bf16.msra.mxu0 %v539
  %683 = vmatpush.bf16.msra.mxu0 %v536
  %684 = vmatpush.bf16.msra.mxu0 %v533
  %685 = vmatmul.bf16.gmra.mxu0 %v403
  %v686 = vpop.f32.mrf.mxu0
  %v687 = vadd.f32 %v447, %v686
  %v688 = vpop.f32.mrf.mxu0
  %v689 = vadd.f32 %v447, %v688
  %690 = vmatmul.bf16.gmra.mxu0 %v404
  %v691 = vpop.f32.mrf.mxu0
  %v692 = vadd.f32 %v447, %v691
  %v693 = vpop.f32.mrf.mxu0
  %v694 = vadd.f32 %v447, %v693
  %695 = vmatmul.bf16.gmra.mxu0 %v405
  %v696 = vpop.f32.mrf.mxu0
  %v697 = vadd.f32 %v447, %v696
  %v698 = vpop.f32.mrf.mxu0
  %v699 = vadd.f32 %v447, %v698
  %700 = vmatmul.bf16.gmra.mxu0 %v406
  %v701 = vpop.f32.mrf.mxu0
  %v702 = vadd.f32 %v447, %v701
  %v703 = vpop.f32.mrf.mxu0
  %v704 = vadd.f32 %v447, %v703
  %705 = vmatmul.bf16.gmra.mxu0 %v407
  %v706 = vpop.f32.mrf.mxu0
  %v707 = vadd.f32 %v447, %v706
  %v708 = vpop.f32.mrf.mxu0
  %v709 = vadd.f32 %v447, %v708
  %710 = vmatmul.bf16.gmra.mxu0 %v408
  %v711 = vpop.f32.mrf.mxu0
  %v712 = vadd.f32 %v447, %v711
  %v713 = vpop.f32.mrf.mxu0
  %v714 = vadd.f32 %v447, %v713
  %715 = vmatmul.bf16.gmra.mxu0 %v409
  %v716 = vpop.f32.mrf.mxu0
  %v717 = vadd.f32 %v447, %v716
  %v718 = vpop.f32.mrf.mxu0
  %v719 = vadd.f32 %v447, %v718
  %720 = vmatmul.bf16.gmra.mxu0 %v410
  %v721 = vpop.f32.mrf.mxu0
  %v722 = vadd.f32 %v447, %v721
  %v723 = vpop.f32.mrf.mxu0
  %v724 = vadd.f32 %v447, %v723
  %725 = vdwg.mxu0
  %v726 = vpack.c.bf16 %v638, %v589
  %v727 = vpack.c.bf16 %v687, %v687
  %v728 = vpack.c.bf16 %v640, %v591
  %v729 = vpack.c.bf16 %v689, %v689
  %v730 = vpack.c.bf16 %v643, %v594
  %v731 = vpack.c.bf16 %v692, %v692
  %v732 = vpack.c.bf16 %v645, %v596
  %v733 = vpack.c.bf16 %v694, %v694
  %v734 = vpack.c.bf16 %v648, %v599
  %v735 = vpack.c.bf16 %v697, %v697
  %v736 = vpack.c.bf16 %v650, %v601
  %v737 = vpack.c.bf16 %v699, %v699
  %v738 = vpack.c.bf16 %v653, %v604
  %v739 = vpack.c.bf16 %v702, %v702
  %v740 = vpack.c.bf16 %v655, %v606
  %v741 = vpack.c.bf16 %v704, %v704
  %v742 = vpack.c.bf16 %v658, %v609
  %v743 = vpack.c.bf16 %v707, %v707
  %v744 = vpack.c.bf16 %v660, %v611
  %v745 = vpack.c.bf16 %v709, %v709
  %v746 = vpack.c.bf16 %v663, %v614
  %v747 = vpack.c.bf16 %v712, %v712
  %v748 = vpack.c.bf16 %v665, %v616
  %v749 = vpack.c.bf16 %v714, %v714
  %v750 = vpack.c.bf16 %v668, %v619
  %v751 = vpack.c.bf16 %v717, %v717
  %v752 = vpack.c.bf16 %v670, %v621
  %v753 = vpack.c.bf16 %v719, %v719
  %v754 = vpack.c.bf16 %v673, %v624
  %v755 = vpack.c.bf16 %v722, %v722
  %v756 = vpack.c.bf16 %v675, %v626
  %v757 = vpack.c.bf16 %v724, %v724
  %758 = vst [vmem:[%s5] sm:$0xff] %v726
  %759 = vst [vmem:[%s5 + $0x8] sm:$0xf] %v727
  %760 = vst [vmem:[%s5 + $0xc] sm:$0xff] %v728
  %761 = vst [vmem:[%s5 + $0x14] sm:$0xf] %v729
  %762 = vst [vmem:[%s5 + $0x18] sm:$0xff] %v730
  %763 = vst [vmem:[%s5 + $0x20] sm:$0xf] %v731
  %764 = vst [vmem:[%s5 + $0x24] sm:$0xff] %v732
  %765 = vst [vmem:[%s5 + $0x2c] sm:$0xf] %v733
  %766 = vst [vmem:[%s5 + $0x30] sm:$0xff] %v734
  %767 = vst [vmem:[%s5 + $0x38] sm:$0xf] %v735
  %768 = vst [vmem:[%s5 + $0x3c] sm:$0xff] %v736
  %769 = vst [vmem:[%s5 + $0x44] sm:$0xf] %v737
  %770 = vst [vmem:[%s5 + $0x48] sm:$0xff] %v738
  %771 = vst [vmem:[%s5 + $0x50] sm:$0xf] %v739
  %772 = vst [vmem:[%s5 + $0x54] sm:$0xff] %v740
  %773 = vst [vmem:[%s5 + $0x5c] sm:$0xf] %v741
  %774 = vst [vmem:[%s5 + $0x60] sm:$0xff] %v742
  %775 = vst [vmem:[%s5 + $0x68] sm:$0xf] %v743
  %776 = vst [vmem:[%s5 + $0x6c] sm:$0xff] %v744
  %777 = vst [vmem:[%s5 + $0x74] sm:$0xf] %v745
  %778 = vst [vmem:[%s5 + $0x78] sm:$0xff] %v746
  %779 = vst [vmem:[%s5 + $0x80] sm:$0xf] %v747
  %780 = vst [vmem:[%s5 + $0x84] sm:$0xff] %v748
  %781 = vst [vmem:[%s5 + $0x8c] sm:$0xf] %v749
  %782 = vst [vmem:[%s5 + $0x90] sm:$0xff] %v750
  %783 = vst [vmem:[%s5 + $0x98] sm:$0xf] %v751
  %784 = vst [vmem:[%s5 + $0x9c] sm:$0xff] %v752
  %785 = vst [vmem:[%s5 + $0xa4] sm:$0xf] %v753
  %786 = vst [vmem:[%s5 + $0xa8] sm:$0xff] %v754
  %787 = vst [vmem:[%s5 + $0xb0] sm:$0xf] %v755
  %788 = vst [vmem:[%s5 + $0xb4] sm:$0xff] %v756
  %789 = vst [vmem:[%s5 + $0xbc] sm:$0xf] %v757
  // Predicated region
  $region22: #{forward.9} parent=0 // pred_check
    _
  $region23: #{forward.9} parent=0 // pred_check_branch
    %791 = sbr.rel (0) target = $region25
  $region24: #{forward.9} parent=0 // pred_region
    _
  $region25: #{forward.9} parent=0 // pred_fallthru
    _
  // Predicated region
  $region26: #{forward.9} parent=0 // pred_check
    _
  $region27: #{forward.9} parent=0 // pred_check_branch
    %793 = sbr.rel (0) target = $region29
  $region28: #{forward.9} parent=0 // pred_region
    _
  $region29: #{forward.9} parent=0 // pred_fallthru
    _

// kernel: forward.11
$region0: #{forward.11}
  #allocation0 [shape = 'u32[]', space=smem, size = 0x4, offset = 0x4, fixed_abs, tag = 'smem constant byte address 0x4 - core index']
  #allocation1 [shape = 'u32[72,128]{1,0:T(1,128)}', space=vmem, size = 0x9000, scoped, tag = 'internal scratch']
  %s0 = inlined_call_operand.vmem [shape: bf16[128,128], index: 0, kind: input, shape index: {}]
  %s1 = inlined_call_operand.vmem [shape: bf16[128,128], index: 1, kind: input, shape index: {}]
  %s2 = inlined_call_operand.vmem [shape: f32[1,128], index: 2, kind: input, shape index: {}]
  %s3 = inlined_call_operand.vmem [shape: f32[128,128], index: 3, kind: input, shape index: {}]
  %s4 = inlined_call_operand.vmem [shape: f32[128,128], index: 4, kind: output, shape index: {}]
  %s5 = sld [smem:[#allocation0]]
  $region26: #{forward.11} parent=0
    _
  %s7 = ssub.s32 1, %s5
  %s8 = scalar_select 0, %s7, %s5
  // Predicated region
  $region2: #{forward.11} parent=0 // pred_check
    _
  $region3: #{forward.11} parent=0 // pred_check_branch
    %10 = sbr.rel (0) target = $region5
  $region4: #{forward.11} parent=0 // pred_region
    _
  $region5: #{forward.11} parent=0 // pred_fallthru
    _
  // Predicated region
  $region6: #{forward.11} parent=0 // pred_check
    _
  $region7: #{forward.11} parent=0 // pred_check_branch
    %12 = sbr.rel (0) target = $region9
  $region8: #{forward.11} parent=0 // pred_region
    _
  $region9: #{forward.11} parent=0 // pred_fallthru
    _
  // Predicated region
  $region10: #{forward.11} parent=0 // pred_check
    _
  $region11: #{forward.11} parent=0 // pred_check_branch
    %14 = sbr.rel (0) target = $region13
  $region12: #{forward.11} parent=0 // pred_region
    _
  $region13: #{forward.11} parent=0 // pred_fallthru
    _
  // Predicated region
  $region14: #{forward.11} parent=0 // pred_check
    _
  $region15: #{forward.11} parent=0 // pred_check_branch
    %16 = sbr.rel (0) target = $region17
  $region16: #{forward.11} parent=0 // pred_region
    _
  $region17: #{forward.11} parent=0 // pred_fallthru
    _
  %v17 = vld [vmem:[%s0] sm:$0xf]
  %v18 = vld [vmem:[%s0 + $0x4] sm:$0xf]
  %v19 = vld [vmem:[%s0 + $0x8] sm:$0xf]
  %v20 = vld [vmem:[%s0 + $0xc] sm:$0xf]
  %v21 = vld [vmem:[%s0 + $0x10] sm:$0xf]
  %v22 = vld [vmem:[%s0 + $0x14] sm:$0xf]
  %v23 = vld [vmem:[%s0 + $0x18] sm:$0xf]
  %v24 = vld [vmem:[%s0 + $0x1c] sm:$0xf]
  %v25 = vld [vmem:[%s0 + $0x20] sm:$0xf]
  %v26 = vld [vmem:[%s0 + $0x24] sm:$0xf]
  %v27 = vld [vmem:[%s0 + $0x28] sm:$0xf]
  %v28 = vld [vmem:[%s0 + $0x2c] sm:$0xf]
  %v29 = vld [vmem:[%s0 + $0x30] sm:$0xf]
  %v30 = vld [vmem:[%s0 + $0x34] sm:$0xf]
  %v31 = vld [vmem:[%s0 + $0x38] sm:$0xf]
  %v32 = vld [vmem:[%s0 + $0x3c] sm:$0xf]
  %v33 = vld [vmem:[%s1] sm:$0xf]
  %v34 = vld [vmem:[%s1 + $0x4] sm:$0xf]
  %v35 = vld [vmem:[%s1 + $0x8] sm:$0xf]
  %v36 = vld [vmem:[%s1 + $0xc] sm:$0xf]
  %v37 = vld [vmem:[%s1 + $0x10] sm:$0xf]
  %v38 = vld [vmem:[%s1 + $0x14] sm:$0xf]
  %v39 = vld [vmem:[%s1 + $0x18] sm:$0xf]
  %v40 = vld [vmem:[%s1 + $0x1c] sm:$0xf]
  %v41 = vld [vmem:[%s1 + $0x20] sm:$0xf]
  %v42 = vld [vmem:[%s1 + $0x24] sm:$0xf]
  %v43 = vld [vmem:[%s1 + $0x28] sm:$0xf]
  %v44 = vld [vmem:[%s1 + $0x2c] sm:$0xf]
  %v45 = vld [vmem:[%s1 + $0x30] sm:$0xf]
  %v46 = vld [vmem:[%s1 + $0x34] sm:$0xf]
  %v47 = vld [vmem:[%s1 + $0x38] sm:$0xf]
  %v48 = vld [vmem:[%s1 + $0x3c] sm:$0xf]
  %v49 = vld [vmem:[%s2] sm:$0x1]
  %v51 = vperm.slane %v49, 0
  %v69 = vunpack.c.l.b16 %v17
  %v70 = vunpack.c.l.b16 %v18
  %v71 = vunpack.c.l.b16 %v19
  %v72 = vunpack.c.l.b16 %v20
  %v73 = vunpack.c.l.b16 %v21
  %v74 = vunpack.c.l.b16 %v22
  %v75 = vunpack.c.l.b16 %v23
  %v76 = vunpack.c.l.b16 %v24
  %v77 = vunpack.c.l.b16 %v25
  %v78 = vunpack.c.l.b16 %v26
  %v79 = vunpack.c.l.b16 %v27
  %v80 = vunpack.c.l.b16 %v28
  %v81 = vunpack.c.l.b16 %v29
  %v82 = vunpack.c.l.b16 %v30
  %v83 = vunpack.c.l.b16 %v31
  %v84 = vunpack.c.l.b16 %v32
  %v85 = vpack.c.b16 %v70, %v69
  %v86 = vpack.c.b16 %v72, %v71
  %v87 = vpack.c.b16 %v74, %v73
  %v88 = vpack.c.b16 %v76, %v75
  %v89 = vpack.c.b16 %v78, %v77
  %v90 = vpack.c.b16 %v80, %v79
  %v91 = vpack.c.b16 %v82, %v81
  %v92 = vpack.c.b16 %v84, %v83
  %v117 = vunpack.c.l.b16 %v33
  %v118 = vunpack.c.l.b16 %v34
  %v119 = vunpack.c.l.b16 %v35
  %v120 = vunpack.c.l.b16 %v36
  %v121 = vunpack.c.l.b16 %v37
  %v122 = vunpack.c.l.b16 %v38
  %v123 = vunpack.c.l.b16 %v39
  %v124 = vunpack.c.l.b16 %v40
  %v125 = vunpack.c.l.b16 %v41
  %v126 = vunpack.c.l.b16 %v42
  %v127 = vunpack.c.l.b16 %v43
  %v128 = vunpack.c.l.b16 %v44
  %v129 = vunpack.c.l.b16 %v45
  %v130 = vunpack.c.l.b16 %v46
  %v131 = vunpack.c.l.b16 %v47
  %v132 = vunpack.c.l.b16 %v48
  %v133 = vpack.c.b16 %v118, %v117
  %v134 = vpack.c.b16 %v120, %v119
  %v135 = vpack.c.b16 %v122, %v121
  %v136 = vpack.c.b16 %v124, %v123
  %v137 = vpack.c.b16 %v126, %v125
  %v138 = vpack.c.b16 %v128, %v127
  %v139 = vpack.c.b16 %v130, %v129
  %v140 = vpack.c.b16 %v132, %v131
  %149 = vmatpush.bf16.msra.mxu0 %v140
  %150 = vmatpush.bf16.msra.mxu0 %v139
  %151 = vmatpush.bf16.msra.mxu0 %v138
  %152 = vmatpush.bf16.msra.mxu0 %v137
  %153 = vmatpush.bf16.msra.mxu0 %v136
  %154 = vmatpush.bf16.msra.mxu0 %v135
  %155 = vmatpush.bf16.msra.mxu0 %v134
  %156 = vmatpush.bf16.msra.mxu0 %v133
  %157 = vmatmul.bf16.gmra.mxu0 %v85
  %v158 = vpop.f32.mrf.mxu0
  %v159 = vadd.f32 %v51, %v158
  %v160 = vpop.f32.mrf.mxu0
  %v161 = vadd.f32 %v51, %v160
  %162 = vmatmul.bf16.gmra.mxu0 %v86
  %v163 = vpop.f32.mrf.mxu0
  %v164 = vadd.f32 %v51, %v163
  %v165 = vpop.f32.mrf.mxu0
  %v166 = vadd.f32 %v51, %v165
  %167 = vmatmul.bf16.gmra.mxu0 %v87
  %v168 = vpop.f32.mrf.mxu0
  %v169 = vadd.f32 %v51, %v168
  %v170 = vpop.f32.mrf.mxu0
  %v171 = vadd.f32 %v51, %v170
  %172 = vmatmul.bf16.gmra.mxu0 %v88
  %v173 = vpop.f32.mrf.mxu0
  %v174 = vadd.f32 %v51, %v173
  %v175 = vpop.f32.mrf.mxu0
  %v176 = vadd.f32 %v51, %v175
  %177 = vmatmul.bf16.gmra.mxu0 %v89
  %v178 = vpop.f32.mrf.mxu0
  %v179 = vadd.f32 %v51, %v178
  %v180 = vpop.f32.mrf.mxu0
  %v181 = vadd.f32 %v51, %v180
  %182 = vmatmul.bf16.gmra.mxu0 %v90
  %v183 = vpop.f32.mrf.mxu0
  %v184 = vadd.f32 %v51, %v183
  %v185 = vpop.f32.mrf.mxu0
  %v186 = vadd.f32 %v51, %v185
  %187 = vmatmul.bf16.gmra.mxu0 %v91
  %v188 = vpop.f32.mrf.mxu0
  %v189 = vadd.f32 %v51, %v188
  %v190 = vpop.f32.mrf.mxu0
  %v191 = vadd.f32 %v51, %v190
  %192 = vmatmul.bf16.gmra.mxu0 %v92
  %v193 = vpop.f32.mrf.mxu0
  %v194 = vadd.f32 %v51, %v193
  %v195 = vpop.f32.mrf.mxu0
  %v196 = vadd.f32 %v51, %v195
  %197 = vdwg.mxu0
  %v198 = vld [vmem:[%s3] sm:$0xff]
  %v199 = vld [vmem:[%s3 + $0x8] sm:$0xff]
  %v200 = vld [vmem:[%s3 + $0x10] sm:$0xff]
  %v201 = vld [vmem:[%s3 + $0x18] sm:$0xff]
  %v202 = vld [vmem:[%s3 + $0x20] sm:$0xff]
  %v203 = vld [vmem:[%s3 + $0x28] sm:$0xff]
  %v204 = vld [vmem:[%s3 + $0x30] sm:$0xff]
  %v205 = vld [vmem:[%s3 + $0x38] sm:$0xff]
  %v206 = vld [vmem:[%s3 + $0x40] sm:$0xff]
  %v207 = vld [vmem:[%s3 + $0x48] sm:$0xff]
  %v208 = vld [vmem:[%s3 + $0x50] sm:$0xff]
  %v209 = vld [vmem:[%s3 + $0x58] sm:$0xff]
  %v210 = vld [vmem:[%s3 + $0x60] sm:$0xff]
  %v211 = vld [vmem:[%s3 + $0x68] sm:$0xff]
  %v212 = vld [vmem:[%s3 + $0x70] sm:$0xff]
  %v213 = vld [vmem:[%s3 + $0x78] sm:$0xff]
  %v214 = vadd.f32 %v159, %v198
  %v215 = vadd.f32 %v161, %v199
  %v216 = vadd.f32 %v164, %v200
  %v217 = vadd.f32 %v166, %v201
  %v218 = vadd.f32 %v169, %v202
  %v219 = vadd.f32 %v171, %v203
  %v220 = vadd.f32 %v174, %v204
  %v221 = vadd.f32 %v176, %v205
  %v222 = vadd.f32 %v179, %v206
  %v223 = vadd.f32 %v181, %v207
  %v224 = vadd.f32 %v184, %v208
  %v225 = vadd.f32 %v186, %v209
  %v226 = vadd.f32 %v189, %v210
  %v227 = vadd.f32 %v191, %v211
  %v228 = vadd.f32 %v194, %v212
  %v229 = vadd.f32 %v196, %v213
  %230 = vst [vmem:[%s4] sm:$0xff] %v214
  %231 = vst [vmem:[%s4 + $0x8] sm:$0xff] %v215
  %232 = vst [vmem:[%s4 + $0x10] sm:$0xff] %v216
  %233 = vst [vmem:[%s4 + $0x18] sm:$0xff] %v217
  %234 = vst [vmem:[%s4 + $0x20] sm:$0xff] %v218
  %235 = vst [vmem:[%s4 + $0x28] sm:$0xff] %v219
  %236 = vst [vmem:[%s4 + $0x30] sm:$0xff] %v220
  %237 = vst [vmem:[%s4 + $0x38] sm:$0xff] %v221
  %238 = vst [vmem:[%s4 + $0x40] sm:$0xff] %v222
  %239 = vst [vmem:[%s4 + $0x48] sm:$0xff] %v223
  %240 = vst [vmem:[%s4 + $0x50] sm:$0xff] %v224
  %241 = vst [vmem:[%s4 + $0x58] sm:$0xff] %v225
  %242 = vst [vmem:[%s4 + $0x60] sm:$0xff] %v226
  %243 = vst [vmem:[%s4 + $0x68] sm:$0xff] %v227
  %244 = vst [vmem:[%s4 + $0x70] sm:$0xff] %v228
  %245 = vst [vmem:[%s4 + $0x78] sm:$0xff] %v229
  // Predicated region
  $region18: #{forward.11} parent=0 // pred_check
    _
  $region19: #{forward.11} parent=0 // pred_check_branch
    %247 = sbr.rel (0) target = $region21
  $region20: #{forward.11} parent=0 // pred_region
    _
  $region21: #{forward.11} parent=0 // pred_fallthru
    _
  // Predicated region
  $region22: #{forward.11} parent=0 // pred_check
    _
  $region23: #{forward.11} parent=0 // pred_check_branch
    %249 = sbr.rel (0) target = $region25
  $region24: #{forward.11} parent=0 // pred_region
    _
  $region25: #{forward.11} parent=0 // pred_fallthru
    _

// kernel: forward.10
$region0: #{forward.10}
  #allocation0 [shape = 'u32[]', space=smem, size = 0x4, offset = 0x4, fixed_abs, tag = 'smem constant byte address 0x4 - core index']
  #allocation1 [shape = 'u32[72,128]{1,0:T(1,128)}', space=vmem, size = 0x9000, scoped, tag = 'internal scratch']
  #allocation2 [shape = 'f32[64,1]{1,0:T(8,128)}', space=vmem, size = 0x8000, scoped, tag = 'scratch operand']
  #allocation3 [shape = 'f32[64,1]{1,0:T(8,128)}', space=vmem, size = 0x8000, scoped, tag = 'scratch operand']
  #allocation4 [shape = 'f32[64,32]{1,0:T(8,128)}', space=vmem, size = 0x8000, scoped, tag = 'scratch operand']
  %s0 = inlined_call_operand.vmem [shape: bf16[8,64,32], index: 0, kind: input, shape index: {}]
  %s1 = inlined_call_operand.vmem [shape: bf16[8,64,32], index: 1, kind: input, shape index: {}]
  %s2 = inlined_call_operand.vmem [shape: bf16[8,64,32], index: 2, kind: input, shape index: {}]
  %s3 = inlined_call_operand.vmem [shape: bf16[8,64,32], index: 3, kind: output, shape index: {}]
  %s4 = sld [smem:[#allocation0]]
  $region61: #{forward.10} parent=0
    _
  %s6 = ssub.s32 1, %s4
  %s7 = scalar_select 0, %s6, %s4
  loop: start=0, step=1, limit=10
  $region2: #{forward.10} parent=0 // loop_pre_header
    _
  $region3: #{forward.10} parent=0 // loop_header
    %s9 = sphi 0, %s13
    %p10 = scmp.ge.s32.totalorder %s9, 10
    %s16 = sphi 0, %s35
    %s17 = sphi 0, %s31
    %s18 = sphi 0, %s27
    %s19 = sphi 0, %s16
    %s20 = sphi 0, %s17
    %s21 = sphi 0, %s18
    %s22 = sphi 0, %s19
    %s23 = sphi 0, %s20
    %s24 = sphi 0, %s21
    %s40 = sphi 0, %s42
    %s43 = sphi 0, %s40
    %s44 = sphi 0, %s43
    %s60 = sphi 0, %s44
    %s72 = sphi 0, %s74
    %s75 = sphi 0, %s72
    %s76 = sphi 0, %s75
    %s92 = sphi 0, %s76
    %s104 = sphi 0, %s106
    %s107 = sphi 0, %s104
    %s108 = sphi 0, %s107
    %s124 = sphi 0, %s108
    %s132 = sphi 0, %s134
    %s135 = sphi 0, %s132
    %s136 = sphi 0, %s135
    %s152 = sphi 0, %s136
  $region4: #{forward.10} parent=0 // loop_header_branch
    %12 = sbr.rel (%p10) target = $region8
  $region5: #{forward.10} parent=0 // loop_body
    %s14 = ssub.s32 %s9, 1
    %s15 = ssub.s32 %s9, 2
    %s25 = sadd.s32 1, %s18
    %p26 = scmp.ge.s32.totalorder %s25, 1
    %s27 = scalar_select %p26, 0, %s25
    %s28 = sadd.s32 1, %s17
    %s29 = scalar_select %p26, %s28, %s17
    %p30 = scmp.ge.s32.totalorder %s29, 1
    %s31 = scalar_select %p30, 0, %s29
    %s32 = sadd.s32 1, %s16
    %s33 = scalar_select %p30, %s32, %s16
    %p34 = scmp.ge.s32.totalorder %s33, 8
    %s35 = scalar_select %p34, 0, %s33
    %s36 = ssub.s32 %s16, %s35
    %s37 = ssub.s32 %s17, %s31
    %s38 = sor.u32 %s36, %s37
    %p39 = scmp.eq.s32.totalorder %s38, 0
    %s41 = sadd.s32 %s40, 1
    %s42 = scalar_select %p39, %s40, %s41
    %p45 = pneg %p39
    %p46 = scmp.eq.s32.totalorder %s9, 7
    %p47 = por %p45, %p46
    %p48 = scmp.ne.s32.totalorder %s40, %s43
    %p49 = scmp.eq.s32.totalorder %s9, 0
    %p50 = por %p48, %p49
    %p51 = scmp.ne.s32.totalorder %s40, %s43
    %p52 = scmp.eq.s32.totalorder %s14, 7
    %p53 = por %p51, %p52
    %p54 = scmp.ne.s32.totalorder %s43, %s44
    %p55 = scmp.eq.s32.totalorder %s14, 0
    %p56 = por %p54, %p55
    %p57 = scmp.ne.s32.totalorder %s43, %s44
    %p58 = scmp.eq.s32.totalorder %s15, 7
    %p59 = por %p57, %p58
    %p61 = scmp.ne.s32.totalorder %s44, %s60
    %p62 = scmp.eq.s32.totalorder %s15, 0
    %p63 = por %p61, %p62
    %p64 = scmp.lt.s32.totalorder %s18, %s17
    %s65 = scalar_select %p64, %s18, %s17
    %p66 = scmp.lt.s32.totalorder %s27, %s31
    %s67 = scalar_select %p66, %s27, %s31
    %s68 = ssub.s32 %s16, %s35
    %s69 = ssub.s32 %s65, %s67
    %s70 = sor.u32 %s68, %s69
    %p71 = scmp.eq.s32.totalorder %s70, 0
    %s73 = sadd.s32 %s72, 1
    %s74 = scalar_select %p71, %s72, %s73
    %p77 = pneg %p71
    %p78 = scmp.eq.s32.totalorder %s9, 7
    %p79 = por %p77, %p78
    %p80 = scmp.ne.s32.totalorder %s72, %s75
    %p81 = scmp.eq.s32.totalorder %s9, 0
    %p82 = por %p80, %p81
    %p83 = scmp.ne.s32.totalorder %s72, %s75
    %p84 = scmp.eq.s32.totalorder %s14, 7
    %p85 = por %p83, %p84
    %p86 = scmp.ne.s32.totalorder %s75, %s76
    %p87 = scmp.eq.s32.totalorder %s14, 0
    %p88 = por %p86, %p87
    %p89 = scmp.ne.s32.totalorder %s75, %s76
    %p90 = scmp.eq.s32.totalorder %s15, 7
    %p91 = por %p89, %p90
    %p93 = scmp.ne.s32.totalorder %s76, %s92
    %p94 = scmp.eq.s32.totalorder %s15, 0
    %p95 = por %p93, %p94
    %p96 = scmp.lt.s32.totalorder %s18, %s17
    %s97 = scalar_select %p96, %s18, %s17
    %p98 = scmp.lt.s32.totalorder %s27, %s31
    %s99 = scalar_select %p98, %s27, %s31
    %s100 = ssub.s32 %s16, %s35
    %s101 = ssub.s32 %s97, %s99
    %s102 = sor.u32 %s100, %s101
    %p103 = scmp.eq.s32.totalorder %s102, 0
    %s105 = sadd.s32 %s104, 1
    %s106 = scalar_select %p103, %s104, %s105
    %p109 = pneg %p103
    %p110 = scmp.eq.s32.totalorder %s9, 7
    %p111 = por %p109, %p110
    %p112 = scmp.ne.s32.totalorder %s104, %s107
    %p113 = scmp.eq.s32.totalorder %s9, 0
    %p114 = por %p112, %p113
    %p115 = scmp.ne.s32.totalorder %s104, %s107
    %p116 = scmp.eq.s32.totalorder %s14, 7
    %p117 = por %p115, %p116
    %p118 = scmp.ne.s32.totalorder %s107, %s108
    %p119 = scmp.eq.s32.totalorder %s14, 0
    %p120 = por %p118, %p119
    %p121 = scmp.ne.s32.totalorder %s107, %s108
    %p122 = scmp.eq.s32.totalorder %s15, 7
    %p123 = por %p121, %p122
    %p125 = scmp.ne.s32.totalorder %s108, %s124
    %p126 = scmp.eq.s32.totalorder %s15, 0
    %p127 = por %p125, %p126
    %s128 = ssub.s32 %s16, %s35
    %s129 = ssub.s32 %s17, %s31
    %s130 = sor.u32 %s128, %s129
    %p131 = scmp.eq.s32.totalorder %s130, 0
    %s133 = sadd.s32 %s132, 1
    %s134 = scalar_select %p131, %s132, %s133
    %p137 = pneg %p131
    %p138 = scmp.eq.s32.totalorder %s9, 7
    %p139 = por %p137, %p138
    %p140 = scmp.ne.s32.totalorder %s132, %s135
    %p141 = scmp.eq.s32.totalorder %s9, 0
    %p142 = por %p140, %p141
    %p143 = scmp.ne.s32.totalorder %s132, %s135
    %p144 = scmp.eq.s32.totalorder %s14, 7
    %p145 = por %p143, %p144
    %p146 = scmp.ne.s32.totalorder %s135, %s136
    %p147 = scmp.eq.s32.totalorder %s14, 0
    %p148 = por %p146, %p147
    %p149 = scmp.ne.s32.totalorder %s135, %s136
    %p150 = scmp.eq.s32.totalorder %s15, 7
    %p151 = por %p149, %p150
    %p153 = scmp.ne.s32.totalorder %s136, %s152
    %p154 = scmp.eq.s32.totalorder %s15, 0
    %p155 = por %p153, %p154
    %p156 = scmp.le.s32.totalorder 1, %s9
    %p157 = scmp.lt.s32.totalorder %s9, 9
    %p158 = pnand %p156, %p157
    %p159 = pneg %p158
    // Predicated region
    $region9: #{forward.10} parent=5 // pred_check
      _
    $region10: #{forward.10} parent=5 // pred_check_branch
      %161 = sbr.rel (%p158) target = $region12
    $region11: #{forward.10} parent=5 // pred_region
      %s162 = ssub.s32 %s9, 1
    $region12: #{forward.10} parent=5 // pred_fallthru
      _
    %p163 = scmp.lt.s32.totalorder %s9, 8
    // Predicated region
    $region13: #{forward.10} parent=5 // pred_check
      %p164 = pneg %p163
    $region14: #{forward.10} parent=5 // pred_check_branch
      %166 = sbr.rel (%p164) target = $region16
    $region15: #{forward.10} parent=5 // pred_region
      // Predicated region
      $region17: #{forward.10} parent=15 // pred_check
        %p167 = pneg %p50
      $region18: #{forward.10} parent=15 // pred_check_branch
        %169 = sbr.rel (%p167) target = $region20
      $region19: #{forward.10} parent=15 // pred_region
        %s170 = smul.u32 8, %s17
        %p171 = scmp.lt.s32.totalorder %s16, 7
        %s172 = scalar_select %p171, %s16, 7
        %p173 = scmp.lt.s32.totalorder %s170, 7
        %s174 = scalar_select %p173, %s170, 7
        %s175 = smul.addr %s172, 8
        %s176 = sadd.s32 %s174, %s175
        %s177 = smul.addr %s176, 4
        %s178 = scalar_lea.vmem %s0, %s177
        %s179 = smul.u32 8, %s17
      $region20: #{forward.10} parent=15 // pred_fallthru
        _
      // Predicated region
      $region21: #{forward.10} parent=15 // pred_check
        %p180 = pneg %p82
      $region22: #{forward.10} parent=15 // pred_check_branch
        %182 = sbr.rel (%p180) target = $region24
      $region23: #{forward.10} parent=15 // pred_region
        %p183 = scmp.lt.s32.totalorder %s18, %s17
        %s184 = scalar_select %p183, %s18, %s17
        %s185 = smul.u32 8, %s184
        %p186 = scmp.lt.s32.totalorder %s16, 7
        %s187 = scalar_select %p186, %s16, 7
        %p188 = scmp.lt.s32.totalorder %s185, 7
        %s189 = scalar_select %p188, %s185, 7
        %s190 = smul.addr %s187, 8
        %s191 = sadd.s32 %s189, %s190
        %s192 = smul.addr %s191, 4
        %s193 = scalar_lea.vmem %s1, %s192
        %p194 = scmp.lt.s32.totalorder %s18, %s17
        %s195 = scalar_select %p194, %s18, %s17
        %s196 = smul.u32 8, %s195
      $region24: #{forward.10} parent=15 // pred_fallthru
        _
      // Predicated region
      $region25: #{forward.10} parent=15 // pred_check
        %p197 = pneg %p114
      $region26: #{forward.10} parent=15 // pred_check_branch
        %199 = sbr.rel (%p197) target = $region28
      $region27: #{forward.10} parent=15 // pred_region
        %p200 = scmp.lt.s32.totalorder %s18, %s17
        %s201 = scalar_select %p200, %s18, %s17
        %s202 = smul.u32 8, %s201
        %p203 = scmp.lt.s32.totalorder %s16, 7
        %s204 = scalar_select %p203, %s16, 7
        %p205 = scmp.lt.s32.totalorder %s202, 7
        %s206 = scalar_select %p205, %s202, 7
        %s207 = smul.addr %s204, 8
        %s208 = sadd.s32 %s206, %s207
        %s209 = smul.addr %s208, 4
        %s210 = scalar_lea.vmem %s2, %s209
        %p211 = scmp.lt.s32.totalorder %s18, %s17
        %s212 = scalar_select %p211, %s18, %s17
        %s213 = smul.u32 8, %s212
      $region28: #{forward.10} parent=15 // pred_fallthru
        _
    $region16: #{forward.10} parent=5 // pred_fallthru
      _
    %p214 = scmp.le.s32.totalorder 1, %s9
    %p215 = scmp.lt.s32.totalorder %s9, 9
    %p216 = pnand %p214, %p215
    %p217 = pneg %p216
    // Predicated region
    $region29: #{forward.10} parent=5 // pred_check
      _
    $region30: #{forward.10} parent=5 // pred_check_branch
      %219 = sbr.rel (%p216) target = $region32
    $region31: #{forward.10} parent=5 // pred_region
      %s220 = ssub.s32 %s9, 1
      %s221 = smul.u32 8, %s20
      %p222 = scmp.lt.s32.totalorder %s19, 7
      %s223 = scalar_select %p222, %s19, 7
      %p224 = scmp.lt.s32.totalorder %s221, 7
      %s225 = scalar_select %p224, %s221, 7
      %s226 = smul.addr %s223, 8
      %s227 = sadd.s32 %s225, %s226
      %s228 = smul.addr %s227, 4
      %s229 = scalar_lea.vmem %s0, %s228
      %p230 = pneg %p56
      %p231 = pneg %p53
      %p232 = scmp.lt.s32.totalorder %s21, %s20
      %s233 = scalar_select %p232, %s21, %s20
      %s234 = smul.u32 8, %s233
      %p235 = scmp.lt.s32.totalorder %s19, 7
      %s236 = scalar_select %p235, %s19, 7
      %p237 = scmp.lt.s32.totalorder %s234, 7
      %s238 = scalar_select %p237, %s234, 7
      %s239 = smul.addr %s236, 8
      %s240 = sadd.s32 %s238, %s239
      %s241 = smul.addr %s240, 4
      %s242 = scalar_lea.vmem %s1, %s241
      %p243 = pneg %p88
      %p244 = pneg %p85
      %p245 = scmp.lt.s32.totalorder %s21, %s20
      %s246 = scalar_select %p245, %s21, %s20
      %s247 = smul.u32 8, %s246
      %p248 = scmp.lt.s32.totalorder %s19, 7
      %s249 = scalar_select %p248, %s19, 7
      %p250 = scmp.lt.s32.totalorder %s247, 7
      %s251 = scalar_select %p250, %s247, 7
      %s252 = smul.addr %s249, 8
      %s253 = sadd.s32 %s251, %s252
      %s254 = smul.addr %s253, 4
      %s255 = scalar_lea.vmem %s2, %s254
      %p256 = pneg %p120
      %p257 = pneg %p117
      %p258 = pneg %p148
      %p259 = pneg %p145
      %s260 = smul.u32 8, %s20
      %p261 = scmp.lt.s32.totalorder %s19, 7
      %s262 = scalar_select %p261, %s19, 7
      %p263 = scmp.lt.s32.totalorder %s260, 7
      %s264 = scalar_select %p263, %s260, 7
      %s265 = smul.addr %s262, 8
      %s266 = sadd.s32 %s264, %s265
      %s267 = smul.addr %s266, 4
      %s268 = scalar_lea.vmem %s3, %s267
      %s269 = smul.u32 8, %s20
      %p270 = scmp.lt.s32.totalorder %s19, 7
      %s271 = scalar_select %p270, %s19, 7
      %p272 = scmp.lt.s32.totalorder %s269, 7
      %s273 = scalar_select %p272, %s269, 7
      %s274 = smul.addr %s271, 8
      %s275 = sadd.s32 %s273, %s274
      %s276 = smul.addr %s275, 4
      %s277 = scalar_lea.vmem %s0, %s276
      %s278 = smul.u32 8, %s20
      %p279 = scmp.lt.s32.totalorder %s21, %s20
      %s280 = scalar_select %p279, %s21, %s20
      %s281 = smul.u32 8, %s280
      %p282 = scmp.lt.s32.totalorder %s19, 7
      %s283 = scalar_select %p282, %s19, 7
      %p284 = scmp.lt.s32.totalorder %s281, 7
      %s285 = scalar_select %p284, %s281, 7
      %s286 = smul.addr %s283, 8
      %s287 = sadd.s32 %s285, %s286
      %s288 = smul.addr %s287, 4
      %s289 = scalar_lea.vmem %s1, %s288
      %p290 = scmp.lt.s32.totalorder %s21, %s20
      %s291 = scalar_select %p290, %s21, %s20
      %s292 = smul.u32 8, %s291
      %p293 = scmp.lt.s32.totalorder %s21, %s20
      %s294 = scalar_select %p293, %s21, %s20
      %s295 = smul.u32 8, %s294
      %p296 = scmp.lt.s32.totalorder %s19, 7
      %s297 = scalar_select %p296, %s19, 7
      %p298 = scmp.lt.s32.totalorder %s295, 7
      %s299 = scalar_select %p298, %s295, 7
      %s300 = smul.addr %s297, 8
      %s301 = sadd.s32 %s299, %s300
      %s302 = smul.addr %s301, 4
      %s303 = scalar_lea.vmem %s2, %s302
      %p304 = scmp.lt.s32.totalorder %s21, %s20
      %s305 = scalar_select %p304, %s21, %s20
      %s306 = smul.u32 8, %s305
      %s307 = smul.u32 8, %s20
      %p308 = scmp.lt.s32.totalorder %s19, 7
      %s309 = scalar_select %p308, %s19, 7
      %p310 = scmp.lt.s32.totalorder %s307, 7
      %s311 = scalar_select %p310, %s307, 7
      %s312 = smul.addr %s309, 8
      %s313 = sadd.s32 %s311, %s312
      %s314 = smul.addr %s313, 4
      %s315 = scalar_lea.vmem %s3, %s314
      %s316 = smul.u32 8, %s20
      %p318 = scmp.eq.s32.totalorder %s21, 0
      // Predicated region
      $region33: #{forward.10} parent=31 // pred_check
        %p319 = pneg %p318
      $region34: #{forward.10} parent=31 // pred_check_branch
        %321 = sbr.rel (%p319) target = $region36
      $region35: #{forward.10} parent=31 // pred_region
        %vm322 = vcmask 7168
        %323 = vst.msk [vmem:[#allocation2] sm:$0xff] %vm322, -1e+30
        %324 = vst.msk [vmem:[#allocation2 + $0x8] sm:$0xff] %vm322, -1e+30
        %325 = vst.msk [vmem:[#allocation2 + $0x10] sm:$0xff] %vm322, -1e+30
        %326 = vst.msk [vmem:[#allocation2 + $0x18] sm:$0xff] %vm322, -1e+30
        %327 = vst.msk [vmem:[#allocation2 + $0x20] sm:$0xff] %vm322, -1e+30
        %328 = vst.msk [vmem:[#allocation2 + $0x28] sm:$0xff] %vm322, -1e+30
        %329 = vst.msk [vmem:[#allocation2 + $0x30] sm:$0xff] %vm322, -1e+30
        %330 = vst.msk [vmem:[#allocation2 + $0x38] sm:$0xff] %vm322, -1e+30
        %331 = vst.msk [vmem:[#allocation3] sm:$0xff] %vm322, 0.0
        %332 = vst.msk [vmem:[#allocation3 + $0x8] sm:$0xff] %vm322, 0.0
        %333 = vst.msk [vmem:[#allocation3 + $0x10] sm:$0xff] %vm322, 0.0
        %334 = vst.msk [vmem:[#allocation3 + $0x18] sm:$0xff] %vm322, 0.0
        %335 = vst.msk [vmem:[#allocation3 + $0x20] sm:$0xff] %vm322, 0.0
        %336 = vst.msk [vmem:[#allocation3 + $0x28] sm:$0xff] %vm322, 0.0
        %337 = vst.msk [vmem:[#allocation3 + $0x30] sm:$0xff] %vm322, 0.0
        %338 = vst.msk [vmem:[#allocation3 + $0x38] sm:$0xff] %vm322, 0.0
        %vm339 = vcmask 261120
        %340 = vst.msk [vmem:[#allocation4] sm:$0xff] %vm339, 0.0
        %341 = vst.msk [vmem:[#allocation4 + $0x8] sm:$0xff] %vm339, 0.0
        %342 = vst.msk [vmem:[#allocation4 + $0x10] sm:$0xff] %vm339, 0.0
        %343 = vst.msk [vmem:[#allocation4 + $0x18] sm:$0xff] %vm339, 0.0
        %344 = vst.msk [vmem:[#allocation4 + $0x20] sm:$0xff] %vm339, 0.0
        %345 = vst.msk [vmem:[#allocation4 + $0x28] sm:$0xff] %vm339, 0.0
        %346 = vst.msk [vmem:[#allocation4 + $0x30] sm:$0xff] %vm339, 0.0
        %347 = vst.msk [vmem:[#allocation4 + $0x38] sm:$0xff] %vm339, 0.0
      $region36: #{forward.10} parent=31 // pred_fallthru
        _
      %p348 = scmp.lt.s32.totalorder %s21, %s20
      // Predicated region
      $region37: #{forward.10} parent=31 // pred_check
        %p349 = pneg %p348
      $region38: #{forward.10} parent=31 // pred_check_branch
        %351 = sbr.rel (%p349) target = $region40
      $region39: #{forward.10} parent=31 // pred_region
        %v352 = vld [vmem:[%s277] sm:$0xf]
        %v353 = vld [vmem:[%s277 + $0x4] sm:$0xf]
        %v354 = vld [vmem:[%s277 + $0x8] sm:$0xf]
        %v355 = vld [vmem:[%s277 + $0xc] sm:$0xf]
        %v356 = vld [vmem:[%s277 + $0x10] sm:$0xf]
        %v357 = vld [vmem:[%s277 + $0x14] sm:$0xf]
        %v358 = vld [vmem:[%s277 + $0x18] sm:$0xf]
        %v359 = vld [vmem:[%s277 + $0x1c] sm:$0xf]
        %v360 = vld [vmem:[%s289] sm:$0xf]
        %v361 = vld [vmem:[%s289 + $0x4] sm:$0xf]
        %v362 = vld [vmem:[%s289 + $0x8] sm:$0xf]
        %v363 = vld [vmem:[%s289 + $0xc] sm:$0xf]
        %v364 = vld [vmem:[%s289 + $0x10] sm:$0xf]
        %v365 = vld [vmem:[%s289 + $0x14] sm:$0xf]
        %v366 = vld [vmem:[%s289 + $0x18] sm:$0xf]
        %v367 = vld [vmem:[%s289 + $0x1c] sm:$0xf]
        %v376 = vunpack.c.l.b16 %v352
        %v377 = vunpack.c.l.b16 %v353
        %v378 = vunpack.c.l.b16 %v354
        %v379 = vunpack.c.l.b16 %v355
        %v380 = vunpack.c.l.b16 %v356
        %v381 = vunpack.c.l.b16 %v357
        %v382 = vunpack.c.l.b16 %v358
        %v383 = vunpack.c.l.b16 %v359
        %v384 = vpack.c.b16 %v377, %v376
        %v385 = vpack.c.b16 %v379, %v378
        %v386 = vpack.c.b16 %v381, %v380
        %v387 = vpack.c.b16 %v383, %v382
        %v396 = vunpack.c.l.b16 %v360
        %v397 = vunpack.c.l.b16 %v361
        %v398 = vunpack.c.l.b16 %v362
        %v399 = vunpack.c.l.b16 %v363
        %v400 = vunpack.c.l.b16 %v364
        %v401 = vunpack.c.l.b16 %v365
        %v402 = vunpack.c.l.b16 %v366
        %v403 = vunpack.c.l.b16 %v367
        %v404 = vpack.c.b16 %v397, %v396
        %v405 = vpack.c.b16 %v399, %v398
        %v406 = vpack.c.b16 %v401, %v400
        %v407 = vpack.c.b16 %v403, %v402
        %vm408 = vcmask 261120
        %v410 = vsel %vm408, %v384, 0
        %v413 = vsel %vm408, %v385, 0
        %v416 = vsel %vm408, %v386, 0
        %v419 = vsel %vm408, %v387, 0
        %v422 = vsel %vm408, %v404, 0
        %v425 = vsel %vm408, %v405, 0
        %v428 = vsel %vm408, %v406, 0
        %v431 = vsel %vm408, %v407, 0
        %433 = vmatpush.bf16.xpose.msra.mxu0 0
        %434 = vmatpush.bf16.xpose.msra.mxu0 0
        %435 = vmatpush.bf16.xpose.msra.mxu0 0
        %436 = vmatpush.bf16.xpose.msra.mxu0 0
        %437 = vmatpush.bf16.xpose.msra.mxu0 %v431
        %438 = vmatpush.bf16.xpose.msra.mxu0 %v428
        %439 = vmatpush.bf16.xpose.msra.mxu0 %v425
        %440 = vmatpush.bf16.xpose.msra.mxu0 %v422
        %441 = vmatmul.bf16.gmra.mxu0 %v410
        %v442 = vpop.f32.mrf.mxu0
        %v443 = vadd.f32 0.0, %v442
        %v444 = vpop.f32.mrf.mxu0
        %v445 = vadd.f32 0.0, %v444
        %446 = vmatmul.bf16.gmra.mxu0 %v413
        %v447 = vpop.f32.mrf.mxu0
        %v448 = vadd.f32 0.0, %v447
        %v449 = vpop.f32.mrf.mxu0
        %v450 = vadd.f32 0.0, %v449
        %451 = vmatmul.bf16.gmra.mxu0 %v416
        %v452 = vpop.f32.mrf.mxu0
        %v453 = vadd.f32 0.0, %v452
        %v454 = vpop.f32.mrf.mxu0
        %v455 = vadd.f32 0.0, %v454
        %456 = vmatmul.bf16.gmra.mxu0 %v419
        %v457 = vpop.f32.mrf.mxu0
        %v458 = vadd.f32 0.0, %v457
        %v459 = vpop.f32.mrf.mxu0
        %v460 = vadd.f32 0.0, %v459
        %461 = vdwg.mxu0
        %v462 = vmul.f32 %v443, 0.17677669
        %v463 = vmul.f32 %v445, 0.17677669
        %v464 = vmul.f32 %v448, 0.17677669
        %v465 = vmul.f32 %v450, 0.17677669
        %v466 = vmul.f32 %v453, 0.17677669
        %v467 = vmul.f32 %v455, 0.17677669
        %v468 = vmul.f32 %v458, 0.17677669
        %v469 = vmul.f32 %v460, 0.17677669
        %v470 = vld [vmem:[#allocation2] sm:$0xff]
        %v471 = vld [vmem:[#allocation2 + $0x8] sm:$0xff]
        %v472 = vld [vmem:[#allocation2 + $0x10] sm:$0xff]
        %v473 = vld [vmem:[#allocation2 + $0x18] sm:$0xff]
        %v474 = vld [vmem:[#allocation2 + $0x20] sm:$0xff]
        %v475 = vld [vmem:[#allocation2 + $0x28] sm:$0xff]
        %v476 = vld [vmem:[#allocation2 + $0x30] sm:$0xff]
        %v477 = vld [vmem:[#allocation2 + $0x38] sm:$0xff]
        %vm478 = vcmask 523264
        %v479 = vsel %vm478, %v462, -inf
        %480 = vmax.xlane.f32.xlu0 %v479
        %v481 = vpop.xlane.xlu0 %480
        %v482 = vsel %vm478, %v463, -inf
        %483 = vmax.xlane.f32.xlu0 %v482
        %v484 = vpop.xlane.xlu0 %483
        %v485 = vsel %vm478, %v464, -inf
        %486 = vmax.xlane.f32.xlu0 %v485
        %v487 = vpop.xlane.xlu0 %486
        %v488 = vsel %vm478, %v465, -inf
        %489 = vmax.xlane.f32.xlu0 %v488
        %v490 = vpop.xlane.xlu0 %489
        %v491 = vsel %vm478, %v466, -inf
        %492 = vmax.xlane.f32.xlu0 %v491
        %v493 = vpop.xlane.xlu0 %492
        %v494 = vsel %vm478, %v467, -inf
        %495 = vmax.xlane.f32.xlu0 %v494
        %v496 = vpop.xlane.xlu0 %495
        %v497 = vsel %vm478, %v468, -inf
        %498 = vmax.xlane.f32.xlu0 %v497
        %v499 = vpop.xlane.xlu0 %498
        %v500 = vsel %vm478, %v469, -inf
        %501 = vmax.xlane.f32.xlu0 %v500
        %v502 = vpop.xlane.xlu0 %501
        %v503 = vmax.f32 %v470, %v481
        %v504 = vmax.f32 %v471, %v484
        %v505 = vmax.f32 %v472, %v487
        %v506 = vmax.f32 %v473, %v490
        %v507 = vmax.f32 %v474, %v493
        %v508 = vmax.f32 %v475, %v496
        %v509 = vmax.f32 %v476, %v499
        %v510 = vmax.f32 %v477, %v502
        %v511 = vsub.f32 %v470, %v503
        %v512 = vsub.f32 %v471, %v504
        %v513 = vsub.f32 %v472, %v505
        %v514 = vsub.f32 %v473, %v506
        %v515 = vsub.f32 %v474, %v507
        %v516 = vsub.f32 %v475, %v508
        %v517 = vsub.f32 %v476, %v509
        %v518 = vsub.f32 %v477, %v510
        %v519 = vmul.f32 %v511, 1.442695
        %v520 = vpow.pop %v519
        %v521 = vmul.f32 %v512, 1.442695
        %v522 = vpow.pop %v521
        %v523 = vmul.f32 %v513, 1.442695
        %v524 = vpow.pop %v523
        %v525 = vmul.f32 %v514, 1.442695
        %v526 = vpow.pop %v525
        %v527 = vmul.f32 %v515, 1.442695
        %v528 = vpow.pop %v527
        %v529 = vmul.f32 %v516, 1.442695
        %v530 = vpow.pop %v529
        %v531 = vmul.f32 %v517, 1.442695
        %v532 = vpow.pop %v531
        %v533 = vmul.f32 %v518, 1.442695
        %v534 = vpow.pop %v533
        %536 = vset.pattern.permute.xlu0 0
        %537 = vperm.xlu0 %536, %v503
        %v538 = vpop.permute.xlu0 %537
        %541 = vset.pattern.permute.xlu0 0
        %542 = vperm.xlu0 %541, %v504
        %v543 = vpop.permute.xlu0 %542
        %546 = vset.pattern.permute.xlu0 0
        %547 = vperm.xlu0 %546, %v505
        %v548 = vpop.permute.xlu0 %547
        %551 = vset.pattern.permute.xlu0 0
        %552 = vperm.xlu0 %551, %v506
        %v553 = vpop.permute.xlu0 %552
        %556 = vset.pattern.permute.xlu0 0
        %557 = vperm.xlu0 %556, %v507
        %v558 = vpop.permute.xlu0 %557
        %561 = vset.pattern.permute.xlu0 0
        %562 = vperm.xlu0 %561, %v508
        %v563 = vpop.permute.xlu0 %562
        %566 = vset.pattern.permute.xlu0 0
        %567 = vperm.xlu0 %566, %v509
        %v568 = vpop.permute.xlu0 %567
        %571 = vset.pattern.permute.xlu0 0
        %572 = vperm.xlu0 %571, %v510
        %v573 = vpop.permute.xlu0 %572
        %v575 = vsub.f32 %v462, %v538
        %v576 = vsub.f32 %v463, %v543
        %v577 = vsub.f32 %v464, %v548
        %v578 = vsub.f32 %v465, %v553
        %v579 = vsub.f32 %v466, %v558
        %v580 = vsub.f32 %v467, %v563
        %v581 = vsub.f32 %v468, %v568
        %v582 = vsub.f32 %v469, %v573
        %v583 = vmul.f32 %v575, 1.442695
        %v584 = vpow.pop %v583
        %v585 = vmul.f32 %v576, 1.442695
        %v586 = vpow.pop %v585
        %v587 = vmul.f32 %v577, 1.442695
        %v588 = vpow.pop %v587
        %v589 = vmul.f32 %v578, 1.442695
        %v590 = vpow.pop %v589
        %v591 = vmul.f32 %v579, 1.442695
        %v592 = vpow.pop %v591
        %v593 = vmul.f32 %v580, 1.442695
        %v594 = vpow.pop %v593
        %v595 = vmul.f32 %v581, 1.442695
        %v596 = vpow.pop %v595
        %v597 = vmul.f32 %v582, 1.442695
        %v598 = vpow.pop %v597
        %v599 = vld [vmem:[#allocation3] sm:$0xff]
        %v600 = vld [vmem:[#allocation3 + $0x8] sm:$0xff]
        %v601 = vld [vmem:[#allocation3 + $0x10] sm:$0xff]
        %v602 = vld [vmem:[#allocation3 + $0x18] sm:$0xff]
        %v603 = vld [vmem:[#allocation3 + $0x20] sm:$0xff]
        %v604 = vld [vmem:[#allocation3 + $0x28] sm:$0xff]
        %v605 = vld [vmem:[#allocation3 + $0x30] sm:$0xff]
        %v606 = vld [vmem:[#allocation3 + $0x38] sm:$0xff]
        %v607 = vmul.f32 %v520, %v599
        %v608 = vmul.f32 %v522, %v600
        %v609 = vmul.f32 %v524, %v601
        %v610 = vmul.f32 %v526, %v602
        %v611 = vmul.f32 %v528, %v603
        %v612 = vmul.f32 %v530, %v604
        %v613 = vmul.f32 %v532, %v605
        %v614 = vmul.f32 %v534, %v606
        %v615 = vsel %vm478, %v584, 0.0
        %616 = vadd.xlane.f32.xlu0 %v615
        %v617 = vpop.xlane.xlu0 %616
        %v618 = vsel %vm478, %v586, 0.0
        %619 = vadd.xlane.f32.xlu0 %v618
        %v620 = vpop.xlane.xlu0 %619
        %v621 = vsel %vm478, %v588, 0.0
        %622 = vadd.xlane.f32.xlu0 %v621
        %v623 = vpop.xlane.xlu0 %622
        %v624 = vsel %vm478, %v590, 0.0
        %625 = vadd.xlane.f32.xlu0 %v624
        %v626 = vpop.xlane.xlu0 %625
        %v627 = vsel %vm478, %v592, 0.0
        %628 = vadd.xlane.f32.xlu0 %v627
        %v629 = vpop.xlane.xlu0 %628
        %v630 = vsel %vm478, %v594, 0.0
        %631 = vadd.xlane.f32.xlu0 %v630
        %v632 = vpop.xlane.xlu0 %631
        %v633 = vsel %vm478, %v596, 0.0
        %634 = vadd.xlane.f32.xlu0 %v633
        %v635 = vpop.xlane.xlu0 %634
        %v636 = vsel %vm478, %v598, 0.0
        %637 = vadd.xlane.f32.xlu0 %v636
        %v638 = vpop.xlane.xlu0 %637
        %v639 = vadd.f32 %v607, %v617
        %v640 = vadd.f32 %v608, %v620
        %v641 = vadd.f32 %v609, %v623
        %v642 = vadd.f32 %v610, %v626
        %v643 = vadd.f32 %v611, %v629
        %v644 = vadd.f32 %v612, %v632
        %v645 = vadd.f32 %v613, %v635
        %v646 = vadd.f32 %v614, %v638
        %vm647 = vcmask 7168
        %648 = vst.msk [vmem:[#allocation3] sm:$0xff] %vm647, %v639
        %649 = vst.msk [vmem:[#allocation3 + $0x8] sm:$0xff] %vm647, %v640
        %650 = vst.msk [vmem:[#allocation3 + $0x10] sm:$0xff] %vm647, %v641
        %651 = vst.msk [vmem:[#allocation3 + $0x18] sm:$0xff] %vm647, %v642
        %652 = vst.msk [vmem:[#allocation3 + $0x20] sm:$0xff] %vm647, %v643
        %653 = vst.msk [vmem:[#allocation3 + $0x28] sm:$0xff] %vm647, %v644
        %654 = vst.msk [vmem:[#allocation3 + $0x30] sm:$0xff] %vm647, %v645
        %655 = vst.msk [vmem:[#allocation3 + $0x38] sm:$0xff] %vm647, %v646
        %v656 = vld [vmem:[#allocation4] sm:$0xff]
        %v657 = vld [vmem:[#allocation4 + $0x8] sm:$0xff]
        %v658 = vld [vmem:[#allocation4 + $0x10] sm:$0xff]
        %v659 = vld [vmem:[#allocation4 + $0x18] sm:$0xff]
        %v660 = vld [vmem:[#allocation4 + $0x20] sm:$0xff]
        %v661 = vld [vmem:[#allocation4 + $0x28] sm:$0xff]
        %v662 = vld [vmem:[#allocation4 + $0x30] sm:$0xff]
        %v663 = vld [vmem:[#allocation4 + $0x38] sm:$0xff]
        %665 = vset.pattern.permute.xlu0 0
        %666 = vperm.xlu0 %665, %v520
        %v667 = vpop.permute.xlu0 %666
        %670 = vset.pattern.permute.xlu0 0
        %671 = vperm.xlu0 %670, %v522
        %v672 = vpop.permute.xlu0 %671
        %675 = vset.pattern.permute.xlu0 0
        %676 = vperm.xlu0 %675, %v524
        %v677 = vpop.permute.xlu0 %676
        %680 = vset.pattern.permute.xlu0 0
        %681 = vperm.xlu0 %680, %v526
        %v682 = vpop.permute.xlu0 %681
        %685 = vset.pattern.permute.xlu0 0
        %686 = vperm.xlu0 %685, %v528
        %v687 = vpop.permute.xlu0 %686
        %690 = vset.pattern.permute.xlu0 0
        %691 = vperm.xlu0 %690, %v530
        %v692 = vpop.permute.xlu0 %691
        %695 = vset.pattern.permute.xlu0 0
        %696 = vperm.xlu0 %695, %v532
        %v697 = vpop.permute.xlu0 %696
        %700 = vset.pattern.permute.xlu0 0
        %701 = vperm.xlu0 %700, %v534
        %v702 = vpop.permute.xlu0 %701
        %v704 = vmul.f32 %v667, %v656
        %v705 = vmul.f32 %v672, %v657
        %v706 = vmul.f32 %v677, %v658
        %v707 = vmul.f32 %v682, %v659
        %v708 = vmul.f32 %v687, %v660
        %v709 = vmul.f32 %v692, %v661
        %v710 = vmul.f32 %v697, %v662
        %v711 = vmul.f32 %v702, %v663
        %v712 = vpack.c.bf16 %v586, %v584
        %v713 = vpack.c.bf16 %v590, %v588
        %v714 = vpack.c.bf16 %v594, %v592
        %v715 = vpack.c.bf16 %v598, %v596
        %v716 = vld [vmem:[%s303] sm:$0xf]
        %v717 = vld [vmem:[%s303 + $0x4] sm:$0xf]
        %v718 = vld [vmem:[%s303 + $0x8] sm:$0xf]
        %v719 = vld [vmem:[%s303 + $0xc] sm:$0xf]
        %v720 = vld [vmem:[%s303 + $0x10] sm:$0xf]
        %v721 = vld [vmem:[%s303 + $0x14] sm:$0xf]
        %v722 = vld [vmem:[%s303 + $0x18] sm:$0xf]
        %v723 = vld [vmem:[%s303 + $0x1c] sm:$0xf]
        %v732 = vunpack.c.l.b16 %v716
        %v733 = vunpack.c.l.b16 %v717
        %v734 = vunpack.c.l.b16 %v718
        %v735 = vunpack.c.l.b16 %v719
        %v736 = vunpack.c.l.b16 %v720
        %v737 = vunpack.c.l.b16 %v721
        %v738 = vunpack.c.l.b16 %v722
        %v739 = vunpack.c.l.b16 %v723
        %v740 = vpack.c.b16 %v733, %v732
        %v741 = vpack.c.b16 %v735, %v734
        %v742 = vpack.c.b16 %v737, %v736
        %v743 = vpack.c.b16 %v739, %v738
        %v749 = vsel %vm478, %v712, 0
        %v752 = vsel %vm478, %v713, 0
        %v755 = vsel %vm478, %v714, 0
        %v758 = vsel %vm478, %v715, 0
        %760 = vmatpush.bf16.msra.mxu0 0
        %761 = vmatpush.bf16.msra.mxu0 0
        %762 = vmatpush.bf16.msra.mxu0 0
        %763 = vmatpush.bf16.msra.mxu0 0
        %764 = vmatpush.bf16.msra.mxu0 %v743
        %765 = vmatpush.bf16.msra.mxu0 %v742
        %766 = vmatpush.bf16.msra.mxu0 %v741
        %767 = vmatpush.bf16.msra.mxu0 %v740
        %768 = vmatmul.bf16.gmra.mxu0 %v749
        %v769 = vpop.f32.mrf.mxu0
        %v770 = vadd.f32 0.0, %v769
        %v771 = vpop.f32.mrf.mxu0
        %v772 = vadd.f32 0.0, %v771
        %773 = vmatmul.bf16.gmra.mxu0 %v752
        %v774 = vpop.f32.mrf.mxu0
        %v775 = vadd.f32 0.0, %v774
        %v776 = vpop.f32.mrf.mxu0
        %v777 = vadd.f32 0.0, %v776
        %778 = vmatmul.bf16.gmra.mxu0 %v755
        %v779 = vpop.f32.mrf.mxu0
        %v780 = vadd.f32 0.0, %v779
        %v781 = vpop.f32.mrf.mxu0
        %v782 = vadd.f32 0.0, %v781
        %783 = vmatmul.bf16.gmra.mxu0 %v758
        %v784 = vpop.f32.mrf.mxu0
        %v785 = vadd.f32 0.0, %v784
        %v786 = vpop.f32.mrf.mxu0
        %v787 = vadd.f32 0.0, %v786
        %788 = vdwg.mxu0
        %v789 = vadd.f32 %v704, %v770
        %v790 = vadd.f32 %v705, %v772
        %v791 = vadd.f32 %v706, %v775
        %v792 = vadd.f32 %v707, %v777
        %v793 = vadd.f32 %v708, %v780
        %v794 = vadd.f32 %v709, %v782
        %v795 = vadd.f32 %v710, %v785
        %v796 = vadd.f32 %v711, %v787
        %797 = vst.msk [vmem:[#allocation4] sm:$0xff] %vm408, %v789
        %798 = vst.msk [vmem:[#allocation4 + $0x8] sm:$0xff] %vm408, %v790
        %799 = vst.msk [vmem:[#allocation4 + $0x10] sm:$0xff] %vm408, %v791
        %800 = vst.msk [vmem:[#allocation4 + $0x18] sm:$0xff] %vm408, %v792
        %801 = vst.msk [vmem:[#allocation4 + $0x20] sm:$0xff] %vm408, %v793
        %802 = vst.msk [vmem:[#allocation4 + $0x28] sm:$0xff] %vm408, %v794
        %803 = vst.msk [vmem:[#allocation4 + $0x30] sm:$0xff] %vm408, %v795
        %804 = vst.msk [vmem:[#allocation4 + $0x38] sm:$0xff] %vm408, %v796
        %805 = vst.msk [vmem:[#allocation2] sm:$0xff] %vm647, %v503
        %806 = vst.msk [vmem:[#allocation2 + $0x8] sm:$0xff] %vm647, %v504
        %807 = vst.msk [vmem:[#allocation2 + $0x10] sm:$0xff] %vm647, %v505
        %808 = vst.msk [vmem:[#allocation2 + $0x18] sm:$0xff] %vm647, %v506
        %809 = vst.msk [vmem:[#allocation2 + $0x20] sm:$0xff] %vm647, %v507
        %810 = vst.msk [vmem:[#allocation2 + $0x28] sm:$0xff] %vm647, %v508
        %811 = vst.msk [vmem:[#allocation2 + $0x30] sm:$0xff] %vm647, %v509
        %812 = vst.msk [vmem:[#allocation2 + $0x38] sm:$0xff] %vm647, %v510
      $region40: #{forward.10} parent=31 // pred_fallthru
        _
      %p813 = scmp.eq.s32.totalorder %s21, %s20
      // Predicated region
      $region41: #{forward.10} parent=31 // pred_check
        %p814 = pneg %p813
      $region42: #{forward.10} parent=31 // pred_check_branch
        %816 = sbr.rel (%p814) target = $region44
      $region43: #{forward.10} parent=31 // pred_region
        %v817 = vld [vmem:[%s277] sm:$0xf]
        %v818 = vld [vmem:[%s277 + $0x4] sm:$0xf]
        %v819 = vld [vmem:[%s277 + $0x8] sm:$0xf]
        %v820 = vld [vmem:[%s277 + $0xc] sm:$0xf]
        %v821 = vld [vmem:[%s277 + $0x10] sm:$0xf]
        %v822 = vld [vmem:[%s277 + $0x14] sm:$0xf]
        %v823 = vld [vmem:[%s277 + $0x18] sm:$0xf]
        %v824 = vld [vmem:[%s277 + $0x1c] sm:$0xf]
        %v825 = vld [vmem:[%s289] sm:$0xf]
        %v826 = vld [vmem:[%s289 + $0x4] sm:$0xf]
        %v827 = vld [vmem:[%s289 + $0x8] sm:$0xf]
        %v828 = vld [vmem:[%s289 + $0xc] sm:$0xf]
        %v829 = vld [vmem:[%s289 + $0x10] sm:$0xf]
        %v830 = vld [vmem:[%s289 + $0x14] sm:$0xf]
        %v831 = vld [vmem:[%s289 + $0x18] sm:$0xf]
        %v832 = vld [vmem:[%s289 + $0x1c] sm:$0xf]
        %v841 = vunpack.c.l.b16 %v817
        %v842 = vunpack.c.l.b16 %v818
        %v843 = vunpack.c.l.b16 %v819
        %v844 = vunpack.c.l.b16 %v820
        %v845 = vunpack.c.l.b16 %v821
        %v846 = vunpack.c.l.b16 %v822
        %v847 = vunpack.c.l.b16 %v823
        %v848 = vunpack.c.l.b16 %v824
        %v849 = vpack.c.b16 %v842, %v841
        %v850 = vpack.c.b16 %v844, %v843
        %v851 = vpack.c.b16 %v846, %v845
        %v852 = vpack.c.b16 %v848, %v847
        %v861 = vunpack.c.l.b16 %v825
        %v862 = vunpack.c.l.b16 %v826
        %v863 = vunpack.c.l.b16 %v827
        %v864 = vunpack.c.l.b16 %v828
        %v865 = vunpack.c.l.b16 %v829
        %v866 = vunpack.c.l.b16 %v830
        %v867 = vunpack.c.l.b16 %v831
        %v868 = vunpack.c.l.b16 %v832
        %v869 = vpack.c.b16 %v862, %v861
        %v870 = vpack.c.b16 %v864, %v863
        %v871 = vpack.c.b16 %v866, %v865
        %v872 = vpack.c.b16 %v868, %v867
        %vm873 = vcmask 261120
        %v875 = vsel %vm873, %v849, 0
        %v878 = vsel %vm873, %v850, 0
        %v881 = vsel %vm873, %v851, 0
        %v884 = vsel %vm873, %v852, 0
        %v887 = vsel %vm873, %v869, 0
        %v890 = vsel %vm873, %v870, 0
        %v893 = vsel %vm873, %v871, 0
        %v896 = vsel %vm873, %v872, 0
        %898 = vmatpush.bf16.xpose.msra.mxu0 0
        %899 = vmatpush.bf16.xpose.msra.mxu0 0
        %900 = vmatpush.bf16.xpose.msra.mxu0 0
        %901 = vmatpush.bf16.xpose.msra.mxu0 0
        %902 = vmatpush.bf16.xpose.msra.mxu0 %v896
        %903 = vmatpush.bf16.xpose.msra.mxu0 %v893
        %904 = vmatpush.bf16.xpose.msra.mxu0 %v890
        %905 = vmatpush.bf16.xpose.msra.mxu0 %v887
        %906 = vmatmul.bf16.gmra.mxu0 %v875
        %v907 = vpop.f32.mrf.mxu0
        %v908 = vadd.f32 0.0, %v907
        %v909 = vpop.f32.mrf.mxu0
        %v910 = vadd.f32 0.0, %v909
        %911 = vmatmul.bf16.gmra.mxu0 %v878
        %v912 = vpop.f32.mrf.mxu0
        %v913 = vadd.f32 0.0, %v912
        %v914 = vpop.f32.mrf.mxu0
        %v915 = vadd.f32 0.0, %v914
        %916 = vmatmul.bf16.gmra.mxu0 %v881
        %v917 = vpop.f32.mrf.mxu0
        %v918 = vadd.f32 0.0, %v917
        %v919 = vpop.f32.mrf.mxu0
        %v920 = vadd.f32 0.0, %v919
        %921 = vmatmul.bf16.gmra.mxu0 %v884
        %v922 = vpop.f32.mrf.mxu0
        %v923 = vadd.f32 0.0, %v922
        %v924 = vpop.f32.mrf.mxu0
        %v925 = vadd.f32 0.0, %v924
        %926 = vdwg.mxu0
        %v927 = vmul.f32 %v908, 0.17677669
        %v928 = vmul.f32 %v910, 0.17677669
        %v929 = vmul.f32 %v913, 0.17677669
        %v930 = vmul.f32 %v915, 0.17677669
        %v931 = vmul.f32 %v918, 0.17677669
        %v932 = vmul.f32 %v920, 0.17677669
        %v933 = vmul.f32 %v923, 0.17677669
        %v934 = vmul.f32 %v925, 0.17677669
        %v935 = vlaneseq
        %v936 = vshrl.u32 %v935, 7
        %v937 = vadd.s32 %v936, 8
        %v938 = vadd.s32 %v936, 16
        %v939 = vadd.s32 %v936, 24
        %v940 = vadd.s32 %v936, 32
        %v941 = vadd.s32 %v936, 40
        %v942 = vadd.s32 %v936, 48
        %v943 = vadd.s32 %v936, 56
        %v944 = vlaneseq
        %v945 = vand.u32 %v944, 127
        %vm946 = vcmp.le.s32.totalorder %v945, %v936
        %vm947 = vcmp.le.s32.totalorder %v945, %v937
        %vm948 = vcmp.le.s32.totalorder %v945, %v938
        %vm949 = vcmp.le.s32.totalorder %v945, %v939
        %vm950 = vcmp.le.s32.totalorder %v945, %v940
        %vm951 = vcmp.le.s32.totalorder %v945, %v941
        %vm952 = vcmp.le.s32.totalorder %v945, %v942
        %vm953 = vcmp.le.s32.totalorder %v945, %v943
        %v954 = vsel %vm946, %v927, -1e+30
        %v955 = vsel %vm947, %v928, -1e+30
        %v956 = vsel %vm948, %v929, -1e+30
        %v957 = vsel %vm949, %v930, -1e+30
        %v958 = vsel %vm950, %v931, -1e+30
        %v959 = vsel %vm951, %v932, -1e+30
        %v960 = vsel %vm952, %v933, -1e+30
        %v961 = vsel %vm953, %v934, -1e+30
        %v962 = vld [vmem:[#allocation2] sm:$0xff]
        %v963 = vld [vmem:[#allocation2 + $0x8] sm:$0xff]
        %v964 = vld [vmem:[#allocation2 + $0x10] sm:$0xff]
        %v965 = vld [vmem:[#allocation2 + $0x18] sm:$0xff]
        %v966 = vld [vmem:[#allocation2 + $0x20] sm:$0xff]
        %v967 = vld [vmem:[#allocation2 + $0x28] sm:$0xff]
        %v968 = vld [vmem:[#allocation2 + $0x30] sm:$0xff]
        %v969 = vld [vmem:[#allocation2 + $0x38] sm:$0xff]
        %vm970 = vcmask 523264
        %v971 = vsel %vm970, %v954, -inf
        %972 = vmax.xlane.f32.xlu0 %v971
        %v973 = vpop.xlane.xlu0 %972
        %v974 = vsel %vm970, %v955, -inf
        %975 = vmax.xlane.f32.xlu0 %v974
        %v976 = vpop.xlane.xlu0 %975
        %v977 = vsel %vm970, %v956, -inf
        %978 = vmax.xlane.f32.xlu0 %v977
        %v979 = vpop.xlane.xlu0 %978
        %v980 = vsel %vm970, %v957, -inf
        %981 = vmax.xlane.f32.xlu0 %v980
        %v982 = vpop.xlane.xlu0 %981
        %v983 = vsel %vm970, %v958, -inf
        %984 = vmax.xlane.f32.xlu0 %v983
        %v985 = vpop.xlane.xlu0 %984
        %v986 = vsel %vm970, %v959, -inf
        %987 = vmax.xlane.f32.xlu0 %v986
        %v988 = vpop.xlane.xlu0 %987
        %v989 = vsel %vm970, %v960, -inf
        %990 = vmax.xlane.f32.xlu0 %v989
        %v991 = vpop.xlane.xlu0 %990
        %v992 = vsel %vm970, %v961, -inf
        %993 = vmax.xlane.f32.xlu0 %v992
        %v994 = vpop.xlane.xlu0 %993
        %v995 = vmax.f32 %v962, %v973
        %v996 = vmax.f32 %v963, %v976
        %v997 = vmax.f32 %v964, %v979
        %v998 = vmax.f32 %v965, %v982
        %v999 = vmax.f32 %v966, %v985
        %v1000 = vmax.f32 %v967, %v988
        %v1001 = vmax.f32 %v968, %v991
        %v1002 = vmax.f32 %v969, %v994
        %v1003 = vsub.f32 %v962, %v995
        %v1004 = vsub.f32 %v963, %v996
        %v1005 = vsub.f32 %v964, %v997
        %v1006 = vsub.f32 %v965, %v998
        %v1007 = vsub.f32 %v966, %v999
        %v1008 = vsub.f32 %v967, %v1000
        %v1009 = vsub.f32 %v968, %v1001
        %v1010 = vsub.f32 %v969, %v1002
        %v1011 = vmul.f32 %v1003, 1.442695
        %v1012 = vpow.pop %v1011
        %v1013 = vmul.f32 %v1004, 1.442695
        %v1014 = vpow.pop %v1013
        %v1015 = vmul.f32 %v1005, 1.442695
        %v1016 = vpow.pop %v1015
        %v1017 = vmul.f32 %v1006, 1.442695
        %v1018 = vpow.pop %v1017
        %v1019 = vmul.f32 %v1007, 1.442695
        %v1020 = vpow.pop %v1019
        %v1021 = vmul.f32 %v1008, 1.442695
        %v1022 = vpow.pop %v1021
        %v1023 = vmul.f32 %v1009, 1.442695
        %v1024 = vpow.pop %v1023
        %v1025 = vmul.f32 %v1010, 1.442695
        %v1026 = vpow.pop %v1025
        %1028 = vset.pattern.permute.xlu0 0
        %1029 = vperm.xlu0 %1028, %v995
        %v1030 = vpop.permute.xlu0 %1029
        %1033 = vset.pattern.permute.xlu0 0
        %1034 = vperm.xlu0 %1033, %v996
        %v1035 = vpop.permute.xlu0 %1034
        %1038 = vset.pattern.permute.xlu0 0
        %1039 = vperm.xlu0 %1038, %v997
        %v1040 = vpop.permute.xlu0 %1039
        %1043 = vset.pattern.permute.xlu0 0
        %1044 = vperm.xlu0 %1043, %v998
        %v1045 = vpop.permute.xlu0 %1044
        %1048 = vset.pattern.permute.xlu0 0
        %1049 = vperm.xlu0 %1048, %v999
        %v1050 = vpop.permute.xlu0 %1049
        %1053 = vset.pattern.permute.xlu0 0
        %1054 = vperm.xlu0 %1053, %v1000
        %v1055 = vpop.permute.xlu0 %1054
        %1058 = vset.pattern.permute.xlu0 0
        %1059 = vperm.xlu0 %1058, %v1001
        %v1060 = vpop.permute.xlu0 %1059
        %1063 = vset.pattern.permute.xlu0 0
        %1064 = vperm.xlu0 %1063, %v1002
        %v1065 = vpop.permute.xlu0 %1064
        %v1067 = vsub.f32 %v954, %v1030
        %v1068 = vsub.f32 %v955, %v1035
        %v1069 = vsub.f32 %v956, %v1040
        %v1070 = vsub.f32 %v957, %v1045
        %v1071 = vsub.f32 %v958, %v1050
        %v1072 = vsub.f32 %v959, %v1055
        %v1073 = vsub.f32 %v960, %v1060
        %v1074 = vsub.f32 %v961, %v1065
        %v1075 = vmul.f32 %v1067, 1.442695
        %v1076 = vpow.pop %v1075
        %v1077 = vmul.f32 %v1068, 1.442695
        %v1078 = vpow.pop %v1077
        %v1079 = vmul.f32 %v1069, 1.442695
        %v1080 = vpow.pop %v1079
        %v1081 = vmul.f32 %v1070, 1.442695
        %v1082 = vpow.pop %v1081
        %v1083 = vmul.f32 %v1071, 1.442695
        %v1084 = vpow.pop %v1083
        %v1085 = vmul.f32 %v1072, 1.442695
        %v1086 = vpow.pop %v1085
        %v1087 = vmul.f32 %v1073, 1.442695
        %v1088 = vpow.pop %v1087
        %v1089 = vmul.f32 %v1074, 1.442695
        %v1090 = vpow.pop %v1089
        %v1091 = vld [vmem:[#allocation3] sm:$0xff]
        %v1092 = vld [vmem:[#allocation3 + $0x8] sm:$0xff]
        %v1093 = vld [vmem:[#allocation3 + $0x10] sm:$0xff]
        %v1094 = vld [vmem:[#allocation3 + $0x18] sm:$0xff]
        %v1095 = vld [vmem:[#allocation3 + $0x20] sm:$0xff]
        %v1096 = vld [vmem:[#allocation3 + $0x28] sm:$0xff]
        %v1097 = vld [vmem:[#allocation3 + $0x30] sm:$0xff]
        %v1098 = vld [vmem:[#allocation3 + $0x38] sm:$0xff]
        %v1099 = vmul.f32 %v1012, %v1091
        %v1100 = vmul.f32 %v1014, %v1092
        %v1101 = vmul.f32 %v1016, %v1093
        %v1102 = vmul.f32 %v1018, %v1094
        %v1103 = vmul.f32 %v1020, %v1095
        %v1104 = vmul.f32 %v1022, %v1096
        %v1105 = vmul.f32 %v1024, %v1097
        %v1106 = vmul.f32 %v1026, %v1098
        %v1107 = vsel %vm970, %v1076, 0.0
        %1108 = vadd.xlane.f32.xlu0 %v1107
        %v1109 = vpop.xlane.xlu0 %1108
        %v1110 = vsel %vm970, %v1078, 0.0
        %1111 = vadd.xlane.f32.xlu0 %v1110
        %v1112 = vpop.xlane.xlu0 %1111
        %v1113 = vsel %vm970, %v1080, 0.0
        %1114 = vadd.xlane.f32.xlu0 %v1113
        %v1115 = vpop.xlane.xlu0 %1114
        %v1116 = vsel %vm970, %v1082, 0.0
        %1117 = vadd.xlane.f32.xlu0 %v1116
        %v1118 = vpop.xlane.xlu0 %1117
        %v1119 = vsel %vm970, %v1084, 0.0
        %1120 = vadd.xlane.f32.xlu0 %v1119
        %v1121 = vpop.xlane.xlu0 %1120
        %v1122 = vsel %vm970, %v1086, 0.0
        %1123 = vadd.xlane.f32.xlu0 %v1122
        %v1124 = vpop.xlane.xlu0 %1123
        %v1125 = vsel %vm970, %v1088, 0.0
        %1126 = vadd.xlane.f32.xlu0 %v1125
        %v1127 = vpop.xlane.xlu0 %1126
        %v1128 = vsel %vm970, %v1090, 0.0
        %1129 = vadd.xlane.f32.xlu0 %v1128
        %v1130 = vpop.xlane.xlu0 %1129
        %v1131 = vadd.f32 %v1099, %v1109
        %v1132 = vadd.f32 %v1100, %v1112
        %v1133 = vadd.f32 %v1101, %v1115
        %v1134 = vadd.f32 %v1102, %v1118
        %v1135 = vadd.f32 %v1103, %v1121
        %v1136 = vadd.f32 %v1104, %v1124
        %v1137 = vadd.f32 %v1105, %v1127
        %v1138 = vadd.f32 %v1106, %v1130
        %vm1139 = vcmask 7168
        %1140 = vst.msk [vmem:[#allocation3] sm:$0xff] %vm1139, %v1131
        %1141 = vst.msk [vmem:[#allocation3 + $0x8] sm:$0xff] %vm1139, %v1132
        %1142 = vst.msk [vmem:[#allocation3 + $0x10] sm:$0xff] %vm1139, %v1133
        %1143 = vst.msk [vmem:[#allocation3 + $0x18] sm:$0xff] %vm1139, %v1134
        %1144 = vst.msk [vmem:[#allocation3 + $0x20] sm:$0xff] %vm1139, %v1135
        %1145 = vst.msk [vmem:[#allocation3 + $0x28] sm:$0xff] %vm1139, %v1136
        %1146 = vst.msk [vmem:[#allocation3 + $0x30] sm:$0xff] %vm1139, %v1137
        %1147 = vst.msk [vmem:[#allocation3 + $0x38] sm:$0xff] %vm1139, %v1138
        %v1148 = vld [vmem:[#allocation4] sm:$0xff]
        %v1149 = vld [vmem:[#allocation4 + $0x8] sm:$0xff]
        %v1150 = vld [vmem:[#allocation4 + $0x10] sm:$0xff]
        %v1151 = vld [vmem:[#allocation4 + $0x18] sm:$0xff]
        %v1152 = vld [vmem:[#allocation4 + $0x20] sm:$0xff]
        %v1153 = vld [vmem:[#allocation4 + $0x28] sm:$0xff]
        %v1154 = vld [vmem:[#allocation4 + $0x30] sm:$0xff]
        %v1155 = vld [vmem:[#allocation4 + $0x38] sm:$0xff]
        %1157 = vset.pattern.permute.xlu0 0
        %1158 = vperm.xlu0 %1157, %v1012
        %v1159 = vpop.permute.xlu0 %1158
        %1162 = vset.pattern.permute.xlu0 0
        %1163 = vperm.xlu0 %1162, %v1014
        %v1164 = vpop.permute.xlu0 %1163
        %1167 = vset.pattern.permute.xlu0 0
        %1168 = vperm.xlu0 %1167, %v1016
        %v1169 = vpop.permute.xlu0 %1168
        %1172 = vset.pattern.permute.xlu0 0
        %1173 = vperm.xlu0 %1172, %v1018
        %v1174 = vpop.permute.xlu0 %1173
        %1177 = vset.pattern.permute.xlu0 0
        %1178 = vperm.xlu0 %1177, %v1020
        %v1179 = vpop.permute.xlu0 %1178
        %1182 = vset.pattern.permute.xlu0 0
        %1183 = vperm.xlu0 %1182, %v1022
        %v1184 = vpop.permute.xlu0 %1183
        %1187 = vset.pattern.permute.xlu0 0
        %1188 = vperm.xlu0 %1187, %v1024
        %v1189 = vpop.permute.xlu0 %1188
        %1192 = vset.pattern.permute.xlu0 0
        %1193 = vperm.xlu0 %1192, %v1026
        %v1194 = vpop.permute.xlu0 %1193
        %v1196 = vmul.f32 %v1159, %v1148
        %v1197 = vmul.f32 %v1164, %v1149
        %v1198 = vmul.f32 %v1169, %v1150
        %v1199 = vmul.f32 %v1174, %v1151
        %v1200 = vmul.f32 %v1179, %v1152
        %v1201 = vmul.f32 %v1184, %v1153
        %v1202 = vmul.f32 %v1189, %v1154
        %v1203 = vmul.f32 %v1194, %v1155
        %v1204 = vpack.c.bf16 %v1078, %v1076
        %v1205 = vpack.c.bf16 %v1082, %v1080
        %v1206 = vpack.c.bf16 %v1086, %v1084
        %v1207 = vpack.c.bf16 %v1090, %v1088
        %v1208 = vld [vmem:[%s303] sm:$0xf]
        %v1209 = vld [vmem:[%s303 + $0x4] sm:$0xf]
        %v1210 = vld [vmem:[%s303 + $0x8] sm:$0xf]
        %v1211 = vld [vmem:[%s303 + $0xc] sm:$0xf]
        %v1212 = vld [vmem:[%s303 + $0x10] sm:$0xf]
        %v1213 = vld [vmem:[%s303 + $0x14] sm:$0xf]
        %v1214 = vld [vmem:[%s303 + $0x18] sm:$0xf]
        %v1215 = vld [vmem:[%s303 + $0x1c] sm:$0xf]
        %v1224 = vunpack.c.l.b16 %v1208
        %v1225 = vunpack.c.l.b16 %v1209
        %v1226 = vunpack.c.l.b16 %v1210
        %v1227 = vunpack.c.l.b16 %v1211
        %v1228 = vunpack.c.l.b16 %v1212
        %v1229 = vunpack.c.l.b16 %v1213
        %v1230 = vunpack.c.l.b16 %v1214
        %v1231 = vunpack.c.l.b16 %v1215
        %v1232 = vpack.c.b16 %v1225, %v1224
        %v1233 = vpack.c.b16 %v1227, %v1226
        %v1234 = vpack.c.b16 %v1229, %v1228
        %v1235 = vpack.c.b16 %v1231, %v1230
        %v1241 = vsel %vm970, %v1204, 0
        %v1244 = vsel %vm970, %v1205, 0
        %v1247 = vsel %vm970, %v1206, 0
        %v1250 = vsel %vm970, %v1207, 0
        %1252 = vmatpush.bf16.msra.mxu0 0
        %1253 = vmatpush.bf16.msra.mxu0 0
        %1254 = vmatpush.bf16.msra.mxu0 0
        %1255 = vmatpush.bf16.msra.mxu0 0
        %1256 = vmatpush.bf16.msra.mxu0 %v1235
        %1257 = vmatpush.bf16.msra.mxu0 %v1234
        %1258 = vmatpush.bf16.msra.mxu0 %v1233
        %1259 = vmatpush.bf16.msra.mxu0 %v1232
        %1260 = vmatmul.bf16.gmra.mxu0 %v1241
        %v1261 = vpop.f32.mrf.mxu0
        %v1262 = vadd.f32 0.0, %v1261
        %v1263 = vpop.f32.mrf.mxu0
        %v1264 = vadd.f32 0.0, %v1263
        %1265 = vmatmul.bf16.gmra.mxu0 %v1244
        %v1266 = vpop.f32.mrf.mxu0
        %v1267 = vadd.f32 0.0, %v1266
        %v1268 = vpop.f32.mrf.mxu0
        %v1269 = vadd.f32 0.0, %v1268
        %1270 = vmatmul.bf16.gmra.mxu0 %v1247
        %v1271 = vpop.f32.mrf.mxu0
        %v1272 = vadd.f32 0.0, %v1271
        %v1273 = vpop.f32.mrf.mxu0
        %v1274 = vadd.f32 0.0, %v1273
        %1275 = vmatmul.bf16.gmra.mxu0 %v1250
        %v1276 = vpop.f32.mrf.mxu0
        %v1277 = vadd.f32 0.0, %v1276
        %v1278 = vpop.f32.mrf.mxu0
        %v1279 = vadd.f32 0.0, %v1278
        %1280 = vdwg.mxu0
        %v1281 = vadd.f32 %v1196, %v1262
        %v1282 = vadd.f32 %v1197, %v1264
        %v1283 = vadd.f32 %v1198, %v1267
        %v1284 = vadd.f32 %v1199, %v1269
        %v1285 = vadd.f32 %v1200, %v1272
        %v1286 = vadd.f32 %v1201, %v1274
        %v1287 = vadd.f32 %v1202, %v1277
        %v1288 = vadd.f32 %v1203, %v1279
        %1289 = vst.msk [vmem:[#allocation4] sm:$0xff] %vm873, %v1281
        %1290 = vst.msk [vmem:[#allocation4 + $0x8] sm:$0xff] %vm873, %v1282
        %1291 = vst.msk [vmem:[#allocation4 + $0x10] sm:$0xff] %vm873, %v1283
        %1292 = vst.msk [vmem:[#allocation4 + $0x18] sm:$0xff] %vm873, %v1284
        %1293 = vst.msk [vmem:[#allocation4 + $0x20] sm:$0xff] %vm873, %v1285
        %1294 = vst.msk [vmem:[#allocation4 + $0x28] sm:$0xff] %vm873, %v1286
        %1295 = vst.msk [vmem:[#allocation4 + $0x30] sm:$0xff] %vm873, %v1287
        %1296 = vst.msk [vmem:[#allocation4 + $0x38] sm:$0xff] %vm873, %v1288
        %1297 = vst.msk [vmem:[#allocation2] sm:$0xff] %vm1139, %v995
        %1298 = vst.msk [vmem:[#allocation2 + $0x8] sm:$0xff] %vm1139, %v996
        %1299 = vst.msk [vmem:[#allocation2 + $0x10] sm:$0xff] %vm1139, %v997
        %1300 = vst.msk [vmem:[#allocation2 + $0x18] sm:$0xff] %vm1139, %v998
        %1301 = vst.msk [vmem:[#allocation2 + $0x20] sm:$0xff] %vm1139, %v999
        %1302 = vst.msk [vmem:[#allocation2 + $0x28] sm:$0xff] %vm1139, %v1000
        %1303 = vst.msk [vmem:[#allocation2 + $0x30] sm:$0xff] %vm1139, %v1001
        %1304 = vst.msk [vmem:[#allocation2 + $0x38] sm:$0xff] %vm1139, %v1002
      $region44: #{forward.10} parent=31 // pred_fallthru
        _
      // Predicated region
      $region45: #{forward.10} parent=31 // pred_check
        %p1305 = pneg %p318
      $region46: #{forward.10} parent=31 // pred_check_branch
        %1307 = sbr.rel (%p1305) target = $region48
      $region47: #{forward.10} parent=31 // pred_region
        %v1308 = vld [vmem:[#allocation3] sm:$0xff]
        %v1309 = vld [vmem:[#allocation3 + $0x8] sm:$0xff]
        %v1310 = vld [vmem:[#allocation3 + $0x10] sm:$0xff]
        %v1311 = vld [vmem:[#allocation3 + $0x18] sm:$0xff]
        %v1312 = vld [vmem:[#allocation3 + $0x20] sm:$0xff]
        %v1313 = vld [vmem:[#allocation3 + $0x28] sm:$0xff]
        %v1314 = vld [vmem:[#allocation3 + $0x30] sm:$0xff]
        %v1315 = vld [vmem:[#allocation3 + $0x38] sm:$0xff]
        %v1316 = vrcp.pop %v1308
        %v1317 = vrcp.pop %v1309
        %v1318 = vrcp.pop %v1310
        %v1319 = vrcp.pop %v1311
        %v1320 = vrcp.pop %v1312
        %v1321 = vrcp.pop %v1313
        %v1322 = vrcp.pop %v1314
        %v1323 = vrcp.pop %v1315
        %v1324 = vld [vmem:[#allocation4] sm:$0xff]
        %v1325 = vld [vmem:[#allocation4 + $0x8] sm:$0xff]
        %v1326 = vld [vmem:[#allocation4 + $0x10] sm:$0xff]
        %v1327 = vld [vmem:[#allocation4 + $0x18] sm:$0xff]
        %v1328 = vld [vmem:[#allocation4 + $0x20] sm:$0xff]
        %v1329 = vld [vmem:[#allocation4 + $0x28] sm:$0xff]
        %v1330 = vld [vmem:[#allocation4 + $0x30] sm:$0xff]
        %v1331 = vld [vmem:[#allocation4 + $0x38] sm:$0xff]
        %1333 = vset.pattern.permute.xlu0 0
        %1334 = vperm.xlu0 %1333, %v1316
        %v1335 = vpop.permute.xlu0 %1334
        %1338 = vset.pattern.permute.xlu0 0
        %1339 = vperm.xlu0 %1338, %v1317
        %v1340 = vpop.permute.xlu0 %1339
        %1343 = vset.pattern.permute.xlu0 0
        %1344 = vperm.xlu0 %1343, %v1318
        %v1345 = vpop.permute.xlu0 %1344
        %1348 = vset.pattern.permute.xlu0 0
        %1349 = vperm.xlu0 %1348, %v1319
        %v1350 = vpop.permute.xlu0 %1349
        %1353 = vset.pattern.permute.xlu0 0
        %1354 = vperm.xlu0 %1353, %v1320
        %v1355 = vpop.permute.xlu0 %1354
        %1358 = vset.pattern.permute.xlu0 0
        %1359 = vperm.xlu0 %1358, %v1321
        %v1360 = vpop.permute.xlu0 %1359
        %1363 = vset.pattern.permute.xlu0 0
        %1364 = vperm.xlu0 %1363, %v1322
        %v1365 = vpop.permute.xlu0 %1364
        %1368 = vset.pattern.permute.xlu0 0
        %1369 = vperm.xlu0 %1368, %v1323
        %v1370 = vpop.permute.xlu0 %1369
        %v1372 = vmul.f32 %v1324, %v1335
        %v1373 = vmul.f32 %v1325, %v1340
        %v1374 = vmul.f32 %v1326, %v1345
        %v1375 = vmul.f32 %v1327, %v1350
        %v1376 = vmul.f32 %v1328, %v1355
        %v1377 = vmul.f32 %v1329, %v1360
        %v1378 = vmul.f32 %v1330, %v1365
        %v1379 = vmul.f32 %v1331, %v1370
        %v1380 = vpack.c.bf16 %v1372, %v1372
        %v1381 = vpack.c.bf16 %v1373, %v1373
        %v1382 = vpack.c.bf16 %v1374, %v1374
        %v1383 = vpack.c.bf16 %v1375, %v1375
        %v1384 = vpack.c.bf16 %v1376, %v1376
        %v1385 = vpack.c.bf16 %v1377, %v1377
        %v1386 = vpack.c.bf16 %v1378, %v1378
        %v1387 = vpack.c.bf16 %v1379, %v1379
        %vm1388 = vcmask 257024
        %1389 = vst.msk [vmem:[%s315] sm:$0xf] %vm1388, %v1380
        %1390 = vst.msk [vmem:[%s315 + $0x4] sm:$0xf] %vm1388, %v1381
        %1391 = vst.msk [vmem:[%s315 + $0x8] sm:$0xf] %vm1388, %v1382
        %1392 = vst.msk [vmem:[%s315 + $0xc] sm:$0xf] %vm1388, %v1383
        %1393 = vst.msk [vmem:[%s315 + $0x10] sm:$0xf] %vm1388, %v1384
        %1394 = vst.msk [vmem:[%s315 + $0x14] sm:$0xf] %vm1388, %v1385
        %1395 = vst.msk [vmem:[%s315 + $0x18] sm:$0xf] %vm1388, %v1386
        %1396 = vst.msk [vmem:[%s315 + $0x1c] sm:$0xf] %vm1388, %v1387
      $region48: #{forward.10} parent=31 // pred_fallthru
        _
      %s1397 = smul.u32 8, %s20
      %p1398 = scmp.lt.s32.totalorder %s19, 7
      %s1399 = scalar_select %p1398, %s19, 7
      %p1400 = scmp.lt.s32.totalorder %s1397, 7
      %s1401 = scalar_select %p1400, %s1397, 7
      %s1402 = smul.addr %s1399, 8
      %s1403 = sadd.s32 %s1401, %s1402
      %s1404 = smul.addr %s1403, 4
      %s1405 = scalar_lea.vmem %s3, %s1404
      // Predicated region
      $region49: #{forward.10} parent=31 // pred_check
        %p1406 = pneg %p145
      $region50: #{forward.10} parent=31 // pred_check_branch
        %1408 = sbr.rel (%p1406) target = $region52
      $region51: #{forward.10} parent=31 // pred_region
        %s1409 = smul.u32 8, %s20
      $region52: #{forward.10} parent=31 // pred_fallthru
        _
    $region32: #{forward.10} parent=5 // pred_fallthru
      _
    %p1410 = scmp.le.s32.totalorder 2, %s9
    // Predicated region
    $region53: #{forward.10} parent=5 // pred_check
      %p1411 = pneg %p1410
    $region54: #{forward.10} parent=5 // pred_check_branch
      %1413 = sbr.rel (%p1411) target = $region56
    $region55: #{forward.10} parent=5 // pred_region
      %s1414 = ssub.s32 %s9, 2
      // Predicated region
      $region57: #{forward.10} parent=55 // pred_check
        %p1415 = pneg %p151
      $region58: #{forward.10} parent=55 // pred_check_branch
        %1417 = sbr.rel (%p1415) target = $region60
      $region59: #{forward.10} parent=55 // pred_region
        %s1418 = smul.u32 8, %s23
        %p1419 = scmp.lt.s32.totalorder %s22, 7
        %s1420 = scalar_select %p1419, %s22, 7
        %p1421 = scmp.lt.s32.totalorder %s1418, 7
        %s1422 = scalar_select %p1421, %s1418, 7
        %s1423 = smul.addr %s1420, 8
        %s1424 = sadd.s32 %s1422, %s1423
        %s1425 = smul.addr %s1424, 4
        %s1426 = scalar_lea.vmem %s3, %s1425
      $region60: #{forward.10} parent=55 // pred_fallthru
        _
    $region56: #{forward.10} parent=5 // pred_fallthru
      _
  $region6: #{forward.10} parent=0 // loop_footer
    %s13 = sadd.s32 1, %s9
  $region7: #{forward.10} parent=0 // loop_footer_branch
    %8 = sbr.rel target = $region3
  $region8: #{forward.10} parent=0 // loop_exit
    _

// kernel: forward.12
$region0: #{forward.12}
  #allocation0 [shape = 'u32[]', space=smem, size = 0x4, offset = 0x4, fixed_abs, tag = 'smem constant byte address 0x4 - core index']
  #allocation1 [shape = 'u32[72,128]{1,0:T(1,128)}', space=vmem, size = 0x9000, scoped, tag = 'internal scratch']
  #allocation2 [shape = 'bf16[128,128]{1,0:T(8,128)(2,1)}', space=vmem, size = 0x8000, scoped, tag = 'scratch operand']
  #allocation3 [shape = 'f32[128,128]{1,0:T(8,128)}', space=vmem, size = 0x10000, scoped, tag = 'scratch operand']
  %s0 = inlined_call_operand.vmem [shape: f32[128,128], index: 0, kind: input, shape index: {}]
  %s1 = inlined_call_operand.vmem [shape: f32[1,128], index: 1, kind: input, shape index: {}]
  %s2 = inlined_call_operand.vmem [shape: f32[1,128], index: 2, kind: input, shape index: {}]
  %s3 = inlined_call_operand.vmem [shape: bf16[128,512], index: 3, kind: input, shape index: {}]
  %s4 = inlined_call_operand.vmem [shape: f32[1,512], index: 4, kind: input, shape index: {}]
  %s5 = inlined_call_operand.vmem [shape: bf16[512,128], index: 5, kind: input, shape index: {}]
  %s6 = inlined_call_operand.vmem [shape: f32[1,128], index: 6, kind: input, shape index: {}]
  %s7 = inlined_call_operand.vmem [shape: f32[128,128], index: 7, kind: output, shape index: {}]
  %s8 = sld [smem:[#allocation0]]
  $region46: #{forward.12} parent=0
    _
  %s10 = ssub.s32 1, %s8
  %s11 = scalar_select 0, %s10, %s8
  // Predicated region
  $region2: #{forward.12} parent=0 // pred_check
    _
  $region3: #{forward.12} parent=0 // pred_check_branch
    %13 = sbr.rel (0) target = $region5
  $region4: #{forward.12} parent=0 // pred_region
    _
  $region5: #{forward.12} parent=0 // pred_fallthru
    _
  // Predicated region
  $region6: #{forward.12} parent=0 // pred_check
    _
  $region7: #{forward.12} parent=0 // pred_check_branch
    %15 = sbr.rel (0) target = $region9
  $region8: #{forward.12} parent=0 // pred_region
    _
  $region9: #{forward.12} parent=0 // pred_fallthru
    _
  // Predicated region
  $region10: #{forward.12} parent=0 // pred_check
    _
  $region11: #{forward.12} parent=0 // pred_check_branch
    %17 = sbr.rel (0) target = $region13
  $region12: #{forward.12} parent=0 // pred_region
    _
  $region13: #{forward.12} parent=0 // pred_fallthru
    _
  // Predicated region
  $region14: #{forward.12} parent=0 // pred_check
    _
  $region15: #{forward.12} parent=0 // pred_check_branch
    %19 = sbr.rel (0) target = $region17
  $region16: #{forward.12} parent=0 // pred_region
    _
  $region17: #{forward.12} parent=0 // pred_fallthru
    _
  // Predicated region
  $region18: #{forward.12} parent=0 // pred_check
    _
  $region19: #{forward.12} parent=0 // pred_check_branch
    %21 = sbr.rel (0) target = $region21
  $region20: #{forward.12} parent=0 // pred_region
    _
  $region21: #{forward.12} parent=0 // pred_fallthru
    _
  // Predicated region
  $region22: #{forward.12} parent=0 // pred_check
    _
  $region23: #{forward.12} parent=0 // pred_check_branch
    %23 = sbr.rel (0) target = $region25
  $region24: #{forward.12} parent=0 // pred_region
    _
  $region25: #{forward.12} parent=0 // pred_fallthru
    _
  // Predicated region
  $region26: #{forward.12} parent=0 // pred_check
    _
  $region27: #{forward.12} parent=0 // pred_check_branch
    %25 = sbr.rel (0) target = $region29
  $region28: #{forward.12} parent=0 // pred_region
    _
  $region29: #{forward.12} parent=0 // pred_fallthru
    _
  %p26 = scmp.eq.s32.totalorder 0, 0
  // Predicated region
  $region30: #{forward.12} parent=0 // pred_check
    %p27 = pneg %p26
  $region31: #{forward.12} parent=0 // pred_check_branch
    %29 = sbr.rel (%p27) target = $region33
  $region32: #{forward.12} parent=0 // pred_region
    %v30 = vld [vmem:[%s0] sm:$0xff]
    %v31 = vld [vmem:[%s0 + $0x8] sm:$0xff]
    %v32 = vld [vmem:[%s0 + $0x10] sm:$0xff]
    %v33 = vld [vmem:[%s0 + $0x18] sm:$0xff]
    %v34 = vld [vmem:[%s0 + $0x20] sm:$0xff]
    %v35 = vld [vmem:[%s0 + $0x28] sm:$0xff]
    %v36 = vld [vmem:[%s0 + $0x30] sm:$0xff]
    %v37 = vld [vmem:[%s0 + $0x38] sm:$0xff]
    %v38 = vld [vmem:[%s0 + $0x40] sm:$0xff]
    %v39 = vld [vmem:[%s0 + $0x48] sm:$0xff]
    %v40 = vld [vmem:[%s0 + $0x50] sm:$0xff]
    %v41 = vld [vmem:[%s0 + $0x58] sm:$0xff]
    %v42 = vld [vmem:[%s0 + $0x60] sm:$0xff]
    %v43 = vld [vmem:[%s0 + $0x68] sm:$0xff]
    %v44 = vld [vmem:[%s0 + $0x70] sm:$0xff]
    %v45 = vld [vmem:[%s0 + $0x78] sm:$0xff]
    %v46 = vld [vmem:[%s1] sm:$0x1]
    %v47 = vld [vmem:[%s2] sm:$0x1]
    %48 = vadd.xlane.f32.xlu0 %v30
    %v49 = vpop.xlane.xlu0 %48
    %50 = vadd.xlane.f32.xlu0 %v31
    %v51 = vpop.xlane.xlu0 %50
    %52 = vadd.xlane.f32.xlu0 %v32
    %v53 = vpop.xlane.xlu0 %52
    %54 = vadd.xlane.f32.xlu0 %v33
    %v55 = vpop.xlane.xlu0 %54
    %56 = vadd.xlane.f32.xlu0 %v34
    %v57 = vpop.xlane.xlu0 %56
    %58 = vadd.xlane.f32.xlu0 %v35
    %v59 = vpop.xlane.xlu0 %58
    %60 = vadd.xlane.f32.xlu0 %v36
    %v61 = vpop.xlane.xlu0 %60
    %62 = vadd.xlane.f32.xlu0 %v37
    %v63 = vpop.xlane.xlu0 %62
    %64 = vadd.xlane.f32.xlu0 %v38
    %v65 = vpop.xlane.xlu0 %64
    %66 = vadd.xlane.f32.xlu0 %v39
    %v67 = vpop.xlane.xlu0 %66
    %68 = vadd.xlane.f32.xlu0 %v40
    %v69 = vpop.xlane.xlu0 %68
    %70 = vadd.xlane.f32.xlu0 %v41
    %v71 = vpop.xlane.xlu0 %70
    %72 = vadd.xlane.f32.xlu0 %v42
    %v73 = vpop.xlane.xlu0 %72
    %74 = vadd.xlane.f32.xlu0 %v43
    %v75 = vpop.xlane.xlu0 %74
    %76 = vadd.xlane.f32.xlu0 %v44
    %v77 = vpop.xlane.xlu0 %76
    %78 = vadd.xlane.f32.xlu0 %v45
    %v79 = vpop.xlane.xlu0 %78
    %v80 = vrcp.pop 128.0
    %v81 = vmul.f32 128.0, %v80
    %v82 = vsub.f32 1.0, %v81
    %v83 = vmul.f32 %v80, %v82
    %v84 = vadd.f32 %v80, %v83
    %vm85 = vweird.f32 %v80
    %v86 = vsel %vm85, %v80, %v84
    %v87 = vmul.f32 %v49, %v86
    %v88 = vmul.f32 %v51, %v86
    %v89 = vmul.f32 %v53, %v86
    %v90 = vmul.f32 %v55, %v86
    %v91 = vmul.f32 %v57, %v86
    %v92 = vmul.f32 %v59, %v86
    %v93 = vmul.f32 %v61, %v86
    %v94 = vmul.f32 %v63, %v86
    %v95 = vmul.f32 %v65, %v86
    %v96 = vmul.f32 %v67, %v86
    %v97 = vmul.f32 %v69, %v86
    %v98 = vmul.f32 %v71, %v86
    %v99 = vmul.f32 %v73, %v86
    %v100 = vmul.f32 %v75, %v86
    %v101 = vmul.f32 %v77, %v86
    %v102 = vmul.f32 %v79, %v86
    %v103 = vsub.f32 %v30, %v87
    %v104 = vsub.f32 %v31, %v88
    %v105 = vsub.f32 %v32, %v89
    %v106 = vsub.f32 %v33, %v90
    %v107 = vsub.f32 %v34, %v91
    %v108 = vsub.f32 %v35, %v92
    %v109 = vsub.f32 %v36, %v93
    %v110 = vsub.f32 %v37, %v94
    %v111 = vsub.f32 %v38, %v95
    %v112 = vsub.f32 %v39, %v96
    %v113 = vsub.f32 %v40, %v97
    %v114 = vsub.f32 %v41, %v98
    %v115 = vsub.f32 %v42, %v99
    %v116 = vsub.f32 %v43, %v100
    %v117 = vsub.f32 %v44, %v101
    %v118 = vsub.f32 %v45, %v102
    %v119 = vmul.f32 %v103, %v103
    %v120 = vmul.f32 %v104, %v104
    %v121 = vmul.f32 %v105, %v105
    %v122 = vmul.f32 %v106, %v106
    %v123 = vmul.f32 %v107, %v107
    %v124 = vmul.f32 %v108, %v108
    %v125 = vmul.f32 %v109, %v109
    %v126 = vmul.f32 %v110, %v110
    %v127 = vmul.f32 %v111, %v111
    %v128 = vmul.f32 %v112, %v112
    %v129 = vmul.f32 %v113, %v113
    %v130 = vmul.f32 %v114, %v114
    %v131 = vmul.f32 %v115, %v115
    %v132 = vmul.f32 %v116, %v116
    %v133 = vmul.f32 %v117, %v117
    %v134 = vmul.f32 %v118, %v118
    %135 = vadd.xlane.f32.xlu0 %v119
    %v136 = vpop.xlane.xlu0 %135
    %137 = vadd.xlane.f32.xlu0 %v120
    %v138 = vpop.xlane.xlu0 %137
    %139 = vadd.xlane.f32.xlu0 %v121
    %v140 = vpop.xlane.xlu0 %139
    %141 = vadd.xlane.f32.xlu0 %v122
    %v142 = vpop.xlane.xlu0 %141
    %143 = vadd.xlane.f32.xlu0 %v123
    %v144 = vpop.xlane.xlu0 %143
    %145 = vadd.xlane.f32.xlu0 %v124
    %v146 = vpop.xlane.xlu0 %145
    %147 = vadd.xlane.f32.xlu0 %v125
    %v148 = vpop.xlane.xlu0 %147
    %149 = vadd.xlane.f32.xlu0 %v126
    %v150 = vpop.xlane.xlu0 %149
    %151 = vadd.xlane.f32.xlu0 %v127
    %v152 = vpop.xlane.xlu0 %151
    %153 = vadd.xlane.f32.xlu0 %v128
    %v154 = vpop.xlane.xlu0 %153
    %155 = vadd.xlane.f32.xlu0 %v129
    %v156 = vpop.xlane.xlu0 %155
    %157 = vadd.xlane.f32.xlu0 %v130
    %v158 = vpop.xlane.xlu0 %157
    %159 = vadd.xlane.f32.xlu0 %v131
    %v160 = vpop.xlane.xlu0 %159
    %161 = vadd.xlane.f32.xlu0 %v132
    %v162 = vpop.xlane.xlu0 %161
    %163 = vadd.xlane.f32.xlu0 %v133
    %v164 = vpop.xlane.xlu0 %163
    %165 = vadd.xlane.f32.xlu0 %v134
    %v166 = vpop.xlane.xlu0 %165
    %v167 = vmul.f32 %v136, %v86
    %v168 = vmul.f32 %v138, %v86
    %v169 = vmul.f32 %v140, %v86
    %v170 = vmul.f32 %v142, %v86
    %v171 = vmul.f32 %v144, %v86
    %v172 = vmul.f32 %v146, %v86
    %v173 = vmul.f32 %v148, %v86
    %v174 = vmul.f32 %v150, %v86
    %v175 = vmul.f32 %v152, %v86
    %v176 = vmul.f32 %v154, %v86
    %v177 = vmul.f32 %v156, %v86
    %v178 = vmul.f32 %v158, %v86
    %v179 = vmul.f32 %v160, %v86
    %v180 = vmul.f32 %v162, %v86
    %v181 = vmul.f32 %v164, %v86
    %v182 = vmul.f32 %v166, %v86
    %v183 = vadd.f32 %v167, 1e-05
    %v184 = vadd.f32 %v168, 1e-05
    %v185 = vadd.f32 %v169, 1e-05
    %v186 = vadd.f32 %v170, 1e-05
    %v187 = vadd.f32 %v171, 1e-05
    %v188 = vadd.f32 %v172, 1e-05
    %v189 = vadd.f32 %v173, 1e-05
    %v190 = vadd.f32 %v174, 1e-05
    %v191 = vadd.f32 %v175, 1e-05
    %v192 = vadd.f32 %v176, 1e-05
    %v193 = vadd.f32 %v177, 1e-05
    %v194 = vadd.f32 %v178, 1e-05
    %v195 = vadd.f32 %v179, 1e-05
    %v196 = vadd.f32 %v180, 1e-05
    %v197 = vadd.f32 %v181, 1e-05
    %v198 = vadd.f32 %v182, 1e-05
    %v199 = vrsqrt.pop %v183
    %v200 = vmul.f32 %v199, %v183
    %v201 = vmul.f32 %v200, %v199
    %v202 = vmul.f32 0.5, %v201
    %v203 = vsub.f32 1.5, %v202
    %v204 = vmul.f32 %v199, %v203
    %vm205 = vweird.f32 %v183
    %vm206 = vweird.f32 %v199
    %vm207 = vmor %vm205, %vm206
    %v208 = vsel %vm207, %v199, %v204
    %v209 = vrsqrt.pop %v184
    %v210 = vmul.f32 %v209, %v184
    %v211 = vmul.f32 %v210, %v209
    %v212 = vmul.f32 0.5, %v211
    %v213 = vsub.f32 1.5, %v212
    %v214 = vmul.f32 %v209, %v213
    %vm215 = vweird.f32 %v184
    %vm216 = vweird.f32 %v209
    %vm217 = vmor %vm215, %vm216
    %v218 = vsel %vm217, %v209, %v214
    %v219 = vrsqrt.pop %v185
    %v220 = vmul.f32 %v219, %v185
    %v221 = vmul.f32 %v220, %v219
    %v222 = vmul.f32 0.5, %v221
    %v223 = vsub.f32 1.5, %v222
    %v224 = vmul.f32 %v219, %v223
    %vm225 = vweird.f32 %v185
    %vm226 = vweird.f32 %v219
    %vm227 = vmor %vm225, %vm226
    %v228 = vsel %vm227, %v219, %v224
    %v229 = vrsqrt.pop %v186
    %v230 = vmul.f32 %v229, %v186
    %v231 = vmul.f32 %v230, %v229
    %v232 = vmul.f32 0.5, %v231
    %v233 = vsub.f32 1.5, %v232
    %v234 = vmul.f32 %v229, %v233
    %vm235 = vweird.f32 %v186
    %vm236 = vweird.f32 %v229
    %vm237 = vmor %vm235, %vm236
    %v238 = vsel %vm237, %v229, %v234
    %v239 = vrsqrt.pop %v187
    %v240 = vmul.f32 %v239, %v187
    %v241 = vmul.f32 %v240, %v239
    %v242 = vmul.f32 0.5, %v241
    %v243 = vsub.f32 1.5, %v242
    %v244 = vmul.f32 %v239, %v243
    %vm245 = vweird.f32 %v187
    %vm246 = vweird.f32 %v239
    %vm247 = vmor %vm245, %vm246
    %v248 = vsel %vm247, %v239, %v244
    %v249 = vrsqrt.pop %v188
    %v250 = vmul.f32 %v249, %v188
    %v251 = vmul.f32 %v250, %v249
    %v252 = vmul.f32 0.5, %v251
    %v253 = vsub.f32 1.5, %v252
    %v254 = vmul.f32 %v249, %v253
    %vm255 = vweird.f32 %v188
    %vm256 = vweird.f32 %v249
    %vm257 = vmor %vm255, %vm256
    %v258 = vsel %vm257, %v249, %v254
    %v259 = vrsqrt.pop %v189
    %v260 = vmul.f32 %v259, %v189
    %v261 = vmul.f32 %v260, %v259
    %v262 = vmul.f32 0.5, %v261
    %v263 = vsub.f32 1.5, %v262
    %v264 = vmul.f32 %v259, %v263
    %vm265 = vweird.f32 %v189
    %vm266 = vweird.f32 %v259
    %vm267 = vmor %vm265, %vm266
    %v268 = vsel %vm267, %v259, %v264
    %v269 = vrsqrt.pop %v190
    %v270 = vmul.f32 %v269, %v190
    %v271 = vmul.f32 %v270, %v269
    %v272 = vmul.f32 0.5, %v271
    %v273 = vsub.f32 1.5, %v272
    %v274 = vmul.f32 %v269, %v273
    %vm275 = vweird.f32 %v190
    %vm276 = vweird.f32 %v269
    %vm277 = vmor %vm275, %vm276
    %v278 = vsel %vm277, %v269, %v274
    %v279 = vrsqrt.pop %v191
    %v280 = vmul.f32 %v279, %v191
    %v281 = vmul.f32 %v280, %v279
    %v282 = vmul.f32 0.5, %v281
    %v283 = vsub.f32 1.5, %v282
    %v284 = vmul.f32 %v279, %v283
    %vm285 = vweird.f32 %v191
    %vm286 = vweird.f32 %v279
    %vm287 = vmor %vm285, %vm286
    %v288 = vsel %vm287, %v279, %v284
    %v289 = vrsqrt.pop %v192
    %v290 = vmul.f32 %v289, %v192
    %v291 = vmul.f32 %v290, %v289
    %v292 = vmul.f32 0.5, %v291
    %v293 = vsub.f32 1.5, %v292
    %v294 = vmul.f32 %v289, %v293
    %vm295 = vweird.f32 %v192
    %vm296 = vweird.f32 %v289
    %vm297 = vmor %vm295, %vm296
    %v298 = vsel %vm297, %v289, %v294
    %v299 = vrsqrt.pop %v193
    %v300 = vmul.f32 %v299, %v193
    %v301 = vmul.f32 %v300, %v299
    %v302 = vmul.f32 0.5, %v301
    %v303 = vsub.f32 1.5, %v302
    %v304 = vmul.f32 %v299, %v303
    %vm305 = vweird.f32 %v193
    %vm306 = vweird.f32 %v299
    %vm307 = vmor %vm305, %vm306
    %v308 = vsel %vm307, %v299, %v304
    %v309 = vrsqrt.pop %v194
    %v310 = vmul.f32 %v309, %v194
    %v311 = vmul.f32 %v310, %v309
    %v312 = vmul.f32 0.5, %v311
    %v313 = vsub.f32 1.5, %v312
    %v314 = vmul.f32 %v309, %v313
    %vm315 = vweird.f32 %v194
    %vm316 = vweird.f32 %v309
    %vm317 = vmor %vm315, %vm316
    %v318 = vsel %vm317, %v309, %v314
    %v319 = vrsqrt.pop %v195
    %v320 = vmul.f32 %v319, %v195
    %v321 = vmul.f32 %v320, %v319
    %v322 = vmul.f32 0.5, %v321
    %v323 = vsub.f32 1.5, %v322
    %v324 = vmul.f32 %v319, %v323
    %vm325 = vweird.f32 %v195
    %vm326 = vweird.f32 %v319
    %vm327 = vmor %vm325, %vm326
    %v328 = vsel %vm327, %v319, %v324
    %v329 = vrsqrt.pop %v196
    %v330 = vmul.f32 %v329, %v196
    %v331 = vmul.f32 %v330, %v329
    %v332 = vmul.f32 0.5, %v331
    %v333 = vsub.f32 1.5, %v332
    %v334 = vmul.f32 %v329, %v333
    %vm335 = vweird.f32 %v196
    %vm336 = vweird.f32 %v329
    %vm337 = vmor %vm335, %vm336
    %v338 = vsel %vm337, %v329, %v334
    %v339 = vrsqrt.pop %v197
    %v340 = vmul.f32 %v339, %v197
    %v341 = vmul.f32 %v340, %v339
    %v342 = vmul.f32 0.5, %v341
    %v343 = vsub.f32 1.5, %v342
    %v344 = vmul.f32 %v339, %v343
    %vm345 = vweird.f32 %v197
    %vm346 = vweird.f32 %v339
    %vm347 = vmor %vm345, %vm346
    %v348 = vsel %vm347, %v339, %v344
    %v349 = vrsqrt.pop %v198
    %v350 = vmul.f32 %v349, %v198
    %v351 = vmul.f32 %v350, %v349
    %v352 = vmul.f32 0.5, %v351
    %v353 = vsub.f32 1.5, %v352
    %v354 = vmul.f32 %v349, %v353
    %vm355 = vweird.f32 %v198
    %vm356 = vweird.f32 %v349
    %vm357 = vmor %vm355, %vm356
    %v358 = vsel %vm357, %v349, %v354
    %v359 = vmul.f32 %v103, %v208
    %v360 = vmul.f32 %v104, %v218
    %v361 = vmul.f32 %v105, %v228
    %v362 = vmul.f32 %v106, %v238
    %v363 = vmul.f32 %v107, %v248
    %v364 = vmul.f32 %v108, %v258
    %v365 = vmul.f32 %v109, %v268
    %v366 = vmul.f32 %v110, %v278
    %v367 = vmul.f32 %v111, %v288
    %v368 = vmul.f32 %v112, %v298
    %v369 = vmul.f32 %v113, %v308
    %v370 = vmul.f32 %v114, %v318
    %v371 = vmul.f32 %v115, %v328
    %v372 = vmul.f32 %v116, %v338
    %v373 = vmul.f32 %v117, %v348
    %v374 = vmul.f32 %v118, %v358
    %v376 = vperm.slane %v46, 0
    %v378 = vmul.f32 %v359, %v376
    %v379 = vmul.f32 %v360, %v376
    %v380 = vmul.f32 %v361, %v376
    %v381 = vmul.f32 %v362, %v376
    %v382 = vmul.f32 %v363, %v376
    %v383 = vmul.f32 %v364, %v376
    %v384 = vmul.f32 %v365, %v376
    %v385 = vmul.f32 %v366, %v376
    %v386 = vmul.f32 %v367, %v376
    %v387 = vmul.f32 %v368, %v376
    %v388 = vmul.f32 %v369, %v376
    %v389 = vmul.f32 %v370, %v376
    %v390 = vmul.f32 %v371, %v376
    %v391 = vmul.f32 %v372, %v376
    %v392 = vmul.f32 %v373, %v376
    %v393 = vmul.f32 %v374, %v376
    %v395 = vperm.slane %v47, 0
    %v397 = vadd.f32 %v378, %v395
    %v398 = vadd.f32 %v379, %v395
    %v399 = vadd.f32 %v380, %v395
    %v400 = vadd.f32 %v381, %v395
    %v401 = vadd.f32 %v382, %v395
    %v402 = vadd.f32 %v383, %v395
    %v403 = vadd.f32 %v384, %v395
    %v404 = vadd.f32 %v385, %v395
    %v405 = vadd.f32 %v386, %v395
    %v406 = vadd.f32 %v387, %v395
    %v407 = vadd.f32 %v388, %v395
    %v408 = vadd.f32 %v389, %v395
    %v409 = vadd.f32 %v390, %v395
    %v410 = vadd.f32 %v391, %v395
    %v411 = vadd.f32 %v392, %v395
    %v412 = vadd.f32 %v393, %v395
    %v413 = vpack.c.bf16 %v397, %v397
    %v414 = vpack.c.bf16 %v398, %v398
    %v415 = vpack.c.bf16 %v399, %v399
    %v416 = vpack.c.bf16 %v400, %v400
    %v417 = vpack.c.bf16 %v401, %v401
    %v418 = vpack.c.bf16 %v402, %v402
    %v419 = vpack.c.bf16 %v403, %v403
    %v420 = vpack.c.bf16 %v404, %v404
    %v421 = vpack.c.bf16 %v405, %v405
    %v422 = vpack.c.bf16 %v406, %v406
    %v423 = vpack.c.bf16 %v407, %v407
    %v424 = vpack.c.bf16 %v408, %v408
    %v425 = vpack.c.bf16 %v409, %v409
    %v426 = vpack.c.bf16 %v410, %v410
    %v427 = vpack.c.bf16 %v411, %v411
    %v428 = vpack.c.bf16 %v412, %v412
    %429 = vst [vmem:[#allocation2] sm:$0xf] %v413
    %430 = vst [vmem:[#allocation2 + $0x4] sm:$0xf] %v414
    %431 = vst [vmem:[#allocation2 + $0x8] sm:$0xf] %v415
    %432 = vst [vmem:[#allocation2 + $0xc] sm:$0xf] %v416
    %433 = vst [vmem:[#allocation2 + $0x10] sm:$0xf] %v417
    %434 = vst [vmem:[#allocation2 + $0x14] sm:$0xf] %v418
    %435 = vst [vmem:[#allocation2 + $0x18] sm:$0xf] %v419
    %436 = vst [vmem:[#allocation2 + $0x1c] sm:$0xf] %v420
    %437 = vst [vmem:[#allocation2 + $0x20] sm:$0xf] %v421
    %438 = vst [vmem:[#allocation2 + $0x24] sm:$0xf] %v422
    %439 = vst [vmem:[#allocation2 + $0x28] sm:$0xf] %v423
    %440 = vst [vmem:[#allocation2 + $0x2c] sm:$0xf] %v424
    %441 = vst [vmem:[#allocation2 + $0x30] sm:$0xf] %v425
    %442 = vst [vmem:[#allocation2 + $0x34] sm:$0xf] %v426
    %443 = vst [vmem:[#allocation2 + $0x38] sm:$0xf] %v427
    %444 = vst [vmem:[#allocation2 + $0x3c] sm:$0xf] %v428
    %v445 = vld [vmem:[%s6] sm:$0x1]
    %v447 = vperm.slane %v445, 0
    %v449 = vadd.f32 %v30, %v447
    %v450 = vadd.f32 %v31, %v447
    %v451 = vadd.f32 %v32, %v447
    %v452 = vadd.f32 %v33, %v447
    %v453 = vadd.f32 %v34, %v447
    %v454 = vadd.f32 %v35, %v447
    %v455 = vadd.f32 %v36, %v447
    %v456 = vadd.f32 %v37, %v447
    %v457 = vadd.f32 %v38, %v447
    %v458 = vadd.f32 %v39, %v447
    %v459 = vadd.f32 %v40, %v447
    %v460 = vadd.f32 %v41, %v447
    %v461 = vadd.f32 %v42, %v447
    %v462 = vadd.f32 %v43, %v447
    %v463 = vadd.f32 %v44, %v447
    %v464 = vadd.f32 %v45, %v447
    %465 = vst [vmem:[#allocation3] sm:$0xff] %v449
    %466 = vst [vmem:[#allocation3 + $0x8] sm:$0xff] %v450
    %467 = vst [vmem:[#allocation3 + $0x10] sm:$0xff] %v451
    %468 = vst [vmem:[#allocation3 + $0x18] sm:$0xff] %v452
    %469 = vst [vmem:[#allocation3 + $0x20] sm:$0xff] %v453
    %470 = vst [vmem:[#allocation3 + $0x28] sm:$0xff] %v454
    %471 = vst [vmem:[#allocation3 + $0x30] sm:$0xff] %v455
    %472 = vst [vmem:[#allocation3 + $0x38] sm:$0xff] %v456
    %473 = vst [vmem:[#allocation3 + $0x40] sm:$0xff] %v457
    %474 = vst [vmem:[#allocation3 + $0x48] sm:$0xff] %v458
    %475 = vst [vmem:[#allocation3 + $0x50] sm:$0xff] %v459
    %476 = vst [vmem:[#allocation3 + $0x58] sm:$0xff] %v460
    %477 = vst [vmem:[#allocation3 + $0x60] sm:$0xff] %v461
    %478 = vst [vmem:[#allocation3 + $0x68] sm:$0xff] %v462
    %479 = vst [vmem:[#allocation3 + $0x70] sm:$0xff] %v463
    %480 = vst [vmem:[#allocation3 + $0x78] sm:$0xff] %v464
  $region33: #{forward.12} parent=0 // pred_fallthru
    _
  %v481 = vld [vmem:[#allocation2] sm:$0xf]
  %v482 = vld [vmem:[#allocation2 + $0x4] sm:$0xf]
  %v483 = vld [vmem:[#allocation2 + $0x8] sm:$0xf]
  %v484 = vld [vmem:[#allocation2 + $0xc] sm:$0xf]
  %v485 = vld [vmem:[#allocation2 + $0x10] sm:$0xf]
  %v486 = vld [vmem:[#allocation2 + $0x14] sm:$0xf]
  %v487 = vld [vmem:[#allocation2 + $0x18] sm:$0xf]
  %v488 = vld [vmem:[#allocation2 + $0x1c] sm:$0xf]
  %v489 = vld [vmem:[#allocation2 + $0x20] sm:$0xf]
  %v490 = vld [vmem:[#allocation2 + $0x24] sm:$0xf]
  %v491 = vld [vmem:[#allocation2 + $0x28] sm:$0xf]
  %v492 = vld [vmem:[#allocation2 + $0x2c] sm:$0xf]
  %v493 = vld [vmem:[#allocation2 + $0x30] sm:$0xf]
  %v494 = vld [vmem:[#allocation2 + $0x34] sm:$0xf]
  %v495 = vld [vmem:[#allocation2 + $0x38] sm:$0xf]
  %v496 = vld [vmem:[#allocation2 + $0x3c] sm:$0xf]
  %v497 = vld [vmem:[%s3] sm:$0xff]
  %v498 = vld [vmem:[%s3 + $0x8] sm:$0xff]
  %v499 = vld [vmem:[%s3 + $0x10] sm:$0xff]
  %v500 = vld [vmem:[%s3 + $0x18] sm:$0xff]
  %v501 = vld [vmem:[%s3 + $0x20] sm:$0xff]
  %v502 = vld [vmem:[%s3 + $0x28] sm:$0xff]
  %v503 = vld [vmem:[%s3 + $0x30] sm:$0xff]
  %v504 = vld [vmem:[%s3 + $0x38] sm:$0xff]
  %v505 = vld [vmem:[%s3 + $0x40] sm:$0xff]
  %v506 = vld [vmem:[%s3 + $0x48] sm:$0xff]
  %v507 = vld [vmem:[%s3 + $0x50] sm:$0xff]
  %v508 = vld [vmem:[%s3 + $0x58] sm:$0xff]
  %v509 = vld [vmem:[%s3 + $0x60] sm:$0xff]
  %v510 = vld [vmem:[%s3 + $0x68] sm:$0xff]
  %v511 = vld [vmem:[%s3 + $0x70] sm:$0xff]
  %v512 = vld [vmem:[%s3 + $0x78] sm:$0xff]
  %v513 = vld [vmem:[%s3 + $0x80] sm:$0xff]
  %v514 = vld [vmem:[%s3 + $0x88] sm:$0xff]
  %v515 = vld [vmem:[%s3 + $0x90] sm:$0xff]
  %v516 = vld [vmem:[%s3 + $0x98] sm:$0xff]
  %v517 = vld [vmem:[%s3 + $0xa0] sm:$0xff]
  %v518 = vld [vmem:[%s3 + $0xa8] sm:$0xff]
  %v519 = vld [vmem:[%s3 + $0xb0] sm:$0xff]
  %v520 = vld [vmem:[%s3 + $0xb8] sm:$0xff]
  %v521 = vld [vmem:[%s3 + $0xc0] sm:$0xff]
  %v522 = vld [vmem:[%s3 + $0xc8] sm:$0xff]
  %v523 = vld [vmem:[%s3 + $0xd0] sm:$0xff]
  %v524 = vld [vmem:[%s3 + $0xd8] sm:$0xff]
  %v525 = vld [vmem:[%s3 + $0xe0] sm:$0xff]
  %v526 = vld [vmem:[%s3 + $0xe8] sm:$0xff]
  %v527 = vld [vmem:[%s3 + $0xf0] sm:$0xff]
  %v528 = vld [vmem:[%s3 + $0xf8] sm:$0xff]
  %v529 = vld [vmem:[%s4] sm:$0xf]
  %v531 = vperm.slane %v529, 0
  %v532 = vperm.slane %v529, 1
  %v533 = vperm.slane %v529, 2
  %v534 = vperm.slane %v529, 3
  %v555 = vunpack.c.l.b16 %v481
  %v556 = vunpack.c.l.b16 %v482
  %v557 = vunpack.c.l.b16 %v483
  %v558 = vunpack.c.l.b16 %v484
  %v559 = vunpack.c.l.b16 %v485
  %v560 = vunpack.c.l.b16 %v486
  %v561 = vunpack.c.l.b16 %v487
  %v562 = vunpack.c.l.b16 %v488
  %v563 = vunpack.c.l.b16 %v489
  %v564 = vunpack.c.l.b16 %v490
  %v565 = vunpack.c.l.b16 %v491
  %v566 = vunpack.c.l.b16 %v492
  %v567 = vunpack.c.l.b16 %v493
  %v568 = vunpack.c.l.b16 %v494
  %v569 = vunpack.c.l.b16 %v495
  %v570 = vunpack.c.l.b16 %v496
  %v571 = vpack.c.b16 %v556, %v555
  %v572 = vpack.c.b16 %v558, %v557
  %v573 = vpack.c.b16 %v560, %v559
  %v574 = vpack.c.b16 %v562, %v561
  %v575 = vpack.c.b16 %v564, %v563
  %v576 = vpack.c.b16 %v566, %v565
  %v577 = vpack.c.b16 %v568, %v567
  %v578 = vpack.c.b16 %v570, %v569
  %v619 = vunpack.c.l.b16 %v497
  %v620 = vunpack.c.h.b16 %v497
  %v621 = vunpack.c.l.b16 %v498
  %v622 = vunpack.c.h.b16 %v498
  %v623 = vunpack.c.l.b16 %v499
  %v624 = vunpack.c.h.b16 %v499
  %v625 = vunpack.c.l.b16 %v500
  %v626 = vunpack.c.h.b16 %v500
  %v627 = vunpack.c.l.b16 %v501
  %v628 = vunpack.c.h.b16 %v501
  %v629 = vunpack.c.l.b16 %v502
  %v630 = vunpack.c.h.b16 %v502
  %v631 = vunpack.c.l.b16 %v503
  %v632 = vunpack.c.h.b16 %v503
  %v633 = vunpack.c.l.b16 %v504
  %v634 = vunpack.c.h.b16 %v504
  %v635 = vunpack.c.l.b16 %v505
  %v636 = vunpack.c.h.b16 %v505
  %v637 = vunpack.c.l.b16 %v506
  %v638 = vunpack.c.h.b16 %v506
  %v639 = vunpack.c.l.b16 %v507
  %v640 = vunpack.c.h.b16 %v507
  %v641 = vunpack.c.l.b16 %v508
  %v642 = vunpack.c.h.b16 %v508
  %v643 = vunpack.c.l.b16 %v509
  %v644 = vunpack.c.h.b16 %v509
  %v645 = vunpack.c.l.b16 %v510
  %v646 = vunpack.c.h.b16 %v510
  %v647 = vunpack.c.l.b16 %v511
  %v648 = vunpack.c.h.b16 %v511
  %v649 = vunpack.c.l.b16 %v512
  %v650 = vunpack.c.h.b16 %v512
  %v651 = vunpack.c.l.b16 %v513
  %v652 = vunpack.c.h.b16 %v513
  %v653 = vunpack.c.l.b16 %v514
  %v654 = vunpack.c.h.b16 %v514
  %v655 = vunpack.c.l.b16 %v515
  %v656 = vunpack.c.h.b16 %v515
  %v657 = vunpack.c.l.b16 %v516
  %v658 = vunpack.c.h.b16 %v516
  %v659 = vunpack.c.l.b16 %v517
  %v660 = vunpack.c.h.b16 %v517
  %v661 = vunpack.c.l.b16 %v518
  %v662 = vunpack.c.h.b16 %v518
  %v663 = vunpack.c.l.b16 %v519
  %v664 = vunpack.c.h.b16 %v519
  %v665 = vunpack.c.l.b16 %v520
  %v666 = vunpack.c.h.b16 %v520
  %v667 = vunpack.c.l.b16 %v521
  %v668 = vunpack.c.h.b16 %v521
  %v669 = vunpack.c.l.b16 %v522
  %v670 = vunpack.c.h.b16 %v522
  %v671 = vunpack.c.l.b16 %v523
  %v672 = vunpack.c.h.b16 %v523
  %v673 = vunpack.c.l.b16 %v524
  %v674 = vunpack.c.h.b16 %v524
  %v675 = vunpack.c.l.b16 %v525
  %v676 = vunpack.c.h.b16 %v525
  %v677 = vunpack.c.l.b16 %v526
  %v678 = vunpack.c.h.b16 %v526
  %v679 = vunpack.c.l.b16 %v527
  %v680 = vunpack.c.h.b16 %v527
  %v681 = vunpack.c.l.b16 %v528
  %v682 = vunpack.c.h.b16 %v528
  %v683 = vpack.c.b16 %v623, %v619
  %v684 = vpack.c.b16 %v624, %v620
  %v685 = vpack.c.b16 %v625, %v621
  %v686 = vpack.c.b16 %v626, %v622
  %v687 = vpack.c.b16 %v631, %v627
  %v688 = vpack.c.b16 %v632, %v628
  %v689 = vpack.c.b16 %v633, %v629
  %v690 = vpack.c.b16 %v634, %v630
  %v691 = vpack.c.b16 %v639, %v635
  %v692 = vpack.c.b16 %v640, %v636
  %v693 = vpack.c.b16 %v641, %v637
  %v694 = vpack.c.b16 %v642, %v638
  %v695 = vpack.c.b16 %v647, %v643
  %v696 = vpack.c.b16 %v648, %v644
  %v697 = vpack.c.b16 %v649, %v645
  %v698 = vpack.c.b16 %v650, %v646
  %v699 = vpack.c.b16 %v655, %v651
  %v700 = vpack.c.b16 %v656, %v652
  %v701 = vpack.c.b16 %v657, %v653
  %v702 = vpack.c.b16 %v658, %v654
  %v703 = vpack.c.b16 %v663, %v659
  %v704 = vpack.c.b16 %v664, %v660
  %v705 = vpack.c.b16 %v665, %v661
  %v706 = vpack.c.b16 %v666, %v662
  %v707 = vpack.c.b16 %v671, %v667
  %v708 = vpack.c.b16 %v672, %v668
  %v709 = vpack.c.b16 %v673, %v669
  %v710 = vpack.c.b16 %v674, %v670
  %v711 = vpack.c.b16 %v679, %v675
  %v712 = vpack.c.b16 %v680, %v676
  %v713 = vpack.c.b16 %v681, %v677
  %v714 = vpack.c.b16 %v682, %v678
  %747 = vmatpush.bf16.msra.mxu0 %v711
  %748 = vmatpush.bf16.msra.mxu0 %v707
  %749 = vmatpush.bf16.msra.mxu0 %v703
  %750 = vmatpush.bf16.msra.mxu0 %v699
  %751 = vmatpush.bf16.msra.mxu0 %v695
  %752 = vmatpush.bf16.msra.mxu0 %v691
  %753 = vmatpush.bf16.msra.mxu0 %v687
  %754 = vmatpush.bf16.msra.mxu0 %v683
  %755 = vmatmul.bf16.gmra.mxu0 %v571
  %v756 = vpop.f32.mrf.mxu0
  %v757 = vadd.f32 %v531, %v756
  %v758 = vpop.f32.mrf.mxu0
  %v759 = vadd.f32 %v531, %v758
  %760 = vmatmul.bf16.gmra.mxu0 %v572
  %v761 = vpop.f32.mrf.mxu0
  %v762 = vadd.f32 %v531, %v761
  %v763 = vpop.f32.mrf.mxu0
  %v764 = vadd.f32 %v531, %v763
  %765 = vmatmul.bf16.gmra.mxu0 %v573
  %v766 = vpop.f32.mrf.mxu0
  %v767 = vadd.f32 %v531, %v766
  %v768 = vpop.f32.mrf.mxu0
  %v769 = vadd.f32 %v531, %v768
  %770 = vmatmul.bf16.gmra.mxu0 %v574
  %v771 = vpop.f32.mrf.mxu0
  %v772 = vadd.f32 %v531, %v771
  %v773 = vpop.f32.mrf.mxu0
  %v774 = vadd.f32 %v531, %v773
  %775 = vmatmul.bf16.gmra.mxu0 %v575
  %v776 = vpop.f32.mrf.mxu0
  %v777 = vadd.f32 %v531, %v776
  %v778 = vpop.f32.mrf.mxu0
  %v779 = vadd.f32 %v531, %v778
  %780 = vmatmul.bf16.gmra.mxu0 %v576
  %v781 = vpop.f32.mrf.mxu0
  %v782 = vadd.f32 %v531, %v781
  %v783 = vpop.f32.mrf.mxu0
  %v784 = vadd.f32 %v531, %v783
  %785 = vmatmul.bf16.gmra.mxu0 %v577
  %v786 = vpop.f32.mrf.mxu0
  %v787 = vadd.f32 %v531, %v786
  %v788 = vpop.f32.mrf.mxu0
  %v789 = vadd.f32 %v531, %v788
  %790 = vmatmul.bf16.gmra.mxu0 %v578
  %v791 = vpop.f32.mrf.mxu0
  %v792 = vadd.f32 %v531, %v791
  %v793 = vpop.f32.mrf.mxu0
  %v794 = vadd.f32 %v531, %v793
  %795 = vdwg.mxu0
  %796 = vmatpush.bf16.msra.mxu0 %v712
  %797 = vmatpush.bf16.msra.mxu0 %v708
  %798 = vmatpush.bf16.msra.mxu0 %v704
  %799 = vmatpush.bf16.msra.mxu0 %v700
  %800 = vmatpush.bf16.msra.mxu0 %v696
  %801 = vmatpush.bf16.msra.mxu0 %v692
  %802 = vmatpush.bf16.msra.mxu0 %v688
  %803 = vmatpush.bf16.msra.mxu0 %v684
  %804 = vmatmul.bf16.gmra.mxu0 %v571
  %v805 = vpop.f32.mrf.mxu0
  %v806 = vadd.f32 %v532, %v805
  %v807 = vpop.f32.mrf.mxu0
  %v808 = vadd.f32 %v532, %v807
  %809 = vmatmul.bf16.gmra.mxu0 %v572
  %v810 = vpop.f32.mrf.mxu0
  %v811 = vadd.f32 %v532, %v810
  %v812 = vpop.f32.mrf.mxu0
  %v813 = vadd.f32 %v532, %v812
  %814 = vmatmul.bf16.gmra.mxu0 %v573
  %v815 = vpop.f32.mrf.mxu0
  %v816 = vadd.f32 %v532, %v815
  %v817 = vpop.f32.mrf.mxu0
  %v818 = vadd.f32 %v532, %v817
  %819 = vmatmul.bf16.gmra.mxu0 %v574
  %v820 = vpop.f32.mrf.mxu0
  %v821 = vadd.f32 %v532, %v820
  %v822 = vpop.f32.mrf.mxu0
  %v823 = vadd.f32 %v532, %v822
  %824 = vmatmul.bf16.gmra.mxu0 %v575
  %v825 = vpop.f32.mrf.mxu0
  %v826 = vadd.f32 %v532, %v825
  %v827 = vpop.f32.mrf.mxu0
  %v828 = vadd.f32 %v532, %v827
  %829 = vmatmul.bf16.gmra.mxu0 %v576
  %v830 = vpop.f32.mrf.mxu0
  %v831 = vadd.f32 %v532, %v830
  %v832 = vpop.f32.mrf.mxu0
  %v833 = vadd.f32 %v532, %v832
  %834 = vmatmul.bf16.gmra.mxu0 %v577
  %v835 = vpop.f32.mrf.mxu0
  %v836 = vadd.f32 %v532, %v835
  %v837 = vpop.f32.mrf.mxu0
  %v838 = vadd.f32 %v532, %v837
  %839 = vmatmul.bf16.gmra.mxu0 %v578
  %v840 = vpop.f32.mrf.mxu0
  %v841 = vadd.f32 %v532, %v840
  %v842 = vpop.f32.mrf.mxu0
  %v843 = vadd.f32 %v532, %v842
  %844 = vdwg.mxu0
  %845 = vmatpush.bf16.msra.mxu0 %v713
  %846 = vmatpush.bf16.msra.mxu0 %v709
  %847 = vmatpush.bf16.msra.mxu0 %v705
  %848 = vmatpush.bf16.msra.mxu0 %v701
  %849 = vmatpush.bf16.msra.mxu0 %v697
  %850 = vmatpush.bf16.msra.mxu0 %v693
  %851 = vmatpush.bf16.msra.mxu0 %v689
  %852 = vmatpush.bf16.msra.mxu0 %v685
  %853 = vmatmul.bf16.gmra.mxu0 %v571
  %v854 = vpop.f32.mrf.mxu0
  %v855 = vadd.f32 %v533, %v854
  %v856 = vpop.f32.mrf.mxu0
  %v857 = vadd.f32 %v533, %v856
  %858 = vmatmul.bf16.gmra.mxu0 %v572
  %v859 = vpop.f32.mrf.mxu0
  %v860 = vadd.f32 %v533, %v859
  %v861 = vpop.f32.mrf.mxu0
  %v862 = vadd.f32 %v533, %v861
  %863 = vmatmul.bf16.gmra.mxu0 %v573
  %v864 = vpop.f32.mrf.mxu0
  %v865 = vadd.f32 %v533, %v864
  %v866 = vpop.f32.mrf.mxu0
  %v867 = vadd.f32 %v533, %v866
  %868 = vmatmul.bf16.gmra.mxu0 %v574
  %v869 = vpop.f32.mrf.mxu0
  %v870 = vadd.f32 %v533, %v869
  %v871 = vpop.f32.mrf.mxu0
  %v872 = vadd.f32 %v533, %v871
  %873 = vmatmul.bf16.gmra.mxu0 %v575
  %v874 = vpop.f32.mrf.mxu0
  %v875 = vadd.f32 %v533, %v874
  %v876 = vpop.f32.mrf.mxu0
  %v877 = vadd.f32 %v533, %v876
  %878 = vmatmul.bf16.gmra.mxu0 %v576
  %v879 = vpop.f32.mrf.mxu0
  %v880 = vadd.f32 %v533, %v879
  %v881 = vpop.f32.mrf.mxu0
  %v882 = vadd.f32 %v533, %v881
  %883 = vmatmul.bf16.gmra.mxu0 %v577
  %v884 = vpop.f32.mrf.mxu0
  %v885 = vadd.f32 %v533, %v884
  %v886 = vpop.f32.mrf.mxu0
  %v887 = vadd.f32 %v533, %v886
  %888 = vmatmul.bf16.gmra.mxu0 %v578
  %v889 = vpop.f32.mrf.mxu0
  %v890 = vadd.f32 %v533, %v889
  %v891 = vpop.f32.mrf.mxu0
  %v892 = vadd.f32 %v533, %v891
  %893 = vdwg.mxu0
  %894 = vmatpush.bf16.msra.mxu0 %v714
  %895 = vmatpush.bf16.msra.mxu0 %v710
  %896 = vmatpush.bf16.msra.mxu0 %v706
  %897 = vmatpush.bf16.msra.mxu0 %v702
  %898 = vmatpush.bf16.msra.mxu0 %v698
  %899 = vmatpush.bf16.msra.mxu0 %v694
  %900 = vmatpush.bf16.msra.mxu0 %v690
  %901 = vmatpush.bf16.msra.mxu0 %v686
  %902 = vmatmul.bf16.gmra.mxu0 %v571
  %v903 = vpop.f32.mrf.mxu0
  %v904 = vadd.f32 %v534, %v903
  %v905 = vpop.f32.mrf.mxu0
  %v906 = vadd.f32 %v534, %v905
  %907 = vmatmul.bf16.gmra.mxu0 %v572
  %v908 = vpop.f32.mrf.mxu0
  %v909 = vadd.f32 %v534, %v908
  %v910 = vpop.f32.mrf.mxu0
  %v911 = vadd.f32 %v534, %v910
  %912 = vmatmul.bf16.gmra.mxu0 %v573
  %v913 = vpop.f32.mrf.mxu0
  %v914 = vadd.f32 %v534, %v913
  %v915 = vpop.f32.mrf.mxu0
  %v916 = vadd.f32 %v534, %v915
  %917 = vmatmul.bf16.gmra.mxu0 %v574
  %v918 = vpop.f32.mrf.mxu0
  %v919 = vadd.f32 %v534, %v918
  %v920 = vpop.f32.mrf.mxu0
  %v921 = vadd.f32 %v534, %v920
  %922 = vmatmul.bf16.gmra.mxu0 %v575
  %v923 = vpop.f32.mrf.mxu0
  %v924 = vadd.f32 %v534, %v923
  %v925 = vpop.f32.mrf.mxu0
  %v926 = vadd.f32 %v534, %v925
  %927 = vmatmul.bf16.gmra.mxu0 %v576
  %v928 = vpop.f32.mrf.mxu0
  %v929 = vadd.f32 %v534, %v928
  %v930 = vpop.f32.mrf.mxu0
  %v931 = vadd.f32 %v534, %v930
  %932 = vmatmul.bf16.gmra.mxu0 %v577
  %v933 = vpop.f32.mrf.mxu0
  %v934 = vadd.f32 %v534, %v933
  %v935 = vpop.f32.mrf.mxu0
  %v936 = vadd.f32 %v534, %v935
  %937 = vmatmul.bf16.gmra.mxu0 %v578
  %v938 = vpop.f32.mrf.mxu0
  %v939 = vadd.f32 %v534, %v938
  %v940 = vpop.f32.mrf.mxu0
  %v941 = vadd.f32 %v534, %v940
  %942 = vdwg.mxu0
  %v943 = vmul.f32 %v757, 0.5
  %v944 = vmul.f32 %v806, 0.5
  %v945 = vmul.f32 %v855, 0.5
  %v946 = vmul.f32 %v904, 0.5
  %v947 = vmul.f32 %v759, 0.5
  %v948 = vmul.f32 %v808, 0.5
  %v949 = vmul.f32 %v857, 0.5
  %v950 = vmul.f32 %v906, 0.5
  %v951 = vmul.f32 %v762, 0.5
  %v952 = vmul.f32 %v811, 0.5
  %v953 = vmul.f32 %v860, 0.5
  %v954 = vmul.f32 %v909, 0.5
  %v955 = vmul.f32 %v764, 0.5
  %v956 = vmul.f32 %v813, 0.5
  %v957 = vmul.f32 %v862, 0.5
  %v958 = vmul.f32 %v911, 0.5
  %v959 = vmul.f32 %v767, 0.5
  %v960 = vmul.f32 %v816, 0.5
  %v961 = vmul.f32 %v865, 0.5
  %v962 = vmul.f32 %v914, 0.5
  %v963 = vmul.f32 %v769, 0.5
  %v964 = vmul.f32 %v818, 0.5
  %v965 = vmul.f32 %v867, 0.5
  %v966 = vmul.f32 %v916, 0.5
  %v967 = vmul.f32 %v772, 0.5
  %v968 = vmul.f32 %v821, 0.5
  %v969 = vmul.f32 %v870, 0.5
  %v970 = vmul.f32 %v919, 0.5
  %v971 = vmul.f32 %v774, 0.5
  %v972 = vmul.f32 %v823, 0.5
  %v973 = vmul.f32 %v872, 0.5
  %v974 = vmul.f32 %v921, 0.5
  %v975 = vmul.f32 %v777, 0.5
  %v976 = vmul.f32 %v826, 0.5
  %v977 = vmul.f32 %v875, 0.5
  %v978 = vmul.f32 %v924, 0.5
  %v979 = vmul.f32 %v779, 0.5
  %v980 = vmul.f32 %v828, 0.5
  %v981 = vmul.f32 %v877, 0.5
  %v982 = vmul.f32 %v926, 0.5
  %v983 = vmul.f32 %v782, 0.5
  %v984 = vmul.f32 %v831, 0.5
  %v985 = vmul.f32 %v880, 0.5
  %v986 = vmul.f32 %v929, 0.5
  %v987 = vmul.f32 %v784, 0.5
  %v988 = vmul.f32 %v833, 0.5
  %v989 = vmul.f32 %v882, 0.5
  %v990 = vmul.f32 %v931, 0.5
  %v991 = vmul.f32 %v787, 0.5
  %v992 = vmul.f32 %v836, 0.5
  %v993 = vmul.f32 %v885, 0.5
  %v994 = vmul.f32 %v934, 0.5
  %v995 = vmul.f32 %v789, 0.5
  %v996 = vmul.f32 %v838, 0.5
  %v997 = vmul.f32 %v887, 0.5
  %v998 = vmul.f32 %v936, 0.5
  %v999 = vmul.f32 %v792, 0.5
  %v1000 = vmul.f32 %v841, 0.5
  %v1001 = vmul.f32 %v890, 0.5
  %v1002 = vmul.f32 %v939, 0.5
  %v1003 = vmul.f32 %v794, 0.5
  %v1004 = vmul.f32 %v843, 0.5
  %v1005 = vmul.f32 %v892, 0.5
  %v1006 = vmul.f32 %v941, 0.5
  %v1007 = vmul.f32 %v757, 0.70710677
  %v1008 = vmul.f32 %v806, 0.70710677
  %v1009 = vmul.f32 %v855, 0.70710677
  %v1010 = vmul.f32 %v904, 0.70710677
  %v1011 = vmul.f32 %v759, 0.70710677
  %v1012 = vmul.f32 %v808, 0.70710677
  %v1013 = vmul.f32 %v857, 0.70710677
  %v1014 = vmul.f32 %v906, 0.70710677
  %v1015 = vmul.f32 %v762, 0.70710677
  %v1016 = vmul.f32 %v811, 0.70710677
  %v1017 = vmul.f32 %v860, 0.70710677
  %v1018 = vmul.f32 %v909, 0.70710677
  %v1019 = vmul.f32 %v764, 0.70710677
  %v1020 = vmul.f32 %v813, 0.70710677
  %v1021 = vmul.f32 %v862, 0.70710677
  %v1022 = vmul.f32 %v911, 0.70710677
  %v1023 = vmul.f32 %v767, 0.70710677
  %v1024 = vmul.f32 %v816, 0.70710677
  %v1025 = vmul.f32 %v865, 0.70710677
  %v1026 = vmul.f32 %v914, 0.70710677
  %v1027 = vmul.f32 %v769, 0.70710677
  %v1028 = vmul.f32 %v818, 0.70710677
  %v1029 = vmul.f32 %v867, 0.70710677
  %v1030 = vmul.f32 %v916, 0.70710677
  %v1031 = vmul.f32 %v772, 0.70710677
  %v1032 = vmul.f32 %v821, 0.70710677
  %v1033 = vmul.f32 %v870, 0.70710677
  %v1034 = vmul.f32 %v919, 0.70710677
  %v1035 = vmul.f32 %v774, 0.70710677
  %v1036 = vmul.f32 %v823, 0.70710677
  %v1037 = vmul.f32 %v872, 0.70710677
  %v1038 = vmul.f32 %v921, 0.70710677
  %v1039 = vmul.f32 %v777, 0.70710677
  %v1040 = vmul.f32 %v826, 0.70710677
  %v1041 = vmul.f32 %v875, 0.70710677
  %v1042 = vmul.f32 %v924, 0.70710677
  %v1043 = vmul.f32 %v779, 0.70710677
  %v1044 = vmul.f32 %v828, 0.70710677
  %v1045 = vmul.f32 %v877, 0.70710677
  %v1046 = vmul.f32 %v926, 0.70710677
  %v1047 = vmul.f32 %v782, 0.70710677
  %v1048 = vmul.f32 %v831, 0.70710677
  %v1049 = vmul.f32 %v880, 0.70710677
  %v1050 = vmul.f32 %v929, 0.70710677
  %v1051 = vmul.f32 %v784, 0.70710677
  %v1052 = vmul.f32 %v833, 0.70710677
  %v1053 = vmul.f32 %v882, 0.70710677
  %v1054 = vmul.f32 %v931, 0.70710677
  %v1055 = vmul.f32 %v787, 0.70710677
  %v1056 = vmul.f32 %v836, 0.70710677
  %v1057 = vmul.f32 %v885, 0.70710677
  %v1058 = vmul.f32 %v934, 0.70710677
  %v1059 = vmul.f32 %v789, 0.70710677
  %v1060 = vmul.f32 %v838, 0.70710677
  %v1061 = vmul.f32 %v887, 0.70710677
  %v1062 = vmul.f32 %v936, 0.70710677
  %v1063 = vmul.f32 %v792, 0.70710677
  %v1064 = vmul.f32 %v841, 0.70710677
  %v1065 = vmul.f32 %v890, 0.70710677
  %v1066 = vmul.f32 %v939, 0.70710677
  %v1067 = vmul.f32 %v794, 0.70710677
  %v1068 = vmul.f32 %v843, 0.70710677
  %v1069 = vmul.f32 %v892, 0.70710677
  %v1070 = vmul.f32 %v941, 0.70710677
  %v1071 = vmul.f32 %v1007, %v1007
  %v1072 = vmin.f32 16.0, %v1071
  %v1073 = vmul.f32 %v1072, 2.1237322e-06
  %v1074 = vadd.f32 %v1073, 0.00028619796
  %v1075 = vmul.f32 %v1072, %v1074
  %v1076 = vadd.f32 %v1075, 0.0036580483
  %v1077 = vmul.f32 %v1072, %v1076
  %v1078 = vadd.f32 %v1077, 0.05243302
  %v1079 = vmul.f32 %v1072, %v1078
  %v1080 = vadd.f32 %v1079, 0.18741608
  %v1081 = vmul.f32 %v1072, %v1080
  %v1082 = vadd.f32 %v1081, 1.1283791
  %v1083 = vmul.f32 %v1007, %v1082
  %v1084 = vmul.f32 %v1072, 3.8918573e-05
  %v1085 = vadd.f32 %v1084, 0.001143296
  %v1086 = vmul.f32 %v1072, %v1085
  %v1087 = vadd.f32 %v1086, 0.014752088
  %v1088 = vmul.f32 %v1072, %v1087
  %v1089 = vadd.f32 %v1088, 0.112945676
  %v1090 = vmul.f32 %v1072, %v1089
  %v1091 = vadd.f32 %v1090, 0.4994258
  %v1092 = vmul.f32 %v1072, %v1091
  %v1093 = vadd.f32 %v1092, 1.0
  %v1094 = vrcp.pop %v1093
  %v1095 = vmul.f32 %v1093, %v1094
  %v1096 = vsub.f32 1.0, %v1095
  %v1097 = vmul.f32 %v1094, %v1096
  %v1098 = vadd.f32 %v1094, %v1097
  %vm1099 = vweird.f32 %v1093
  %vm1100 = vweird.f32 %v1094
  %vm1101 = vmor %vm1099, %vm1100
  %v1102 = vsel %vm1101, %v1094, %v1098
  %v1103 = vand.u32 2147483647, %v1093
  %vm1104 = vcmp.eq.f32.partialorder %v1103, 8.507059e+37
  %v1105 = vand.u32 %v1093, 2147483648
  %v1106 = vor.u32 1.1754944e-38, %v1105
  %v1107 = vsel %vm1104, %v1106, %v1102
  %v1108 = vmul.f32 %v1083, %v1107
  %v1109 = vmin.f32 %v1108, 1.0
  %v1110 = vmax.f32 %v1109, -1.0
  %v1111 = vmul.f32 %v1008, %v1008
  %v1112 = vmin.f32 16.0, %v1111
  %v1113 = vmul.f32 %v1112, 2.1237322e-06
  %v1114 = vadd.f32 %v1113, 0.00028619796
  %v1115 = vmul.f32 %v1112, %v1114
  %v1116 = vadd.f32 %v1115, 0.0036580483
  %v1117 = vmul.f32 %v1112, %v1116
  %v1118 = vadd.f32 %v1117, 0.05243302
  %v1119 = vmul.f32 %v1112, %v1118
  %v1120 = vadd.f32 %v1119, 0.18741608
  %v1121 = vmul.f32 %v1112, %v1120
  %v1122 = vadd.f32 %v1121, 1.1283791
  %v1123 = vmul.f32 %v1008, %v1122
  %v1124 = vmul.f32 %v1112, 3.8918573e-05
  %v1125 = vadd.f32 %v1124, 0.001143296
  %v1126 = vmul.f32 %v1112, %v1125
  %v1127 = vadd.f32 %v1126, 0.014752088
  %v1128 = vmul.f32 %v1112, %v1127
  %v1129 = vadd.f32 %v1128, 0.112945676
  %v1130 = vmul.f32 %v1112, %v1129
  %v1131 = vadd.f32 %v1130, 0.4994258
  %v1132 = vmul.f32 %v1112, %v1131
  %v1133 = vadd.f32 %v1132, 1.0
  %v1134 = vrcp.pop %v1133
  %v1135 = vmul.f32 %v1133, %v1134
  %v1136 = vsub.f32 1.0, %v1135
  %v1137 = vmul.f32 %v1134, %v1136
  %v1138 = vadd.f32 %v1134, %v1137
  %vm1139 = vweird.f32 %v1133
  %vm1140 = vweird.f32 %v1134
  %vm1141 = vmor %vm1139, %vm1140
  %v1142 = vsel %vm1141, %v1134, %v1138
  %v1143 = vand.u32 2147483647, %v1133
  %vm1144 = vcmp.eq.f32.partialorder %v1143, 8.507059e+37
  %v1145 = vand.u32 %v1133, 2147483648
  %v1146 = vor.u32 1.1754944e-38, %v1145
  %v1147 = vsel %vm1144, %v1146, %v1142
  %v1148 = vmul.f32 %v1123, %v1147
  %v1149 = vmin.f32 %v1148, 1.0
  %v1150 = vmax.f32 %v1149, -1.0
  %v1151 = vmul.f32 %v1009, %v1009
  %v1152 = vmin.f32 16.0, %v1151
  %v1153 = vmul.f32 %v1152, 2.1237322e-06
  %v1154 = vadd.f32 %v1153, 0.00028619796
  %v1155 = vmul.f32 %v1152, %v1154
  %v1156 = vadd.f32 %v1155, 0.0036580483
  %v1157 = vmul.f32 %v1152, %v1156
  %v1158 = vadd.f32 %v1157, 0.05243302
  %v1159 = vmul.f32 %v1152, %v1158
  %v1160 = vadd.f32 %v1159, 0.18741608
  %v1161 = vmul.f32 %v1152, %v1160
  %v1162 = vadd.f32 %v1161, 1.1283791
  %v1163 = vmul.f32 %v1009, %v1162
  %v1164 = vmul.f32 %v1152, 3.8918573e-05
  %v1165 = vadd.f32 %v1164, 0.001143296
  %v1166 = vmul.f32 %v1152, %v1165
  %v1167 = vadd.f32 %v1166, 0.014752088
  %v1168 = vmul.f32 %v1152, %v1167
  %v1169 = vadd.f32 %v1168, 0.112945676
  %v1170 = vmul.f32 %v1152, %v1169
  %v1171 = vadd.f32 %v1170, 0.4994258
  %v1172 = vmul.f32 %v1152, %v1171
  %v1173 = vadd.f32 %v1172, 1.0
  %v1174 = vrcp.pop %v1173
  %v1175 = vmul.f32 %v1173, %v1174
  %v1176 = vsub.f32 1.0, %v1175
  %v1177 = vmul.f32 %v1174, %v1176
  %v1178 = vadd.f32 %v1174, %v1177
  %vm1179 = vweird.f32 %v1173
  %vm1180 = vweird.f32 %v1174
  %vm1181 = vmor %vm1179, %vm1180
  %v1182 = vsel %vm1181, %v1174, %v1178
  %v1183 = vand.u32 2147483647, %v1173
  %vm1184 = vcmp.eq.f32.partialorder %v1183, 8.507059e+37
  %v1185 = vand.u32 %v1173, 2147483648
  %v1186 = vor.u32 1.1754944e-38, %v1185
  %v1187 = vsel %vm1184, %v1186, %v1182
  %v1188 = vmul.f32 %v1163, %v1187
  %v1189 = vmin.f32 %v1188, 1.0
  %v1190 = vmax.f32 %v1189, -1.0
  %v1191 = vmul.f32 %v1010, %v1010
  %v1192 = vmin.f32 16.0, %v1191
  %v1193 = vmul.f32 %v1192, 2.1237322e-06
  %v1194 = vadd.f32 %v1193, 0.00028619796
  %v1195 = vmul.f32 %v1192, %v1194
  %v1196 = vadd.f32 %v1195, 0.0036580483
  %v1197 = vmul.f32 %v1192, %v1196
  %v1198 = vadd.f32 %v1197, 0.05243302
  %v1199 = vmul.f32 %v1192, %v1198
  %v1200 = vadd.f32 %v1199, 0.18741608
  %v1201 = vmul.f32 %v1192, %v1200
  %v1202 = vadd.f32 %v1201, 1.1283791
  %v1203 = vmul.f32 %v1010, %v1202
  %v1204 = vmul.f32 %v1192, 3.8918573e-05
  %v1205 = vadd.f32 %v1204, 0.001143296
  %v1206 = vmul.f32 %v1192, %v1205
  %v1207 = vadd.f32 %v1206, 0.014752088
  %v1208 = vmul.f32 %v1192, %v1207
  %v1209 = vadd.f32 %v1208, 0.112945676
  %v1210 = vmul.f32 %v1192, %v1209
  %v1211 = vadd.f32 %v1210, 0.4994258
  %v1212 = vmul.f32 %v1192, %v1211
  %v1213 = vadd.f32 %v1212, 1.0
  %v1214 = vrcp.pop %v1213
  %v1215 = vmul.f32 %v1213, %v1214
  %v1216 = vsub.f32 1.0, %v1215
  %v1217 = vmul.f32 %v1214, %v1216
  %v1218 = vadd.f32 %v1214, %v1217
  %vm1219 = vweird.f32 %v1213
  %vm1220 = vweird.f32 %v1214
  %vm1221 = vmor %vm1219, %vm1220
  %v1222 = vsel %vm1221, %v1214, %v1218
  %v1223 = vand.u32 2147483647, %v1213
  %vm1224 = vcmp.eq.f32.partialorder %v1223, 8.507059e+37
  %v1225 = vand.u32 %v1213, 2147483648
  %v1226 = vor.u32 1.1754944e-38, %v1225
  %v1227 = vsel %vm1224, %v1226, %v1222
  %v1228 = vmul.f32 %v1203, %v1227
  %v1229 = vmin.f32 %v1228, 1.0
  %v1230 = vmax.f32 %v1229, -1.0
  %v1231 = vmul.f32 %v1011, %v1011
  %v1232 = vmin.f32 16.0, %v1231
  %v1233 = vmul.f32 %v1232, 2.1237322e-06
  %v1234 = vadd.f32 %v1233, 0.00028619796
  %v1235 = vmul.f32 %v1232, %v1234
  %v1236 = vadd.f32 %v1235, 0.0036580483
  %v1237 = vmul.f32 %v1232, %v1236
  %v1238 = vadd.f32 %v1237, 0.05243302
  %v1239 = vmul.f32 %v1232, %v1238
  %v1240 = vadd.f32 %v1239, 0.18741608
  %v1241 = vmul.f32 %v1232, %v1240
  %v1242 = vadd.f32 %v1241, 1.1283791
  %v1243 = vmul.f32 %v1011, %v1242
  %v1244 = vmul.f32 %v1232, 3.8918573e-05
  %v1245 = vadd.f32 %v1244, 0.001143296
  %v1246 = vmul.f32 %v1232, %v1245
  %v1247 = vadd.f32 %v1246, 0.014752088
  %v1248 = vmul.f32 %v1232, %v1247
  %v1249 = vadd.f32 %v1248, 0.112945676
  %v1250 = vmul.f32 %v1232, %v1249
  %v1251 = vadd.f32 %v1250, 0.4994258
  %v1252 = vmul.f32 %v1232, %v1251
  %v1253 = vadd.f32 %v1252, 1.0
  %v1254 = vrcp.pop %v1253
  %v1255 = vmul.f32 %v1253, %v1254
  %v1256 = vsub.f32 1.0, %v1255
  %v1257 = vmul.f32 %v1254, %v1256
  %v1258 = vadd.f32 %v1254, %v1257
  %vm1259 = vweird.f32 %v1253
  %vm1260 = vweird.f32 %v1254
  %vm1261 = vmor %vm1259, %vm1260
  %v1262 = vsel %vm1261, %v1254, %v1258
  %v1263 = vand.u32 2147483647, %v1253
  %vm1264 = vcmp.eq.f32.partialorder %v1263, 8.507059e+37
  %v1265 = vand.u32 %v1253, 2147483648
  %v1266 = vor.u32 1.1754944e-38, %v1265
  %v1267 = vsel %vm1264, %v1266, %v1262
  %v1268 = vmul.f32 %v1243, %v1267
  %v1269 = vmin.f32 %v1268, 1.0
  %v1270 = vmax.f32 %v1269, -1.0
  %v1271 = vmul.f32 %v1012, %v1012
  %v1272 = vmin.f32 16.0, %v1271
  %v1273 = vmul.f32 %v1272, 2.1237322e-06
  %v1274 = vadd.f32 %v1273, 0.00028619796
  %v1275 = vmul.f32 %v1272, %v1274
  %v1276 = vadd.f32 %v1275, 0.0036580483
  %v1277 = vmul.f32 %v1272, %v1276
  %v1278 = vadd.f32 %v1277, 0.05243302
  %v1279 = vmul.f32 %v1272, %v1278
  %v1280 = vadd.f32 %v1279, 0.18741608
  %v1281 = vmul.f32 %v1272, %v1280
  %v1282 = vadd.f32 %v1281, 1.1283791
  %v1283 = vmul.f32 %v1012, %v1282
  %v1284 = vmul.f32 %v1272, 3.8918573e-05
  %v1285 = vadd.f32 %v1284, 0.001143296
  %v1286 = vmul.f32 %v1272, %v1285
  %v1287 = vadd.f32 %v1286, 0.014752088
  %v1288 = vmul.f32 %v1272, %v1287
  %v1289 = vadd.f32 %v1288, 0.112945676
  %v1290 = vmul.f32 %v1272, %v1289
  %v1291 = vadd.f32 %v1290, 0.4994258
  %v1292 = vmul.f32 %v1272, %v1291
  %v1293 = vadd.f32 %v1292, 1.0
  %v1294 = vrcp.pop %v1293
  %v1295 = vmul.f32 %v1293, %v1294
  %v1296 = vsub.f32 1.0, %v1295
  %v1297 = vmul.f32 %v1294, %v1296
  %v1298 = vadd.f32 %v1294, %v1297
  %vm1299 = vweird.f32 %v1293
  %vm1300 = vweird.f32 %v1294
  %vm1301 = vmor %vm1299, %vm1300
  %v1302 = vsel %vm1301, %v1294, %v1298
  %v1303 = vand.u32 2147483647, %v1293
  %vm1304 = vcmp.eq.f32.partialorder %v1303, 8.507059e+37
  %v1305 = vand.u32 %v1293, 2147483648
  %v1306 = vor.u32 1.1754944e-38, %v1305
  %v1307 = vsel %vm1304, %v1306, %v1302
  %v1308 = vmul.f32 %v1283, %v1307
  %v1309 = vmin.f32 %v1308, 1.0
  %v1310 = vmax.f32 %v1309, -1.0
  %v1311 = vmul.f32 %v1013, %v1013
  %v1312 = vmin.f32 16.0, %v1311
  %v1313 = vmul.f32 %v1312, 2.1237322e-06
  %v1314 = vadd.f32 %v1313, 0.00028619796
  %v1315 = vmul.f32 %v1312, %v1314
  %v1316 = vadd.f32 %v1315, 0.0036580483
  %v1317 = vmul.f32 %v1312, %v1316
  %v1318 = vadd.f32 %v1317, 0.05243302
  %v1319 = vmul.f32 %v1312, %v1318
  %v1320 = vadd.f32 %v1319, 0.18741608
  %v1321 = vmul.f32 %v1312, %v1320
  %v1322 = vadd.f32 %v1321, 1.1283791
  %v1323 = vmul.f32 %v1013, %v1322
  %v1324 = vmul.f32 %v1312, 3.8918573e-05
  %v1325 = vadd.f32 %v1324, 0.001143296
  %v1326 = vmul.f32 %v1312, %v1325
  %v1327 = vadd.f32 %v1326, 0.014752088
  %v1328 = vmul.f32 %v1312, %v1327
  %v1329 = vadd.f32 %v1328, 0.112945676
  %v1330 = vmul.f32 %v1312, %v1329
  %v1331 = vadd.f32 %v1330, 0.4994258
  %v1332 = vmul.f32 %v1312, %v1331
  %v1333 = vadd.f32 %v1332, 1.0
  %v1334 = vrcp.pop %v1333
  %v1335 = vmul.f32 %v1333, %v1334
  %v1336 = vsub.f32 1.0, %v1335
  %v1337 = vmul.f32 %v1334, %v1336
  %v1338 = vadd.f32 %v1334, %v1337
  %vm1339 = vweird.f32 %v1333
  %vm1340 = vweird.f32 %v1334
  %vm1341 = vmor %vm1339, %vm1340
  %v1342 = vsel %vm1341, %v1334, %v1338
  %v1343 = vand.u32 2147483647, %v1333
  %vm1344 = vcmp.eq.f32.partialorder %v1343, 8.507059e+37
  %v1345 = vand.u32 %v1333, 2147483648
  %v1346 = vor.u32 1.1754944e-38, %v1345
  %v1347 = vsel %vm1344, %v1346, %v1342
  %v1348 = vmul.f32 %v1323, %v1347
  %v1349 = vmin.f32 %v1348, 1.0
  %v1350 = vmax.f32 %v1349, -1.0
  %v1351 = vmul.f32 %v1014, %v1014
  %v1352 = vmin.f32 16.0, %v1351
  %v1353 = vmul.f32 %v1352, 2.1237322e-06
  %v1354 = vadd.f32 %v1353, 0.00028619796
  %v1355 = vmul.f32 %v1352, %v1354
  %v1356 = vadd.f32 %v1355, 0.0036580483
  %v1357 = vmul.f32 %v1352, %v1356
  %v1358 = vadd.f32 %v1357, 0.05243302
  %v1359 = vmul.f32 %v1352, %v1358
  %v1360 = vadd.f32 %v1359, 0.18741608
  %v1361 = vmul.f32 %v1352, %v1360
  %v1362 = vadd.f32 %v1361, 1.1283791
  %v1363 = vmul.f32 %v1014, %v1362
  %v1364 = vmul.f32 %v1352, 3.8918573e-05
  %v1365 = vadd.f32 %v1364, 0.001143296
  %v1366 = vmul.f32 %v1352, %v1365
  %v1367 = vadd.f32 %v1366, 0.014752088
  %v1368 = vmul.f32 %v1352, %v1367
  %v1369 = vadd.f32 %v1368, 0.112945676
  %v1370 = vmul.f32 %v1352, %v1369
  %v1371 = vadd.f32 %v1370, 0.4994258
  %v1372 = vmul.f32 %v1352, %v1371
  %v1373 = vadd.f32 %v1372, 1.0
  %v1374 = vrcp.pop %v1373
  %v1375 = vmul.f32 %v1373, %v1374
  %v1376 = vsub.f32 1.0, %v1375
  %v1377 = vmul.f32 %v1374, %v1376
  %v1378 = vadd.f32 %v1374, %v1377
  %vm1379 = vweird.f32 %v1373
  %vm1380 = vweird.f32 %v1374
  %vm1381 = vmor %vm1379, %vm1380
  %v1382 = vsel %vm1381, %v1374, %v1378
  %v1383 = vand.u32 2147483647, %v1373
  %vm1384 = vcmp.eq.f32.partialorder %v1383, 8.507059e+37
  %v1385 = vand.u32 %v1373, 2147483648
  %v1386 = vor.u32 1.1754944e-38, %v1385
  %v1387 = vsel %vm1384, %v1386, %v1382
  %v1388 = vmul.f32 %v1363, %v1387
  %v1389 = vmin.f32 %v1388, 1.0
  %v1390 = vmax.f32 %v1389, -1.0
  %v1391 = vmul.f32 %v1015, %v1015
  %v1392 = vmin.f32 16.0, %v1391
  %v1393 = vmul.f32 %v1392, 2.1237322e-06
  %v1394 = vadd.f32 %v1393, 0.00028619796
  %v1395 = vmul.f32 %v1392, %v1394
  %v1396 = vadd.f32 %v1395, 0.0036580483
  %v1397 = vmul.f32 %v1392, %v1396
  %v1398 = vadd.f32 %v1397, 0.05243302
  %v1399 = vmul.f32 %v1392, %v1398
  %v1400 = vadd.f32 %v1399, 0.18741608
  %v1401 = vmul.f32 %v1392, %v1400
  %v1402 = vadd.f32 %v1401, 1.1283791
  %v1403 = vmul.f32 %v1015, %v1402
  %v1404 = vmul.f32 %v1392, 3.8918573e-05
  %v1405 = vadd.f32 %v1404, 0.001143296
  %v1406 = vmul.f32 %v1392, %v1405
  %v1407 = vadd.f32 %v1406, 0.014752088
  %v1408 = vmul.f32 %v1392, %v1407
  %v1409 = vadd.f32 %v1408, 0.112945676
  %v1410 = vmul.f32 %v1392, %v1409
  %v1411 = vadd.f32 %v1410, 0.4994258
  %v1412 = vmul.f32 %v1392, %v1411
  %v1413 = vadd.f32 %v1412, 1.0
  %v1414 = vrcp.pop %v1413
  %v1415 = vmul.f32 %v1413, %v1414
  %v1416 = vsub.f32 1.0, %v1415
  %v1417 = vmul.f32 %v1414, %v1416
  %v1418 = vadd.f32 %v1414, %v1417
  %vm1419 = vweird.f32 %v1413
  %vm1420 = vweird.f32 %v1414
  %vm1421 = vmor %vm1419, %vm1420
  %v1422 = vsel %vm1421, %v1414, %v1418
  %v1423 = vand.u32 2147483647, %v1413
  %vm1424 = vcmp.eq.f32.partialorder %v1423, 8.507059e+37
  %v1425 = vand.u32 %v1413, 2147483648
  %v1426 = vor.u32 1.1754944e-38, %v1425
  %v1427 = vsel %vm1424, %v1426, %v1422
  %v1428 = vmul.f32 %v1403, %v1427
  %v1429 = vmin.f32 %v1428, 1.0
  %v1430 = vmax.f32 %v1429, -1.0
  %v1431 = vmul.f32 %v1016, %v1016
  %v1432 = vmin.f32 16.0, %v1431
  %v1433 = vmul.f32 %v1432, 2.1237322e-06
  %v1434 = vadd.f32 %v1433, 0.00028619796
  %v1435 = vmul.f32 %v1432, %v1434
  %v1436 = vadd.f32 %v1435, 0.0036580483
  %v1437 = vmul.f32 %v1432, %v1436
  %v1438 = vadd.f32 %v1437, 0.05243302
  %v1439 = vmul.f32 %v1432, %v1438
  %v1440 = vadd.f32 %v1439, 0.18741608
  %v1441 = vmul.f32 %v1432, %v1440
  %v1442 = vadd.f32 %v1441, 1.1283791
  %v1443 = vmul.f32 %v1016, %v1442
  %v1444 = vmul.f32 %v1432, 3.8918573e-05
  %v1445 = vadd.f32 %v1444, 0.001143296
  %v1446 = vmul.f32 %v1432, %v1445
  %v1447 = vadd.f32 %v1446, 0.014752088
  %v1448 = vmul.f32 %v1432, %v1447
  %v1449 = vadd.f32 %v1448, 0.112945676
  %v1450 = vmul.f32 %v1432, %v1449
  %v1451 = vadd.f32 %v1450, 0.4994258
  %v1452 = vmul.f32 %v1432, %v1451
  %v1453 = vadd.f32 %v1452, 1.0
  %v1454 = vrcp.pop %v1453
  %v1455 = vmul.f32 %v1453, %v1454
  %v1456 = vsub.f32 1.0, %v1455
  %v1457 = vmul.f32 %v1454, %v1456
  %v1458 = vadd.f32 %v1454, %v1457
  %vm1459 = vweird.f32 %v1453
  %vm1460 = vweird.f32 %v1454
  %vm1461 = vmor %vm1459, %vm1460
  %v1462 = vsel %vm1461, %v1454, %v1458
  %v1463 = vand.u32 2147483647, %v1453
  %vm1464 = vcmp.eq.f32.partialorder %v1463, 8.507059e+37
  %v1465 = vand.u32 %v1453, 2147483648
  %v1466 = vor.u32 1.1754944e-38, %v1465
  %v1467 = vsel %vm1464, %v1466, %v1462
  %v1468 = vmul.f32 %v1443, %v1467
  %v1469 = vmin.f32 %v1468, 1.0
  %v1470 = vmax.f32 %v1469, -1.0
  %v1471 = vmul.f32 %v1017, %v1017
  %v1472 = vmin.f32 16.0, %v1471
  %v1473 = vmul.f32 %v1472, 2.1237322e-06
  %v1474 = vadd.f32 %v1473, 0.00028619796
  %v1475 = vmul.f32 %v1472, %v1474
  %v1476 = vadd.f32 %v1475, 0.0036580483
  %v1477 = vmul.f32 %v1472, %v1476
  %v1478 = vadd.f32 %v1477, 0.05243302
  %v1479 = vmul.f32 %v1472, %v1478
  %v1480 = vadd.f32 %v1479, 0.18741608
  %v1481 = vmul.f32 %v1472, %v1480
  %v1482 = vadd.f32 %v1481, 1.1283791
  %v1483 = vmul.f32 %v1017, %v1482
  %v1484 = vmul.f32 %v1472, 3.8918573e-05
  %v1485 = vadd.f32 %v1484, 0.001143296
  %v1486 = vmul.f32 %v1472, %v1485
  %v1487 = vadd.f32 %v1486, 0.014752088
  %v1488 = vmul.f32 %v1472, %v1487
  %v1489 = vadd.f32 %v1488, 0.112945676
  %v1490 = vmul.f32 %v1472, %v1489
  %v1491 = vadd.f32 %v1490, 0.4994258
  %v1492 = vmul.f32 %v1472, %v1491
  %v1493 = vadd.f32 %v1492, 1.0
  %v1494 = vrcp.pop %v1493
  %v1495 = vmul.f32 %v1493, %v1494
  %v1496 = vsub.f32 1.0, %v1495
  %v1497 = vmul.f32 %v1494, %v1496
  %v1498 = vadd.f32 %v1494, %v1497
  %vm1499 = vweird.f32 %v1493
  %vm1500 = vweird.f32 %v1494
  %vm1501 = vmor %vm1499, %vm1500
  %v1502 = vsel %vm1501, %v1494, %v1498
  %v1503 = vand.u32 2147483647, %v1493
  %vm1504 = vcmp.eq.f32.partialorder %v1503, 8.507059e+37
  %v1505 = vand.u32 %v1493, 2147483648
  %v1506 = vor.u32 1.1754944e-38, %v1505
  %v1507 = vsel %vm1504, %v1506, %v1502
  %v1508 = vmul.f32 %v1483, %v1507
  %v1509 = vmin.f32 %v1508, 1.0
  %v1510 = vmax.f32 %v1509, -1.0
  %v1511 = vmul.f32 %v1018, %v1018
  %v1512 = vmin.f32 16.0, %v1511
  %v1513 = vmul.f32 %v1512, 2.1237322e-06
  %v1514 = vadd.f32 %v1513, 0.00028619796
  %v1515 = vmul.f32 %v1512, %v1514
  %v1516 = vadd.f32 %v1515, 0.0036580483
  %v1517 = vmul.f32 %v1512, %v1516
  %v1518 = vadd.f32 %v1517, 0.05243302
  %v1519 = vmul.f32 %v1512, %v1518
  %v1520 = vadd.f32 %v1519, 0.18741608
  %v1521 = vmul.f32 %v1512, %v1520
  %v1522 = vadd.f32 %v1521, 1.1283791
  %v1523 = vmul.f32 %v1018, %v1522
  %v1524 = vmul.f32 %v1512, 3.8918573e-05
  %v1525 = vadd.f32 %v1524, 0.001143296
  %v1526 = vmul.f32 %v1512, %v1525
  %v1527 = vadd.f32 %v1526, 0.014752088
  %v1528 = vmul.f32 %v1512, %v1527
  %v1529 = vadd.f32 %v1528, 0.112945676
  %v1530 = vmul.f32 %v1512, %v1529
  %v1531 = vadd.f32 %v1530, 0.4994258
  %v1532 = vmul.f32 %v1512, %v1531
  %v1533 = vadd.f32 %v1532, 1.0
  %v1534 = vrcp.pop %v1533
  %v1535 = vmul.f32 %v1533, %v1534
  %v1536 = vsub.f32 1.0, %v1535
  %v1537 = vmul.f32 %v1534, %v1536
  %v1538 = vadd.f32 %v1534, %v1537
  %vm1539 = vweird.f32 %v1533
  %vm1540 = vweird.f32 %v1534
  %vm1541 = vmor %vm1539, %vm1540
  %v1542 = vsel %vm1541, %v1534, %v1538
  %v1543 = vand.u32 2147483647, %v1533
  %vm1544 = vcmp.eq.f32.partialorder %v1543, 8.507059e+37
  %v1545 = vand.u32 %v1533, 2147483648
  %v1546 = vor.u32 1.1754944e-38, %v1545
  %v1547 = vsel %vm1544, %v1546, %v1542
  %v1548 = vmul.f32 %v1523, %v1547
  %v1549 = vmin.f32 %v1548, 1.0
  %v1550 = vmax.f32 %v1549, -1.0
  %v1551 = vmul.f32 %v1019, %v1019
  %v1552 = vmin.f32 16.0, %v1551
  %v1553 = vmul.f32 %v1552, 2.1237322e-06
  %v1554 = vadd.f32 %v1553, 0.00028619796
  %v1555 = vmul.f32 %v1552, %v1554
  %v1556 = vadd.f32 %v1555, 0.0036580483
  %v1557 = vmul.f32 %v1552, %v1556
  %v1558 = vadd.f32 %v1557, 0.05243302
  %v1559 = vmul.f32 %v1552, %v1558
  %v1560 = vadd.f32 %v1559, 0.18741608
  %v1561 = vmul.f32 %v1552, %v1560
  %v1562 = vadd.f32 %v1561, 1.1283791
  %v1563 = vmul.f32 %v1019, %v1562
  %v1564 = vmul.f32 %v1552, 3.8918573e-05
  %v1565 = vadd.f32 %v1564, 0.001143296
  %v1566 = vmul.f32 %v1552, %v1565
  %v1567 = vadd.f32 %v1566, 0.014752088
  %v1568 = vmul.f32 %v1552, %v1567
  %v1569 = vadd.f32 %v1568, 0.112945676
  %v1570 = vmul.f32 %v1552, %v1569
  %v1571 = vadd.f32 %v1570, 0.4994258
  %v1572 = vmul.f32 %v1552, %v1571
  %v1573 = vadd.f32 %v1572, 1.0
  %v1574 = vrcp.pop %v1573
  %v1575 = vmul.f32 %v1573, %v1574
  %v1576 = vsub.f32 1.0, %v1575
  %v1577 = vmul.f32 %v1574, %v1576
  %v1578 = vadd.f32 %v1574, %v1577
  %vm1579 = vweird.f32 %v1573
  %vm1580 = vweird.f32 %v1574
  %vm1581 = vmor %vm1579, %vm1580
  %v1582 = vsel %vm1581, %v1574, %v1578
  %v1583 = vand.u32 2147483647, %v1573
  %vm1584 = vcmp.eq.f32.partialorder %v1583, 8.507059e+37
  %v1585 = vand.u32 %v1573, 2147483648
  %v1586 = vor.u32 1.1754944e-38, %v1585
  %v1587 = vsel %vm1584, %v1586, %v1582
  %v1588 = vmul.f32 %v1563, %v1587
  %v1589 = vmin.f32 %v1588, 1.0
  %v1590 = vmax.f32 %v1589, -1.0
  %v1591 = vmul.f32 %v1020, %v1020
  %v1592 = vmin.f32 16.0, %v1591
  %v1593 = vmul.f32 %v1592, 2.1237322e-06
  %v1594 = vadd.f32 %v1593, 0.00028619796
  %v1595 = vmul.f32 %v1592, %v1594
  %v1596 = vadd.f32 %v1595, 0.0036580483
  %v1597 = vmul.f32 %v1592, %v1596
  %v1598 = vadd.f32 %v1597, 0.05243302
  %v1599 = vmul.f32 %v1592, %v1598
  %v1600 = vadd.f32 %v1599, 0.18741608
  %v1601 = vmul.f32 %v1592, %v1600
  %v1602 = vadd.f32 %v1601, 1.1283791
  %v1603 = vmul.f32 %v1020, %v1602
  %v1604 = vmul.f32 %v1592, 3.8918573e-05
  %v1605 = vadd.f32 %v1604, 0.001143296
  %v1606 = vmul.f32 %v1592, %v1605
  %v1607 = vadd.f32 %v1606, 0.014752088
  %v1608 = vmul.f32 %v1592, %v1607
  %v1609 = vadd.f32 %v1608, 0.112945676
  %v1610 = vmul.f32 %v1592, %v1609
  %v1611 = vadd.f32 %v1610, 0.4994258
  %v1612 = vmul.f32 %v1592, %v1611
  %v1613 = vadd.f32 %v1612, 1.0
  %v1614 = vrcp.pop %v1613
  %v1615 = vmul.f32 %v1613, %v1614
  %v1616 = vsub.f32 1.0, %v1615
  %v1617 = vmul.f32 %v1614, %v1616
  %v1618 = vadd.f32 %v1614, %v1617
  %vm1619 = vweird.f32 %v1613
  %vm1620 = vweird.f32 %v1614
  %vm1621 = vmor %vm1619, %vm1620
  %v1622 = vsel %vm1621, %v1614, %v1618
  %v1623 = vand.u32 2147483647, %v1613
  %vm1624 = vcmp.eq.f32.partialorder %v1623, 8.507059e+37
  %v1625 = vand.u32 %v1613, 2147483648
  %v1626 = vor.u32 1.1754944e-38, %v1625
  %v1627 = vsel %vm1624, %v1626, %v1622
  %v1628 = vmul.f32 %v1603, %v1627
  %v1629 = vmin.f32 %v1628, 1.0
  %v1630 = vmax.f32 %v1629, -1.0
  %v1631 = vmul.f32 %v1021, %v1021
  %v1632 = vmin.f32 16.0, %v1631
  %v1633 = vmul.f32 %v1632, 2.1237322e-06
  %v1634 = vadd.f32 %v1633, 0.00028619796
  %v1635 = vmul.f32 %v1632, %v1634
  %v1636 = vadd.f32 %v1635, 0.0036580483
  %v1637 = vmul.f32 %v1632, %v1636
  %v1638 = vadd.f32 %v1637, 0.05243302
  %v1639 = vmul.f32 %v1632, %v1638
  %v1640 = vadd.f32 %v1639, 0.18741608
  %v1641 = vmul.f32 %v1632, %v1640
  %v1642 = vadd.f32 %v1641, 1.1283791
  %v1643 = vmul.f32 %v1021, %v1642
  %v1644 = vmul.f32 %v1632, 3.8918573e-05
  %v1645 = vadd.f32 %v1644, 0.001143296
  %v1646 = vmul.f32 %v1632, %v1645
  %v1647 = vadd.f32 %v1646, 0.014752088
  %v1648 = vmul.f32 %v1632, %v1647
  %v1649 = vadd.f32 %v1648, 0.112945676
  %v1650 = vmul.f32 %v1632, %v1649
  %v1651 = vadd.f32 %v1650, 0.4994258
  %v1652 = vmul.f32 %v1632, %v1651
  %v1653 = vadd.f32 %v1652, 1.0
  %v1654 = vrcp.pop %v1653
  %v1655 = vmul.f32 %v1653, %v1654
  %v1656 = vsub.f32 1.0, %v1655
  %v1657 = vmul.f32 %v1654, %v1656
  %v1658 = vadd.f32 %v1654, %v1657
  %vm1659 = vweird.f32 %v1653
  %vm1660 = vweird.f32 %v1654
  %vm1661 = vmor %vm1659, %vm1660
  %v1662 = vsel %vm1661, %v1654, %v1658
  %v1663 = vand.u32 2147483647, %v1653
  %vm1664 = vcmp.eq.f32.partialorder %v1663, 8.507059e+37
  %v1665 = vand.u32 %v1653, 2147483648
  %v1666 = vor.u32 1.1754944e-38, %v1665
  %v1667 = vsel %vm1664, %v1666, %v1662
  %v1668 = vmul.f32 %v1643, %v1667
  %v1669 = vmin.f32 %v1668, 1.0
  %v1670 = vmax.f32 %v1669, -1.0
  %v1671 = vmul.f32 %v1022, %v1022
  %v1672 = vmin.f32 16.0, %v1671
  %v1673 = vmul.f32 %v1672, 2.1237322e-06
  %v1674 = vadd.f32 %v1673, 0.00028619796
  %v1675 = vmul.f32 %v1672, %v1674
  %v1676 = vadd.f32 %v1675, 0.0036580483
  %v1677 = vmul.f32 %v1672, %v1676
  %v1678 = vadd.f32 %v1677, 0.05243302
  %v1679 = vmul.f32 %v1672, %v1678
  %v1680 = vadd.f32 %v1679, 0.18741608
  %v1681 = vmul.f32 %v1672, %v1680
  %v1682 = vadd.f32 %v1681, 1.1283791
  %v1683 = vmul.f32 %v1022, %v1682
  %v1684 = vmul.f32 %v1672, 3.8918573e-05
  %v1685 = vadd.f32 %v1684, 0.001143296
  %v1686 = vmul.f32 %v1672, %v1685
  %v1687 = vadd.f32 %v1686, 0.014752088
  %v1688 = vmul.f32 %v1672, %v1687
  %v1689 = vadd.f32 %v1688, 0.112945676
  %v1690 = vmul.f32 %v1672, %v1689
  %v1691 = vadd.f32 %v1690, 0.4994258
  %v1692 = vmul.f32 %v1672, %v1691
  %v1693 = vadd.f32 %v1692, 1.0
  %v1694 = vrcp.pop %v1693
  %v1695 = vmul.f32 %v1693, %v1694
  %v1696 = vsub.f32 1.0, %v1695
  %v1697 = vmul.f32 %v1694, %v1696
  %v1698 = vadd.f32 %v1694, %v1697
  %vm1699 = vweird.f32 %v1693
  %vm1700 = vweird.f32 %v1694
  %vm1701 = vmor %vm1699, %vm1700
  %v1702 = vsel %vm1701, %v1694, %v1698
  %v1703 = vand.u32 2147483647, %v1693
  %vm1704 = vcmp.eq.f32.partialorder %v1703, 8.507059e+37
  %v1705 = vand.u32 %v1693, 2147483648
  %v1706 = vor.u32 1.1754944e-38, %v1705
  %v1707 = vsel %vm1704, %v1706, %v1702
  %v1708 = vmul.f32 %v1683, %v1707
  %v1709 = vmin.f32 %v1708, 1.0
  %v1710 = vmax.f32 %v1709, -1.0
  %v1711 = vmul.f32 %v1023, %v1023
  %v1712 = vmin.f32 16.0, %v1711
  %v1713 = vmul.f32 %v1712, 2.1237322e-06
  %v1714 = vadd.f32 %v1713, 0.00028619796
  %v1715 = vmul.f32 %v1712, %v1714
  %v1716 = vadd.f32 %v1715, 0.0036580483
  %v1717 = vmul.f32 %v1712, %v1716
  %v1718 = vadd.f32 %v1717, 0.05243302
  %v1719 = vmul.f32 %v1712, %v1718
  %v1720 = vadd.f32 %v1719, 0.18741608
  %v1721 = vmul.f32 %v1712, %v1720
  %v1722 = vadd.f32 %v1721, 1.1283791
  %v1723 = vmul.f32 %v1023, %v1722
  %v1724 = vmul.f32 %v1712, 3.8918573e-05
  %v1725 = vadd.f32 %v1724, 0.001143296
  %v1726 = vmul.f32 %v1712, %v1725
  %v1727 = vadd.f32 %v1726, 0.014752088
  %v1728 = vmul.f32 %v1712, %v1727
  %v1729 = vadd.f32 %v1728, 0.112945676
  %v1730 = vmul.f32 %v1712, %v1729
  %v1731 = vadd.f32 %v1730, 0.4994258
  %v1732 = vmul.f32 %v1712, %v1731
  %v1733 = vadd.f32 %v1732, 1.0
  %v1734 = vrcp.pop %v1733
  %v1735 = vmul.f32 %v1733, %v1734
  %v1736 = vsub.f32 1.0, %v1735
  %v1737 = vmul.f32 %v1734, %v1736
  %v1738 = vadd.f32 %v1734, %v1737
  %vm1739 = vweird.f32 %v1733
  %vm1740 = vweird.f32 %v1734
  %vm1741 = vmor %vm1739, %vm1740
  %v1742 = vsel %vm1741, %v1734, %v1738
  %v1743 = vand.u32 2147483647, %v1733
  %vm1744 = vcmp.eq.f32.partialorder %v1743, 8.507059e+37
  %v1745 = vand.u32 %v1733, 2147483648
  %v1746 = vor.u32 1.1754944e-38, %v1745
  %v1747 = vsel %vm1744, %v1746, %v1742
  %v1748 = vmul.f32 %v1723, %v1747
  %v1749 = vmin.f32 %v1748, 1.0
  %v1750 = vmax.f32 %v1749, -1.0
  %v1751 = vmul.f32 %v1024, %v1024
  %v1752 = vmin.f32 16.0, %v1751
  %v1753 = vmul.f32 %v1752, 2.1237322e-06
  %v1754 = vadd.f32 %v1753, 0.00028619796
  %v1755 = vmul.f32 %v1752, %v1754
  %v1756 = vadd.f32 %v1755, 0.0036580483
  %v1757 = vmul.f32 %v1752, %v1756
  %v1758 = vadd.f32 %v1757, 0.05243302
  %v1759 = vmul.f32 %v1752, %v1758
  %v1760 = vadd.f32 %v1759, 0.18741608
  %v1761 = vmul.f32 %v1752, %v1760
  %v1762 = vadd.f32 %v1761, 1.1283791
  %v1763 = vmul.f32 %v1024, %v1762
  %v1764 = vmul.f32 %v1752, 3.8918573e-05
  %v1765 = vadd.f32 %v1764, 0.001143296
  %v1766 = vmul.f32 %v1752, %v1765
  %v1767 = vadd.f32 %v1766, 0.014752088
  %v1768 = vmul.f32 %v1752, %v1767
  %v1769 = vadd.f32 %v1768, 0.112945676
  %v1770 = vmul.f32 %v1752, %v1769
  %v1771 = vadd.f32 %v1770, 0.4994258
  %v1772 = vmul.f32 %v1752, %v1771
  %v1773 = vadd.f32 %v1772, 1.0
  %v1774 = vrcp.pop %v1773
  %v1775 = vmul.f32 %v1773, %v1774
  %v1776 = vsub.f32 1.0, %v1775
  %v1777 = vmul.f32 %v1774, %v1776
  %v1778 = vadd.f32 %v1774, %v1777
  %vm1779 = vweird.f32 %v1773
  %vm1780 = vweird.f32 %v1774
  %vm1781 = vmor %vm1779, %vm1780
  %v1782 = vsel %vm1781, %v1774, %v1778
  %v1783 = vand.u32 2147483647, %v1773
  %vm1784 = vcmp.eq.f32.partialorder %v1783, 8.507059e+37
  %v1785 = vand.u32 %v1773, 2147483648
  %v1786 = vor.u32 1.1754944e-38, %v1785
  %v1787 = vsel %vm1784, %v1786, %v1782
  %v1788 = vmul.f32 %v1763, %v1787
  %v1789 = vmin.f32 %v1788, 1.0
  %v1790 = vmax.f32 %v1789, -1.0
  %v1791 = vmul.f32 %v1025, %v1025
  %v1792 = vmin.f32 16.0, %v1791
  %v1793 = vmul.f32 %v1792, 2.1237322e-06
  %v1794 = vadd.f32 %v1793, 0.00028619796
  %v1795 = vmul.f32 %v1792, %v1794
  %v1796 = vadd.f32 %v1795, 0.0036580483
  %v1797 = vmul.f32 %v1792, %v1796
  %v1798 = vadd.f32 %v1797, 0.05243302
  %v1799 = vmul.f32 %v1792, %v1798
  %v1800 = vadd.f32 %v1799, 0.18741608
  %v1801 = vmul.f32 %v1792, %v1800
  %v1802 = vadd.f32 %v1801, 1.1283791
  %v1803 = vmul.f32 %v1025, %v1802
  %v1804 = vmul.f32 %v1792, 3.8918573e-05
  %v1805 = vadd.f32 %v1804, 0.001143296
  %v1806 = vmul.f32 %v1792, %v1805
  %v1807 = vadd.f32 %v1806, 0.014752088
  %v1808 = vmul.f32 %v1792, %v1807
  %v1809 = vadd.f32 %v1808, 0.112945676
  %v1810 = vmul.f32 %v1792, %v1809
  %v1811 = vadd.f32 %v1810, 0.4994258
  %v1812 = vmul.f32 %v1792, %v1811
  %v1813 = vadd.f32 %v1812, 1.0
  %v1814 = vrcp.pop %v1813
  %v1815 = vmul.f32 %v1813, %v1814
  %v1816 = vsub.f32 1.0, %v1815
  %v1817 = vmul.f32 %v1814, %v1816
  %v1818 = vadd.f32 %v1814, %v1817
  %vm1819 = vweird.f32 %v1813
  %vm1820 = vweird.f32 %v1814
  %vm1821 = vmor %vm1819, %vm1820
  %v1822 = vsel %vm1821, %v1814, %v1818
  %v1823 = vand.u32 2147483647, %v1813
  %vm1824 = vcmp.eq.f32.partialorder %v1823, 8.507059e+37
  %v1825 = vand.u32 %v1813, 2147483648
  %v1826 = vor.u32 1.1754944e-38, %v1825
  %v1827 = vsel %vm1824, %v1826, %v1822
  %v1828 = vmul.f32 %v1803, %v1827
  %v1829 = vmin.f32 %v1828, 1.0
  %v1830 = vmax.f32 %v1829, -1.0
  %v1831 = vmul.f32 %v1026, %v1026
  %v1832 = vmin.f32 16.0, %v1831
  %v1833 = vmul.f32 %v1832, 2.1237322e-06
  %v1834 = vadd.f32 %v1833, 0.00028619796
  %v1835 = vmul.f32 %v1832, %v1834
  %v1836 = vadd.f32 %v1835, 0.0036580483
  %v1837 = vmul.f32 %v1832, %v1836
  %v1838 = vadd.f32 %v1837, 0.05243302
  %v1839 = vmul.f32 %v1832, %v1838
  %v1840 = vadd.f32 %v1839, 0.18741608
  %v1841 = vmul.f32 %v1832, %v1840
  %v1842 = vadd.f32 %v1841, 1.1283791
  %v1843 = vmul.f32 %v1026, %v1842
  %v1844 = vmul.f32 %v1832, 3.8918573e-05
  %v1845 = vadd.f32 %v1844, 0.001143296
  %v1846 = vmul.f32 %v1832, %v1845
  %v1847 = vadd.f32 %v1846, 0.014752088
  %v1848 = vmul.f32 %v1832, %v1847
  %v1849 = vadd.f32 %v1848, 0.112945676
  %v1850 = vmul.f32 %v1832, %v1849
  %v1851 = vadd.f32 %v1850, 0.4994258
  %v1852 = vmul.f32 %v1832, %v1851
  %v1853 = vadd.f32 %v1852, 1.0
  %v1854 = vrcp.pop %v1853
  %v1855 = vmul.f32 %v1853, %v1854
  %v1856 = vsub.f32 1.0, %v1855
  %v1857 = vmul.f32 %v1854, %v1856
  %v1858 = vadd.f32 %v1854, %v1857
  %vm1859 = vweird.f32 %v1853
  %vm1860 = vweird.f32 %v1854
  %vm1861 = vmor %vm1859, %vm1860
  %v1862 = vsel %vm1861, %v1854, %v1858
  %v1863 = vand.u32 2147483647, %v1853
  %vm1864 = vcmp.eq.f32.partialorder %v1863, 8.507059e+37
  %v1865 = vand.u32 %v1853, 2147483648
  %v1866 = vor.u32 1.1754944e-38, %v1865
  %v1867 = vsel %vm1864, %v1866, %v1862
  %v1868 = vmul.f32 %v1843, %v1867
  %v1869 = vmin.f32 %v1868, 1.0
  %v1870 = vmax.f32 %v1869, -1.0
  %v1871 = vmul.f32 %v1027, %v1027
  %v1872 = vmin.f32 16.0, %v1871
  %v1873 = vmul.f32 %v1872, 2.1237322e-06
  %v1874 = vadd.f32 %v1873, 0.00028619796
  %v1875 = vmul.f32 %v1872, %v1874
  %v1876 = vadd.f32 %v1875, 0.0036580483
  %v1877 = vmul.f32 %v1872, %v1876
  %v1878 = vadd.f32 %v1877, 0.05243302
  %v1879 = vmul.f32 %v1872, %v1878
  %v1880 = vadd.f32 %v1879, 0.18741608
  %v1881 = vmul.f32 %v1872, %v1880
  %v1882 = vadd.f32 %v1881, 1.1283791
  %v1883 = vmul.f32 %v1027, %v1882
  %v1884 = vmul.f32 %v1872, 3.8918573e-05
  %v1885 = vadd.f32 %v1884, 0.001143296
  %v1886 = vmul.f32 %v1872, %v1885
  %v1887 = vadd.f32 %v1886, 0.014752088
  %v1888 = vmul.f32 %v1872, %v1887
  %v1889 = vadd.f32 %v1888, 0.112945676
  %v1890 = vmul.f32 %v1872, %v1889
  %v1891 = vadd.f32 %v1890, 0.4994258
  %v1892 = vmul.f32 %v1872, %v1891
  %v1893 = vadd.f32 %v1892, 1.0
  %v1894 = vrcp.pop %v1893
  %v1895 = vmul.f32 %v1893, %v1894
  %v1896 = vsub.f32 1.0, %v1895
  %v1897 = vmul.f32 %v1894, %v1896
  %v1898 = vadd.f32 %v1894, %v1897
  %vm1899 = vweird.f32 %v1893
  %vm1900 = vweird.f32 %v1894
  %vm1901 = vmor %vm1899, %vm1900
  %v1902 = vsel %vm1901, %v1894, %v1898
  %v1903 = vand.u32 2147483647, %v1893
  %vm1904 = vcmp.eq.f32.partialorder %v1903, 8.507059e+37
  %v1905 = vand.u32 %v1893, 2147483648
  %v1906 = vor.u32 1.1754944e-38, %v1905
  %v1907 = vsel %vm1904, %v1906, %v1902
  %v1908 = vmul.f32 %v1883, %v1907
  %v1909 = vmin.f32 %v1908, 1.0
  %v1910 = vmax.f32 %v1909, -1.0
  %v1911 = vmul.f32 %v1028, %v1028
  %v1912 = vmin.f32 16.0, %v1911
  %v1913 = vmul.f32 %v1912, 2.1237322e-06
  %v1914 = vadd.f32 %v1913, 0.00028619796
  %v1915 = vmul.f32 %v1912, %v1914
  %v1916 = vadd.f32 %v1915, 0.0036580483
  %v1917 = vmul.f32 %v1912, %v1916
  %v1918 = vadd.f32 %v1917, 0.05243302
  %v1919 = vmul.f32 %v1912, %v1918
  %v1920 = vadd.f32 %v1919, 0.18741608
  %v1921 = vmul.f32 %v1912, %v1920
  %v1922 = vadd.f32 %v1921, 1.1283791
  %v1923 = vmul.f32 %v1028, %v1922
  %v1924 = vmul.f32 %v1912, 3.8918573e-05
  %v1925 = vadd.f32 %v1924, 0.001143296
  %v1926 = vmul.f32 %v1912, %v1925
  %v1927 = vadd.f32 %v1926, 0.014752088
  %v1928 = vmul.f32 %v1912, %v1927
  %v1929 = vadd.f32 %v1928, 0.112945676
  %v1930 = vmul.f32 %v1912, %v1929
  %v1931 = vadd.f32 %v1930, 0.4994258
  %v1932 = vmul.f32 %v1912, %v1931
  %v1933 = vadd.f32 %v1932, 1.0
  %v1934 = vrcp.pop %v1933
  %v1935 = vmul.f32 %v1933, %v1934
  %v1936 = vsub.f32 1.0, %v1935
  %v1937 = vmul.f32 %v1934, %v1936
  %v1938 = vadd.f32 %v1934, %v1937
  %vm1939 = vweird.f32 %v1933
  %vm1940 = vweird.f32 %v1934
  %vm1941 = vmor %vm1939, %vm1940
  %v1942 = vsel %vm1941, %v1934, %v1938
  %v1943 = vand.u32 2147483647, %v1933
  %vm1944 = vcmp.eq.f32.partialorder %v1943, 8.507059e+37
  %v1945 = vand.u32 %v1933, 2147483648
  %v1946 = vor.u32 1.1754944e-38, %v1945
  %v1947 = vsel %vm1944, %v1946, %v1942
  %v1948 = vmul.f32 %v1923, %v1947
  %v1949 = vmin.f32 %v1948, 1.0
  %v1950 = vmax.f32 %v1949, -1.0
  %v1951 = vmul.f32 %v1029, %v1029
  %v1952 = vmin.f32 16.0, %v1951
  %v1953 = vmul.f32 %v1952, 2.1237322e-06
  %v1954 = vadd.f32 %v1953, 0.00028619796
  %v1955 = vmul.f32 %v1952, %v1954
  %v1956 = vadd.f32 %v1955, 0.0036580483
  %v1957 = vmul.f32 %v1952, %v1956
  %v1958 = vadd.f32 %v1957, 0.05243302
  %v1959 = vmul.f32 %v1952, %v1958
  %v1960 = vadd.f32 %v1959, 0.18741608
  %v1961 = vmul.f32 %v1952, %v1960
  %v1962 = vadd.f32 %v1961, 1.1283791
  %v1963 = vmul.f32 %v1029, %v1962
  %v1964 = vmul.f32 %v1952, 3.8918573e-05
  %v1965 = vadd.f32 %v1964, 0.001143296
  %v1966 = vmul.f32 %v1952, %v1965
  %v1967 = vadd.f32 %v1966, 0.014752088
  %v1968 = vmul.f32 %v1952, %v1967
  %v1969 = vadd.f32 %v1968, 0.112945676
  %v1970 = vmul.f32 %v1952, %v1969
  %v1971 = vadd.f32 %v1970, 0.4994258
  %v1972 = vmul.f32 %v1952, %v1971
  %v1973 = vadd.f32 %v1972, 1.0
  %v1974 = vrcp.pop %v1973
  %v1975 = vmul.f32 %v1973, %v1974
  %v1976 = vsub.f32 1.0, %v1975
  %v1977 = vmul.f32 %v1974, %v1976
  %v1978 = vadd.f32 %v1974, %v1977
  %vm1979 = vweird.f32 %v1973
  %vm1980 = vweird.f32 %v1974
  %vm1981 = vmor %vm1979, %vm1980
  %v1982 = vsel %vm1981, %v1974, %v1978
  %v1983 = vand.u32 2147483647, %v1973
  %vm1984 = vcmp.eq.f32.partialorder %v1983, 8.507059e+37
  %v1985 = vand.u32 %v1973, 2147483648
  %v1986 = vor.u32 1.1754944e-38, %v1985
  %v1987 = vsel %vm1984, %v1986, %v1982
  %v1988 = vmul.f32 %v1963, %v1987
  %v1989 = vmin.f32 %v1988, 1.0
  %v1990 = vmax.f32 %v1989, -1.0
  %v1991 = vmul.f32 %v1030, %v1030
  %v1992 = vmin.f32 16.0, %v1991
  %v1993 = vmul.f32 %v1992, 2.1237322e-06
  %v1994 = vadd.f32 %v1993, 0.00028619796
  %v1995 = vmul.f32 %v1992, %v1994
  %v1996 = vadd.f32 %v1995, 0.0036580483
  %v1997 = vmul.f32 %v1992, %v1996
  %v1998 = vadd.f32 %v1997, 0.05243302
  %v1999 = vmul.f32 %v1992, %v1998
  %v2000 = vadd.f32 %v1999, 0.18741608
  %v2001 = vmul.f32 %v1992, %v2000
  %v2002 = vadd.f32 %v2001, 1.1283791
  %v2003 = vmul.f32 %v1030, %v2002
  %v2004 = vmul.f32 %v1992, 3.8918573e-05
  %v2005 = vadd.f32 %v2004, 0.001143296
  %v2006 = vmul.f32 %v1992, %v2005
  %v2007 = vadd.f32 %v2006, 0.014752088
  %v2008 = vmul.f32 %v1992, %v2007
  %v2009 = vadd.f32 %v2008, 0.112945676
  %v2010 = vmul.f32 %v1992, %v2009
  %v2011 = vadd.f32 %v2010, 0.4994258
  %v2012 = vmul.f32 %v1992, %v2011
  %v2013 = vadd.f32 %v2012, 1.0
  %v2014 = vrcp.pop %v2013
  %v2015 = vmul.f32 %v2013, %v2014
  %v2016 = vsub.f32 1.0, %v2015
  %v2017 = vmul.f32 %v2014, %v2016
  %v2018 = vadd.f32 %v2014, %v2017
  %vm2019 = vweird.f32 %v2013
  %vm2020 = vweird.f32 %v2014
  %vm2021 = vmor %vm2019, %vm2020
  %v2022 = vsel %vm2021, %v2014, %v2018
  %v2023 = vand.u32 2147483647, %v2013
  %vm2024 = vcmp.eq.f32.partialorder %v2023, 8.507059e+37
  %v2025 = vand.u32 %v2013, 2147483648
  %v2026 = vor.u32 1.1754944e-38, %v2025
  %v2027 = vsel %vm2024, %v2026, %v2022
  %v2028 = vmul.f32 %v2003, %v2027
  %v2029 = vmin.f32 %v2028, 1.0
  %v2030 = vmax.f32 %v2029, -1.0
  %v2031 = vmul.f32 %v1031, %v1031
  %v2032 = vmin.f32 16.0, %v2031
  %v2033 = vmul.f32 %v2032, 2.1237322e-06
  %v2034 = vadd.f32 %v2033, 0.00028619796
  %v2035 = vmul.f32 %v2032, %v2034
  %v2036 = vadd.f32 %v2035, 0.0036580483
  %v2037 = vmul.f32 %v2032, %v2036
  %v2038 = vadd.f32 %v2037, 0.05243302
  %v2039 = vmul.f32 %v2032, %v2038
  %v2040 = vadd.f32 %v2039, 0.18741608
  %v2041 = vmul.f32 %v2032, %v2040
  %v2042 = vadd.f32 %v2041, 1.1283791
  %v2043 = vmul.f32 %v1031, %v2042
  %v2044 = vmul.f32 %v2032, 3.8918573e-05
  %v2045 = vadd.f32 %v2044, 0.001143296
  %v2046 = vmul.f32 %v2032, %v2045
  %v2047 = vadd.f32 %v2046, 0.014752088
  %v2048 = vmul.f32 %v2032, %v2047
  %v2049 = vadd.f32 %v2048, 0.112945676
  %v2050 = vmul.f32 %v2032, %v2049
  %v2051 = vadd.f32 %v2050, 0.4994258
  %v2052 = vmul.f32 %v2032, %v2051
  %v2053 = vadd.f32 %v2052, 1.0
  %v2054 = vrcp.pop %v2053
  %v2055 = vmul.f32 %v2053, %v2054
  %v2056 = vsub.f32 1.0, %v2055
  %v2057 = vmul.f32 %v2054, %v2056
  %v2058 = vadd.f32 %v2054, %v2057
  %vm2059 = vweird.f32 %v2053
  %vm2060 = vweird.f32 %v2054
  %vm2061 = vmor %vm2059, %vm2060
  %v2062 = vsel %vm2061, %v2054, %v2058
  %v2063 = vand.u32 2147483647, %v2053
  %vm2064 = vcmp.eq.f32.partialorder %v2063, 8.507059e+37
  %v2065 = vand.u32 %v2053, 2147483648
  %v2066 = vor.u32 1.1754944e-38, %v2065
  %v2067 = vsel %vm2064, %v2066, %v2062
  %v2068 = vmul.f32 %v2043, %v2067
  %v2069 = vmin.f32 %v2068, 1.0
  %v2070 = vmax.f32 %v2069, -1.0
  %v2071 = vmul.f32 %v1032, %v1032
  %v2072 = vmin.f32 16.0, %v2071
  %v2073 = vmul.f32 %v2072, 2.1237322e-06
  %v2074 = vadd.f32 %v2073, 0.00028619796
  %v2075 = vmul.f32 %v2072, %v2074
  %v2076 = vadd.f32 %v2075, 0.0036580483
  %v2077 = vmul.f32 %v2072, %v2076
  %v2078 = vadd.f32 %v2077, 0.05243302
  %v2079 = vmul.f32 %v2072, %v2078
  %v2080 = vadd.f32 %v2079, 0.18741608
  %v2081 = vmul.f32 %v2072, %v2080
  %v2082 = vadd.f32 %v2081, 1.1283791
  %v2083 = vmul.f32 %v1032, %v2082
  %v2084 = vmul.f32 %v2072, 3.8918573e-05
  %v2085 = vadd.f32 %v2084, 0.001143296
  %v2086 = vmul.f32 %v2072, %v2085
  %v2087 = vadd.f32 %v2086, 0.014752088
  %v2088 = vmul.f32 %v2072, %v2087
  %v2089 = vadd.f32 %v2088, 0.112945676
  %v2090 = vmul.f32 %v2072, %v2089
  %v2091 = vadd.f32 %v2090, 0.4994258
  %v2092 = vmul.f32 %v2072, %v2091
  %v2093 = vadd.f32 %v2092, 1.0
  %v2094 = vrcp.pop %v2093
  %v2095 = vmul.f32 %v2093, %v2094
  %v2096 = vsub.f32 1.0, %v2095
  %v2097 = vmul.f32 %v2094, %v2096
  %v2098 = vadd.f32 %v2094, %v2097
  %vm2099 = vweird.f32 %v2093
  %vm2100 = vweird.f32 %v2094
  %vm2101 = vmor %vm2099, %vm2100
  %v2102 = vsel %vm2101, %v2094, %v2098
  %v2103 = vand.u32 2147483647, %v2093
  %vm2104 = vcmp.eq.f32.partialorder %v2103, 8.507059e+37
  %v2105 = vand.u32 %v2093, 2147483648
  %v2106 = vor.u32 1.1754944e-38, %v2105
  %v2107 = vsel %vm2104, %v2106, %v2102
  %v2108 = vmul.f32 %v2083, %v2107
  %v2109 = vmin.f32 %v2108, 1.0
  %v2110 = vmax.f32 %v2109, -1.0
  %v2111 = vmul.f32 %v1033, %v1033
  %v2112 = vmin.f32 16.0, %v2111
  %v2113 = vmul.f32 %v2112, 2.1237322e-06
  %v2114 = vadd.f32 %v2113, 0.00028619796
  %v2115 = vmul.f32 %v2112, %v2114
  %v2116 = vadd.f32 %v2115, 0.0036580483
  %v2117 = vmul.f32 %v2112, %v2116
  %v2118 = vadd.f32 %v2117, 0.05243302
  %v2119 = vmul.f32 %v2112, %v2118
  %v2120 = vadd.f32 %v2119, 0.18741608
  %v2121 = vmul.f32 %v2112, %v2120
  %v2122 = vadd.f32 %v2121, 1.1283791
  %v2123 = vmul.f32 %v1033, %v2122
  %v2124 = vmul.f32 %v2112, 3.8918573e-05
  %v2125 = vadd.f32 %v2124, 0.001143296
  %v2126 = vmul.f32 %v2112, %v2125
  %v2127 = vadd.f32 %v2126, 0.014752088
  %v2128 = vmul.f32 %v2112, %v2127
  %v2129 = vadd.f32 %v2128, 0.112945676
  %v2130 = vmul.f32 %v2112, %v2129
  %v2131 = vadd.f32 %v2130, 0.4994258
  %v2132 = vmul.f32 %v2112, %v2131
  %v2133 = vadd.f32 %v2132, 1.0
  %v2134 = vrcp.pop %v2133
  %v2135 = vmul.f32 %v2133, %v2134
  %v2136 = vsub.f32 1.0, %v2135
  %v2137 = vmul.f32 %v2134, %v2136
  %v2138 = vadd.f32 %v2134, %v2137
  %vm2139 = vweird.f32 %v2133
  %vm2140 = vweird.f32 %v2134
  %vm2141 = vmor %vm2139, %vm2140
  %v2142 = vsel %vm2141, %v2134, %v2138
  %v2143 = vand.u32 2147483647, %v2133
  %vm2144 = vcmp.eq.f32.partialorder %v2143, 8.507059e+37
  %v2145 = vand.u32 %v2133, 2147483648
  %v2146 = vor.u32 1.1754944e-38, %v2145
  %v2147 = vsel %vm2144, %v2146, %v2142
  %v2148 = vmul.f32 %v2123, %v2147
  %v2149 = vmin.f32 %v2148, 1.0
  %v2150 = vmax.f32 %v2149, -1.0
  %v2151 = vmul.f32 %v1034, %v1034
  %v2152 = vmin.f32 16.0, %v2151
  %v2153 = vmul.f32 %v2152, 2.1237322e-06
  %v2154 = vadd.f32 %v2153, 0.00028619796
  %v2155 = vmul.f32 %v2152, %v2154
  %v2156 = vadd.f32 %v2155, 0.0036580483
  %v2157 = vmul.f32 %v2152, %v2156
  %v2158 = vadd.f32 %v2157, 0.05243302
  %v2159 = vmul.f32 %v2152, %v2158
  %v2160 = vadd.f32 %v2159, 0.18741608
  %v2161 = vmul.f32 %v2152, %v2160
  %v2162 = vadd.f32 %v2161, 1.1283791
  %v2163 = vmul.f32 %v1034, %v2162
  %v2164 = vmul.f32 %v2152, 3.8918573e-05
  %v2165 = vadd.f32 %v2164, 0.001143296
  %v2166 = vmul.f32 %v2152, %v2165
  %v2167 = vadd.f32 %v2166, 0.014752088
  %v2168 = vmul.f32 %v2152, %v2167
  %v2169 = vadd.f32 %v2168, 0.112945676
  %v2170 = vmul.f32 %v2152, %v2169
  %v2171 = vadd.f32 %v2170, 0.4994258
  %v2172 = vmul.f32 %v2152, %v2171
  %v2173 = vadd.f32 %v2172, 1.0
  %v2174 = vrcp.pop %v2173
  %v2175 = vmul.f32 %v2173, %v2174
  %v2176 = vsub.f32 1.0, %v2175
  %v2177 = vmul.f32 %v2174, %v2176
  %v2178 = vadd.f32 %v2174, %v2177
  %vm2179 = vweird.f32 %v2173
  %vm2180 = vweird.f32 %v2174
  %vm2181 = vmor %vm2179, %vm2180
  %v2182 = vsel %vm2181, %v2174, %v2178
  %v2183 = vand.u32 2147483647, %v2173
  %vm2184 = vcmp.eq.f32.partialorder %v2183, 8.507059e+37
  %v2185 = vand.u32 %v2173, 2147483648
  %v2186 = vor.u32 1.1754944e-38, %v2185
  %v2187 = vsel %vm2184, %v2186, %v2182
  %v2188 = vmul.f32 %v2163, %v2187
  %v2189 = vmin.f32 %v2188, 1.0
  %v2190 = vmax.f32 %v2189, -1.0
  %v2191 = vmul.f32 %v1035, %v1035
  %v2192 = vmin.f32 16.0, %v2191
  %v2193 = vmul.f32 %v2192, 2.1237322e-06
  %v2194 = vadd.f32 %v2193, 0.00028619796
  %v2195 = vmul.f32 %v2192, %v2194
  %v2196 = vadd.f32 %v2195, 0.0036580483
  %v2197 = vmul.f32 %v2192, %v2196
  %v2198 = vadd.f32 %v2197, 0.05243302
  %v2199 = vmul.f32 %v2192, %v2198
  %v2200 = vadd.f32 %v2199, 0.18741608
  %v2201 = vmul.f32 %v2192, %v2200
  %v2202 = vadd.f32 %v2201, 1.1283791
  %v2203 = vmul.f32 %v1035, %v2202
  %v2204 = vmul.f32 %v2192, 3.8918573e-05
  %v2205 = vadd.f32 %v2204, 0.001143296
  %v2206 = vmul.f32 %v2192, %v2205
  %v2207 = vadd.f32 %v2206, 0.014752088
  %v2208 = vmul.f32 %v2192, %v2207
  %v2209 = vadd.f32 %v2208, 0.112945676
  %v2210 = vmul.f32 %v2192, %v2209
  %v2211 = vadd.f32 %v2210, 0.4994258
  %v2212 = vmul.f32 %v2192, %v2211
  %v2213 = vadd.f32 %v2212, 1.0
  %v2214 = vrcp.pop %v2213
  %v2215 = vmul.f32 %v2213, %v2214
  %v2216 = vsub.f32 1.0, %v2215
  %v2217 = vmul.f32 %v2214, %v2216
  %v2218 = vadd.f32 %v2214, %v2217
  %vm2219 = vweird.f32 %v2213
  %vm2220 = vweird.f32 %v2214
  %vm2221 = vmor %vm2219, %vm2220
  %v2222 = vsel %vm2221, %v2214, %v2218
  %v2223 = vand.u32 2147483647, %v2213
  %vm2224 = vcmp.eq.f32.partialorder %v2223, 8.507059e+37
  %v2225 = vand.u32 %v2213, 2147483648
  %v2226 = vor.u32 1.1754944e-38, %v2225
  %v2227 = vsel %vm2224, %v2226, %v2222
  %v2228 = vmul.f32 %v2203, %v2227
  %v2229 = vmin.f32 %v2228, 1.0
  %v2230 = vmax.f32 %v2229, -1.0
  %v2231 = vmul.f32 %v1036, %v1036
  %v2232 = vmin.f32 16.0, %v2231
  %v2233 = vmul.f32 %v2232, 2.1237322e-06
  %v2234 = vadd.f32 %v2233, 0.00028619796
  %v2235 = vmul.f32 %v2232, %v2234
  %v2236 = vadd.f32 %v2235, 0.0036580483
  %v2237 = vmul.f32 %v2232, %v2236
  %v2238 = vadd.f32 %v2237, 0.05243302
  %v2239 = vmul.f32 %v2232, %v2238
  %v2240 = vadd.f32 %v2239, 0.18741608
  %v2241 = vmul.f32 %v2232, %v2240
  %v2242 = vadd.f32 %v2241, 1.1283791
  %v2243 = vmul.f32 %v1036, %v2242
  %v2244 = vmul.f32 %v2232, 3.8918573e-05
  %v2245 = vadd.f32 %v2244, 0.001143296
  %v2246 = vmul.f32 %v2232, %v2245
  %v2247 = vadd.f32 %v2246, 0.014752088
  %v2248 = vmul.f32 %v2232, %v2247
  %v2249 = vadd.f32 %v2248, 0.112945676
  %v2250 = vmul.f32 %v2232, %v2249
  %v2251 = vadd.f32 %v2250, 0.4994258
  %v2252 = vmul.f32 %v2232, %v2251
  %v2253 = vadd.f32 %v2252, 1.0
  %v2254 = vrcp.pop %v2253
  %v2255 = vmul.f32 %v2253, %v2254
  %v2256 = vsub.f32 1.0, %v2255
  %v2257 = vmul.f32 %v2254, %v2256
  %v2258 = vadd.f32 %v2254, %v2257
  %vm2259 = vweird.f32 %v2253
  %vm2260 = vweird.f32 %v2254
  %vm2261 = vmor %vm2259, %vm2260
  %v2262 = vsel %vm2261, %v2254, %v2258
  %v2263 = vand.u32 2147483647, %v2253
  %vm2264 = vcmp.eq.f32.partialorder %v2263, 8.507059e+37
  %v2265 = vand.u32 %v2253, 2147483648
  %v2266 = vor.u32 1.1754944e-38, %v2265
  %v2267 = vsel %vm2264, %v2266, %v2262
  %v2268 = vmul.f32 %v2243, %v2267
  %v2269 = vmin.f32 %v2268, 1.0
  %v2270 = vmax.f32 %v2269, -1.0
  %v2271 = vmul.f32 %v1037, %v1037
  %v2272 = vmin.f32 16.0, %v2271
  %v2273 = vmul.f32 %v2272, 2.1237322e-06
  %v2274 = vadd.f32 %v2273, 0.00028619796
  %v2275 = vmul.f32 %v2272, %v2274
  %v2276 = vadd.f32 %v2275, 0.0036580483
  %v2277 = vmul.f32 %v2272, %v2276
  %v2278 = vadd.f32 %v2277, 0.05243302
  %v2279 = vmul.f32 %v2272, %v2278
  %v2280 = vadd.f32 %v2279, 0.18741608
  %v2281 = vmul.f32 %v2272, %v2280
  %v2282 = vadd.f32 %v2281, 1.1283791
  %v2283 = vmul.f32 %v1037, %v2282
  %v2284 = vmul.f32 %v2272, 3.8918573e-05
  %v2285 = vadd.f32 %v2284, 0.001143296
  %v2286 = vmul.f32 %v2272, %v2285
  %v2287 = vadd.f32 %v2286, 0.014752088
  %v2288 = vmul.f32 %v2272, %v2287
  %v2289 = vadd.f32 %v2288, 0.112945676
  %v2290 = vmul.f32 %v2272, %v2289
  %v2291 = vadd.f32 %v2290, 0.4994258
  %v2292 = vmul.f32 %v2272, %v2291
  %v2293 = vadd.f32 %v2292, 1.0
  %v2294 = vrcp.pop %v2293
  %v2295 = vmul.f32 %v2293, %v2294
  %v2296 = vsub.f32 1.0, %v2295
  %v2297 = vmul.f32 %v2294, %v2296
  %v2298 = vadd.f32 %v2294, %v2297
  %vm2299 = vweird.f32 %v2293
  %vm2300 = vweird.f32 %v2294
  %vm2301 = vmor %vm2299, %vm2300
  %v2302 = vsel %vm2301, %v2294, %v2298
  %v2303 = vand.u32 2147483647, %v2293
  %vm2304 = vcmp.eq.f32.partialorder %v2303, 8.507059e+37
  %v2305 = vand.u32 %v2293, 2147483648
  %v2306 = vor.u32 1.1754944e-38, %v2305
  %v2307 = vsel %vm2304, %v2306, %v2302
  %v2308 = vmul.f32 %v2283, %v2307
  %v2309 = vmin.f32 %v2308, 1.0
  %v2310 = vmax.f32 %v2309, -1.0
  %v2311 = vmul.f32 %v1038, %v1038
  %v2312 = vmin.f32 16.0, %v2311
  %v2313 = vmul.f32 %v2312, 2.1237322e-06
  %v2314 = vadd.f32 %v2313, 0.00028619796
  %v2315 = vmul.f32 %v2312, %v2314
  %v2316 = vadd.f32 %v2315, 0.0036580483
  %v2317 = vmul.f32 %v2312, %v2316
  %v2318 = vadd.f32 %v2317, 0.05243302
  %v2319 = vmul.f32 %v2312, %v2318
  %v2320 = vadd.f32 %v2319, 0.18741608
  %v2321 = vmul.f32 %v2312, %v2320
  %v2322 = vadd.f32 %v2321, 1.1283791
  %v2323 = vmul.f32 %v1038, %v2322
  %v2324 = vmul.f32 %v2312, 3.8918573e-05
  %v2325 = vadd.f32 %v2324, 0.001143296
  %v2326 = vmul.f32 %v2312, %v2325
  %v2327 = vadd.f32 %v2326, 0.014752088
  %v2328 = vmul.f32 %v2312, %v2327
  %v2329 = vadd.f32 %v2328, 0.112945676
  %v2330 = vmul.f32 %v2312, %v2329
  %v2331 = vadd.f32 %v2330, 0.4994258
  %v2332 = vmul.f32 %v2312, %v2331
  %v2333 = vadd.f32 %v2332, 1.0
  %v2334 = vrcp.pop %v2333
  %v2335 = vmul.f32 %v2333, %v2334
  %v2336 = vsub.f32 1.0, %v2335
  %v2337 = vmul.f32 %v2334, %v2336
  %v2338 = vadd.f32 %v2334, %v2337
  %vm2339 = vweird.f32 %v2333
  %vm2340 = vweird.f32 %v2334
  %vm2341 = vmor %vm2339, %vm2340
  %v2342 = vsel %vm2341, %v2334, %v2338
  %v2343 = vand.u32 2147483647, %v2333
  %vm2344 = vcmp.eq.f32.partialorder %v2343, 8.507059e+37
  %v2345 = vand.u32 %v2333, 2147483648
  %v2346 = vor.u32 1.1754944e-38, %v2345
  %v2347 = vsel %vm2344, %v2346, %v2342
  %v2348 = vmul.f32 %v2323, %v2347
  %v2349 = vmin.f32 %v2348, 1.0
  %v2350 = vmax.f32 %v2349, -1.0
  %v2351 = vmul.f32 %v1039, %v1039
  %v2352 = vmin.f32 16.0, %v2351
  %v2353 = vmul.f32 %v2352, 2.1237322e-06
  %v2354 = vadd.f32 %v2353, 0.00028619796
  %v2355 = vmul.f32 %v2352, %v2354
  %v2356 = vadd.f32 %v2355, 0.0036580483
  %v2357 = vmul.f32 %v2352, %v2356
  %v2358 = vadd.f32 %v2357, 0.05243302
  %v2359 = vmul.f32 %v2352, %v2358
  %v2360 = vadd.f32 %v2359, 0.18741608
  %v2361 = vmul.f32 %v2352, %v2360
  %v2362 = vadd.f32 %v2361, 1.1283791
  %v2363 = vmul.f32 %v1039, %v2362
  %v2364 = vmul.f32 %v2352, 3.8918573e-05
  %v2365 = vadd.f32 %v2364, 0.001143296
  %v2366 = vmul.f32 %v2352, %v2365
  %v2367 = vadd.f32 %v2366, 0.014752088
  %v2368 = vmul.f32 %v2352, %v2367
  %v2369 = vadd.f32 %v2368, 0.112945676
  %v2370 = vmul.f32 %v2352, %v2369
  %v2371 = vadd.f32 %v2370, 0.4994258
  %v2372 = vmul.f32 %v2352, %v2371
  %v2373 = vadd.f32 %v2372, 1.0
  %v2374 = vrcp.pop %v2373
  %v2375 = vmul.f32 %v2373, %v2374
  %v2376 = vsub.f32 1.0, %v2375
  %v2377 = vmul.f32 %v2374, %v2376
  %v2378 = vadd.f32 %v2374, %v2377
  %vm2379 = vweird.f32 %v2373
  %vm2380 = vweird.f32 %v2374
  %vm2381 = vmor %vm2379, %vm2380
  %v2382 = vsel %vm2381, %v2374, %v2378
  %v2383 = vand.u32 2147483647, %v2373
  %vm2384 = vcmp.eq.f32.partialorder %v2383, 8.507059e+37
  %v2385 = vand.u32 %v2373, 2147483648
  %v2386 = vor.u32 1.1754944e-38, %v2385
  %v2387 = vsel %vm2384, %v2386, %v2382
  %v2388 = vmul.f32 %v2363, %v2387
  %v2389 = vmin.f32 %v2388, 1.0
  %v2390 = vmax.f32 %v2389, -1.0
  %v2391 = vmul.f32 %v1040, %v1040
  %v2392 = vmin.f32 16.0, %v2391
  %v2393 = vmul.f32 %v2392, 2.1237322e-06
  %v2394 = vadd.f32 %v2393, 0.00028619796
  %v2395 = vmul.f32 %v2392, %v2394
  %v2396 = vadd.f32 %v2395, 0.0036580483
  %v2397 = vmul.f32 %v2392, %v2396
  %v2398 = vadd.f32 %v2397, 0.05243302
  %v2399 = vmul.f32 %v2392, %v2398
  %v2400 = vadd.f32 %v2399, 0.18741608
  %v2401 = vmul.f32 %v2392, %v2400
  %v2402 = vadd.f32 %v2401, 1.1283791
  %v2403 = vmul.f32 %v1040, %v2402
  %v2404 = vmul.f32 %v2392, 3.8918573e-05
  %v2405 = vadd.f32 %v2404, 0.001143296
  %v2406 = vmul.f32 %v2392, %v2405
  %v2407 = vadd.f32 %v2406, 0.014752088
  %v2408 = vmul.f32 %v2392, %v2407
  %v2409 = vadd.f32 %v2408, 0.112945676
  %v2410 = vmul.f32 %v2392, %v2409
  %v2411 = vadd.f32 %v2410, 0.4994258
  %v2412 = vmul.f32 %v2392, %v2411
  %v2413 = vadd.f32 %v2412, 1.0
  %v2414 = vrcp.pop %v2413
  %v2415 = vmul.f32 %v2413, %v2414
  %v2416 = vsub.f32 1.0, %v2415
  %v2417 = vmul.f32 %v2414, %v2416
  %v2418 = vadd.f32 %v2414, %v2417
  %vm2419 = vweird.f32 %v2413
  %vm2420 = vweird.f32 %v2414
  %vm2421 = vmor %vm2419, %vm2420
  %v2422 = vsel %vm2421, %v2414, %v2418
  %v2423 = vand.u32 2147483647, %v2413
  %vm2424 = vcmp.eq.f32.partialorder %v2423, 8.507059e+37
  %v2425 = vand.u32 %v2413, 2147483648
  %v2426 = vor.u32 1.1754944e-38, %v2425
  %v2427 = vsel %vm2424, %v2426, %v2422
  %v2428 = vmul.f32 %v2403, %v2427
  %v2429 = vmin.f32 %v2428, 1.0
  %v2430 = vmax.f32 %v2429, -1.0
  %v2431 = vmul.f32 %v1041, %v1041
  %v2432 = vmin.f32 16.0, %v2431
  %v2433 = vmul.f32 %v2432, 2.1237322e-06
  %v2434 = vadd.f32 %v2433, 0.00028619796
  %v2435 = vmul.f32 %v2432, %v2434
  %v2436 = vadd.f32 %v2435, 0.0036580483
  %v2437 = vmul.f32 %v2432, %v2436
  %v2438 = vadd.f32 %v2437, 0.05243302
  %v2439 = vmul.f32 %v2432, %v2438
  %v2440 = vadd.f32 %v2439, 0.18741608
  %v2441 = vmul.f32 %v2432, %v2440
  %v2442 = vadd.f32 %v2441, 1.1283791
  %v2443 = vmul.f32 %v1041, %v2442
  %v2444 = vmul.f32 %v2432, 3.8918573e-05
  %v2445 = vadd.f32 %v2444, 0.001143296
  %v2446 = vmul.f32 %v2432, %v2445
  %v2447 = vadd.f32 %v2446, 0.014752088
  %v2448 = vmul.f32 %v2432, %v2447
  %v2449 = vadd.f32 %v2448, 0.112945676
  %v2450 = vmul.f32 %v2432, %v2449
  %v2451 = vadd.f32 %v2450, 0.4994258
  %v2452 = vmul.f32 %v2432, %v2451
  %v2453 = vadd.f32 %v2452, 1.0
  %v2454 = vrcp.pop %v2453
  %v2455 = vmul.f32 %v2453, %v2454
  %v2456 = vsub.f32 1.0, %v2455
  %v2457 = vmul.f32 %v2454, %v2456
  %v2458 = vadd.f32 %v2454, %v2457
  %vm2459 = vweird.f32 %v2453
  %vm2460 = vweird.f32 %v2454
  %vm2461 = vmor %vm2459, %vm2460
  %v2462 = vsel %vm2461, %v2454, %v2458
  %v2463 = vand.u32 2147483647, %v2453
  %vm2464 = vcmp.eq.f32.partialorder %v2463, 8.507059e+37
  %v2465 = vand.u32 %v2453, 2147483648
  %v2466 = vor.u32 1.1754944e-38, %v2465
  %v2467 = vsel %vm2464, %v2466, %v2462
  %v2468 = vmul.f32 %v2443, %v2467
  %v2469 = vmin.f32 %v2468, 1.0
  %v2470 = vmax.f32 %v2469, -1.0
  %v2471 = vmul.f32 %v1042, %v1042
  %v2472 = vmin.f32 16.0, %v2471
  %v2473 = vmul.f32 %v2472, 2.1237322e-06
  %v2474 = vadd.f32 %v2473, 0.00028619796
  %v2475 = vmul.f32 %v2472, %v2474
  %v2476 = vadd.f32 %v2475, 0.0036580483
  %v2477 = vmul.f32 %v2472, %v2476
  %v2478 = vadd.f32 %v2477, 0.05243302
  %v2479 = vmul.f32 %v2472, %v2478
  %v2480 = vadd.f32 %v2479, 0.18741608
  %v2481 = vmul.f32 %v2472, %v2480
  %v2482 = vadd.f32 %v2481, 1.1283791
  %v2483 = vmul.f32 %v1042, %v2482
  %v2484 = vmul.f32 %v2472, 3.8918573e-05
  %v2485 = vadd.f32 %v2484, 0.001143296
  %v2486 = vmul.f32 %v2472, %v2485
  %v2487 = vadd.f32 %v2486, 0.014752088
  %v2488 = vmul.f32 %v2472, %v2487
  %v2489 = vadd.f32 %v2488, 0.112945676
  %v2490 = vmul.f32 %v2472, %v2489
  %v2491 = vadd.f32 %v2490, 0.4994258
  %v2492 = vmul.f32 %v2472, %v2491
  %v2493 = vadd.f32 %v2492, 1.0
  %v2494 = vrcp.pop %v2493
  %v2495 = vmul.f32 %v2493, %v2494
  %v2496 = vsub.f32 1.0, %v2495
  %v2497 = vmul.f32 %v2494, %v2496
  %v2498 = vadd.f32 %v2494, %v2497
  %vm2499 = vweird.f32 %v2493
  %vm2500 = vweird.f32 %v2494
  %vm2501 = vmor %vm2499, %vm2500
  %v2502 = vsel %vm2501, %v2494, %v2498
  %v2503 = vand.u32 2147483647, %v2493
  %vm2504 = vcmp.eq.f32.partialorder %v2503, 8.507059e+37
  %v2505 = vand.u32 %v2493, 2147483648
  %v2506 = vor.u32 1.1754944e-38, %v2505
  %v2507 = vsel %vm2504, %v2506, %v2502
  %v2508 = vmul.f32 %v2483, %v2507
  %v2509 = vmin.f32 %v2508, 1.0
  %v2510 = vmax.f32 %v2509, -1.0
  %v2511 = vmul.f32 %v1043, %v1043
  %v2512 = vmin.f32 16.0, %v2511
  %v2513 = vmul.f32 %v2512, 2.1237322e-06
  %v2514 = vadd.f32 %v2513, 0.00028619796
  %v2515 = vmul.f32 %v2512, %v2514
  %v2516 = vadd.f32 %v2515, 0.0036580483
  %v2517 = vmul.f32 %v2512, %v2516
  %v2518 = vadd.f32 %v2517, 0.05243302
  %v2519 = vmul.f32 %v2512, %v2518
  %v2520 = vadd.f32 %v2519, 0.18741608
  %v2521 = vmul.f32 %v2512, %v2520
  %v2522 = vadd.f32 %v2521, 1.1283791
  %v2523 = vmul.f32 %v1043, %v2522
  %v2524 = vmul.f32 %v2512, 3.8918573e-05
  %v2525 = vadd.f32 %v2524, 0.001143296
  %v2526 = vmul.f32 %v2512, %v2525
  %v2527 = vadd.f32 %v2526, 0.014752088
  %v2528 = vmul.f32 %v2512, %v2527
  %v2529 = vadd.f32 %v2528, 0.112945676
  %v2530 = vmul.f32 %v2512, %v2529
  %v2531 = vadd.f32 %v2530, 0.4994258
  %v2532 = vmul.f32 %v2512, %v2531
  %v2533 = vadd.f32 %v2532, 1.0
  %v2534 = vrcp.pop %v2533
  %v2535 = vmul.f32 %v2533, %v2534
  %v2536 = vsub.f32 1.0, %v2535
  %v2537 = vmul.f32 %v2534, %v2536
  %v2538 = vadd.f32 %v2534, %v2537
  %vm2539 = vweird.f32 %v2533
  %vm2540 = vweird.f32 %v2534
  %vm2541 = vmor %vm2539, %vm2540
  %v2542 = vsel %vm2541, %v2534, %v2538
  %v2543 = vand.u32 2147483647, %v2533
  %vm2544 = vcmp.eq.f32.partialorder %v2543, 8.507059e+37
  %v2545 = vand.u32 %v2533, 2147483648
  %v2546 = vor.u32 1.1754944e-38, %v2545
  %v2547 = vsel %vm2544, %v2546, %v2542
  %v2548 = vmul.f32 %v2523, %v2547
  %v2549 = vmin.f32 %v2548, 1.0
  %v2550 = vmax.f32 %v2549, -1.0
  %v2551 = vmul.f32 %v1044, %v1044
  %v2552 = vmin.f32 16.0, %v2551
  %v2553 = vmul.f32 %v2552, 2.1237322e-06
  %v2554 = vadd.f32 %v2553, 0.00028619796
  %v2555 = vmul.f32 %v2552, %v2554
  %v2556 = vadd.f32 %v2555, 0.0036580483
  %v2557 = vmul.f32 %v2552, %v2556
  %v2558 = vadd.f32 %v2557, 0.05243302
  %v2559 = vmul.f32 %v2552, %v2558
  %v2560 = vadd.f32 %v2559, 0.18741608
  %v2561 = vmul.f32 %v2552, %v2560
  %v2562 = vadd.f32 %v2561, 1.1283791
  %v2563 = vmul.f32 %v1044, %v2562
  %v2564 = vmul.f32 %v2552, 3.8918573e-05
  %v2565 = vadd.f32 %v2564, 0.001143296
  %v2566 = vmul.f32 %v2552, %v2565
  %v2567 = vadd.f32 %v2566, 0.014752088
  %v2568 = vmul.f32 %v2552, %v2567
  %v2569 = vadd.f32 %v2568, 0.112945676
  %v2570 = vmul.f32 %v2552, %v2569
  %v2571 = vadd.f32 %v2570, 0.4994258
  %v2572 = vmul.f32 %v2552, %v2571
  %v2573 = vadd.f32 %v2572, 1.0
  %v2574 = vrcp.pop %v2573
  %v2575 = vmul.f32 %v2573, %v2574
  %v2576 = vsub.f32 1.0, %v2575
  %v2577 = vmul.f32 %v2574, %v2576
  %v2578 = vadd.f32 %v2574, %v2577
  %vm2579 = vweird.f32 %v2573
  %vm2580 = vweird.f32 %v2574
  %vm2581 = vmor %vm2579, %vm2580
  %v2582 = vsel %vm2581, %v2574, %v2578
  %v2583 = vand.u32 2147483647, %v2573
  %vm2584 = vcmp.eq.f32.partialorder %v2583, 8.507059e+37
  %v2585 = vand.u32 %v2573, 2147483648
  %v2586 = vor.u32 1.1754944e-38, %v2585
  %v2587 = vsel %vm2584, %v2586, %v2582
  %v2588 = vmul.f32 %v2563, %v2587
  %v2589 = vmin.f32 %v2588, 1.0
  %v2590 = vmax.f32 %v2589, -1.0
  %v2591 = vmul.f32 %v1045, %v1045
  %v2592 = vmin.f32 16.0, %v2591
  %v2593 = vmul.f32 %v2592, 2.1237322e-06
  %v2594 = vadd.f32 %v2593, 0.00028619796
  %v2595 = vmul.f32 %v2592, %v2594
  %v2596 = vadd.f32 %v2595, 0.0036580483
  %v2597 = vmul.f32 %v2592, %v2596
  %v2598 = vadd.f32 %v2597, 0.05243302
  %v2599 = vmul.f32 %v2592, %v2598
  %v2600 = vadd.f32 %v2599, 0.18741608
  %v2601 = vmul.f32 %v2592, %v2600
  %v2602 = vadd.f32 %v2601, 1.1283791
  %v2603 = vmul.f32 %v1045, %v2602
  %v2604 = vmul.f32 %v2592, 3.8918573e-05
  %v2605 = vadd.f32 %v2604, 0.001143296
  %v2606 = vmul.f32 %v2592, %v2605
  %v2607 = vadd.f32 %v2606, 0.014752088
  %v2608 = vmul.f32 %v2592, %v2607
  %v2609 = vadd.f32 %v2608, 0.112945676
  %v2610 = vmul.f32 %v2592, %v2609
  %v2611 = vadd.f32 %v2610, 0.4994258
  %v2612 = vmul.f32 %v2592, %v2611
  %v2613 = vadd.f32 %v2612, 1.0
  %v2614 = vrcp.pop %v2613
  %v2615 = vmul.f32 %v2613, %v2614
  %v2616 = vsub.f32 1.0, %v2615
  %v2617 = vmul.f32 %v2614, %v2616
  %v2618 = vadd.f32 %v2614, %v2617
  %vm2619 = vweird.f32 %v2613
  %vm2620 = vweird.f32 %v2614
  %vm2621 = vmor %vm2619, %vm2620
  %v2622 = vsel %vm2621, %v2614, %v2618
  %v2623 = vand.u32 2147483647, %v2613
  %vm2624 = vcmp.eq.f32.partialorder %v2623, 8.507059e+37
  %v2625 = vand.u32 %v2613, 2147483648
  %v2626 = vor.u32 1.1754944e-38, %v2625
  %v2627 = vsel %vm2624, %v2626, %v2622
  %v2628 = vmul.f32 %v2603, %v2627
  %v2629 = vmin.f32 %v2628, 1.0
  %v2630 = vmax.f32 %v2629, -1.0
  %v2631 = vmul.f32 %v1046, %v1046
  %v2632 = vmin.f32 16.0, %v2631
  %v2633 = vmul.f32 %v2632, 2.1237322e-06
  %v2634 = vadd.f32 %v2633, 0.00028619796
  %v2635 = vmul.f32 %v2632, %v2634
  %v2636 = vadd.f32 %v2635, 0.0036580483
  %v2637 = vmul.f32 %v2632, %v2636
  %v2638 = vadd.f32 %v2637, 0.05243302
  %v2639 = vmul.f32 %v2632, %v2638
  %v2640 = vadd.f32 %v2639, 0.18741608
  %v2641 = vmul.f32 %v2632, %v2640
  %v2642 = vadd.f32 %v2641, 1.1283791
  %v2643 = vmul.f32 %v1046, %v2642
  %v2644 = vmul.f32 %v2632, 3.8918573e-05
  %v2645 = vadd.f32 %v2644, 0.001143296
  %v2646 = vmul.f32 %v2632, %v2645
  %v2647 = vadd.f32 %v2646, 0.014752088
  %v2648 = vmul.f32 %v2632, %v2647
  %v2649 = vadd.f32 %v2648, 0.112945676
  %v2650 = vmul.f32 %v2632, %v2649
  %v2651 = vadd.f32 %v2650, 0.4994258
  %v2652 = vmul.f32 %v2632, %v2651
  %v2653 = vadd.f32 %v2652, 1.0
  %v2654 = vrcp.pop %v2653
  %v2655 = vmul.f32 %v2653, %v2654
  %v2656 = vsub.f32 1.0, %v2655
  %v2657 = vmul.f32 %v2654, %v2656
  %v2658 = vadd.f32 %v2654, %v2657
  %vm2659 = vweird.f32 %v2653
  %vm2660 = vweird.f32 %v2654
  %vm2661 = vmor %vm2659, %vm2660
  %v2662 = vsel %vm2661, %v2654, %v2658
  %v2663 = vand.u32 2147483647, %v2653
  %vm2664 = vcmp.eq.f32.partialorder %v2663, 8.507059e+37
  %v2665 = vand.u32 %v2653, 2147483648
  %v2666 = vor.u32 1.1754944e-38, %v2665
  %v2667 = vsel %vm2664, %v2666, %v2662
  %v2668 = vmul.f32 %v2643, %v2667
  %v2669 = vmin.f32 %v2668, 1.0
  %v2670 = vmax.f32 %v2669, -1.0
  %v2671 = vmul.f32 %v1047, %v1047
  %v2672 = vmin.f32 16.0, %v2671
  %v2673 = vmul.f32 %v2672, 2.1237322e-06
  %v2674 = vadd.f32 %v2673, 0.00028619796
  %v2675 = vmul.f32 %v2672, %v2674
  %v2676 = vadd.f32 %v2675, 0.0036580483
  %v2677 = vmul.f32 %v2672, %v2676
  %v2678 = vadd.f32 %v2677, 0.05243302
  %v2679 = vmul.f32 %v2672, %v2678
  %v2680 = vadd.f32 %v2679, 0.18741608
  %v2681 = vmul.f32 %v2672, %v2680
  %v2682 = vadd.f32 %v2681, 1.1283791
  %v2683 = vmul.f32 %v1047, %v2682
  %v2684 = vmul.f32 %v2672, 3.8918573e-05
  %v2685 = vadd.f32 %v2684, 0.001143296
  %v2686 = vmul.f32 %v2672, %v2685
  %v2687 = vadd.f32 %v2686, 0.014752088
  %v2688 = vmul.f32 %v2672, %v2687
  %v2689 = vadd.f32 %v2688, 0.112945676
  %v2690 = vmul.f32 %v2672, %v2689
  %v2691 = vadd.f32 %v2690, 0.4994258
  %v2692 = vmul.f32 %v2672, %v2691
  %v2693 = vadd.f32 %v2692, 1.0
  %v2694 = vrcp.pop %v2693
  %v2695 = vmul.f32 %v2693, %v2694
  %v2696 = vsub.f32 1.0, %v2695
  %v2697 = vmul.f32 %v2694, %v2696
  %v2698 = vadd.f32 %v2694, %v2697
  %vm2699 = vweird.f32 %v2693
  %vm2700 = vweird.f32 %v2694
  %vm2701 = vmor %vm2699, %vm2700
  %v2702 = vsel %vm2701, %v2694, %v2698
  %v2703 = vand.u32 2147483647, %v2693
  %vm2704 = vcmp.eq.f32.partialorder %v2703, 8.507059e+37
  %v2705 = vand.u32 %v2693, 2147483648
  %v2706 = vor.u32 1.1754944e-38, %v2705
  %v2707 = vsel %vm2704, %v2706, %v2702
  %v2708 = vmul.f32 %v2683, %v2707
  %v2709 = vmin.f32 %v2708, 1.0
  %v2710 = vmax.f32 %v2709, -1.0
  %v2711 = vmul.f32 %v1048, %v1048
  %v2712 = vmin.f32 16.0, %v2711
  %v2713 = vmul.f32 %v2712, 2.1237322e-06
  %v2714 = vadd.f32 %v2713, 0.00028619796
  %v2715 = vmul.f32 %v2712, %v2714
  %v2716 = vadd.f32 %v2715, 0.0036580483
  %v2717 = vmul.f32 %v2712, %v2716
  %v2718 = vadd.f32 %v2717, 0.05243302
  %v2719 = vmul.f32 %v2712, %v2718
  %v2720 = vadd.f32 %v2719, 0.18741608
  %v2721 = vmul.f32 %v2712, %v2720
  %v2722 = vadd.f32 %v2721, 1.1283791
  %v2723 = vmul.f32 %v1048, %v2722
  %v2724 = vmul.f32 %v2712, 3.8918573e-05
  %v2725 = vadd.f32 %v2724, 0.001143296
  %v2726 = vmul.f32 %v2712, %v2725
  %v2727 = vadd.f32 %v2726, 0.014752088
  %v2728 = vmul.f32 %v2712, %v2727
  %v2729 = vadd.f32 %v2728, 0.112945676
  %v2730 = vmul.f32 %v2712, %v2729
  %v2731 = vadd.f32 %v2730, 0.4994258
  %v2732 = vmul.f32 %v2712, %v2731
  %v2733 = vadd.f32 %v2732, 1.0
  %v2734 = vrcp.pop %v2733
  %v2735 = vmul.f32 %v2733, %v2734
  %v2736 = vsub.f32 1.0, %v2735
  %v2737 = vmul.f32 %v2734, %v2736
  %v2738 = vadd.f32 %v2734, %v2737
  %vm2739 = vweird.f32 %v2733
  %vm2740 = vweird.f32 %v2734
  %vm2741 = vmor %vm2739, %vm2740
  %v2742 = vsel %vm2741, %v2734, %v2738
  %v2743 = vand.u32 2147483647, %v2733
  %vm2744 = vcmp.eq.f32.partialorder %v2743, 8.507059e+37
  %v2745 = vand.u32 %v2733, 2147483648
  %v2746 = vor.u32 1.1754944e-38, %v2745
  %v2747 = vsel %vm2744, %v2746, %v2742
  %v2748 = vmul.f32 %v2723, %v2747
  %v2749 = vmin.f32 %v2748, 1.0
  %v2750 = vmax.f32 %v2749, -1.0
  %v2751 = vmul.f32 %v1049, %v1049
  %v2752 = vmin.f32 16.0, %v2751
  %v2753 = vmul.f32 %v2752, 2.1237322e-06
  %v2754 = vadd.f32 %v2753, 0.00028619796
  %v2755 = vmul.f32 %v2752, %v2754
  %v2756 = vadd.f32 %v2755, 0.0036580483
  %v2757 = vmul.f32 %v2752, %v2756
  %v2758 = vadd.f32 %v2757, 0.05243302
  %v2759 = vmul.f32 %v2752, %v2758
  %v2760 = vadd.f32 %v2759, 0.18741608
  %v2761 = vmul.f32 %v2752, %v2760
  %v2762 = vadd.f32 %v2761, 1.1283791
  %v2763 = vmul.f32 %v1049, %v2762
  %v2764 = vmul.f32 %v2752, 3.8918573e-05
  %v2765 = vadd.f32 %v2764, 0.001143296
  %v2766 = vmul.f32 %v2752, %v2765
  %v2767 = vadd.f32 %v2766, 0.014752088
  %v2768 = vmul.f32 %v2752, %v2767
  %v2769 = vadd.f32 %v2768, 0.112945676
  %v2770 = vmul.f32 %v2752, %v2769
  %v2771 = vadd.f32 %v2770, 0.4994258
  %v2772 = vmul.f32 %v2752, %v2771
  %v2773 = vadd.f32 %v2772, 1.0
  %v2774 = vrcp.pop %v2773
  %v2775 = vmul.f32 %v2773, %v2774
  %v2776 = vsub.f32 1.0, %v2775
  %v2777 = vmul.f32 %v2774, %v2776
  %v2778 = vadd.f32 %v2774, %v2777
  %vm2779 = vweird.f32 %v2773
  %vm2780 = vweird.f32 %v2774
  %vm2781 = vmor %vm2779, %vm2780
  %v2782 = vsel %vm2781, %v2774, %v2778
  %v2783 = vand.u32 2147483647, %v2773
  %vm2784 = vcmp.eq.f32.partialorder %v2783, 8.507059e+37
  %v2785 = vand.u32 %v2773, 2147483648
  %v2786 = vor.u32 1.1754944e-38, %v2785
  %v2787 = vsel %vm2784, %v2786, %v2782
  %v2788 = vmul.f32 %v2763, %v2787
  %v2789 = vmin.f32 %v2788, 1.0
  %v2790 = vmax.f32 %v2789, -1.0
  %v2791 = vmul.f32 %v1050, %v1050
  %v2792 = vmin.f32 16.0, %v2791
  %v2793 = vmul.f32 %v2792, 2.1237322e-06
  %v2794 = vadd.f32 %v2793, 0.00028619796
  %v2795 = vmul.f32 %v2792, %v2794
  %v2796 = vadd.f32 %v2795, 0.0036580483
  %v2797 = vmul.f32 %v2792, %v2796
  %v2798 = vadd.f32 %v2797, 0.05243302
  %v2799 = vmul.f32 %v2792, %v2798
  %v2800 = vadd.f32 %v2799, 0.18741608
  %v2801 = vmul.f32 %v2792, %v2800
  %v2802 = vadd.f32 %v2801, 1.1283791
  %v2803 = vmul.f32 %v1050, %v2802
  %v2804 = vmul.f32 %v2792, 3.8918573e-05
  %v2805 = vadd.f32 %v2804, 0.001143296
  %v2806 = vmul.f32 %v2792, %v2805
  %v2807 = vadd.f32 %v2806, 0.014752088
  %v2808 = vmul.f32 %v2792, %v2807
  %v2809 = vadd.f32 %v2808, 0.112945676
  %v2810 = vmul.f32 %v2792, %v2809
  %v2811 = vadd.f32 %v2810, 0.4994258
  %v2812 = vmul.f32 %v2792, %v2811
  %v2813 = vadd.f32 %v2812, 1.0
  %v2814 = vrcp.pop %v2813
  %v2815 = vmul.f32 %v2813, %v2814
  %v2816 = vsub.f32 1.0, %v2815
  %v2817 = vmul.f32 %v2814, %v2816
  %v2818 = vadd.f32 %v2814, %v2817
  %vm2819 = vweird.f32 %v2813
  %vm2820 = vweird.f32 %v2814
  %vm2821 = vmor %vm2819, %vm2820
  %v2822 = vsel %vm2821, %v2814, %v2818
  %v2823 = vand.u32 2147483647, %v2813
  %vm2824 = vcmp.eq.f32.partialorder %v2823, 8.507059e+37
  %v2825 = vand.u32 %v2813, 2147483648
  %v2826 = vor.u32 1.1754944e-38, %v2825
  %v2827 = vsel %vm2824, %v2826, %v2822
  %v2828 = vmul.f32 %v2803, %v2827
  %v2829 = vmin.f32 %v2828, 1.0
  %v2830 = vmax.f32 %v2829, -1.0
  %v2831 = vmul.f32 %v1051, %v1051
  %v2832 = vmin.f32 16.0, %v2831
  %v2833 = vmul.f32 %v2832, 2.1237322e-06
  %v2834 = vadd.f32 %v2833, 0.00028619796
  %v2835 = vmul.f32 %v2832, %v2834
  %v2836 = vadd.f32 %v2835, 0.0036580483
  %v2837 = vmul.f32 %v2832, %v2836
  %v2838 = vadd.f32 %v2837, 0.05243302
  %v2839 = vmul.f32 %v2832, %v2838
  %v2840 = vadd.f32 %v2839, 0.18741608
  %v2841 = vmul.f32 %v2832, %v2840
  %v2842 = vadd.f32 %v2841, 1.1283791
  %v2843 = vmul.f32 %v1051, %v2842
  %v2844 = vmul.f32 %v2832, 3.8918573e-05
  %v2845 = vadd.f32 %v2844, 0.001143296
  %v2846 = vmul.f32 %v2832, %v2845
  %v2847 = vadd.f32 %v2846, 0.014752088
  %v2848 = vmul.f32 %v2832, %v2847
  %v2849 = vadd.f32 %v2848, 0.112945676
  %v2850 = vmul.f32 %v2832, %v2849
  %v2851 = vadd.f32 %v2850, 0.4994258
  %v2852 = vmul.f32 %v2832, %v2851
  %v2853 = vadd.f32 %v2852, 1.0
  %v2854 = vrcp.pop %v2853
  %v2855 = vmul.f32 %v2853, %v2854
  %v2856 = vsub.f32 1.0, %v2855
  %v2857 = vmul.f32 %v2854, %v2856
  %v2858 = vadd.f32 %v2854, %v2857
  %vm2859 = vweird.f32 %v2853
  %vm2860 = vweird.f32 %v2854
  %vm2861 = vmor %vm2859, %vm2860
  %v2862 = vsel %vm2861, %v2854, %v2858
  %v2863 = vand.u32 2147483647, %v2853
  %vm2864 = vcmp.eq.f32.partialorder %v2863, 8.507059e+37
  %v2865 = vand.u32 %v2853, 2147483648
  %v2866 = vor.u32 1.1754944e-38, %v2865
  %v2867 = vsel %vm2864, %v2866, %v2862
  %v2868 = vmul.f32 %v2843, %v2867
  %v2869 = vmin.f32 %v2868, 1.0
  %v2870 = vmax.f32 %v2869, -1.0
  %v2871 = vmul.f32 %v1052, %v1052
  %v2872 = vmin.f32 16.0, %v2871
  %v2873 = vmul.f32 %v2872, 2.1237322e-06
  %v2874 = vadd.f32 %v2873, 0.00028619796
  %v2875 = vmul.f32 %v2872, %v2874
  %v2876 = vadd.f32 %v2875, 0.0036580483
  %v2877 = vmul.f32 %v2872, %v2876
  %v2878 = vadd.f32 %v2877, 0.05243302
  %v2879 = vmul.f32 %v2872, %v2878
  %v2880 = vadd.f32 %v2879, 0.18741608
  %v2881 = vmul.f32 %v2872, %v2880
  %v2882 = vadd.f32 %v2881, 1.1283791
  %v2883 = vmul.f32 %v1052, %v2882
  %v2884 = vmul.f32 %v2872, 3.8918573e-05
  %v2885 = vadd.f32 %v2884, 0.001143296
  %v2886 = vmul.f32 %v2872, %v2885
  %v2887 = vadd.f32 %v2886, 0.014752088
  %v2888 = vmul.f32 %v2872, %v2887
  %v2889 = vadd.f32 %v2888, 0.112945676
  %v2890 = vmul.f32 %v2872, %v2889
  %v2891 = vadd.f32 %v2890, 0.4994258
  %v2892 = vmul.f32 %v2872, %v2891
  %v2893 = vadd.f32 %v2892, 1.0
  %v2894 = vrcp.pop %v2893
  %v2895 = vmul.f32 %v2893, %v2894
  %v2896 = vsub.f32 1.0, %v2895
  %v2897 = vmul.f32 %v2894, %v2896
  %v2898 = vadd.f32 %v2894, %v2897
  %vm2899 = vweird.f32 %v2893
  %vm2900 = vweird.f32 %v2894
  %vm2901 = vmor %vm2899, %vm2900
  %v2902 = vsel %vm2901, %v2894, %v2898
  %v2903 = vand.u32 2147483647, %v2893
  %vm2904 = vcmp.eq.f32.partialorder %v2903, 8.507059e+37
  %v2905 = vand.u32 %v2893, 2147483648
  %v2906 = vor.u32 1.1754944e-38, %v2905
  %v2907 = vsel %vm2904, %v2906, %v2902
  %v2908 = vmul.f32 %v2883, %v2907
  %v2909 = vmin.f32 %v2908, 1.0
  %v2910 = vmax.f32 %v2909, -1.0
  %v2911 = vmul.f32 %v1053, %v1053
  %v2912 = vmin.f32 16.0, %v2911
  %v2913 = vmul.f32 %v2912, 2.1237322e-06
  %v2914 = vadd.f32 %v2913, 0.00028619796
  %v2915 = vmul.f32 %v2912, %v2914
  %v2916 = vadd.f32 %v2915, 0.0036580483
  %v2917 = vmul.f32 %v2912, %v2916
  %v2918 = vadd.f32 %v2917, 0.05243302
  %v2919 = vmul.f32 %v2912, %v2918
  %v2920 = vadd.f32 %v2919, 0.18741608
  %v2921 = vmul.f32 %v2912, %v2920
  %v2922 = vadd.f32 %v2921, 1.1283791
  %v2923 = vmul.f32 %v1053, %v2922
  %v2924 = vmul.f32 %v2912, 3.8918573e-05
  %v2925 = vadd.f32 %v2924, 0.001143296
  %v2926 = vmul.f32 %v2912, %v2925
  %v2927 = vadd.f32 %v2926, 0.014752088
  %v2928 = vmul.f32 %v2912, %v2927
  %v2929 = vadd.f32 %v2928, 0.112945676
  %v2930 = vmul.f32 %v2912, %v2929
  %v2931 = vadd.f32 %v2930, 0.4994258
  %v2932 = vmul.f32 %v2912, %v2931
  %v2933 = vadd.f32 %v2932, 1.0
  %v2934 = vrcp.pop %v2933
  %v2935 = vmul.f32 %v2933, %v2934
  %v2936 = vsub.f32 1.0, %v2935
  %v2937 = vmul.f32 %v2934, %v2936
  %v2938 = vadd.f32 %v2934, %v2937
  %vm2939 = vweird.f32 %v2933
  %vm2940 = vweird.f32 %v2934
  %vm2941 = vmor %vm2939, %vm2940
  %v2942 = vsel %vm2941, %v2934, %v2938
  %v2943 = vand.u32 2147483647, %v2933
  %vm2944 = vcmp.eq.f32.partialorder %v2943, 8.507059e+37
  %v2945 = vand.u32 %v2933, 2147483648
  %v2946 = vor.u32 1.1754944e-38, %v2945
  %v2947 = vsel %vm2944, %v2946, %v2942
  %v2948 = vmul.f32 %v2923, %v2947
  %v2949 = vmin.f32 %v2948, 1.0
  %v2950 = vmax.f32 %v2949, -1.0
  %v2951 = vmul.f32 %v1054, %v1054
  %v2952 = vmin.f32 16.0, %v2951
  %v2953 = vmul.f32 %v2952, 2.1237322e-06
  %v2954 = vadd.f32 %v2953, 0.00028619796
  %v2955 = vmul.f32 %v2952, %v2954
  %v2956 = vadd.f32 %v2955, 0.0036580483
  %v2957 = vmul.f32 %v2952, %v2956
  %v2958 = vadd.f32 %v2957, 0.05243302
  %v2959 = vmul.f32 %v2952, %v2958
  %v2960 = vadd.f32 %v2959, 0.18741608
  %v2961 = vmul.f32 %v2952, %v2960
  %v2962 = vadd.f32 %v2961, 1.1283791
  %v2963 = vmul.f32 %v1054, %v2962
  %v2964 = vmul.f32 %v2952, 3.8918573e-05
  %v2965 = vadd.f32 %v2964, 0.001143296
  %v2966 = vmul.f32 %v2952, %v2965
  %v2967 = vadd.f32 %v2966, 0.014752088
  %v2968 = vmul.f32 %v2952, %v2967
  %v2969 = vadd.f32 %v2968, 0.112945676
  %v2970 = vmul.f32 %v2952, %v2969
  %v2971 = vadd.f32 %v2970, 0.4994258
  %v2972 = vmul.f32 %v2952, %v2971
  %v2973 = vadd.f32 %v2972, 1.0
  %v2974 = vrcp.pop %v2973
  %v2975 = vmul.f32 %v2973, %v2974
  %v2976 = vsub.f32 1.0, %v2975
  %v2977 = vmul.f32 %v2974, %v2976
  %v2978 = vadd.f32 %v2974, %v2977
  %vm2979 = vweird.f32 %v2973
  %vm2980 = vweird.f32 %v2974
  %vm2981 = vmor %vm2979, %vm2980
  %v2982 = vsel %vm2981, %v2974, %v2978
  %v2983 = vand.u32 2147483647, %v2973
  %vm2984 = vcmp.eq.f32.partialorder %v2983, 8.507059e+37
  %v2985 = vand.u32 %v2973, 2147483648
  %v2986 = vor.u32 1.1754944e-38, %v2985
  %v2987 = vsel %vm2984, %v2986, %v2982
  %v2988 = vmul.f32 %v2963, %v2987
  %v2989 = vmin.f32 %v2988, 1.0
  %v2990 = vmax.f32 %v2989, -1.0
  %v2991 = vmul.f32 %v1055, %v1055
  %v2992 = vmin.f32 16.0, %v2991
  %v2993 = vmul.f32 %v2992, 2.1237322e-06
  %v2994 = vadd.f32 %v2993, 0.00028619796
  %v2995 = vmul.f32 %v2992, %v2994
  %v2996 = vadd.f32 %v2995, 0.0036580483
  %v2997 = vmul.f32 %v2992, %v2996
  %v2998 = vadd.f32 %v2997, 0.05243302
  %v2999 = vmul.f32 %v2992, %v2998
  %v3000 = vadd.f32 %v2999, 0.18741608
  %v3001 = vmul.f32 %v2992, %v3000
  %v3002 = vadd.f32 %v3001, 1.1283791
  %v3003 = vmul.f32 %v1055, %v3002
  %v3004 = vmul.f32 %v2992, 3.8918573e-05
  %v3005 = vadd.f32 %v3004, 0.001143296
  %v3006 = vmul.f32 %v2992, %v3005
  %v3007 = vadd.f32 %v3006, 0.014752088
  %v3008 = vmul.f32 %v2992, %v3007
  %v3009 = vadd.f32 %v3008, 0.112945676
  %v3010 = vmul.f32 %v2992, %v3009
  %v3011 = vadd.f32 %v3010, 0.4994258
  %v3012 = vmul.f32 %v2992, %v3011
  %v3013 = vadd.f32 %v3012, 1.0
  %v3014 = vrcp.pop %v3013
  %v3015 = vmul.f32 %v3013, %v3014
  %v3016 = vsub.f32 1.0, %v3015
  %v3017 = vmul.f32 %v3014, %v3016
  %v3018 = vadd.f32 %v3014, %v3017
  %vm3019 = vweird.f32 %v3013
  %vm3020 = vweird.f32 %v3014
  %vm3021 = vmor %vm3019, %vm3020
  %v3022 = vsel %vm3021, %v3014, %v3018
  %v3023 = vand.u32 2147483647, %v3013
  %vm3024 = vcmp.eq.f32.partialorder %v3023, 8.507059e+37
  %v3025 = vand.u32 %v3013, 2147483648
  %v3026 = vor.u32 1.1754944e-38, %v3025
  %v3027 = vsel %vm3024, %v3026, %v3022
  %v3028 = vmul.f32 %v3003, %v3027
  %v3029 = vmin.f32 %v3028, 1.0
  %v3030 = vmax.f32 %v3029, -1.0
  %v3031 = vmul.f32 %v1056, %v1056
  %v3032 = vmin.f32 16.0, %v3031
  %v3033 = vmul.f32 %v3032, 2.1237322e-06
  %v3034 = vadd.f32 %v3033, 0.00028619796
  %v3035 = vmul.f32 %v3032, %v3034
  %v3036 = vadd.f32 %v3035, 0.0036580483
  %v3037 = vmul.f32 %v3032, %v3036
  %v3038 = vadd.f32 %v3037, 0.05243302
  %v3039 = vmul.f32 %v3032, %v3038
  %v3040 = vadd.f32 %v3039, 0.18741608
  %v3041 = vmul.f32 %v3032, %v3040
  %v3042 = vadd.f32 %v3041, 1.1283791
  %v3043 = vmul.f32 %v1056, %v3042
  %v3044 = vmul.f32 %v3032, 3.8918573e-05
  %v3045 = vadd.f32 %v3044, 0.001143296
  %v3046 = vmul.f32 %v3032, %v3045
  %v3047 = vadd.f32 %v3046, 0.014752088
  %v3048 = vmul.f32 %v3032, %v3047
  %v3049 = vadd.f32 %v3048, 0.112945676
  %v3050 = vmul.f32 %v3032, %v3049
  %v3051 = vadd.f32 %v3050, 0.4994258
  %v3052 = vmul.f32 %v3032, %v3051
  %v3053 = vadd.f32 %v3052, 1.0
  %v3054 = vrcp.pop %v3053
  %v3055 = vmul.f32 %v3053, %v3054
  %v3056 = vsub.f32 1.0, %v3055
  %v3057 = vmul.f32 %v3054, %v3056
  %v3058 = vadd.f32 %v3054, %v3057
  %vm3059 = vweird.f32 %v3053
  %vm3060 = vweird.f32 %v3054
  %vm3061 = vmor %vm3059, %vm3060
  %v3062 = vsel %vm3061, %v3054, %v3058
  %v3063 = vand.u32 2147483647, %v3053
  %vm3064 = vcmp.eq.f32.partialorder %v3063, 8.507059e+37
  %v3065 = vand.u32 %v3053, 2147483648
  %v3066 = vor.u32 1.1754944e-38, %v3065
  %v3067 = vsel %vm3064, %v3066, %v3062
  %v3068 = vmul.f32 %v3043, %v3067
  %v3069 = vmin.f32 %v3068, 1.0
  %v3070 = vmax.f32 %v3069, -1.0
  %v3071 = vmul.f32 %v1057, %v1057
  %v3072 = vmin.f32 16.0, %v3071
  %v3073 = vmul.f32 %v3072, 2.1237322e-06
  %v3074 = vadd.f32 %v3073, 0.00028619796
  %v3075 = vmul.f32 %v3072, %v3074
  %v3076 = vadd.f32 %v3075, 0.0036580483
  %v3077 = vmul.f32 %v3072, %v3076
  %v3078 = vadd.f32 %v3077, 0.05243302
  %v3079 = vmul.f32 %v3072, %v3078
  %v3080 = vadd.f32 %v3079, 0.18741608
  %v3081 = vmul.f32 %v3072, %v3080
  %v3082 = vadd.f32 %v3081, 1.1283791
  %v3083 = vmul.f32 %v1057, %v3082
  %v3084 = vmul.f32 %v3072, 3.8918573e-05
  %v3085 = vadd.f32 %v3084, 0.001143296
  %v3086 = vmul.f32 %v3072, %v3085
  %v3087 = vadd.f32 %v3086, 0.014752088
  %v3088 = vmul.f32 %v3072, %v3087
  %v3089 = vadd.f32 %v3088, 0.112945676
  %v3090 = vmul.f32 %v3072, %v3089
  %v3091 = vadd.f32 %v3090, 0.4994258
  %v3092 = vmul.f32 %v3072, %v3091
  %v3093 = vadd.f32 %v3092, 1.0
  %v3094 = vrcp.pop %v3093
  %v3095 = vmul.f32 %v3093, %v3094
  %v3096 = vsub.f32 1.0, %v3095
  %v3097 = vmul.f32 %v3094, %v3096
  %v3098 = vadd.f32 %v3094, %v3097
  %vm3099 = vweird.f32 %v3093
  %vm3100 = vweird.f32 %v3094
  %vm3101 = vmor %vm3099, %vm3100
  %v3102 = vsel %vm3101, %v3094, %v3098
  %v3103 = vand.u32 2147483647, %v3093
  %vm3104 = vcmp.eq.f32.partialorder %v3103, 8.507059e+37
  %v3105 = vand.u32 %v3093, 2147483648
  %v3106 = vor.u32 1.1754944e-38, %v3105
  %v3107 = vsel %vm3104, %v3106, %v3102
  %v3108 = vmul.f32 %v3083, %v3107
  %v3109 = vmin.f32 %v3108, 1.0
  %v3110 = vmax.f32 %v3109, -1.0
  %v3111 = vmul.f32 %v1058, %v1058
  %v3112 = vmin.f32 16.0, %v3111
  %v3113 = vmul.f32 %v3112, 2.1237322e-06
  %v3114 = vadd.f32 %v3113, 0.00028619796
  %v3115 = vmul.f32 %v3112, %v3114
  %v3116 = vadd.f32 %v3115, 0.0036580483
  %v3117 = vmul.f32 %v3112, %v3116
  %v3118 = vadd.f32 %v3117, 0.05243302
  %v3119 = vmul.f32 %v3112, %v3118
  %v3120 = vadd.f32 %v3119, 0.18741608
  %v3121 = vmul.f32 %v3112, %v3120
  %v3122 = vadd.f32 %v3121, 1.1283791
  %v3123 = vmul.f32 %v1058, %v3122
  %v3124 = vmul.f32 %v3112, 3.8918573e-05
  %v3125 = vadd.f32 %v3124, 0.001143296
  %v3126 = vmul.f32 %v3112, %v3125
  %v3127 = vadd.f32 %v3126, 0.014752088
  %v3128 = vmul.f32 %v3112, %v3127
  %v3129 = vadd.f32 %v3128, 0.112945676
  %v3130 = vmul.f32 %v3112, %v3129
  %v3131 = vadd.f32 %v3130, 0.4994258
  %v3132 = vmul.f32 %v3112, %v3131
  %v3133 = vadd.f32 %v3132, 1.0
  %v3134 = vrcp.pop %v3133
  %v3135 = vmul.f32 %v3133, %v3134
  %v3136 = vsub.f32 1.0, %v3135
  %v3137 = vmul.f32 %v3134, %v3136
  %v3138 = vadd.f32 %v3134, %v3137
  %vm3139 = vweird.f32 %v3133
  %vm3140 = vweird.f32 %v3134
  %vm3141 = vmor %vm3139, %vm3140
  %v3142 = vsel %vm3141, %v3134, %v3138
  %v3143 = vand.u32 2147483647, %v3133
  %vm3144 = vcmp.eq.f32.partialorder %v3143, 8.507059e+37
  %v3145 = vand.u32 %v3133, 2147483648
  %v3146 = vor.u32 1.1754944e-38, %v3145
  %v3147 = vsel %vm3144, %v3146, %v3142
  %v3148 = vmul.f32 %v3123, %v3147
  %v3149 = vmin.f32 %v3148, 1.0
  %v3150 = vmax.f32 %v3149, -1.0
  %v3151 = vmul.f32 %v1059, %v1059
  %v3152 = vmin.f32 16.0, %v3151
  %v3153 = vmul.f32 %v3152, 2.1237322e-06
  %v3154 = vadd.f32 %v3153, 0.00028619796
  %v3155 = vmul.f32 %v3152, %v3154
  %v3156 = vadd.f32 %v3155, 0.0036580483
  %v3157 = vmul.f32 %v3152, %v3156
  %v3158 = vadd.f32 %v3157, 0.05243302
  %v3159 = vmul.f32 %v3152, %v3158
  %v3160 = vadd.f32 %v3159, 0.18741608
  %v3161 = vmul.f32 %v3152, %v3160
  %v3162 = vadd.f32 %v3161, 1.1283791
  %v3163 = vmul.f32 %v1059, %v3162
  %v3164 = vmul.f32 %v3152, 3.8918573e-05
  %v3165 = vadd.f32 %v3164, 0.001143296
  %v3166 = vmul.f32 %v3152, %v3165
  %v3167 = vadd.f32 %v3166, 0.014752088
  %v3168 = vmul.f32 %v3152, %v3167
  %v3169 = vadd.f32 %v3168, 0.112945676
  %v3170 = vmul.f32 %v3152, %v3169
  %v3171 = vadd.f32 %v3170, 0.4994258
  %v3172 = vmul.f32 %v3152, %v3171
  %v3173 = vadd.f32 %v3172, 1.0
  %v3174 = vrcp.pop %v3173
  %v3175 = vmul.f32 %v3173, %v3174
  %v3176 = vsub.f32 1.0, %v3175
  %v3177 = vmul.f32 %v3174, %v3176
  %v3178 = vadd.f32 %v3174, %v3177
  %vm3179 = vweird.f32 %v3173
  %vm3180 = vweird.f32 %v3174
  %vm3181 = vmor %vm3179, %vm3180
  %v3182 = vsel %vm3181, %v3174, %v3178
  %v3183 = vand.u32 2147483647, %v3173
  %vm3184 = vcmp.eq.f32.partialorder %v3183, 8.507059e+37
  %v3185 = vand.u32 %v3173, 2147483648
  %v3186 = vor.u32 1.1754944e-38, %v3185
  %v3187 = vsel %vm3184, %v3186, %v3182
  %v3188 = vmul.f32 %v3163, %v3187
  %v3189 = vmin.f32 %v3188, 1.0
  %v3190 = vmax.f32 %v3189, -1.0
  %v3191 = vmul.f32 %v1060, %v1060
  %v3192 = vmin.f32 16.0, %v3191
  %v3193 = vmul.f32 %v3192, 2.1237322e-06
  %v3194 = vadd.f32 %v3193, 0.00028619796
  %v3195 = vmul.f32 %v3192, %v3194
  %v3196 = vadd.f32 %v3195, 0.0036580483
  %v3197 = vmul.f32 %v3192, %v3196
  %v3198 = vadd.f32 %v3197, 0.05243302
  %v3199 = vmul.f32 %v3192, %v3198
  %v3200 = vadd.f32 %v3199, 0.18741608
  %v3201 = vmul.f32 %v3192, %v3200
  %v3202 = vadd.f32 %v3201, 1.1283791
  %v3203 = vmul.f32 %v1060, %v3202
  %v3204 = vmul.f32 %v3192, 3.8918573e-05
  %v3205 = vadd.f32 %v3204, 0.001143296
  %v3206 = vmul.f32 %v3192, %v3205
  %v3207 = vadd.f32 %v3206, 0.014752088
  %v3208 = vmul.f32 %v3192, %v3207
  %v3209 = vadd.f32 %v3208, 0.112945676
  %v3210 = vmul.f32 %v3192, %v3209
  %v3211 = vadd.f32 %v3210, 0.4994258
  %v3212 = vmul.f32 %v3192, %v3211
  %v3213 = vadd.f32 %v3212, 1.0
  %v3214 = vrcp.pop %v3213
  %v3215 = vmul.f32 %v3213, %v3214
  %v3216 = vsub.f32 1.0, %v3215
  %v3217 = vmul.f32 %v3214, %v3216
  %v3218 = vadd.f32 %v3214, %v3217
  %vm3219 = vweird.f32 %v3213
  %vm3220 = vweird.f32 %v3214
  %vm3221 = vmor %vm3219, %vm3220
  %v3222 = vsel %vm3221, %v3214, %v3218
  %v3223 = vand.u32 2147483647, %v3213
  %vm3224 = vcmp.eq.f32.partialorder %v3223, 8.507059e+37
  %v3225 = vand.u32 %v3213, 2147483648
  %v3226 = vor.u32 1.1754944e-38, %v3225
  %v3227 = vsel %vm3224, %v3226, %v3222
  %v3228 = vmul.f32 %v3203, %v3227
  %v3229 = vmin.f32 %v3228, 1.0
  %v3230 = vmax.f32 %v3229, -1.0
  %v3231 = vmul.f32 %v1061, %v1061
  %v3232 = vmin.f32 16.0, %v3231
  %v3233 = vmul.f32 %v3232, 2.1237322e-06
  %v3234 = vadd.f32 %v3233, 0.00028619796
  %v3235 = vmul.f32 %v3232, %v3234
  %v3236 = vadd.f32 %v3235, 0.0036580483
  %v3237 = vmul.f32 %v3232, %v3236
  %v3238 = vadd.f32 %v3237, 0.05243302
  %v3239 = vmul.f32 %v3232, %v3238
  %v3240 = vadd.f32 %v3239, 0.18741608
  %v3241 = vmul.f32 %v3232, %v3240
  %v3242 = vadd.f32 %v3241, 1.1283791
  %v3243 = vmul.f32 %v1061, %v3242
  %v3244 = vmul.f32 %v3232, 3.8918573e-05
  %v3245 = vadd.f32 %v3244, 0.001143296
  %v3246 = vmul.f32 %v3232, %v3245
  %v3247 = vadd.f32 %v3246, 0.014752088
  %v3248 = vmul.f32 %v3232, %v3247
  %v3249 = vadd.f32 %v3248, 0.112945676
  %v3250 = vmul.f32 %v3232, %v3249
  %v3251 = vadd.f32 %v3250, 0.4994258
  %v3252 = vmul.f32 %v3232, %v3251
  %v3253 = vadd.f32 %v3252, 1.0
  %v3254 = vrcp.pop %v3253
  %v3255 = vmul.f32 %v3253, %v3254
  %v3256 = vsub.f32 1.0, %v3255
  %v3257 = vmul.f32 %v3254, %v3256
  %v3258 = vadd.f32 %v3254, %v3257
  %vm3259 = vweird.f32 %v3253
  %vm3260 = vweird.f32 %v3254
  %vm3261 = vmor %vm3259, %vm3260
  %v3262 = vsel %vm3261, %v3254, %v3258
  %v3263 = vand.u32 2147483647, %v3253
  %vm3264 = vcmp.eq.f32.partialorder %v3263, 8.507059e+37
  %v3265 = vand.u32 %v3253, 2147483648
  %v3266 = vor.u32 1.1754944e-38, %v3265
  %v3267 = vsel %vm3264, %v3266, %v3262
  %v3268 = vmul.f32 %v3243, %v3267
  %v3269 = vmin.f32 %v3268, 1.0
  %v3270 = vmax.f32 %v3269, -1.0
  %v3271 = vmul.f32 %v1062, %v1062
  %v3272 = vmin.f32 16.0, %v3271
  %v3273 = vmul.f32 %v3272, 2.1237322e-06
  %v3274 = vadd.f32 %v3273, 0.00028619796
  %v3275 = vmul.f32 %v3272, %v3274
  %v3276 = vadd.f32 %v3275, 0.0036580483
  %v3277 = vmul.f32 %v3272, %v3276
  %v3278 = vadd.f32 %v3277, 0.05243302
  %v3279 = vmul.f32 %v3272, %v3278
  %v3280 = vadd.f32 %v3279, 0.18741608
  %v3281 = vmul.f32 %v3272, %v3280
  %v3282 = vadd.f32 %v3281, 1.1283791
  %v3283 = vmul.f32 %v1062, %v3282
  %v3284 = vmul.f32 %v3272, 3.8918573e-05
  %v3285 = vadd.f32 %v3284, 0.001143296
  %v3286 = vmul.f32 %v3272, %v3285
  %v3287 = vadd.f32 %v3286, 0.014752088
  %v3288 = vmul.f32 %v3272, %v3287
  %v3289 = vadd.f32 %v3288, 0.112945676
  %v3290 = vmul.f32 %v3272, %v3289
  %v3291 = vadd.f32 %v3290, 0.4994258
  %v3292 = vmul.f32 %v3272, %v3291
  %v3293 = vadd.f32 %v3292, 1.0
  %v3294 = vrcp.pop %v3293
  %v3295 = vmul.f32 %v3293, %v3294
  %v3296 = vsub.f32 1.0, %v3295
  %v3297 = vmul.f32 %v3294, %v3296
  %v3298 = vadd.f32 %v3294, %v3297
  %vm3299 = vweird.f32 %v3293
  %vm3300 = vweird.f32 %v3294
  %vm3301 = vmor %vm3299, %vm3300
  %v3302 = vsel %vm3301, %v3294, %v3298
  %v3303 = vand.u32 2147483647, %v3293
  %vm3304 = vcmp.eq.f32.partialorder %v3303, 8.507059e+37
  %v3305 = vand.u32 %v3293, 2147483648
  %v3306 = vor.u32 1.1754944e-38, %v3305
  %v3307 = vsel %vm3304, %v3306, %v3302
  %v3308 = vmul.f32 %v3283, %v3307
  %v3309 = vmin.f32 %v3308, 1.0
  %v3310 = vmax.f32 %v3309, -1.0
  %v3311 = vmul.f32 %v1063, %v1063
  %v3312 = vmin.f32 16.0, %v3311
  %v3313 = vmul.f32 %v3312, 2.1237322e-06
  %v3314 = vadd.f32 %v3313, 0.00028619796
  %v3315 = vmul.f32 %v3312, %v3314
  %v3316 = vadd.f32 %v3315, 0.0036580483
  %v3317 = vmul.f32 %v3312, %v3316
  %v3318 = vadd.f32 %v3317, 0.05243302
  %v3319 = vmul.f32 %v3312, %v3318
  %v3320 = vadd.f32 %v3319, 0.18741608
  %v3321 = vmul.f32 %v3312, %v3320
  %v3322 = vadd.f32 %v3321, 1.1283791
  %v3323 = vmul.f32 %v1063, %v3322
  %v3324 = vmul.f32 %v3312, 3.8918573e-05
  %v3325 = vadd.f32 %v3324, 0.001143296
  %v3326 = vmul.f32 %v3312, %v3325
  %v3327 = vadd.f32 %v3326, 0.014752088
  %v3328 = vmul.f32 %v3312, %v3327
  %v3329 = vadd.f32 %v3328, 0.112945676
  %v3330 = vmul.f32 %v3312, %v3329
  %v3331 = vadd.f32 %v3330, 0.4994258
  %v3332 = vmul.f32 %v3312, %v3331
  %v3333 = vadd.f32 %v3332, 1.0
  %v3334 = vrcp.pop %v3333
  %v3335 = vmul.f32 %v3333, %v3334
  %v3336 = vsub.f32 1.0, %v3335
  %v3337 = vmul.f32 %v3334, %v3336
  %v3338 = vadd.f32 %v3334, %v3337
  %vm3339 = vweird.f32 %v3333
  %vm3340 = vweird.f32 %v3334
  %vm3341 = vmor %vm3339, %vm3340
  %v3342 = vsel %vm3341, %v3334, %v3338
  %v3343 = vand.u32 2147483647, %v3333
  %vm3344 = vcmp.eq.f32.partialorder %v3343, 8.507059e+37
  %v3345 = vand.u32 %v3333, 2147483648
  %v3346 = vor.u32 1.1754944e-38, %v3345
  %v3347 = vsel %vm3344, %v3346, %v3342
  %v3348 = vmul.f32 %v3323, %v3347
  %v3349 = vmin.f32 %v3348, 1.0
  %v3350 = vmax.f32 %v3349, -1.0
  %v3351 = vmul.f32 %v1064, %v1064
  %v3352 = vmin.f32 16.0, %v3351
  %v3353 = vmul.f32 %v3352, 2.1237322e-06
  %v3354 = vadd.f32 %v3353, 0.00028619796
  %v3355 = vmul.f32 %v3352, %v3354
  %v3356 = vadd.f32 %v3355, 0.0036580483
  %v3357 = vmul.f32 %v3352, %v3356
  %v3358 = vadd.f32 %v3357, 0.05243302
  %v3359 = vmul.f32 %v3352, %v3358
  %v3360 = vadd.f32 %v3359, 0.18741608
  %v3361 = vmul.f32 %v3352, %v3360
  %v3362 = vadd.f32 %v3361, 1.1283791
  %v3363 = vmul.f32 %v1064, %v3362
  %v3364 = vmul.f32 %v3352, 3.8918573e-05
  %v3365 = vadd.f32 %v3364, 0.001143296
  %v3366 = vmul.f32 %v3352, %v3365
  %v3367 = vadd.f32 %v3366, 0.014752088
  %v3368 = vmul.f32 %v3352, %v3367
  %v3369 = vadd.f32 %v3368, 0.112945676
  %v3370 = vmul.f32 %v3352, %v3369
  %v3371 = vadd.f32 %v3370, 0.4994258
  %v3372 = vmul.f32 %v3352, %v3371
  %v3373 = vadd.f32 %v3372, 1.0
  %v3374 = vrcp.pop %v3373
  %v3375 = vmul.f32 %v3373, %v3374
  %v3376 = vsub.f32 1.0, %v3375
  %v3377 = vmul.f32 %v3374, %v3376
  %v3378 = vadd.f32 %v3374, %v3377
  %vm3379 = vweird.f32 %v3373
  %vm3380 = vweird.f32 %v3374
  %vm3381 = vmor %vm3379, %vm3380
  %v3382 = vsel %vm3381, %v3374, %v3378
  %v3383 = vand.u32 2147483647, %v3373
  %vm3384 = vcmp.eq.f32.partialorder %v3383, 8.507059e+37
  %v3385 = vand.u32 %v3373, 2147483648
  %v3386 = vor.u32 1.1754944e-38, %v3385
  %v3387 = vsel %vm3384, %v3386, %v3382
  %v3388 = vmul.f32 %v3363, %v3387
  %v3389 = vmin.f32 %v3388, 1.0
  %v3390 = vmax.f32 %v3389, -1.0
  %v3391 = vmul.f32 %v1065, %v1065
  %v3392 = vmin.f32 16.0, %v3391
  %v3393 = vmul.f32 %v3392, 2.1237322e-06
  %v3394 = vadd.f32 %v3393, 0.00028619796
  %v3395 = vmul.f32 %v3392, %v3394
  %v3396 = vadd.f32 %v3395, 0.0036580483
  %v3397 = vmul.f32 %v3392, %v3396
  %v3398 = vadd.f32 %v3397, 0.05243302
  %v3399 = vmul.f32 %v3392, %v3398
  %v3400 = vadd.f32 %v3399, 0.18741608
  %v3401 = vmul.f32 %v3392, %v3400
  %v3402 = vadd.f32 %v3401, 1.1283791
  %v3403 = vmul.f32 %v1065, %v3402
  %v3404 = vmul.f32 %v3392, 3.8918573e-05
  %v3405 = vadd.f32 %v3404, 0.001143296
  %v3406 = vmul.f32 %v3392, %v3405
  %v3407 = vadd.f32 %v3406, 0.014752088
  %v3408 = vmul.f32 %v3392, %v3407
  %v3409 = vadd.f32 %v3408, 0.112945676
  %v3410 = vmul.f32 %v3392, %v3409
  %v3411 = vadd.f32 %v3410, 0.4994258
  %v3412 = vmul.f32 %v3392, %v3411
  %v3413 = vadd.f32 %v3412, 1.0
  %v3414 = vrcp.pop %v3413
  %v3415 = vmul.f32 %v3413, %v3414
  %v3416 = vsub.f32 1.0, %v3415
  %v3417 = vmul.f32 %v3414, %v3416
  %v3418 = vadd.f32 %v3414, %v3417
  %vm3419 = vweird.f32 %v3413
  %vm3420 = vweird.f32 %v3414
  %vm3421 = vmor %vm3419, %vm3420
  %v3422 = vsel %vm3421, %v3414, %v3418
  %v3423 = vand.u32 2147483647, %v3413
  %vm3424 = vcmp.eq.f32.partialorder %v3423, 8.507059e+37
  %v3425 = vand.u32 %v3413, 2147483648
  %v3426 = vor.u32 1.1754944e-38, %v3425
  %v3427 = vsel %vm3424, %v3426, %v3422
  %v3428 = vmul.f32 %v3403, %v3427
  %v3429 = vmin.f32 %v3428, 1.0
  %v3430 = vmax.f32 %v3429, -1.0
  %v3431 = vmul.f32 %v1066, %v1066
  %v3432 = vmin.f32 16.0, %v3431
  %v3433 = vmul.f32 %v3432, 2.1237322e-06
  %v3434 = vadd.f32 %v3433, 0.00028619796
  %v3435 = vmul.f32 %v3432, %v3434
  %v3436 = vadd.f32 %v3435, 0.0036580483
  %v3437 = vmul.f32 %v3432, %v3436
  %v3438 = vadd.f32 %v3437, 0.05243302
  %v3439 = vmul.f32 %v3432, %v3438
  %v3440 = vadd.f32 %v3439, 0.18741608
  %v3441 = vmul.f32 %v3432, %v3440
  %v3442 = vadd.f32 %v3441, 1.1283791
  %v3443 = vmul.f32 %v1066, %v3442
  %v3444 = vmul.f32 %v3432, 3.8918573e-05
  %v3445 = vadd.f32 %v3444, 0.001143296
  %v3446 = vmul.f32 %v3432, %v3445
  %v3447 = vadd.f32 %v3446, 0.014752088
  %v3448 = vmul.f32 %v3432, %v3447
  %v3449 = vadd.f32 %v3448, 0.112945676
  %v3450 = vmul.f32 %v3432, %v3449
  %v3451 = vadd.f32 %v3450, 0.4994258
  %v3452 = vmul.f32 %v3432, %v3451
  %v3453 = vadd.f32 %v3452, 1.0
  %v3454 = vrcp.pop %v3453
  %v3455 = vmul.f32 %v3453, %v3454
  %v3456 = vsub.f32 1.0, %v3455
  %v3457 = vmul.f32 %v3454, %v3456
  %v3458 = vadd.f32 %v3454, %v3457
  %vm3459 = vweird.f32 %v3453
  %vm3460 = vweird.f32 %v3454
  %vm3461 = vmor %vm3459, %vm3460
  %v3462 = vsel %vm3461, %v3454, %v3458
  %v3463 = vand.u32 2147483647, %v3453
  %vm3464 = vcmp.eq.f32.partialorder %v3463, 8.507059e+37
  %v3465 = vand.u32 %v3453, 2147483648
  %v3466 = vor.u32 1.1754944e-38, %v3465
  %v3467 = vsel %vm3464, %v3466, %v3462
  %v3468 = vmul.f32 %v3443, %v3467
  %v3469 = vmin.f32 %v3468, 1.0
  %v3470 = vmax.f32 %v3469, -1.0
  %v3471 = vmul.f32 %v1067, %v1067
  %v3472 = vmin.f32 16.0, %v3471
  %v3473 = vmul.f32 %v3472, 2.1237322e-06
  %v3474 = vadd.f32 %v3473, 0.00028619796
  %v3475 = vmul.f32 %v3472, %v3474
  %v3476 = vadd.f32 %v3475, 0.0036580483
  %v3477 = vmul.f32 %v3472, %v3476
  %v3478 = vadd.f32 %v3477, 0.05243302
  %v3479 = vmul.f32 %v3472, %v3478
  %v3480 = vadd.f32 %v3479, 0.18741608
  %v3481 = vmul.f32 %v3472, %v3480
  %v3482 = vadd.f32 %v3481, 1.1283791
  %v3483 = vmul.f32 %v1067, %v3482
  %v3484 = vmul.f32 %v3472, 3.8918573e-05
  %v3485 = vadd.f32 %v3484, 0.001143296
  %v3486 = vmul.f32 %v3472, %v3485
  %v3487 = vadd.f32 %v3486, 0.014752088
  %v3488 = vmul.f32 %v3472, %v3487
  %v3489 = vadd.f32 %v3488, 0.112945676
  %v3490 = vmul.f32 %v3472, %v3489
  %v3491 = vadd.f32 %v3490, 0.4994258
  %v3492 = vmul.f32 %v3472, %v3491
  %v3493 = vadd.f32 %v3492, 1.0
  %v3494 = vrcp.pop %v3493
  %v3495 = vmul.f32 %v3493, %v3494
  %v3496 = vsub.f32 1.0, %v3495
  %v3497 = vmul.f32 %v3494, %v3496
  %v3498 = vadd.f32 %v3494, %v3497
  %vm3499 = vweird.f32 %v3493
  %vm3500 = vweird.f32 %v3494
  %vm3501 = vmor %vm3499, %vm3500
  %v3502 = vsel %vm3501, %v3494, %v3498
  %v3503 = vand.u32 2147483647, %v3493
  %vm3504 = vcmp.eq.f32.partialorder %v3503, 8.507059e+37
  %v3505 = vand.u32 %v3493, 2147483648
  %v3506 = vor.u32 1.1754944e-38, %v3505
  %v3507 = vsel %vm3504, %v3506, %v3502
  %v3508 = vmul.f32 %v3483, %v3507
  %v3509 = vmin.f32 %v3508, 1.0
  %v3510 = vmax.f32 %v3509, -1.0
  %v3511 = vmul.f32 %v1068, %v1068
  %v3512 = vmin.f32 16.0, %v3511
  %v3513 = vmul.f32 %v3512, 2.1237322e-06
  %v3514 = vadd.f32 %v3513, 0.00028619796
  %v3515 = vmul.f32 %v3512, %v3514
  %v3516 = vadd.f32 %v3515, 0.0036580483
  %v3517 = vmul.f32 %v3512, %v3516
  %v3518 = vadd.f32 %v3517, 0.05243302
  %v3519 = vmul.f32 %v3512, %v3518
  %v3520 = vadd.f32 %v3519, 0.18741608
  %v3521 = vmul.f32 %v3512, %v3520
  %v3522 = vadd.f32 %v3521, 1.1283791
  %v3523 = vmul.f32 %v1068, %v3522
  %v3524 = vmul.f32 %v3512, 3.8918573e-05
  %v3525 = vadd.f32 %v3524, 0.001143296
  %v3526 = vmul.f32 %v3512, %v3525
  %v3527 = vadd.f32 %v3526, 0.014752088
  %v3528 = vmul.f32 %v3512, %v3527
  %v3529 = vadd.f32 %v3528, 0.112945676
  %v3530 = vmul.f32 %v3512, %v3529
  %v3531 = vadd.f32 %v3530, 0.4994258
  %v3532 = vmul.f32 %v3512, %v3531
  %v3533 = vadd.f32 %v3532, 1.0
  %v3534 = vrcp.pop %v3533
  %v3535 = vmul.f32 %v3533, %v3534
  %v3536 = vsub.f32 1.0, %v3535
  %v3537 = vmul.f32 %v3534, %v3536
  %v3538 = vadd.f32 %v3534, %v3537
  %vm3539 = vweird.f32 %v3533
  %vm3540 = vweird.f32 %v3534
  %vm3541 = vmor %vm3539, %vm3540
  %v3542 = vsel %vm3541, %v3534, %v3538
  %v3543 = vand.u32 2147483647, %v3533
  %vm3544 = vcmp.eq.f32.partialorder %v3543, 8.507059e+37
  %v3545 = vand.u32 %v3533, 2147483648
  %v3546 = vor.u32 1.1754944e-38, %v3545
  %v3547 = vsel %vm3544, %v3546, %v3542
  %v3548 = vmul.f32 %v3523, %v3547
  %v3549 = vmin.f32 %v3548, 1.0
  %v3550 = vmax.f32 %v3549, -1.0
  %v3551 = vmul.f32 %v1069, %v1069
  %v3552 = vmin.f32 16.0, %v3551
  %v3553 = vmul.f32 %v3552, 2.1237322e-06
  %v3554 = vadd.f32 %v3553, 0.00028619796
  %v3555 = vmul.f32 %v3552, %v3554
  %v3556 = vadd.f32 %v3555, 0.0036580483
  %v3557 = vmul.f32 %v3552, %v3556
  %v3558 = vadd.f32 %v3557, 0.05243302
  %v3559 = vmul.f32 %v3552, %v3558
  %v3560 = vadd.f32 %v3559, 0.18741608
  %v3561 = vmul.f32 %v3552, %v3560
  %v3562 = vadd.f32 %v3561, 1.1283791
  %v3563 = vmul.f32 %v1069, %v3562
  %v3564 = vmul.f32 %v3552, 3.8918573e-05
  %v3565 = vadd.f32 %v3564, 0.001143296
  %v3566 = vmul.f32 %v3552, %v3565
  %v3567 = vadd.f32 %v3566, 0.014752088
  %v3568 = vmul.f32 %v3552, %v3567
  %v3569 = vadd.f32 %v3568, 0.112945676
  %v3570 = vmul.f32 %v3552, %v3569
  %v3571 = vadd.f32 %v3570, 0.4994258
  %v3572 = vmul.f32 %v3552, %v3571
  %v3573 = vadd.f32 %v3572, 1.0
  %v3574 = vrcp.pop %v3573
  %v3575 = vmul.f32 %v3573, %v3574
  %v3576 = vsub.f32 1.0, %v3575
  %v3577 = vmul.f32 %v3574, %v3576
  %v3578 = vadd.f32 %v3574, %v3577
  %vm3579 = vweird.f32 %v3573
  %vm3580 = vweird.f32 %v3574
  %vm3581 = vmor %vm3579, %vm3580
  %v3582 = vsel %vm3581, %v3574, %v3578
  %v3583 = vand.u32 2147483647, %v3573
  %vm3584 = vcmp.eq.f32.partialorder %v3583, 8.507059e+37
  %v3585 = vand.u32 %v3573, 2147483648
  %v3586 = vor.u32 1.1754944e-38, %v3585
  %v3587 = vsel %vm3584, %v3586, %v3582
  %v3588 = vmul.f32 %v3563, %v3587
  %v3589 = vmin.f32 %v3588, 1.0
  %v3590 = vmax.f32 %v3589, -1.0
  %v3591 = vmul.f32 %v1070, %v1070
  %v3592 = vmin.f32 16.0, %v3591
  %v3593 = vmul.f32 %v3592, 2.1237322e-06
  %v3594 = vadd.f32 %v3593, 0.00028619796
  %v3595 = vmul.f32 %v3592, %v3594
  %v3596 = vadd.f32 %v3595, 0.0036580483
  %v3597 = vmul.f32 %v3592, %v3596
  %v3598 = vadd.f32 %v3597, 0.05243302
  %v3599 = vmul.f32 %v3592, %v3598
  %v3600 = vadd.f32 %v3599, 0.18741608
  %v3601 = vmul.f32 %v3592, %v3600
  %v3602 = vadd.f32 %v3601, 1.1283791
  %v3603 = vmul.f32 %v1070, %v3602
  %v3604 = vmul.f32 %v3592, 3.8918573e-05
  %v3605 = vadd.f32 %v3604, 0.001143296
  %v3606 = vmul.f32 %v3592, %v3605
  %v3607 = vadd.f32 %v3606, 0.014752088
  %v3608 = vmul.f32 %v3592, %v3607
  %v3609 = vadd.f32 %v3608, 0.112945676
  %v3610 = vmul.f32 %v3592, %v3609
  %v3611 = vadd.f32 %v3610, 0.4994258
  %v3612 = vmul.f32 %v3592, %v3611
  %v3613 = vadd.f32 %v3612, 1.0
  %v3614 = vrcp.pop %v3613
  %v3615 = vmul.f32 %v3613, %v3614
  %v3616 = vsub.f32 1.0, %v3615
  %v3617 = vmul.f32 %v3614, %v3616
  %v3618 = vadd.f32 %v3614, %v3617
  %vm3619 = vweird.f32 %v3613
  %vm3620 = vweird.f32 %v3614
  %vm3621 = vmor %vm3619, %vm3620
  %v3622 = vsel %vm3621, %v3614, %v3618
  %v3623 = vand.u32 2147483647, %v3613
  %vm3624 = vcmp.eq.f32.partialorder %v3623, 8.507059e+37
  %v3625 = vand.u32 %v3613, 2147483648
  %v3626 = vor.u32 1.1754944e-38, %v3625
  %v3627 = vsel %vm3624, %v3626, %v3622
  %v3628 = vmul.f32 %v3603, %v3627
  %v3629 = vmin.f32 %v3628, 1.0
  %v3630 = vmax.f32 %v3629, -1.0
  %v3631 = vadd.f32 %v1110, 1.0
  %v3632 = vadd.f32 %v1150, 1.0
  %v3633 = vadd.f32 %v1190, 1.0
  %v3634 = vadd.f32 %v1230, 1.0
  %v3635 = vadd.f32 %v1270, 1.0
  %v3636 = vadd.f32 %v1310, 1.0
  %v3637 = vadd.f32 %v1350, 1.0
  %v3638 = vadd.f32 %v1390, 1.0
  %v3639 = vadd.f32 %v1430, 1.0
  %v3640 = vadd.f32 %v1470, 1.0
  %v3641 = vadd.f32 %v1510, 1.0
  %v3642 = vadd.f32 %v1550, 1.0
  %v3643 = vadd.f32 %v1590, 1.0
  %v3644 = vadd.f32 %v1630, 1.0
  %v3645 = vadd.f32 %v1670, 1.0
  %v3646 = vadd.f32 %v1710, 1.0
  %v3647 = vadd.f32 %v1750, 1.0
  %v3648 = vadd.f32 %v1790, 1.0
  %v3649 = vadd.f32 %v1830, 1.0
  %v3650 = vadd.f32 %v1870, 1.0
  %v3651 = vadd.f32 %v1910, 1.0
  %v3652 = vadd.f32 %v1950, 1.0
  %v3653 = vadd.f32 %v1990, 1.0
  %v3654 = vadd.f32 %v2030, 1.0
  %v3655 = vadd.f32 %v2070, 1.0
  %v3656 = vadd.f32 %v2110, 1.0
  %v3657 = vadd.f32 %v2150, 1.0
  %v3658 = vadd.f32 %v2190, 1.0
  %v3659 = vadd.f32 %v2230, 1.0
  %v3660 = vadd.f32 %v2270, 1.0
  %v3661 = vadd.f32 %v2310, 1.0
  %v3662 = vadd.f32 %v2350, 1.0
  %v3663 = vadd.f32 %v2390, 1.0
  %v3664 = vadd.f32 %v2430, 1.0
  %v3665 = vadd.f32 %v2470, 1.0
  %v3666 = vadd.f32 %v2510, 1.0
  %v3667 = vadd.f32 %v2550, 1.0
  %v3668 = vadd.f32 %v2590, 1.0
  %v3669 = vadd.f32 %v2630, 1.0
  %v3670 = vadd.f32 %v2670, 1.0
  %v3671 = vadd.f32 %v2710, 1.0
  %v3672 = vadd.f32 %v2750, 1.0
  %v3673 = vadd.f32 %v2790, 1.0
  %v3674 = vadd.f32 %v2830, 1.0
  %v3675 = vadd.f32 %v2870, 1.0
  %v3676 = vadd.f32 %v2910, 1.0
  %v3677 = vadd.f32 %v2950, 1.0
  %v3678 = vadd.f32 %v2990, 1.0
  %v3679 = vadd.f32 %v3030, 1.0
  %v3680 = vadd.f32 %v3070, 1.0
  %v3681 = vadd.f32 %v3110, 1.0
  %v3682 = vadd.f32 %v3150, 1.0
  %v3683 = vadd.f32 %v3190, 1.0
  %v3684 = vadd.f32 %v3230, 1.0
  %v3685 = vadd.f32 %v3270, 1.0
  %v3686 = vadd.f32 %v3310, 1.0
  %v3687 = vadd.f32 %v3350, 1.0
  %v3688 = vadd.f32 %v3390, 1.0
  %v3689 = vadd.f32 %v3430, 1.0
  %v3690 = vadd.f32 %v3470, 1.0
  %v3691 = vadd.f32 %v3510, 1.0
  %v3692 = vadd.f32 %v3550, 1.0
  %v3693 = vadd.f32 %v3590, 1.0
  %v3694 = vadd.f32 %v3630, 1.0
  %v3695 = vmul.f32 %v943, %v3631
  %v3696 = vmul.f32 %v944, %v3632
  %v3697 = vmul.f32 %v945, %v3633
  %v3698 = vmul.f32 %v946, %v3634
  %v3699 = vmul.f32 %v947, %v3635
  %v3700 = vmul.f32 %v948, %v3636
  %v3701 = vmul.f32 %v949, %v3637
  %v3702 = vmul.f32 %v950, %v3638
  %v3703 = vmul.f32 %v951, %v3639
  %v3704 = vmul.f32 %v952, %v3640
  %v3705 = vmul.f32 %v953, %v3641
  %v3706 = vmul.f32 %v954, %v3642
  %v3707 = vmul.f32 %v955, %v3643
  %v3708 = vmul.f32 %v956, %v3644
  %v3709 = vmul.f32 %v957, %v3645
  %v3710 = vmul.f32 %v958, %v3646
  %v3711 = vmul.f32 %v959, %v3647
  %v3712 = vmul.f32 %v960, %v3648
  %v3713 = vmul.f32 %v961, %v3649
  %v3714 = vmul.f32 %v962, %v3650
  %v3715 = vmul.f32 %v963, %v3651
  %v3716 = vmul.f32 %v964, %v3652
  %v3717 = vmul.f32 %v965, %v3653
  %v3718 = vmul.f32 %v966, %v3654
  %v3719 = vmul.f32 %v967, %v3655
  %v3720 = vmul.f32 %v968, %v3656
  %v3721 = vmul.f32 %v969, %v3657
  %v3722 = vmul.f32 %v970, %v3658
  %v3723 = vmul.f32 %v971, %v3659
  %v3724 = vmul.f32 %v972, %v3660
  %v3725 = vmul.f32 %v973, %v3661
  %v3726 = vmul.f32 %v974, %v3662
  %v3727 = vmul.f32 %v975, %v3663
  %v3728 = vmul.f32 %v976, %v3664
  %v3729 = vmul.f32 %v977, %v3665
  %v3730 = vmul.f32 %v978, %v3666
  %v3731 = vmul.f32 %v979, %v3667
  %v3732 = vmul.f32 %v980, %v3668
  %v3733 = vmul.f32 %v981, %v3669
  %v3734 = vmul.f32 %v982, %v3670
  %v3735 = vmul.f32 %v983, %v3671
  %v3736 = vmul.f32 %v984, %v3672
  %v3737 = vmul.f32 %v985, %v3673
  %v3738 = vmul.f32 %v986, %v3674
  %v3739 = vmul.f32 %v987, %v3675
  %v3740 = vmul.f32 %v988, %v3676
  %v3741 = vmul.f32 %v989, %v3677
  %v3742 = vmul.f32 %v990, %v3678
  %v3743 = vmul.f32 %v991, %v3679
  %v3744 = vmul.f32 %v992, %v3680
  %v3745 = vmul.f32 %v993, %v3681
  %v3746 = vmul.f32 %v994, %v3682
  %v3747 = vmul.f32 %v995, %v3683
  %v3748 = vmul.f32 %v996, %v3684
  %v3749 = vmul.f32 %v997, %v3685
  %v3750 = vmul.f32 %v998, %v3686
  %v3751 = vmul.f32 %v999, %v3687
  %v3752 = vmul.f32 %v1000, %v3688
  %v3753 = vmul.f32 %v1001, %v3689
  %v3754 = vmul.f32 %v1002, %v3690
  %v3755 = vmul.f32 %v1003, %v3691
  %v3756 = vmul.f32 %v1004, %v3692
  %v3757 = vmul.f32 %v1005, %v3693
  %v3758 = vmul.f32 %v1006, %v3694
  %v3759 = vld [vmem:[#allocation3] sm:$0xff]
  %v3760 = vld [vmem:[#allocation3 + $0x8] sm:$0xff]
  %v3761 = vld [vmem:[#allocation3 + $0x10] sm:$0xff]
  %v3762 = vld [vmem:[#allocation3 + $0x18] sm:$0xff]
  %v3763 = vld [vmem:[#allocation3 + $0x20] sm:$0xff]
  %v3764 = vld [vmem:[#allocation3 + $0x28] sm:$0xff]
  %v3765 = vld [vmem:[#allocation3 + $0x30] sm:$0xff]
  %v3766 = vld [vmem:[#allocation3 + $0x38] sm:$0xff]
  %v3767 = vld [vmem:[#allocation3 + $0x40] sm:$0xff]
  %v3768 = vld [vmem:[#allocation3 + $0x48] sm:$0xff]
  %v3769 = vld [vmem:[#allocation3 + $0x50] sm:$0xff]
  %v3770 = vld [vmem:[#allocation3 + $0x58] sm:$0xff]
  %v3771 = vld [vmem:[#allocation3 + $0x60] sm:$0xff]
  %v3772 = vld [vmem:[#allocation3 + $0x68] sm:$0xff]
  %v3773 = vld [vmem:[#allocation3 + $0x70] sm:$0xff]
  %v3774 = vld [vmem:[#allocation3 + $0x78] sm:$0xff]
  %v3775 = vpack.c.bf16 %v3699, %v3695
  %v3776 = vpack.c.bf16 %v3700, %v3696
  %v3777 = vpack.c.bf16 %v3701, %v3697
  %v3778 = vpack.c.bf16 %v3702, %v3698
  %v3779 = vpack.c.bf16 %v3707, %v3703
  %v3780 = vpack.c.bf16 %v3708, %v3704
  %v3781 = vpack.c.bf16 %v3709, %v3705
  %v3782 = vpack.c.bf16 %v3710, %v3706
  %v3783 = vpack.c.bf16 %v3715, %v3711
  %v3784 = vpack.c.bf16 %v3716, %v3712
  %v3785 = vpack.c.bf16 %v3717, %v3713
  %v3786 = vpack.c.bf16 %v3718, %v3714
  %v3787 = vpack.c.bf16 %v3723, %v3719
  %v3788 = vpack.c.bf16 %v3724, %v3720
  %v3789 = vpack.c.bf16 %v3725, %v3721
  %v3790 = vpack.c.bf16 %v3726, %v3722
  %v3791 = vpack.c.bf16 %v3731, %v3727
  %v3792 = vpack.c.bf16 %v3732, %v3728
  %v3793 = vpack.c.bf16 %v3733, %v3729
  %v3794 = vpack.c.bf16 %v3734, %v3730
  %v3795 = vpack.c.bf16 %v3739, %v3735
  %v3796 = vpack.c.bf16 %v3740, %v3736
  %v3797 = vpack.c.bf16 %v3741, %v3737
  %v3798 = vpack.c.bf16 %v3742, %v3738
  %v3799 = vpack.c.bf16 %v3747, %v3743
  %v3800 = vpack.c.bf16 %v3748, %v3744
  %v3801 = vpack.c.bf16 %v3749, %v3745
  %v3802 = vpack.c.bf16 %v3750, %v3746
  %v3803 = vpack.c.bf16 %v3755, %v3751
  %v3804 = vpack.c.bf16 %v3756, %v3752
  %v3805 = vpack.c.bf16 %v3757, %v3753
  %v3806 = vpack.c.bf16 %v3758, %v3754
  %v3807 = vld [vmem:[%s5] sm:$0xf]
  %v3808 = vld [vmem:[%s5 + $0x4] sm:$0xf]
  %v3809 = vld [vmem:[%s5 + $0x8] sm:$0xf]
  %v3810 = vld [vmem:[%s5 + $0xc] sm:$0xf]
  %v3811 = vld [vmem:[%s5 + $0x10] sm:$0xf]
  %v3812 = vld [vmem:[%s5 + $0x14] sm:$0xf]
  %v3813 = vld [vmem:[%s5 + $0x18] sm:$0xf]
  %v3814 = vld [vmem:[%s5 + $0x1c] sm:$0xf]
  %v3815 = vld [vmem:[%s5 + $0x20] sm:$0xf]
  %v3816 = vld [vmem:[%s5 + $0x24] sm:$0xf]
  %v3817 = vld [vmem:[%s5 + $0x28] sm:$0xf]
  %v3818 = vld [vmem:[%s5 + $0x2c] sm:$0xf]
  %v3819 = vld [vmem:[%s5 + $0x30] sm:$0xf]
  %v3820 = vld [vmem:[%s5 + $0x34] sm:$0xf]
  %v3821 = vld [vmem:[%s5 + $0x38] sm:$0xf]
  %v3822 = vld [vmem:[%s5 + $0x3c] sm:$0xf]
  %v3823 = vld [vmem:[%s5 + $0x40] sm:$0xf]
  %v3824 = vld [vmem:[%s5 + $0x44] sm:$0xf]
  %v3825 = vld [vmem:[%s5 + $0x48] sm:$0xf]
  %v3826 = vld [vmem:[%s5 + $0x4c] sm:$0xf]
  %v3827 = vld [vmem:[%s5 + $0x50] sm:$0xf]
  %v3828 = vld [vmem:[%s5 + $0x54] sm:$0xf]
  %v3829 = vld [vmem:[%s5 + $0x58] sm:$0xf]
  %v3830 = vld [vmem:[%s5 + $0x5c] sm:$0xf]
  %v3831 = vld [vmem:[%s5 + $0x60] sm:$0xf]
  %v3832 = vld [vmem:[%s5 + $0x64] sm:$0xf]
  %v3833 = vld [vmem:[%s5 + $0x68] sm:$0xf]
  %v3834 = vld [vmem:[%s5 + $0x6c] sm:$0xf]
  %v3835 = vld [vmem:[%s5 + $0x70] sm:$0xf]
  %v3836 = vld [vmem:[%s5 + $0x74] sm:$0xf]
  %v3837 = vld [vmem:[%s5 + $0x78] sm:$0xf]
  %v3838 = vld [vmem:[%s5 + $0x7c] sm:$0xf]
  %v3839 = vld [vmem:[%s5 + $0x80] sm:$0xf]
  %v3840 = vld [vmem:[%s5 + $0x84] sm:$0xf]
  %v3841 = vld [vmem:[%s5 + $0x88] sm:$0xf]
  %v3842 = vld [vmem:[%s5 + $0x8c] sm:$0xf]
  %v3843 = vld [vmem:[%s5 + $0x90] sm:$0xf]
  %v3844 = vld [vmem:[%s5 + $0x94] sm:$0xf]
  %v3845 = vld [vmem:[%s5 + $0x98] sm:$0xf]
  %v3846 = vld [vmem:[%s5 + $0x9c] sm:$0xf]
  %v3847 = vld [vmem:[%s5 + $0xa0] sm:$0xf]
  %v3848 = vld [vmem:[%s5 + $0xa4] sm:$0xf]
  %v3849 = vld [vmem:[%s5 + $0xa8] sm:$0xf]
  %v3850 = vld [vmem:[%s5 + $0xac] sm:$0xf]
  %v3851 = vld [vmem:[%s5 + $0xb0] sm:$0xf]
  %v3852 = vld [vmem:[%s5 + $0xb4] sm:$0xf]
  %v3853 = vld [vmem:[%s5 + $0xb8] sm:$0xf]
  %v3854 = vld [vmem:[%s5 + $0xbc] sm:$0xf]
  %v3855 = vld [vmem:[%s5 + $0xc0] sm:$0xf]
  %v3856 = vld [vmem:[%s5 + $0xc4] sm:$0xf]
  %v3857 = vld [vmem:[%s5 + $0xc8] sm:$0xf]
  %v3858 = vld [vmem:[%s5 + $0xcc] sm:$0xf]
  %v3859 = vld [vmem:[%s5 + $0xd0] sm:$0xf]
  %v3860 = vld [vmem:[%s5 + $0xd4] sm:$0xf]
  %v3861 = vld [vmem:[%s5 + $0xd8] sm:$0xf]
  %v3862 = vld [vmem:[%s5 + $0xdc] sm:$0xf]
  %v3863 = vld [vmem:[%s5 + $0xe0] sm:$0xf]
  %v3864 = vld [vmem:[%s5 + $0xe4] sm:$0xf]
  %v3865 = vld [vmem:[%s5 + $0xe8] sm:$0xf]
  %v3866 = vld [vmem:[%s5 + $0xec] sm:$0xf]
  %v3867 = vld [vmem:[%s5 + $0xf0] sm:$0xf]
  %v3868 = vld [vmem:[%s5 + $0xf4] sm:$0xf]
  %v3869 = vld [vmem:[%s5 + $0xf8] sm:$0xf]
  %v3870 = vld [vmem:[%s5 + $0xfc] sm:$0xf]
  %v3935 = vunpack.c.l.b16 %v3807
  %v3936 = vunpack.c.l.b16 %v3808
  %v3937 = vunpack.c.l.b16 %v3809
  %v3938 = vunpack.c.l.b16 %v3810
  %v3939 = vunpack.c.l.b16 %v3811
  %v3940 = vunpack.c.l.b16 %v3812
  %v3941 = vunpack.c.l.b16 %v3813
  %v3942 = vunpack.c.l.b16 %v3814
  %v3943 = vunpack.c.l.b16 %v3815
  %v3944 = vunpack.c.l.b16 %v3816
  %v3945 = vunpack.c.l.b16 %v3817
  %v3946 = vunpack.c.l.b16 %v3818
  %v3947 = vunpack.c.l.b16 %v3819
  %v3948 = vunpack.c.l.b16 %v3820
  %v3949 = vunpack.c.l.b16 %v3821
  %v3950 = vunpack.c.l.b16 %v3822
  %v3951 = vunpack.c.l.b16 %v3823
  %v3952 = vunpack.c.l.b16 %v3824
  %v3953 = vunpack.c.l.b16 %v3825
  %v3954 = vunpack.c.l.b16 %v3826
  %v3955 = vunpack.c.l.b16 %v3827
  %v3956 = vunpack.c.l.b16 %v3828
  %v3957 = vunpack.c.l.b16 %v3829
  %v3958 = vunpack.c.l.b16 %v3830
  %v3959 = vunpack.c.l.b16 %v3831
  %v3960 = vunpack.c.l.b16 %v3832
  %v3961 = vunpack.c.l.b16 %v3833
  %v3962 = vunpack.c.l.b16 %v3834
  %v3963 = vunpack.c.l.b16 %v3835
  %v3964 = vunpack.c.l.b16 %v3836
  %v3965 = vunpack.c.l.b16 %v3837
  %v3966 = vunpack.c.l.b16 %v3838
  %v3967 = vunpack.c.l.b16 %v3839
  %v3968 = vunpack.c.l.b16 %v3840
  %v3969 = vunpack.c.l.b16 %v3841
  %v3970 = vunpack.c.l.b16 %v3842
  %v3971 = vunpack.c.l.b16 %v3843
  %v3972 = vunpack.c.l.b16 %v3844
  %v3973 = vunpack.c.l.b16 %v3845
  %v3974 = vunpack.c.l.b16 %v3846
  %v3975 = vunpack.c.l.b16 %v3847
  %v3976 = vunpack.c.l.b16 %v3848
  %v3977 = vunpack.c.l.b16 %v3849
  %v3978 = vunpack.c.l.b16 %v3850
  %v3979 = vunpack.c.l.b16 %v3851
  %v3980 = vunpack.c.l.b16 %v3852
  %v3981 = vunpack.c.l.b16 %v3853
  %v3982 = vunpack.c.l.b16 %v3854
  %v3983 = vunpack.c.l.b16 %v3855
  %v3984 = vunpack.c.l.b16 %v3856
  %v3985 = vunpack.c.l.b16 %v3857
  %v3986 = vunpack.c.l.b16 %v3858
  %v3987 = vunpack.c.l.b16 %v3859
  %v3988 = vunpack.c.l.b16 %v3860
  %v3989 = vunpack.c.l.b16 %v3861
  %v3990 = vunpack.c.l.b16 %v3862
  %v3991 = vunpack.c.l.b16 %v3863
  %v3992 = vunpack.c.l.b16 %v3864
  %v3993 = vunpack.c.l.b16 %v3865
  %v3994 = vunpack.c.l.b16 %v3866
  %v3995 = vunpack.c.l.b16 %v3867
  %v3996 = vunpack.c.l.b16 %v3868
  %v3997 = vunpack.c.l.b16 %v3869
  %v3998 = vunpack.c.l.b16 %v3870
  %v3999 = vpack.c.b16 %v3936, %v3935
  %v4000 = vpack.c.b16 %v3938, %v3937
  %v4001 = vpack.c.b16 %v3940, %v3939
  %v4002 = vpack.c.b16 %v3942, %v3941
  %v4003 = vpack.c.b16 %v3944, %v3943
  %v4004 = vpack.c.b16 %v3946, %v3945
  %v4005 = vpack.c.b16 %v3948, %v3947
  %v4006 = vpack.c.b16 %v3950, %v3949
  %v4007 = vpack.c.b16 %v3952, %v3951
  %v4008 = vpack.c.b16 %v3954, %v3953
  %v4009 = vpack.c.b16 %v3956, %v3955
  %v4010 = vpack.c.b16 %v3958, %v3957
  %v4011 = vpack.c.b16 %v3960, %v3959
  %v4012 = vpack.c.b16 %v3962, %v3961
  %v4013 = vpack.c.b16 %v3964, %v3963
  %v4014 = vpack.c.b16 %v3966, %v3965
  %v4015 = vpack.c.b16 %v3968, %v3967
  %v4016 = vpack.c.b16 %v3970, %v3969
  %v4017 = vpack.c.b16 %v3972, %v3971
  %v4018 = vpack.c.b16 %v3974, %v3973
  %v4019 = vpack.c.b16 %v3976, %v3975
  %v4020 = vpack.c.b16 %v3978, %v3977
  %v4021 = vpack.c.b16 %v3980, %v3979
  %v4022 = vpack.c.b16 %v3982, %v3981
  %v4023 = vpack.c.b16 %v3984, %v3983
  %v4024 = vpack.c.b16 %v3986, %v3985
  %v4025 = vpack.c.b16 %v3988, %v3987
  %v4026 = vpack.c.b16 %v3990, %v3989
  %v4027 = vpack.c.b16 %v3992, %v3991
  %v4028 = vpack.c.b16 %v3994, %v3993
  %v4029 = vpack.c.b16 %v3996, %v3995
  %v4030 = vpack.c.b16 %v3998, %v3997
  %4063 = vmatpush.bf16.msra.mxu0 %v4006
  %4064 = vmatpush.bf16.msra.mxu0 %v4005
  %4065 = vmatpush.bf16.msra.mxu0 %v4004
  %4066 = vmatpush.bf16.msra.mxu0 %v4003
  %4067 = vmatpush.bf16.msra.mxu0 %v4002
  %4068 = vmatpush.bf16.msra.mxu0 %v4001
  %4069 = vmatpush.bf16.msra.mxu0 %v4000
  %4070 = vmatpush.bf16.msra.mxu0 %v3999
  %4071 = vmatmul.bf16.gmra.mxu0 %v3775
  %v4072 = vpop.f32.mrf.mxu0
  %v4073 = vadd.f32 0.0, %v4072
  %v4074 = vpop.f32.mrf.mxu0
  %v4075 = vadd.f32 0.0, %v4074
  %4076 = vmatmul.bf16.gmra.mxu0 %v3779
  %v4077 = vpop.f32.mrf.mxu0
  %v4078 = vadd.f32 0.0, %v4077
  %v4079 = vpop.f32.mrf.mxu0
  %v4080 = vadd.f32 0.0, %v4079
  %4081 = vmatmul.bf16.gmra.mxu0 %v3783
  %v4082 = vpop.f32.mrf.mxu0
  %v4083 = vadd.f32 0.0, %v4082
  %v4084 = vpop.f32.mrf.mxu0
  %v4085 = vadd.f32 0.0, %v4084
  %4086 = vmatmul.bf16.gmra.mxu0 %v3787
  %v4087 = vpop.f32.mrf.mxu0
  %v4088 = vadd.f32 0.0, %v4087
  %v4089 = vpop.f32.mrf.mxu0
  %v4090 = vadd.f32 0.0, %v4089
  %4091 = vmatmul.bf16.gmra.mxu0 %v3791
  %v4092 = vpop.f32.mrf.mxu0
  %v4093 = vadd.f32 0.0, %v4092
  %v4094 = vpop.f32.mrf.mxu0
  %v4095 = vadd.f32 0.0, %v4094
  %4096 = vmatmul.bf16.gmra.mxu0 %v3795
  %v4097 = vpop.f32.mrf.mxu0
  %v4098 = vadd.f32 0.0, %v4097
  %v4099 = vpop.f32.mrf.mxu0
  %v4100 = vadd.f32 0.0, %v4099
  %4101 = vmatmul.bf16.gmra.mxu0 %v3799
  %v4102 = vpop.f32.mrf.mxu0
  %v4103 = vadd.f32 0.0, %v4102
  %v4104 = vpop.f32.mrf.mxu0
  %v4105 = vadd.f32 0.0, %v4104
  %4106 = vmatmul.bf16.gmra.mxu0 %v3803
  %v4107 = vpop.f32.mrf.mxu0
  %v4108 = vadd.f32 0.0, %v4107
  %v4109 = vpop.f32.mrf.mxu0
  %v4110 = vadd.f32 0.0, %v4109
  %4111 = vdwg.mxu0
  %4112 = vmatpush.bf16.msra.mxu0 %v4014
  %4113 = vmatpush.bf16.msra.mxu0 %v4013
  %4114 = vmatpush.bf16.msra.mxu0 %v4012
  %4115 = vmatpush.bf16.msra.mxu0 %v4011
  %4116 = vmatpush.bf16.msra.mxu0 %v4010
  %4117 = vmatpush.bf16.msra.mxu0 %v4009
  %4118 = vmatpush.bf16.msra.mxu0 %v4008
  %4119 = vmatpush.bf16.msra.mxu0 %v4007
  %4120 = vmatmul.bf16.gmra.mxu0 %v3776
  %v4121 = vpop.f32.mrf.mxu0
  %v4122 = vadd.f32 %v4073, %v4121
  %v4123 = vpop.f32.mrf.mxu0
  %v4124 = vadd.f32 %v4075, %v4123
  %4125 = vmatmul.bf16.gmra.mxu0 %v3780
  %v4126 = vpop.f32.mrf.mxu0
  %v4127 = vadd.f32 %v4078, %v4126
  %v4128 = vpop.f32.mrf.mxu0
  %v4129 = vadd.f32 %v4080, %v4128
  %4130 = vmatmul.bf16.gmra.mxu0 %v3784
  %v4131 = vpop.f32.mrf.mxu0
  %v4132 = vadd.f32 %v4083, %v4131
  %v4133 = vpop.f32.mrf.mxu0
  %v4134 = vadd.f32 %v4085, %v4133
  %4135 = vmatmul.bf16.gmra.mxu0 %v3788
  %v4136 = vpop.f32.mrf.mxu0
  %v4137 = vadd.f32 %v4088, %v4136
  %v4138 = vpop.f32.mrf.mxu0
  %v4139 = vadd.f32 %v4090, %v4138
  %4140 = vmatmul.bf16.gmra.mxu0 %v3792
  %v4141 = vpop.f32.mrf.mxu0
  %v4142 = vadd.f32 %v4093, %v4141
  %v4143 = vpop.f32.mrf.mxu0
  %v4144 = vadd.f32 %v4095, %v4143
  %4145 = vmatmul.bf16.gmra.mxu0 %v3796
  %v4146 = vpop.f32.mrf.mxu0
  %v4147 = vadd.f32 %v4098, %v4146
  %v4148 = vpop.f32.mrf.mxu0
  %v4149 = vadd.f32 %v4100, %v4148
  %4150 = vmatmul.bf16.gmra.mxu0 %v3800
  %v4151 = vpop.f32.mrf.mxu0
  %v4152 = vadd.f32 %v4103, %v4151
  %v4153 = vpop.f32.mrf.mxu0
  %v4154 = vadd.f32 %v4105, %v4153
  %4155 = vmatmul.bf16.gmra.mxu0 %v3804
  %v4156 = vpop.f32.mrf.mxu0
  %v4157 = vadd.f32 %v4108, %v4156
  %v4158 = vpop.f32.mrf.mxu0
  %v4159 = vadd.f32 %v4110, %v4158
  %4160 = vdwg.mxu0
  %4161 = vmatpush.bf16.msra.mxu0 %v4022
  %4162 = vmatpush.bf16.msra.mxu0 %v4021
  %4163 = vmatpush.bf16.msra.mxu0 %v4020
  %4164 = vmatpush.bf16.msra.mxu0 %v4019
  %4165 = vmatpush.bf16.msra.mxu0 %v4018
  %4166 = vmatpush.bf16.msra.mxu0 %v4017
  %4167 = vmatpush.bf16.msra.mxu0 %v4016
  %4168 = vmatpush.bf16.msra.mxu0 %v4015
  %4169 = vmatmul.bf16.gmra.mxu0 %v3777
  %v4170 = vpop.f32.mrf.mxu0
  %v4171 = vadd.f32 %v4122, %v4170
  %v4172 = vpop.f32.mrf.mxu0
  %v4173 = vadd.f32 %v4124, %v4172
  %4174 = vmatmul.bf16.gmra.mxu0 %v3781
  %v4175 = vpop.f32.mrf.mxu0
  %v4176 = vadd.f32 %v4127, %v4175
  %v4177 = vpop.f32.mrf.mxu0
  %v4178 = vadd.f32 %v4129, %v4177
  %4179 = vmatmul.bf16.gmra.mxu0 %v3785
  %v4180 = vpop.f32.mrf.mxu0
  %v4181 = vadd.f32 %v4132, %v4180
  %v4182 = vpop.f32.mrf.mxu0
  %v4183 = vadd.f32 %v4134, %v4182
  %4184 = vmatmul.bf16.gmra.mxu0 %v3789
  %v4185 = vpop.f32.mrf.mxu0
  %v4186 = vadd.f32 %v4137, %v4185
  %v4187 = vpop.f32.mrf.mxu0
  %v4188 = vadd.f32 %v4139, %v4187
  %4189 = vmatmul.bf16.gmra.mxu0 %v3793
  %v4190 = vpop.f32.mrf.mxu0
  %v4191 = vadd.f32 %v4142, %v4190
  %v4192 = vpop.f32.mrf.mxu0
  %v4193 = vadd.f32 %v4144, %v4192
  %4194 = vmatmul.bf16.gmra.mxu0 %v3797
  %v4195 = vpop.f32.mrf.mxu0
  %v4196 = vadd.f32 %v4147, %v4195
  %v4197 = vpop.f32.mrf.mxu0
  %v4198 = vadd.f32 %v4149, %v4197
  %4199 = vmatmul.bf16.gmra.mxu0 %v3801
  %v4200 = vpop.f32.mrf.mxu0
  %v4201 = vadd.f32 %v4152, %v4200
  %v4202 = vpop.f32.mrf.mxu0
  %v4203 = vadd.f32 %v4154, %v4202
  %4204 = vmatmul.bf16.gmra.mxu0 %v3805
  %v4205 = vpop.f32.mrf.mxu0
  %v4206 = vadd.f32 %v4157, %v4205
  %v4207 = vpop.f32.mrf.mxu0
  %v4208 = vadd.f32 %v4159, %v4207
  %4209 = vdwg.mxu0
  %4210 = vmatpush.bf16.msra.mxu0 %v4030
  %4211 = vmatpush.bf16.msra.mxu0 %v4029
  %4212 = vmatpush.bf16.msra.mxu0 %v4028
  %4213 = vmatpush.bf16.msra.mxu0 %v4027
  %4214 = vmatpush.bf16.msra.mxu0 %v4026
  %4215 = vmatpush.bf16.msra.mxu0 %v4025
  %4216 = vmatpush.bf16.msra.mxu0 %v4024
  %4217 = vmatpush.bf16.msra.mxu0 %v4023
  %4218 = vmatmul.bf16.gmra.mxu0 %v3778
  %v4219 = vpop.f32.mrf.mxu0
  %v4220 = vadd.f32 %v4171, %v4219
  %v4221 = vpop.f32.mrf.mxu0
  %v4222 = vadd.f32 %v4173, %v4221
  %4223 = vmatmul.bf16.gmra.mxu0 %v3782
  %v4224 = vpop.f32.mrf.mxu0
  %v4225 = vadd.f32 %v4176, %v4224
  %v4226 = vpop.f32.mrf.mxu0
  %v4227 = vadd.f32 %v4178, %v4226
  %4228 = vmatmul.bf16.gmra.mxu0 %v3786
  %v4229 = vpop.f32.mrf.mxu0
  %v4230 = vadd.f32 %v4181, %v4229
  %v4231 = vpop.f32.mrf.mxu0
  %v4232 = vadd.f32 %v4183, %v4231
  %4233 = vmatmul.bf16.gmra.mxu0 %v3790
  %v4234 = vpop.f32.mrf.mxu0
  %v4235 = vadd.f32 %v4186, %v4234
  %v4236 = vpop.f32.mrf.mxu0
  %v4237 = vadd.f32 %v4188, %v4236
  %4238 = vmatmul.bf16.gmra.mxu0 %v3794
  %v4239 = vpop.f32.mrf.mxu0
  %v4240 = vadd.f32 %v4191, %v4239
  %v4241 = vpop.f32.mrf.mxu0
  %v4242 = vadd.f32 %v4193, %v4241
  %4243 = vmatmul.bf16.gmra.mxu0 %v3798
  %v4244 = vpop.f32.mrf.mxu0
  %v4245 = vadd.f32 %v4196, %v4244
  %v4246 = vpop.f32.mrf.mxu0
  %v4247 = vadd.f32 %v4198, %v4246
  %4248 = vmatmul.bf16.gmra.mxu0 %v3802
  %v4249 = vpop.f32.mrf.mxu0
  %v4250 = vadd.f32 %v4201, %v4249
  %v4251 = vpop.f32.mrf.mxu0
  %v4252 = vadd.f32 %v4203, %v4251
  %4253 = vmatmul.bf16.gmra.mxu0 %v3806
  %v4254 = vpop.f32.mrf.mxu0
  %v4255 = vadd.f32 %v4206, %v4254
  %v4256 = vpop.f32.mrf.mxu0
  %v4257 = vadd.f32 %v4208, %v4256
  %4258 = vdwg.mxu0
  %v4259 = vadd.f32 %v3759, %v4220
  %v4260 = vadd.f32 %v3760, %v4222
  %v4261 = vadd.f32 %v3761, %v4225
  %v4262 = vadd.f32 %v3762, %v4227
  %v4263 = vadd.f32 %v3763, %v4230
  %v4264 = vadd.f32 %v3764, %v4232
  %v4265 = vadd.f32 %v3765, %v4235
  %v4266 = vadd.f32 %v3766, %v4237
  %v4267 = vadd.f32 %v3767, %v4240
  %v4268 = vadd.f32 %v3768, %v4242
  %v4269 = vadd.f32 %v3769, %v4245
  %v4270 = vadd.f32 %v3770, %v4247
  %v4271 = vadd.f32 %v3771, %v4250
  %v4272 = vadd.f32 %v3772, %v4252
  %v4273 = vadd.f32 %v3773, %v4255
  %v4274 = vadd.f32 %v3774, %v4257
  %4275 = vst [vmem:[#allocation3] sm:$0xff] %v4259
  %4276 = vst [vmem:[#allocation3 + $0x8] sm:$0xff] %v4260
  %4277 = vst [vmem:[#allocation3 + $0x10] sm:$0xff] %v4261
  %4278 = vst [vmem:[#allocation3 + $0x18] sm:$0xff] %v4262
  %4279 = vst [vmem:[#allocation3 + $0x20] sm:$0xff] %v4263
  %4280 = vst [vmem:[#allocation3 + $0x28] sm:$0xff] %v4264
  %4281 = vst [vmem:[#allocation3 + $0x30] sm:$0xff] %v4265
  %4282 = vst [vmem:[#allocation3 + $0x38] sm:$0xff] %v4266
  %4283 = vst [vmem:[#allocation3 + $0x40] sm:$0xff] %v4267
  %4284 = vst [vmem:[#allocation3 + $0x48] sm:$0xff] %v4268
  %4285 = vst [vmem:[#allocation3 + $0x50] sm:$0xff] %v4269
  %4286 = vst [vmem:[#allocation3 + $0x58] sm:$0xff] %v4270
  %4287 = vst [vmem:[#allocation3 + $0x60] sm:$0xff] %v4271
  %4288 = vst [vmem:[#allocation3 + $0x68] sm:$0xff] %v4272
  %4289 = vst [vmem:[#allocation3 + $0x70] sm:$0xff] %v4273
  %4290 = vst [vmem:[#allocation3 + $0x78] sm:$0xff] %v4274
  // Predicated region
  $region34: #{forward.12} parent=0 // pred_check
    %p4291 = pneg %p26
  $region35: #{forward.12} parent=0 // pred_check_branch
    %4293 = sbr.rel (%p4291) target = $region37
  $region36: #{forward.12} parent=0 // pred_region
    %v4294 = vld [vmem:[#allocation3] sm:$0xff]
    %v4295 = vld [vmem:[#allocation3 + $0x8] sm:$0xff]
    %v4296 = vld [vmem:[#allocation3 + $0x10] sm:$0xff]
    %v4297 = vld [vmem:[#allocation3 + $0x18] sm:$0xff]
    %v4298 = vld [vmem:[#allocation3 + $0x20] sm:$0xff]
    %v4299 = vld [vmem:[#allocation3 + $0x28] sm:$0xff]
    %v4300 = vld [vmem:[#allocation3 + $0x30] sm:$0xff]
    %v4301 = vld [vmem:[#allocation3 + $0x38] sm:$0xff]
    %v4302 = vld [vmem:[#allocation3 + $0x40] sm:$0xff]
    %v4303 = vld [vmem:[#allocation3 + $0x48] sm:$0xff]
    %v4304 = vld [vmem:[#allocation3 + $0x50] sm:$0xff]
    %v4305 = vld [vmem:[#allocation3 + $0x58] sm:$0xff]
    %v4306 = vld [vmem:[#allocation3 + $0x60] sm:$0xff]
    %v4307 = vld [vmem:[#allocation3 + $0x68] sm:$0xff]
    %v4308 = vld [vmem:[#allocation3 + $0x70] sm:$0xff]
    %v4309 = vld [vmem:[#allocation3 + $0x78] sm:$0xff]
    %4310 = vst [vmem:[%s7] sm:$0xff] %v4294
    %4311 = vst [vmem:[%s7 + $0x8] sm:$0xff] %v4295
    %4312 = vst [vmem:[%s7 + $0x10] sm:$0xff] %v4296
    %4313 = vst [vmem:[%s7 + $0x18] sm:$0xff] %v4297
    %4314 = vst [vmem:[%s7 + $0x20] sm:$0xff] %v4298
    %4315 = vst [vmem:[%s7 + $0x28] sm:$0xff] %v4299
    %4316 = vst [vmem:[%s7 + $0x30] sm:$0xff] %v4300
    %4317 = vst [vmem:[%s7 + $0x38] sm:$0xff] %v4301
    %4318 = vst [vmem:[%s7 + $0x40] sm:$0xff] %v4302
    %4319 = vst [vmem:[%s7 + $0x48] sm:$0xff] %v4303
    %4320 = vst [vmem:[%s7 + $0x50] sm:$0xff] %v4304
    %4321 = vst [vmem:[%s7 + $0x58] sm:$0xff] %v4305
    %4322 = vst [vmem:[%s7 + $0x60] sm:$0xff] %v4306
    %4323 = vst [vmem:[%s7 + $0x68] sm:$0xff] %v4307
    %4324 = vst [vmem:[%s7 + $0x70] sm:$0xff] %v4308
    %4325 = vst [vmem:[%s7 + $0x78] sm:$0xff] %v4309
  $region37: #{forward.12} parent=0 // pred_fallthru
    _
  // Predicated region
  $region38: #{forward.12} parent=0 // pred_check
    _
  $region39: #{forward.12} parent=0 // pred_check_branch
    %4327 = sbr.rel (0) target = $region41
  $region40: #{forward.12} parent=0 // pred_region
    _
  $region41: #{forward.12} parent=0 // pred_fallthru
    _
  // Predicated region
  $region42: #{forward.12} parent=0 // pred_check
    _
  $region43: #{forward.12} parent=0 // pred_check_branch
    %4329 = sbr.rel (0) target = $region45
  $region44: #{forward.12} parent=0 // pred_region
    _
  $region45: #{forward.12} parent=0 // pred_fallthru
    _

// kernel: forward.17
$region0: #{forward.17}
  #allocation0 [shape = 'u32[]', space=smem, size = 0x4, offset = 0x4, fixed_abs, tag = 'smem constant byte address 0x4 - core index']
  #allocation1 [shape = 'u32[72,128]{1,0:T(1,128)}', space=vmem, size = 0x9000, scoped, tag = 'internal scratch']
  %s0 = inlined_call_operand.vmem [shape: f32[2,128], index: 0, kind: input, shape index: {}]
  %s1 = inlined_call_operand.vmem [shape: f32[1,128], index: 1, kind: input, shape index: {}]
  %s2 = inlined_call_operand.vmem [shape: f32[1,128], index: 2, kind: input, shape index: {}]
  %s3 = inlined_call_operand.vmem [shape: bf16[2048,128], index: 3, kind: input, shape index: {}]
  %s4 = inlined_call_operand.vmem [shape: f32[2,2048], index: 4, kind: output, shape index: {}]
  %s5 = sld [smem:[#allocation0]]
  $region26: #{forward.17} parent=0
    _
  %s7 = ssub.s32 1, %s5
  %s8 = scalar_select 0, %s7, %s5
  // Predicated region
  $region2: #{forward.17} parent=0 // pred_check
    _
  $region3: #{forward.17} parent=0 // pred_check_branch
    %10 = sbr.rel (0) target = $region5
  $region4: #{forward.17} parent=0 // pred_region
    _
  $region5: #{forward.17} parent=0 // pred_fallthru
    _
  // Predicated region
  $region6: #{forward.17} parent=0 // pred_check
    _
  $region7: #{forward.17} parent=0 // pred_check_branch
    %12 = sbr.rel (0) target = $region9
  $region8: #{forward.17} parent=0 // pred_region
    _
  $region9: #{forward.17} parent=0 // pred_fallthru
    _
  // Predicated region
  $region10: #{forward.17} parent=0 // pred_check
    _
  $region11: #{forward.17} parent=0 // pred_check_branch
    %14 = sbr.rel (0) target = $region13
  $region12: #{forward.17} parent=0 // pred_region
    _
  $region13: #{forward.17} parent=0 // pred_fallthru
    _
  // Predicated region
  $region14: #{forward.17} parent=0 // pred_check
    _
  $region15: #{forward.17} parent=0 // pred_check_branch
    %16 = sbr.rel (0) target = $region17
  $region16: #{forward.17} parent=0 // pred_region
    _
  $region17: #{forward.17} parent=0 // pred_fallthru
    _
  %v17 = vld [vmem:[%s0] sm:$0x3]
  %v18 = vld [vmem:[%s1] sm:$0x1]
  %v19 = vld [vmem:[%s2] sm:$0x1]
  %vm20 = vcmask 1041408
  %v21 = vsel %vm20, %v17, 0.0
  %22 = vadd.xlane.f32.xlu0 %v21
  %v23 = vpop.xlane.xlu0 %22
  %v24 = vrcp.pop 128.0
  %v25 = vmul.f32 128.0, %v24
  %v26 = vsub.f32 1.0, %v25
  %v27 = vmul.f32 %v24, %v26
  %v28 = vadd.f32 %v24, %v27
  %vm29 = vweird.f32 %v24
  %v30 = vsel %vm29, %v24, %v28
  %v31 = vmul.f32 %v23, %v30
  %v32 = vsub.f32 %v17, %v31
  %v33 = vmul.f32 %v32, %v32
  %v34 = vsel %vm20, %v33, 0.0
  %35 = vadd.xlane.f32.xlu0 %v34
  %v36 = vpop.xlane.xlu0 %35
  %v37 = vmul.f32 %v36, %v30
  %v38 = vadd.f32 %v37, 1e-05
  %v39 = vrsqrt.pop %v38
  %v40 = vmul.f32 %v39, %v38
  %v41 = vmul.f32 %v40, %v39
  %v42 = vmul.f32 0.5, %v41
  %v43 = vsub.f32 1.5, %v42
  %v44 = vmul.f32 %v39, %v43
  %vm45 = vweird.f32 %v38
  %vm46 = vweird.f32 %v39
  %vm47 = vmor %vm45, %vm46
  %v48 = vsel %vm47, %v39, %v44
  %v49 = vmul.f32 %v32, %v48
  %v51 = vperm.slane %v18, 0
  %v53 = vmul.f32 %v49, %v51
  %v55 = vperm.slane %v19, 0
  %v57 = vadd.f32 %v53, %v55
  %v58 = vpack.c.bf16 %v57, %v57
  %v59 = vld [vmem:[%s3] sm:$0xf]
  %v60 = vld [vmem:[%s3 + $0x4] sm:$0xf]
  %v61 = vld [vmem:[%s3 + $0x8] sm:$0xf]
  %v62 = vld [vmem:[%s3 + $0xc] sm:$0xf]
  %v63 = vld [vmem:[%s3 + $0x10] sm:$0xf]
  %v64 = vld [vmem:[%s3 + $0x14] sm:$0xf]
  %v65 = vld [vmem:[%s3 + $0x18] sm:$0xf]
  %v66 = vld [vmem:[%s3 + $0x1c] sm:$0xf]
  %v67 = vld [vmem:[%s3 + $0x20] sm:$0xf]
  %v68 = vld [vmem:[%s3 + $0x24] sm:$0xf]
  %v69 = vld [vmem:[%s3 + $0x28] sm:$0xf]
  %v70 = vld [vmem:[%s3 + $0x2c] sm:$0xf]
  %v71 = vld [vmem:[%s3 + $0x30] sm:$0xf]
  %v72 = vld [vmem:[%s3 + $0x34] sm:$0xf]
  %v73 = vld [vmem:[%s3 + $0x38] sm:$0xf]
  %v74 = vld [vmem:[%s3 + $0x3c] sm:$0xf]
  %v75 = vld [vmem:[%s3 + $0x40] sm:$0xf]
  %v76 = vld [vmem:[%s3 + $0x44] sm:$0xf]
  %v77 = vld [vmem:[%s3 + $0x48] sm:$0xf]
  %v78 = vld [vmem:[%s3 + $0x4c] sm:$0xf]
  %v79 = vld [vmem:[%s3 + $0x50] sm:$0xf]
  %v80 = vld [vmem:[%s3 + $0x54] sm:$0xf]
  %v81 = vld [vmem:[%s3 + $0x58] sm:$0xf]
  %v82 = vld [vmem:[%s3 + $0x5c] sm:$0xf]
  %v83 = vld [vmem:[%s3 + $0x60] sm:$0xf]
  %v84 = vld [vmem:[%s3 + $0x64] sm:$0xf]
  %v85 = vld [vmem:[%s3 + $0x68] sm:$0xf]
  %v86 = vld [vmem:[%s3 + $0x6c] sm:$0xf]
  %v87 = vld [vmem:[%s3 + $0x70] sm:$0xf]
  %v88 = vld [vmem:[%s3 + $0x74] sm:$0xf]
  %v89 = vld [vmem:[%s3 + $0x78] sm:$0xf]
  %v90 = vld [vmem:[%s3 + $0x7c] sm:$0xf]
  %v91 = vld [vmem:[%s3 + $0x80] sm:$0xf]
  %v92 = vld [vmem:[%s3 + $0x84] sm:$0xf]
  %v93 = vld [vmem:[%s3 + $0x88] sm:$0xf]
  %v94 = vld [vmem:[%s3 + $0x8c] sm:$0xf]
  %v95 = vld [vmem:[%s3 + $0x90] sm:$0xf]
  %v96 = vld [vmem:[%s3 + $0x94] sm:$0xf]
  %v97 = vld [vmem:[%s3 + $0x98] sm:$0xf]
  %v98 = vld [vmem:[%s3 + $0x9c] sm:$0xf]
  %v99 = vld [vmem:[%s3 + $0xa0] sm:$0xf]
  %v100 = vld [vmem:[%s3 + $0xa4] sm:$0xf]
  %v101 = vld [vmem:[%s3 + $0xa8] sm:$0xf]
  %v102 = vld [vmem:[%s3 + $0xac] sm:$0xf]
  %v103 = vld [vmem:[%s3 + $0xb0] sm:$0xf]
  %v104 = vld [vmem:[%s3 + $0xb4] sm:$0xf]
  %v105 = vld [vmem:[%s3 + $0xb8] sm:$0xf]
  %v106 = vld [vmem:[%s3 + $0xbc] sm:$0xf]
  %v107 = vld [vmem:[%s3 + $0xc0] sm:$0xf]
  %v108 = vld [vmem:[%s3 + $0xc4] sm:$0xf]
  %v109 = vld [vmem:[%s3 + $0xc8] sm:$0xf]
  %v110 = vld [vmem:[%s3 + $0xcc] sm:$0xf]
  %v111 = vld [vmem:[%s3 + $0xd0] sm:$0xf]
  %v112 = vld [vmem:[%s3 + $0xd4] sm:$0xf]
  %v113 = vld [vmem:[%s3 + $0xd8] sm:$0xf]
  %v114 = vld [vmem:[%s3 + $0xdc] sm:$0xf]
  %v115 = vld [vmem:[%s3 + $0xe0] sm:$0xf]
  %v116 = vld [vmem:[%s3 + $0xe4] sm:$0xf]
  %v117 = vld [vmem:[%s3 + $0xe8] sm:$0xf]
  %v118 = vld [vmem:[%s3 + $0xec] sm:$0xf]
  %v119 = vld [vmem:[%s3 + $0xf0] sm:$0xf]
  %v120 = vld [vmem:[%s3 + $0xf4] sm:$0xf]
  %v121 = vld [vmem:[%s3 + $0xf8] sm:$0xf]
  %v122 = vld [vmem:[%s3 + $0xfc] sm:$0xf]
  %v123 = vld [vmem:[%s3 + $0x100] sm:$0xf]
  %v124 = vld [vmem:[%s3 + $0x104] sm:$0xf]
  %v125 = vld [vmem:[%s3 + $0x108] sm:$0xf]
  %v126 = vld [vmem:[%s3 + $0x10c] sm:$0xf]
  %v127 = vld [vmem:[%s3 + $0x110] sm:$0xf]
  %v128 = vld [vmem:[%s3 + $0x114] sm:$0xf]
  %v129 = vld [vmem:[%s3 + $0x118] sm:$0xf]
  %v130 = vld [vmem:[%s3 + $0x11c] sm:$0xf]
  %v131 = vld [vmem:[%s3 + $0x120] sm:$0xf]
  %v132 = vld [vmem:[%s3 + $0x124] sm:$0xf]
  %v133 = vld [vmem:[%s3 + $0x128] sm:$0xf]
  %v134 = vld [vmem:[%s3 + $0x12c] sm:$0xf]
  %v135 = vld [vmem:[%s3 + $0x130] sm:$0xf]
  %v136 = vld [vmem:[%s3 + $0x134] sm:$0xf]
  %v137 = vld [vmem:[%s3 + $0x138] sm:$0xf]
  %v138 = vld [vmem:[%s3 + $0x13c] sm:$0xf]
  %v139 = vld [vmem:[%s3 + $0x140] sm:$0xf]
  %v140 = vld [vmem:[%s3 + $0x144] sm:$0xf]
  %v141 = vld [vmem:[%s3 + $0x148] sm:$0xf]
  %v142 = vld [vmem:[%s3 + $0x14c] sm:$0xf]
  %v143 = vld [vmem:[%s3 + $0x150] sm:$0xf]
  %v144 = vld [vmem:[%s3 + $0x154] sm:$0xf]
  %v145 = vld [vmem:[%s3 + $0x158] sm:$0xf]
  %v146 = vld [vmem:[%s3 + $0x15c] sm:$0xf]
  %v147 = vld [vmem:[%s3 + $0x160] sm:$0xf]
  %v148 = vld [vmem:[%s3 + $0x164] sm:$0xf]
  %v149 = vld [vmem:[%s3 + $0x168] sm:$0xf]
  %v150 = vld [vmem:[%s3 + $0x16c] sm:$0xf]
  %v151 = vld [vmem:[%s3 + $0x170] sm:$0xf]
  %v152 = vld [vmem:[%s3 + $0x174] sm:$0xf]
  %v153 = vld [vmem:[%s3 + $0x178] sm:$0xf]
  %v154 = vld [vmem:[%s3 + $0x17c] sm:$0xf]
  %v155 = vld [vmem:[%s3 + $0x180] sm:$0xf]
  %v156 = vld [vmem:[%s3 + $0x184] sm:$0xf]
  %v157 = vld [vmem:[%s3 + $0x188] sm:$0xf]
  %v158 = vld [vmem:[%s3 + $0x18c] sm:$0xf]
  %v159 = vld [vmem:[%s3 + $0x190] sm:$0xf]
  %v160 = vld [vmem:[%s3 + $0x194] sm:$0xf]
  %v161 = vld [vmem:[%s3 + $0x198] sm:$0xf]
  %v162 = vld [vmem:[%s3 + $0x19c] sm:$0xf]
  %v163 = vld [vmem:[%s3 + $0x1a0] sm:$0xf]
  %v164 = vld [vmem:[%s3 + $0x1a4] sm:$0xf]
  %v165 = vld [vmem:[%s3 + $0x1a8] sm:$0xf]
  %v166 = vld [vmem:[%s3 + $0x1ac] sm:$0xf]
  %v167 = vld [vmem:[%s3 + $0x1b0] sm:$0xf]
  %v168 = vld [vmem:[%s3 + $0x1b4] sm:$0xf]
  %v169 = vld [vmem:[%s3 + $0x1b8] sm:$0xf]
  %v170 = vld [vmem:[%s3 + $0x1bc] sm:$0xf]
  %v171 = vld [vmem:[%s3 + $0x1c0] sm:$0xf]
  %v172 = vld [vmem:[%s3 + $0x1c4] sm:$0xf]
  %v173 = vld [vmem:[%s3 + $0x1c8] sm:$0xf]
  %v174 = vld [vmem:[%s3 + $0x1cc] sm:$0xf]
  %v175 = vld [vmem:[%s3 + $0x1d0] sm:$0xf]
  %v176 = vld [vmem:[%s3 + $0x1d4] sm:$0xf]
  %v177 = vld [vmem:[%s3 + $0x1d8] sm:$0xf]
  %v178 = vld [vmem:[%s3 + $0x1dc] sm:$0xf]
  %v179 = vld [vmem:[%s3 + $0x1e0] sm:$0xf]
  %v180 = vld [vmem:[%s3 + $0x1e4] sm:$0xf]
  %v181 = vld [vmem:[%s3 + $0x1e8] sm:$0xf]
  %v182 = vld [vmem:[%s3 + $0x1ec] sm:$0xf]
  %v183 = vld [vmem:[%s3 + $0x1f0] sm:$0xf]
  %v184 = vld [vmem:[%s3 + $0x1f4] sm:$0xf]
  %v185 = vld [vmem:[%s3 + $0x1f8] sm:$0xf]
  %v186 = vld [vmem:[%s3 + $0x1fc] sm:$0xf]
  %v187 = vld [vmem:[%s3 + $0x200] sm:$0xf]
  %v188 = vld [vmem:[%s3 + $0x204] sm:$0xf]
  %v189 = vld [vmem:[%s3 + $0x208] sm:$0xf]
  %v190 = vld [vmem:[%s3 + $0x20c] sm:$0xf]
  %v191 = vld [vmem:[%s3 + $0x210] sm:$0xf]
  %v192 = vld [vmem:[%s3 + $0x214] sm:$0xf]
  %v193 = vld [vmem:[%s3 + $0x218] sm:$0xf]
  %v194 = vld [vmem:[%s3 + $0x21c] sm:$0xf]
  %v195 = vld [vmem:[%s3 + $0x220] sm:$0xf]
  %v196 = vld [vmem:[%s3 + $0x224] sm:$0xf]
  %v197 = vld [vmem:[%s3 + $0x228] sm:$0xf]
  %v198 = vld [vmem:[%s3 + $0x22c] sm:$0xf]
  %v199 = vld [vmem:[%s3 + $0x230] sm:$0xf]
  %v200 = vld [vmem:[%s3 + $0x234] sm:$0xf]
  %v201 = vld [vmem:[%s3 + $0x238] sm:$0xf]
  %v202 = vld [vmem:[%s3 + $0x23c] sm:$0xf]
  %v203 = vld [vmem:[%s3 + $0x240] sm:$0xf]
  %v204 = vld [vmem:[%s3 + $0x244] sm:$0xf]
  %v205 = vld [vmem:[%s3 + $0x248] sm:$0xf]
  %v206 = vld [vmem:[%s3 + $0x24c] sm:$0xf]
  %v207 = vld [vmem:[%s3 + $0x250] sm:$0xf]
  %v208 = vld [vmem:[%s3 + $0x254] sm:$0xf]
  %v209 = vld [vmem:[%s3 + $0x258] sm:$0xf]
  %v210 = vld [vmem:[%s3 + $0x25c] sm:$0xf]
  %v211 = vld [vmem:[%s3 + $0x260] sm:$0xf]
  %v212 = vld [vmem:[%s3 + $0x264] sm:$0xf]
  %v213 = vld [vmem:[%s3 + $0x268] sm:$0xf]
  %v214 = vld [vmem:[%s3 + $0x26c] sm:$0xf]
  %v215 = vld [vmem:[%s3 + $0x270] sm:$0xf]
  %v216 = vld [vmem:[%s3 + $0x274] sm:$0xf]
  %v217 = vld [vmem:[%s3 + $0x278] sm:$0xf]
  %v218 = vld [vmem:[%s3 + $0x27c] sm:$0xf]
  %v219 = vld [vmem:[%s3 + $0x280] sm:$0xf]
  %v220 = vld [vmem:[%s3 + $0x284] sm:$0xf]
  %v221 = vld [vmem:[%s3 + $0x288] sm:$0xf]
  %v222 = vld [vmem:[%s3 + $0x28c] sm:$0xf]
  %v223 = vld [vmem:[%s3 + $0x290] sm:$0xf]
  %v224 = vld [vmem:[%s3 + $0x294] sm:$0xf]
  %v225 = vld [vmem:[%s3 + $0x298] sm:$0xf]
  %v226 = vld [vmem:[%s3 + $0x29c] sm:$0xf]
  %v227 = vld [vmem:[%s3 + $0x2a0] sm:$0xf]
  %v228 = vld [vmem:[%s3 + $0x2a4] sm:$0xf]
  %v229 = vld [vmem:[%s3 + $0x2a8] sm:$0xf]
  %v230 = vld [vmem:[%s3 + $0x2ac] sm:$0xf]
  %v231 = vld [vmem:[%s3 + $0x2b0] sm:$0xf]
  %v232 = vld [vmem:[%s3 + $0x2b4] sm:$0xf]
  %v233 = vld [vmem:[%s3 + $0x2b8] sm:$0xf]
  %v234 = vld [vmem:[%s3 + $0x2bc] sm:$0xf]
  %v235 = vld [vmem:[%s3 + $0x2c0] sm:$0xf]
  %v236 = vld [vmem:[%s3 + $0x2c4] sm:$0xf]
  %v237 = vld [vmem:[%s3 + $0x2c8] sm:$0xf]
  %v238 = vld [vmem:[%s3 + $0x2cc] sm:$0xf]
  %v239 = vld [vmem:[%s3 + $0x2d0] sm:$0xf]
  %v240 = vld [vmem:[%s3 + $0x2d4] sm:$0xf]
  %v241 = vld [vmem:[%s3 + $0x2d8] sm:$0xf]
  %v242 = vld [vmem:[%s3 + $0x2dc] sm:$0xf]
  %v243 = vld [vmem:[%s3 + $0x2e0] sm:$0xf]
  %v244 = vld [vmem:[%s3 + $0x2e4] sm:$0xf]
  %v245 = vld [vmem:[%s3 + $0x2e8] sm:$0xf]
  %v246 = vld [vmem:[%s3 + $0x2ec] sm:$0xf]
  %v247 = vld [vmem:[%s3 + $0x2f0] sm:$0xf]
  %v248 = vld [vmem:[%s3 + $0x2f4] sm:$0xf]
  %v249 = vld [vmem:[%s3 + $0x2f8] sm:$0xf]
  %v250 = vld [vmem:[%s3 + $0x2fc] sm:$0xf]
  %v251 = vld [vmem:[%s3 + $0x300] sm:$0xf]
  %v252 = vld [vmem:[%s3 + $0x304] sm:$0xf]
  %v253 = vld [vmem:[%s3 + $0x308] sm:$0xf]
  %v254 = vld [vmem:[%s3 + $0x30c] sm:$0xf]
  %v255 = vld [vmem:[%s3 + $0x310] sm:$0xf]
  %v256 = vld [vmem:[%s3 + $0x314] sm:$0xf]
  %v257 = vld [vmem:[%s3 + $0x318] sm:$0xf]
  %v258 = vld [vmem:[%s3 + $0x31c] sm:$0xf]
  %v259 = vld [vmem:[%s3 + $0x320] sm:$0xf]
  %v260 = vld [vmem:[%s3 + $0x324] sm:$0xf]
  %v261 = vld [vmem:[%s3 + $0x328] sm:$0xf]
  %v262 = vld [vmem:[%s3 + $0x32c] sm:$0xf]
  %v263 = vld [vmem:[%s3 + $0x330] sm:$0xf]
  %v264 = vld [vmem:[%s3 + $0x334] sm:$0xf]
  %v265 = vld [vmem:[%s3 + $0x338] sm:$0xf]
  %v266 = vld [vmem:[%s3 + $0x33c] sm:$0xf]
  %v267 = vld [vmem:[%s3 + $0x340] sm:$0xf]
  %v268 = vld [vmem:[%s3 + $0x344] sm:$0xf]
  %v269 = vld [vmem:[%s3 + $0x348] sm:$0xf]
  %v270 = vld [vmem:[%s3 + $0x34c] sm:$0xf]
  %v271 = vld [vmem:[%s3 + $0x350] sm:$0xf]
  %v272 = vld [vmem:[%s3 + $0x354] sm:$0xf]
  %v273 = vld [vmem:[%s3 + $0x358] sm:$0xf]
  %v274 = vld [vmem:[%s3 + $0x35c] sm:$0xf]
  %v275 = vld [vmem:[%s3 + $0x360] sm:$0xf]
  %v276 = vld [vmem:[%s3 + $0x364] sm:$0xf]
  %v277 = vld [vmem:[%s3 + $0x368] sm:$0xf]
  %v278 = vld [vmem:[%s3 + $0x36c] sm:$0xf]
  %v279 = vld [vmem:[%s3 + $0x370] sm:$0xf]
  %v280 = vld [vmem:[%s3 + $0x374] sm:$0xf]
  %v281 = vld [vmem:[%s3 + $0x378] sm:$0xf]
  %v282 = vld [vmem:[%s3 + $0x37c] sm:$0xf]
  %v283 = vld [vmem:[%s3 + $0x380] sm:$0xf]
  %v284 = vld [vmem:[%s3 + $0x384] sm:$0xf]
  %v285 = vld [vmem:[%s3 + $0x388] sm:$0xf]
  %v286 = vld [vmem:[%s3 + $0x38c] sm:$0xf]
  %v287 = vld [vmem:[%s3 + $0x390] sm:$0xf]
  %v288 = vld [vmem:[%s3 + $0x394] sm:$0xf]
  %v289 = vld [vmem:[%s3 + $0x398] sm:$0xf]
  %v290 = vld [vmem:[%s3 + $0x39c] sm:$0xf]
  %v291 = vld [vmem:[%s3 + $0x3a0] sm:$0xf]
  %v292 = vld [vmem:[%s3 + $0x3a4] sm:$0xf]
  %v293 = vld [vmem:[%s3 + $0x3a8] sm:$0xf]
  %v294 = vld [vmem:[%s3 + $0x3ac] sm:$0xf]
  %v295 = vld [vmem:[%s3 + $0x3b0] sm:$0xf]
  %v296 = vld [vmem:[%s3 + $0x3b4] sm:$0xf]
  %v297 = vld [vmem:[%s3 + $0x3b8] sm:$0xf]
  %v298 = vld [vmem:[%s3 + $0x3bc] sm:$0xf]
  %v299 = vld [vmem:[%s3 + $0x3c0] sm:$0xf]
  %v300 = vld [vmem:[%s3 + $0x3c4] sm:$0xf]
  %v301 = vld [vmem:[%s3 + $0x3c8] sm:$0xf]
  %v302 = vld [vmem:[%s3 + $0x3cc] sm:$0xf]
  %v303 = vld [vmem:[%s3 + $0x3d0] sm:$0xf]
  %v304 = vld [vmem:[%s3 + $0x3d4] sm:$0xf]
  %v305 = vld [vmem:[%s3 + $0x3d8] sm:$0xf]
  %v306 = vld [vmem:[%s3 + $0x3dc] sm:$0xf]
  %v307 = vld [vmem:[%s3 + $0x3e0] sm:$0xf]
  %v308 = vld [vmem:[%s3 + $0x3e4] sm:$0xf]
  %v309 = vld [vmem:[%s3 + $0x3e8] sm:$0xf]
  %v310 = vld [vmem:[%s3 + $0x3ec] sm:$0xf]
  %v311 = vld [vmem:[%s3 + $0x3f0] sm:$0xf]
  %v312 = vld [vmem:[%s3 + $0x3f4] sm:$0xf]
  %v313 = vld [vmem:[%s3 + $0x3f8] sm:$0xf]
  %v314 = vld [vmem:[%s3 + $0x3fc] sm:$0xf]
  %v571 = vunpack.c.l.b16 %v59
  %v572 = vunpack.c.l.b16 %v60
  %v573 = vunpack.c.l.b16 %v61
  %v574 = vunpack.c.l.b16 %v62
  %v575 = vunpack.c.l.b16 %v63
  %v576 = vunpack.c.l.b16 %v64
  %v577 = vunpack.c.l.b16 %v65
  %v578 = vunpack.c.l.b16 %v66
  %v579 = vunpack.c.l.b16 %v67
  %v580 = vunpack.c.l.b16 %v68
  %v581 = vunpack.c.l.b16 %v69
  %v582 = vunpack.c.l.b16 %v70
  %v583 = vunpack.c.l.b16 %v71
  %v584 = vunpack.c.l.b16 %v72
  %v585 = vunpack.c.l.b16 %v73
  %v586 = vunpack.c.l.b16 %v74
  %v587 = vunpack.c.l.b16 %v75
  %v588 = vunpack.c.l.b16 %v76
  %v589 = vunpack.c.l.b16 %v77
  %v590 = vunpack.c.l.b16 %v78
  %v591 = vunpack.c.l.b16 %v79
  %v592 = vunpack.c.l.b16 %v80
  %v593 = vunpack.c.l.b16 %v81
  %v594 = vunpack.c.l.b16 %v82
  %v595 = vunpack.c.l.b16 %v83
  %v596 = vunpack.c.l.b16 %v84
  %v597 = vunpack.c.l.b16 %v85
  %v598 = vunpack.c.l.b16 %v86
  %v599 = vunpack.c.l.b16 %v87
  %v600 = vunpack.c.l.b16 %v88
  %v601 = vunpack.c.l.b16 %v89
  %v602 = vunpack.c.l.b16 %v90
  %v603 = vunpack.c.l.b16 %v91
  %v604 = vunpack.c.l.b16 %v92
  %v605 = vunpack.c.l.b16 %v93
  %v606 = vunpack.c.l.b16 %v94
  %v607 = vunpack.c.l.b16 %v95
  %v608 = vunpack.c.l.b16 %v96
  %v609 = vunpack.c.l.b16 %v97
  %v610 = vunpack.c.l.b16 %v98
  %v611 = vunpack.c.l.b16 %v99
  %v612 = vunpack.c.l.b16 %v100
  %v613 = vunpack.c.l.b16 %v101
  %v614 = vunpack.c.l.b16 %v102
  %v615 = vunpack.c.l.b16 %v103
  %v616 = vunpack.c.l.b16 %v104
  %v617 = vunpack.c.l.b16 %v105
  %v618 = vunpack.c.l.b16 %v106
  %v619 = vunpack.c.l.b16 %v107
  %v620 = vunpack.c.l.b16 %v108
  %v621 = vunpack.c.l.b16 %v109
  %v622 = vunpack.c.l.b16 %v110
  %v623 = vunpack.c.l.b16 %v111
  %v624 = vunpack.c.l.b16 %v112
  %v625 = vunpack.c.l.b16 %v113
  %v626 = vunpack.c.l.b16 %v114
  %v627 = vunpack.c.l.b16 %v115
  %v628 = vunpack.c.l.b16 %v116
  %v629 = vunpack.c.l.b16 %v117
  %v630 = vunpack.c.l.b16 %v118
  %v631 = vunpack.c.l.b16 %v119
  %v632 = vunpack.c.l.b16 %v120
  %v633 = vunpack.c.l.b16 %v121
  %v634 = vunpack.c.l.b16 %v122
  %v635 = vunpack.c.l.b16 %v123
  %v636 = vunpack.c.l.b16 %v124
  %v637 = vunpack.c.l.b16 %v125
  %v638 = vunpack.c.l.b16 %v126
  %v639 = vunpack.c.l.b16 %v127
  %v640 = vunpack.c.l.b16 %v128
  %v641 = vunpack.c.l.b16 %v129
  %v642 = vunpack.c.l.b16 %v130
  %v643 = vunpack.c.l.b16 %v131
  %v644 = vunpack.c.l.b16 %v132
  %v645 = vunpack.c.l.b16 %v133
  %v646 = vunpack.c.l.b16 %v134
  %v647 = vunpack.c.l.b16 %v135
  %v648 = vunpack.c.l.b16 %v136
  %v649 = vunpack.c.l.b16 %v137
  %v650 = vunpack.c.l.b16 %v138
  %v651 = vunpack.c.l.b16 %v139
  %v652 = vunpack.c.l.b16 %v140
  %v653 = vunpack.c.l.b16 %v141
  %v654 = vunpack.c.l.b16 %v142
  %v655 = vunpack.c.l.b16 %v143
  %v656 = vunpack.c.l.b16 %v144
  %v657 = vunpack.c.l.b16 %v145
  %v658 = vunpack.c.l.b16 %v146
  %v659 = vunpack.c.l.b16 %v147
  %v660 = vunpack.c.l.b16 %v148
  %v661 = vunpack.c.l.b16 %v149
  %v662 = vunpack.c.l.b16 %v150
  %v663 = vunpack.c.l.b16 %v151
  %v664 = vunpack.c.l.b16 %v152
  %v665 = vunpack.c.l.b16 %v153
  %v666 = vunpack.c.l.b16 %v154
  %v667 = vunpack.c.l.b16 %v155
  %v668 = vunpack.c.l.b16 %v156
  %v669 = vunpack.c.l.b16 %v157
  %v670 = vunpack.c.l.b16 %v158
  %v671 = vunpack.c.l.b16 %v159
  %v672 = vunpack.c.l.b16 %v160
  %v673 = vunpack.c.l.b16 %v161
  %v674 = vunpack.c.l.b16 %v162
  %v675 = vunpack.c.l.b16 %v163
  %v676 = vunpack.c.l.b16 %v164
  %v677 = vunpack.c.l.b16 %v165
  %v678 = vunpack.c.l.b16 %v166
  %v679 = vunpack.c.l.b16 %v167
  %v680 = vunpack.c.l.b16 %v168
  %v681 = vunpack.c.l.b16 %v169
  %v682 = vunpack.c.l.b16 %v170
  %v683 = vunpack.c.l.b16 %v171
  %v684 = vunpack.c.l.b16 %v172
  %v685 = vunpack.c.l.b16 %v173
  %v686 = vunpack.c.l.b16 %v174
  %v687 = vunpack.c.l.b16 %v175
  %v688 = vunpack.c.l.b16 %v176
  %v689 = vunpack.c.l.b16 %v177
  %v690 = vunpack.c.l.b16 %v178
  %v691 = vunpack.c.l.b16 %v179
  %v692 = vunpack.c.l.b16 %v180
  %v693 = vunpack.c.l.b16 %v181
  %v694 = vunpack.c.l.b16 %v182
  %v695 = vunpack.c.l.b16 %v183
  %v696 = vunpack.c.l.b16 %v184
  %v697 = vunpack.c.l.b16 %v185
  %v698 = vunpack.c.l.b16 %v186
  %v699 = vunpack.c.l.b16 %v187
  %v700 = vunpack.c.l.b16 %v188
  %v701 = vunpack.c.l.b16 %v189
  %v702 = vunpack.c.l.b16 %v190
  %v703 = vunpack.c.l.b16 %v191
  %v704 = vunpack.c.l.b16 %v192
  %v705 = vunpack.c.l.b16 %v193
  %v706 = vunpack.c.l.b16 %v194
  %v707 = vunpack.c.l.b16 %v195
  %v708 = vunpack.c.l.b16 %v196
  %v709 = vunpack.c.l.b16 %v197
  %v710 = vunpack.c.l.b16 %v198
  %v711 = vunpack.c.l.b16 %v199
  %v712 = vunpack.c.l.b16 %v200
  %v713 = vunpack.c.l.b16 %v201
  %v714 = vunpack.c.l.b16 %v202
  %v715 = vunpack.c.l.b16 %v203
  %v716 = vunpack.c.l.b16 %v204
  %v717 = vunpack.c.l.b16 %v205
  %v718 = vunpack.c.l.b16 %v206
  %v719 = vunpack.c.l.b16 %v207
  %v720 = vunpack.c.l.b16 %v208
  %v721 = vunpack.c.l.b16 %v209
  %v722 = vunpack.c.l.b16 %v210
  %v723 = vunpack.c.l.b16 %v211
  %v724 = vunpack.c.l.b16 %v212
  %v725 = vunpack.c.l.b16 %v213
  %v726 = vunpack.c.l.b16 %v214
  %v727 = vunpack.c.l.b16 %v215
  %v728 = vunpack.c.l.b16 %v216
  %v729 = vunpack.c.l.b16 %v217
  %v730 = vunpack.c.l.b16 %v218
  %v731 = vunpack.c.l.b16 %v219
  %v732 = vunpack.c.l.b16 %v220
  %v733 = vunpack.c.l.b16 %v221
  %v734 = vunpack.c.l.b16 %v222
  %v735 = vunpack.c.l.b16 %v223
  %v736 = vunpack.c.l.b16 %v224
  %v737 = vunpack.c.l.b16 %v225
  %v738 = vunpack.c.l.b16 %v226
  %v739 = vunpack.c.l.b16 %v227
  %v740 = vunpack.c.l.b16 %v228
  %v741 = vunpack.c.l.b16 %v229
  %v742 = vunpack.c.l.b16 %v230
  %v743 = vunpack.c.l.b16 %v231
  %v744 = vunpack.c.l.b16 %v232
  %v745 = vunpack.c.l.b16 %v233
  %v746 = vunpack.c.l.b16 %v234
  %v747 = vunpack.c.l.b16 %v235
  %v748 = vunpack.c.l.b16 %v236
  %v749 = vunpack.c.l.b16 %v237
  %v750 = vunpack.c.l.b16 %v238
  %v751 = vunpack.c.l.b16 %v239
  %v752 = vunpack.c.l.b16 %v240
  %v753 = vunpack.c.l.b16 %v241
  %v754 = vunpack.c.l.b16 %v242
  %v755 = vunpack.c.l.b16 %v243
  %v756 = vunpack.c.l.b16 %v244
  %v757 = vunpack.c.l.b16 %v245
  %v758 = vunpack.c.l.b16 %v246
  %v759 = vunpack.c.l.b16 %v247
  %v760 = vunpack.c.l.b16 %v248
  %v761 = vunpack.c.l.b16 %v249
  %v762 = vunpack.c.l.b16 %v250
  %v763 = vunpack.c.l.b16 %v251
  %v764 = vunpack.c.l.b16 %v252
  %v765 = vunpack.c.l.b16 %v253
  %v766 = vunpack.c.l.b16 %v254
  %v767 = vunpack.c.l.b16 %v255
  %v768 = vunpack.c.l.b16 %v256
  %v769 = vunpack.c.l.b16 %v257
  %v770 = vunpack.c.l.b16 %v258
  %v771 = vunpack.c.l.b16 %v259
  %v772 = vunpack.c.l.b16 %v260
  %v773 = vunpack.c.l.b16 %v261
  %v774 = vunpack.c.l.b16 %v262
  %v775 = vunpack.c.l.b16 %v263
  %v776 = vunpack.c.l.b16 %v264
  %v777 = vunpack.c.l.b16 %v265
  %v778 = vunpack.c.l.b16 %v266
  %v779 = vunpack.c.l.b16 %v267
  %v780 = vunpack.c.l.b16 %v268
  %v781 = vunpack.c.l.b16 %v269
  %v782 = vunpack.c.l.b16 %v270
  %v783 = vunpack.c.l.b16 %v271
  %v784 = vunpack.c.l.b16 %v272
  %v785 = vunpack.c.l.b16 %v273
  %v786 = vunpack.c.l.b16 %v274
  %v787 = vunpack.c.l.b16 %v275
  %v788 = vunpack.c.l.b16 %v276
  %v789 = vunpack.c.l.b16 %v277
  %v790 = vunpack.c.l.b16 %v278
  %v791 = vunpack.c.l.b16 %v279
  %v792 = vunpack.c.l.b16 %v280
  %v793 = vunpack.c.l.b16 %v281
  %v794 = vunpack.c.l.b16 %v282
  %v795 = vunpack.c.l.b16 %v283
  %v796 = vunpack.c.l.b16 %v284
  %v797 = vunpack.c.l.b16 %v285
  %v798 = vunpack.c.l.b16 %v286
  %v799 = vunpack.c.l.b16 %v287
  %v800 = vunpack.c.l.b16 %v288
  %v801 = vunpack.c.l.b16 %v289
  %v802 = vunpack.c.l.b16 %v290
  %v803 = vunpack.c.l.b16 %v291
  %v804 = vunpack.c.l.b16 %v292
  %v805 = vunpack.c.l.b16 %v293
  %v806 = vunpack.c.l.b16 %v294
  %v807 = vunpack.c.l.b16 %v295
  %v808 = vunpack.c.l.b16 %v296
  %v809 = vunpack.c.l.b16 %v297
  %v810 = vunpack.c.l.b16 %v298
  %v811 = vunpack.c.l.b16 %v299
  %v812 = vunpack.c.l.b16 %v300
  %v813 = vunpack.c.l.b16 %v301
  %v814 = vunpack.c.l.b16 %v302
  %v815 = vunpack.c.l.b16 %v303
  %v816 = vunpack.c.l.b16 %v304
  %v817 = vunpack.c.l.b16 %v305
  %v818 = vunpack.c.l.b16 %v306
  %v819 = vunpack.c.l.b16 %v307
  %v820 = vunpack.c.l.b16 %v308
  %v821 = vunpack.c.l.b16 %v309
  %v822 = vunpack.c.l.b16 %v310
  %v823 = vunpack.c.l.b16 %v311
  %v824 = vunpack.c.l.b16 %v312
  %v825 = vunpack.c.l.b16 %v313
  %v826 = vunpack.c.l.b16 %v314
  %v827 = vpack.c.b16 %v572, %v571
  %v828 = vpack.c.b16 %v574, %v573
  %v829 = vpack.c.b16 %v576, %v575
  %v830 = vpack.c.b16 %v578, %v577
  %v831 = vpack.c.b16 %v580, %v579
  %v832 = vpack.c.b16 %v582, %v581
  %v833 = vpack.c.b16 %v584, %v583
  %v834 = vpack.c.b16 %v586, %v585
  %v835 = vpack.c.b16 %v588, %v587
  %v836 = vpack.c.b16 %v590, %v589
  %v837 = vpack.c.b16 %v592, %v591
  %v838 = vpack.c.b16 %v594, %v593
  %v839 = vpack.c.b16 %v596, %v595
  %v840 = vpack.c.b16 %v598, %v597
  %v841 = vpack.c.b16 %v600, %v599
  %v842 = vpack.c.b16 %v602, %v601
  %v843 = vpack.c.b16 %v604, %v603
  %v844 = vpack.c.b16 %v606, %v605
  %v845 = vpack.c.b16 %v608, %v607
  %v846 = vpack.c.b16 %v610, %v609
  %v847 = vpack.c.b16 %v612, %v611
  %v848 = vpack.c.b16 %v614, %v613
  %v849 = vpack.c.b16 %v616, %v615
  %v850 = vpack.c.b16 %v618, %v617
  %v851 = vpack.c.b16 %v620, %v619
  %v852 = vpack.c.b16 %v622, %v621
  %v853 = vpack.c.b16 %v624, %v623
  %v854 = vpack.c.b16 %v626, %v625
  %v855 = vpack.c.b16 %v628, %v627
  %v856 = vpack.c.b16 %v630, %v629
  %v857 = vpack.c.b16 %v632, %v631
  %v858 = vpack.c.b16 %v634, %v633
  %v859 = vpack.c.b16 %v636, %v635
  %v860 = vpack.c.b16 %v638, %v637
  %v861 = vpack.c.b16 %v640, %v639
  %v862 = vpack.c.b16 %v642, %v641
  %v863 = vpack.c.b16 %v644, %v643
  %v864 = vpack.c.b16 %v646, %v645
  %v865 = vpack.c.b16 %v648, %v647
  %v866 = vpack.c.b16 %v650, %v649
  %v867 = vpack.c.b16 %v652, %v651
  %v868 = vpack.c.b16 %v654, %v653
  %v869 = vpack.c.b16 %v656, %v655
  %v870 = vpack.c.b16 %v658, %v657
  %v871 = vpack.c.b16 %v660, %v659
  %v872 = vpack.c.b16 %v662, %v661
  %v873 = vpack.c.b16 %v664, %v663
  %v874 = vpack.c.b16 %v666, %v665
  %v875 = vpack.c.b16 %v668, %v667
  %v876 = vpack.c.b16 %v670, %v669
  %v877 = vpack.c.b16 %v672, %v671
  %v878 = vpack.c.b16 %v674, %v673
  %v879 = vpack.c.b16 %v676, %v675
  %v880 = vpack.c.b16 %v678, %v677
  %v881 = vpack.c.b16 %v680, %v679
  %v882 = vpack.c.b16 %v682, %v681
  %v883 = vpack.c.b16 %v684, %v683
  %v884 = vpack.c.b16 %v686, %v685
  %v885 = vpack.c.b16 %v688, %v687
  %v886 = vpack.c.b16 %v690, %v689
  %v887 = vpack.c.b16 %v692, %v691
  %v888 = vpack.c.b16 %v694, %v693
  %v889 = vpack.c.b16 %v696, %v695
  %v890 = vpack.c.b16 %v698, %v697
  %v891 = vpack.c.b16 %v700, %v699
  %v892 = vpack.c.b16 %v702, %v701
  %v893 = vpack.c.b16 %v704, %v703
  %v894 = vpack.c.b16 %v706, %v705
  %v895 = vpack.c.b16 %v708, %v707
  %v896 = vpack.c.b16 %v710, %v709
  %v897 = vpack.c.b16 %v712, %v711
  %v898 = vpack.c.b16 %v714, %v713
  %v899 = vpack.c.b16 %v716, %v715
  %v900 = vpack.c.b16 %v718, %v717
  %v901 = vpack.c.b16 %v720, %v719
  %v902 = vpack.c.b16 %v722, %v721
  %v903 = vpack.c.b16 %v724, %v723
  %v904 = vpack.c.b16 %v726, %v725
  %v905 = vpack.c.b16 %v728, %v727
  %v906 = vpack.c.b16 %v730, %v729
  %v907 = vpack.c.b16 %v732, %v731
  %v908 = vpack.c.b16 %v734, %v733
  %v909 = vpack.c.b16 %v736, %v735
  %v910 = vpack.c.b16 %v738, %v737
  %v911 = vpack.c.b16 %v740, %v739
  %v912 = vpack.c.b16 %v742, %v741
  %v913 = vpack.c.b16 %v744, %v743
  %v914 = vpack.c.b16 %v746, %v745
  %v915 = vpack.c.b16 %v748, %v747
  %v916 = vpack.c.b16 %v750, %v749
  %v917 = vpack.c.b16 %v752, %v751
  %v918 = vpack.c.b16 %v754, %v753
  %v919 = vpack.c.b16 %v756, %v755
  %v920 = vpack.c.b16 %v758, %v757
  %v921 = vpack.c.b16 %v760, %v759
  %v922 = vpack.c.b16 %v762, %v761
  %v923 = vpack.c.b16 %v764, %v763
  %v924 = vpack.c.b16 %v766, %v765
  %v925 = vpack.c.b16 %v768, %v767
  %v926 = vpack.c.b16 %v770, %v769
  %v927 = vpack.c.b16 %v772, %v771
  %v928 = vpack.c.b16 %v774, %v773
  %v929 = vpack.c.b16 %v776, %v775
  %v930 = vpack.c.b16 %v778, %v777
  %v931 = vpack.c.b16 %v780, %v779
  %v932 = vpack.c.b16 %v782, %v781
  %v933 = vpack.c.b16 %v784, %v783
  %v934 = vpack.c.b16 %v786, %v785
  %v935 = vpack.c.b16 %v788, %v787
  %v936 = vpack.c.b16 %v790, %v789
  %v937 = vpack.c.b16 %v792, %v791
  %v938 = vpack.c.b16 %v794, %v793
  %v939 = vpack.c.b16 %v796, %v795
  %v940 = vpack.c.b16 %v798, %v797
  %v941 = vpack.c.b16 %v800, %v799
  %v942 = vpack.c.b16 %v802, %v801
  %v943 = vpack.c.b16 %v804, %v803
  %v944 = vpack.c.b16 %v806, %v805
  %v945 = vpack.c.b16 %v808, %v807
  %v946 = vpack.c.b16 %v810, %v809
  %v947 = vpack.c.b16 %v812, %v811
  %v948 = vpack.c.b16 %v814, %v813
  %v949 = vpack.c.b16 %v816, %v815
  %v950 = vpack.c.b16 %v818, %v817
  %v951 = vpack.c.b16 %v820, %v819
  %v952 = vpack.c.b16 %v822, %v821
  %v953 = vpack.c.b16 %v824, %v823
  %v954 = vpack.c.b16 %v826, %v825
  %1083 = vmatpush.bf16.xpose.msra.mxu0 %v834
  %1084 = vmatpush.bf16.xpose.msra.mxu0 %v833
  %1085 = vmatpush.bf16.xpose.msra.mxu0 %v832
  %1086 = vmatpush.bf16.xpose.msra.mxu0 %v831
  %1087 = vmatpush.bf16.xpose.msra.mxu0 %v830
  %1088 = vmatpush.bf16.xpose.msra.mxu0 %v829
  %1089 = vmatpush.bf16.xpose.msra.mxu0 %v828
  %1090 = vmatpush.bf16.xpose.msra.mxu0 %v827
  %1091 = vmatmul.bf16.gmra.mxu0 %v58
  %v1092 = vpop.f32.mrf.mxu0
  %v1093 = vadd.f32 0.0, %v1092
  %v1094 = vpop.f32.mrf.mxu0
  %1095 = vdwg.mxu0
  %1096 = vmatpush.bf16.xpose.msra.mxu0 %v842
  %1097 = vmatpush.bf16.xpose.msra.mxu0 %v841
  %1098 = vmatpush.bf16.xpose.msra.mxu0 %v840
  %1099 = vmatpush.bf16.xpose.msra.mxu0 %v839
  %1100 = vmatpush.bf16.xpose.msra.mxu0 %v838
  %1101 = vmatpush.bf16.xpose.msra.mxu0 %v837
  %1102 = vmatpush.bf16.xpose.msra.mxu0 %v836
  %1103 = vmatpush.bf16.xpose.msra.mxu0 %v835
  %1104 = vmatmul.bf16.gmra.mxu0 %v58
  %v1105 = vpop.f32.mrf.mxu0
  %v1106 = vadd.f32 0.0, %v1105
  %v1107 = vpop.f32.mrf.mxu0
  %1108 = vdwg.mxu0
  %1109 = vmatpush.bf16.xpose.msra.mxu0 %v850
  %1110 = vmatpush.bf16.xpose.msra.mxu0 %v849
  %1111 = vmatpush.bf16.xpose.msra.mxu0 %v848
  %1112 = vmatpush.bf16.xpose.msra.mxu0 %v847
  %1113 = vmatpush.bf16.xpose.msra.mxu0 %v846
  %1114 = vmatpush.bf16.xpose.msra.mxu0 %v845
  %1115 = vmatpush.bf16.xpose.msra.mxu0 %v844
  %1116 = vmatpush.bf16.xpose.msra.mxu0 %v843
  %1117 = vmatmul.bf16.gmra.mxu0 %v58
  %v1118 = vpop.f32.mrf.mxu0
  %v1119 = vadd.f32 0.0, %v1118
  %v1120 = vpop.f32.mrf.mxu0
  %1121 = vdwg.mxu0
  %1122 = vmatpush.bf16.xpose.msra.mxu0 %v858
  %1123 = vmatpush.bf16.xpose.msra.mxu0 %v857
  %1124 = vmatpush.bf16.xpose.msra.mxu0 %v856
  %1125 = vmatpush.bf16.xpose.msra.mxu0 %v855
  %1126 = vmatpush.bf16.xpose.msra.mxu0 %v854
  %1127 = vmatpush.bf16.xpose.msra.mxu0 %v853
  %1128 = vmatpush.bf16.xpose.msra.mxu0 %v852
  %1129 = vmatpush.bf16.xpose.msra.mxu0 %v851
  %1130 = vmatmul.bf16.gmra.mxu0 %v58
  %v1131 = vpop.f32.mrf.mxu0
  %v1132 = vadd.f32 0.0, %v1131
  %v1133 = vpop.f32.mrf.mxu0
  %1134 = vdwg.mxu0
  %1135 = vmatpush.bf16.xpose.msra.mxu0 %v866
  %1136 = vmatpush.bf16.xpose.msra.mxu0 %v865
  %1137 = vmatpush.bf16.xpose.msra.mxu0 %v864
  %1138 = vmatpush.bf16.xpose.msra.mxu0 %v863
  %1139 = vmatpush.bf16.xpose.msra.mxu0 %v862
  %1140 = vmatpush.bf16.xpose.msra.mxu0 %v861
  %1141 = vmatpush.bf16.xpose.msra.mxu0 %v860
  %1142 = vmatpush.bf16.xpose.msra.mxu0 %v859
  %1143 = vmatmul.bf16.gmra.mxu0 %v58
  %v1144 = vpop.f32.mrf.mxu0
  %v1145 = vadd.f32 0.0, %v1144
  %v1146 = vpop.f32.mrf.mxu0
  %1147 = vdwg.mxu0
  %1148 = vmatpush.bf16.xpose.msra.mxu0 %v874
  %1149 = vmatpush.bf16.xpose.msra.mxu0 %v873
  %1150 = vmatpush.bf16.xpose.msra.mxu0 %v872
  %1151 = vmatpush.bf16.xpose.msra.mxu0 %v871
  %1152 = vmatpush.bf16.xpose.msra.mxu0 %v870
  %1153 = vmatpush.bf16.xpose.msra.mxu0 %v869
  %1154 = vmatpush.bf16.xpose.msra.mxu0 %v868
  %1155 = vmatpush.bf16.xpose.msra.mxu0 %v867
  %1156 = vmatmul.bf16.gmra.mxu0 %v58
  %v1157 = vpop.f32.mrf.mxu0
  %v1158 = vadd.f32 0.0, %v1157
  %v1159 = vpop.f32.mrf.mxu0
  %1160 = vdwg.mxu0
  %1161 = vmatpush.bf16.xpose.msra.mxu0 %v882
  %1162 = vmatpush.bf16.xpose.msra.mxu0 %v881
  %1163 = vmatpush.bf16.xpose.msra.mxu0 %v880
  %1164 = vmatpush.bf16.xpose.msra.mxu0 %v879
  %1165 = vmatpush.bf16.xpose.msra.mxu0 %v878
  %1166 = vmatpush.bf16.xpose.msra.mxu0 %v877
  %1167 = vmatpush.bf16.xpose.msra.mxu0 %v876
  %1168 = vmatpush.bf16.xpose.msra.mxu0 %v875
  %1169 = vmatmul.bf16.gmra.mxu0 %v58
  %v1170 = vpop.f32.mrf.mxu0
  %v1171 = vadd.f32 0.0, %v1170
  %v1172 = vpop.f32.mrf.mxu0
  %1173 = vdwg.mxu0
  %1174 = vmatpush.bf16.xpose.msra.mxu0 %v890
  %1175 = vmatpush.bf16.xpose.msra.mxu0 %v889
  %1176 = vmatpush.bf16.xpose.msra.mxu0 %v888
  %1177 = vmatpush.bf16.xpose.msra.mxu0 %v887
  %1178 = vmatpush.bf16.xpose.msra.mxu0 %v886
  %1179 = vmatpush.bf16.xpose.msra.mxu0 %v885
  %1180 = vmatpush.bf16.xpose.msra.mxu0 %v884
  %1181 = vmatpush.bf16.xpose.msra.mxu0 %v883
  %1182 = vmatmul.bf16.gmra.mxu0 %v58
  %v1183 = vpop.f32.mrf.mxu0
  %v1184 = vadd.f32 0.0, %v1183
  %v1185 = vpop.f32.mrf.mxu0
  %1186 = vdwg.mxu0
  %1187 = vmatpush.bf16.xpose.msra.mxu0 %v898
  %1188 = vmatpush.bf16.xpose.msra.mxu0 %v897
  %1189 = vmatpush.bf16.xpose.msra.mxu0 %v896
  %1190 = vmatpush.bf16.xpose.msra.mxu0 %v895
  %1191 = vmatpush.bf16.xpose.msra.mxu0 %v894
  %1192 = vmatpush.bf16.xpose.msra.mxu0 %v893
  %1193 = vmatpush.bf16.xpose.msra.mxu0 %v892
  %1194 = vmatpush.bf16.xpose.msra.mxu0 %v891
  %1195 = vmatmul.bf16.gmra.mxu0 %v58
  %v1196 = vpop.f32.mrf.mxu0
  %v1197 = vadd.f32 0.0, %v1196
  %v1198 = vpop.f32.mrf.mxu0
  %1199 = vdwg.mxu0
  %1200 = vmatpush.bf16.xpose.msra.mxu0 %v906
  %1201 = vmatpush.bf16.xpose.msra.mxu0 %v905
  %1202 = vmatpush.bf16.xpose.msra.mxu0 %v904
  %1203 = vmatpush.bf16.xpose.msra.mxu0 %v903
  %1204 = vmatpush.bf16.xpose.msra.mxu0 %v902
  %1205 = vmatpush.bf16.xpose.msra.mxu0 %v901
  %1206 = vmatpush.bf16.xpose.msra.mxu0 %v900
  %1207 = vmatpush.bf16.xpose.msra.mxu0 %v899
  %1208 = vmatmul.bf16.gmra.mxu0 %v58
  %v1209 = vpop.f32.mrf.mxu0
  %v1210 = vadd.f32 0.0, %v1209
  %v1211 = vpop.f32.mrf.mxu0
  %1212 = vdwg.mxu0
  %1213 = vmatpush.bf16.xpose.msra.mxu0 %v914
  %1214 = vmatpush.bf16.xpose.msra.mxu0 %v913
  %1215 = vmatpush.bf16.xpose.msra.mxu0 %v912
  %1216 = vmatpush.bf16.xpose.msra.mxu0 %v911
  %1217 = vmatpush.bf16.xpose.msra.mxu0 %v910
  %1218 = vmatpush.bf16.xpose.msra.mxu0 %v909
  %1219 = vmatpush.bf16.xpose.msra.mxu0 %v908
  %1220 = vmatpush.bf16.xpose.msra.mxu0 %v907
  %1221 = vmatmul.bf16.gmra.mxu0 %v58
  %v1222 = vpop.f32.mrf.mxu0
  %v1223 = vadd.f32 0.0, %v1222
  %v1224 = vpop.f32.mrf.mxu0
  %1225 = vdwg.mxu0
  %1226 = vmatpush.bf16.xpose.msra.mxu0 %v922
  %1227 = vmatpush.bf16.xpose.msra.mxu0 %v921
  %1228 = vmatpush.bf16.xpose.msra.mxu0 %v920
  %1229 = vmatpush.bf16.xpose.msra.mxu0 %v919
  %1230 = vmatpush.bf16.xpose.msra.mxu0 %v918
  %1231 = vmatpush.bf16.xpose.msra.mxu0 %v917
  %1232 = vmatpush.bf16.xpose.msra.mxu0 %v916
  %1233 = vmatpush.bf16.xpose.msra.mxu0 %v915
  %1234 = vmatmul.bf16.gmra.mxu0 %v58
  %v1235 = vpop.f32.mrf.mxu0
  %v1236 = vadd.f32 0.0, %v1235
  %v1237 = vpop.f32.mrf.mxu0
  %1238 = vdwg.mxu0
  %1239 = vmatpush.bf16.xpose.msra.mxu0 %v930
  %1240 = vmatpush.bf16.xpose.msra.mxu0 %v929
  %1241 = vmatpush.bf16.xpose.msra.mxu0 %v928
  %1242 = vmatpush.bf16.xpose.msra.mxu0 %v927
  %1243 = vmatpush.bf16.xpose.msra.mxu0 %v926
  %1244 = vmatpush.bf16.xpose.msra.mxu0 %v925
  %1245 = vmatpush.bf16.xpose.msra.mxu0 %v924
  %1246 = vmatpush.bf16.xpose.msra.mxu0 %v923
  %1247 = vmatmul.bf16.gmra.mxu0 %v58
  %v1248 = vpop.f32.mrf.mxu0
  %v1249 = vadd.f32 0.0, %v1248
  %v1250 = vpop.f32.mrf.mxu0
  %1251 = vdwg.mxu0
  %1252 = vmatpush.bf16.xpose.msra.mxu0 %v938
  %1253 = vmatpush.bf16.xpose.msra.mxu0 %v937
  %1254 = vmatpush.bf16.xpose.msra.mxu0 %v936
  %1255 = vmatpush.bf16.xpose.msra.mxu0 %v935
  %1256 = vmatpush.bf16.xpose.msra.mxu0 %v934
  %1257 = vmatpush.bf16.xpose.msra.mxu0 %v933
  %1258 = vmatpush.bf16.xpose.msra.mxu0 %v932
  %1259 = vmatpush.bf16.xpose.msra.mxu0 %v931
  %1260 = vmatmul.bf16.gmra.mxu0 %v58
  %v1261 = vpop.f32.mrf.mxu0
  %v1262 = vadd.f32 0.0, %v1261
  %v1263 = vpop.f32.mrf.mxu0
  %1264 = vdwg.mxu0
  %1265 = vmatpush.bf16.xpose.msra.mxu0 %v946
  %1266 = vmatpush.bf16.xpose.msra.mxu0 %v945
  %1267 = vmatpush.bf16.xpose.msra.mxu0 %v944
  %1268 = vmatpush.bf16.xpose.msra.mxu0 %v943
  %1269 = vmatpush.bf16.xpose.msra.mxu0 %v942
  %1270 = vmatpush.bf16.xpose.msra.mxu0 %v941
  %1271 = vmatpush.bf16.xpose.msra.mxu0 %v940
  %1272 = vmatpush.bf16.xpose.msra.mxu0 %v939
  %1273 = vmatmul.bf16.gmra.mxu0 %v58
  %v1274 = vpop.f32.mrf.mxu0
  %v1275 = vadd.f32 0.0, %v1274
  %v1276 = vpop.f32.mrf.mxu0
  %1277 = vdwg.mxu0
  %1278 = vmatpush.bf16.xpose.msra.mxu0 %v954
  %1279 = vmatpush.bf16.xpose.msra.mxu0 %v953
  %1280 = vmatpush.bf16.xpose.msra.mxu0 %v952
  %1281 = vmatpush.bf16.xpose.msra.mxu0 %v951
  %1282 = vmatpush.bf16.xpose.msra.mxu0 %v950
  %1283 = vmatpush.bf16.xpose.msra.mxu0 %v949
  %1284 = vmatpush.bf16.xpose.msra.mxu0 %v948
  %1285 = vmatpush.bf16.xpose.msra.mxu0 %v947
  %1286 = vmatmul.bf16.gmra.mxu0 %v58
  %v1287 = vpop.f32.mrf.mxu0
  %v1288 = vadd.f32 0.0, %v1287
  %v1289 = vpop.f32.mrf.mxu0
  %1290 = vdwg.mxu0
  %v1307 = vrot.slane %v1106, 6
  %v1308 = vrot.slane %v1119, 4
  %v1309 = vrot.slane %v1132, 2
  %v1310 = vrot.slane %v1158, 6
  %v1311 = vrot.slane %v1171, 4
  %v1312 = vrot.slane %v1184, 2
  %v1313 = vrot.slane %v1210, 6
  %v1314 = vrot.slane %v1223, 4
  %v1315 = vrot.slane %v1236, 2
  %v1316 = vrot.slane %v1262, 6
  %v1317 = vrot.slane %v1275, 4
  %v1318 = vrot.slane %v1288, 2
  %v1319 = vsel %vm20, %v1093, %v1307
  %vm1320 = vcmask 1045508
  %v1321 = vsel %vm1320, %v1308, %v1309
  %vm1322 = vcmask 1043456
  %v1323 = vsel %vm1322, %v1319, %v1321
  %v1324 = vsel %vm20, %v1145, %v1310
  %v1325 = vsel %vm1320, %v1311, %v1312
  %v1326 = vsel %vm1322, %v1324, %v1325
  %v1327 = vsel %vm20, %v1197, %v1313
  %v1328 = vsel %vm1320, %v1314, %v1315
  %v1329 = vsel %vm1322, %v1327, %v1328
  %v1330 = vsel %vm20, %v1249, %v1316
  %v1331 = vsel %vm1320, %v1317, %v1318
  %v1332 = vsel %vm1322, %v1330, %v1331
  %1337 = vst [vmem:[%s4] sm:$0xff] %v1323
  %1338 = vst [vmem:[%s4 + $0x8] sm:$0xff] %v1326
  %1339 = vst [vmem:[%s4 + $0x10] sm:$0xff] %v1329
  %1340 = vst [vmem:[%s4 + $0x18] sm:$0xff] %v1332
  // Predicated region
  $region18: #{forward.17} parent=0 // pred_check
    _
  $region19: #{forward.17} parent=0 // pred_check_branch
    %1342 = sbr.rel (0) target = $region21
  $region20: #{forward.17} parent=0 // pred_region
    _
  $region21: #{forward.17} parent=0 // pred_fallthru
    _
  // Predicated region
  $region22: #{forward.17} parent=0 // pred_check
    _
  $region23: #{forward.17} parent=0 // pred_check_branch
    %1344 = sbr.rel (0) target = $region25
  $region24: #{forward.17} parent=0 // pred_region
    _
  $region25: #{forward.17} parent=0 // pred_fallthru
    _

</llo_original>
